<compile_context>
chip_gen: v6e
topology: v6e:2x2x1
jax: 0.10.0
libtpu: 0.0.40
codegen_flags: <defaults>
</compile_context>

<pallas_src>
import functools

import numpy as np
import jax
import jax.numpy as jnp
from jax.experimental import pallas as pl
from jax.experimental.pallas import tpu as pltpu

WEIGHT_DTYPE = jnp.bfloat16   # dtype of streamed weights / matmul inputs
CI = 32                       # deconv stage-1 input channels (fixed by module)
CO = 16                       # deconv stage-1 output channels (fixed by module)

_OPERAND_ORDER = ("w1", "b1", "w2", "b2", "wh", "bh",
                  "wm1", "bm1", "wm2", "bm2", "we1", "be1", "we2", "be2")


# ----------------------------------------------------------------------------
# Fused decoder kernel: one pallas_call, 7 small matmuls + in-kernel shuffle.
# ----------------------------------------------------------------------------
def _make_decoder_kernel(B, window_size, num_mel_bins, height, width):
    Wq, Mq = window_size // 4, num_mel_bins // 4
    Hq, Wdq = height // 4, width // 4
    mel_head = CI * Wq * Mq                  # 512: width of the mel head slice
    k1m = CI * Mq                            # stage-1 mel K (ci, j1)
    k1e = CI * Hq * Wdq                      # stage-1 energy K (ci, h1, w1)
    k2m = CO * (2 * Mq)                      # stage-2 mel K (co, j2)
    k2e = CO * (2 * Hq) * (2 * Wdq)          # stage-2 energy K (co, h2, w2)
    hw = height * width

    def kernel(z_ref, w1_ref, b1_ref, w2_ref, b2_ref, wh_ref, bh_ref,
               wm1_ref, bm1_ref, wm2_ref, bm2_ref,
               we1_ref, be1_ref, we2_ref, be2_ref,
               mel_ref, energy_ref,
               x1m_ref, x1e_ref, x2m_ref, x2e_ref):

        def mm(x, w_ref, b_ref, relu):
            # bf16 matmul inputs (MXU native), f32 accumulation, f32 activations.
            y = jnp.dot(x.astype(jnp.bfloat16), w_ref[...],
                        preferred_element_type=jnp.float32)
            y = y + b_ref[...]                      # (1, N) bias broadcasts
            return jnp.maximum(y, 0.0) if relu else y

        # Shared trunk + fused (mel|energy) head.  Head columns were permuted
        # at prep time to "frame-row major" order.
        h = mm(z_ref[...], w1_ref, b1_ref, True)        # (B, 512)
        h = mm(h, w2_ref, b2_ref, True)                  # (B, 1024)
        heads = mm(h, wh_ref, bh_ref, True)              # (B, 1024) = [mel|energy]

        # Stage-1 activation assembly: rows = (frame_row, b), cols = (ci, minor).
        for r in range(Wq):
            x1m_ref[r * B:(r + 1) * B, :] = heads[:, r * k1m:(r + 1) * k1m]
            x1e_ref[r * B:(r + 1) * B, :] = \
                heads[:, mel_head + r * k1e: mel_head + (r + 1) * k1e]

        # Stage-1 deconvs as row-folded matmuls; cols = (a1, co, upsampled minor).
        y1m = mm(x1m_ref[...], wm1_ref, bm1_ref, True)   # (Wq*B, 2*k2m)
        y1e = mm(x1e_ref[...], we1_ref, be1_ref, True)   # (Wq*B, 2*k2e)

        # Stage-2 activation assembly: a1-blocked row order (a1, frame_row, b).
        for a1 in range(2):
            x2m_ref[a1 * Wq * B:(a1 + 1) * Wq * B, :] = \
                y1m[:, a1 * k2m:(a1 + 1) * k2m]
            x2e_ref[a1 * Wq * B:(a1 + 1) * Wq * B, :] = \
                y1e[:, a1 * k2e:(a1 + 1) * k2e]

        # Stage-2 deconvs; each a2 column block is one full output frame row.
        y2m = mm(x2m_ref[...], wm2_ref, bm2_ref, False)  # (2*Wq*B, 2*num_mel_bins)
        y2e = mm(x2e_ref[...], we2_ref, be2_ref, False)  # (2*Wq*B, 2*height*width)

        # Pixel shuffle: scatter lane-contiguous rows into PyTorch row order.
        for a1 in range(2):
            for r in range(Wq):
                for b in range(B):
                    src = a1 * Wq * B + r * B + b
                    for a2 in range(2):
                        t = 4 * r + 2 * a1 + a2          # output frame index
                        row = b * window_size + t
                        mel_ref[row:row + 1, :] = \
                            y2m[src:src + 1,
                                a2 * num_mel_bins:(a2 + 1) * num_mel_bins]
                        energy_ref[row:row + 1, :] = \
                            y2e[src:src + 1, a2 * hw:(a2 + 1) * hw]

    return kernel


@functools.partial(jax.jit,
                   static_argnames=("window_size", "num_mel_bins", "height", "width"))
def hierarchical_decoder_forward(z, fused, *, window_size, num_mel_bins, height, width):
    B = z.shape[0]
    Wq, Mq = window_size // 4, num_mel_bins // 4
    Hq, Wdq = height // 4, width // 4
    k1m, k1e = CI * Mq, CI * Hq * Wdq
    k2m, k2e = CO * (2 * Mq), CO * (2 * Hq) * (2 * Wdq)

    kernel = _make_decoder_kernel(B, window_size, num_mel_bins, height, width)
    operands = (z,) + tuple(fused[k] for k in _OPERAND_ORDER)

    def full_spec(arr):                       # every operand is 2-D, full block
        return pl.BlockSpec(arr.shape, lambda i: (0, 0))

    mel_flat, energy_flat = pl.pallas_call(
        kernel,
        out_shape=(
            jax.ShapeDtypeStruct((B * window_size, num_mel_bins), jnp.float32),
            jax.ShapeDtypeStruct((B * window_size, height * width), jnp.float32),
        ),
        grid=(1,),
        in_specs=[full_spec(a) for a in operands],
        out_specs=(
            pl.BlockSpec((B * window_size, num_mel_bins), lambda i: (0, 0)),
            pl.BlockSpec((B * window_size, height * width), lambda i: (0, 0)),
        ),
        scratch_shapes=[
            pltpu.VMEM((Wq * B, k1m), jnp.float32),      # stage-1 mel input
            pltpu.VMEM((Wq * B, k1e), jnp.float32),      # stage-1 energy input
            pltpu.VMEM((2 * Wq * B, k2m), jnp.float32),  # stage-2 mel input
            pltpu.VMEM((2 * Wq * B, k2e), jnp.float32),  # stage-2 energy input
        ],
        compiler_params=pltpu.CompilerParams(
            dimension_semantics=("arbitrary",),
            vmem_limit_bytes=14 * 1024 * 1024,
        ),
    )(*operands)

    # Outputs are already in PyTorch row-major order; reshapes are free.
    mel_recon = mel_flat.reshape(B, window_size, num_mel_bins)
    energy_recon = energy_flat.reshape(B, window_size, height, width)
    return mel_recon, energy_recon


# ----------------------------------------------------------------------------
# One-time parameter preparation (permutes / folds weights; casts to bf16).
# ----------------------------------------------------------------------------
def prepare_fused_params(p, *, window_size, num_mel_bins, height, width,
                         weight_dtype=WEIGHT_DTYPE):
    Wq, Mq = window_size // 4, num_mel_bins // 4
    Hq, Wdq = height // 4, width // 4

    def np32(x):
        return np.asarray(jax.device_get(x), np.float32)

    def wcast(x):
        return jnp.asarray(x, weight_dtype)

    def bias_row(x):
        return jnp.asarray(np.asarray(x, np.float32).reshape(1, -1), jnp.float32)

    # --- fused head: permute output features to "frame-row major", concatenate.
    mel_w, mel_b = np32(p["mel_fc_w"]), np32(p["mel_fc_b"])       # (512,1024),(512,)
    old_m = np.arange(CI * Wq * Mq).reshape(CI, Wq, Mq)           # (ci, i1, j1) -> old
    perm_m = old_m.transpose(1, 0, 2).reshape(-1)                 # new order (i1, ci, j1)
    whm, bhm = mel_w.T[:, perm_m], mel_b[perm_m]

    en_w, en_b = np32(p["energy_fc_w"]), np32(p["energy_fc_b"])
    old_e = np.arange(CI * Wq * Hq * Wdq).reshape(CI, Wq, Hq, Wdq)
    perm_e = old_e.transpose(1, 0, 2, 3).reshape(-1)              # (d1, ci, h1, w1)
    whe, bhe = en_w.T[:, perm_e], en_b[perm_e]

    wh = np.concatenate([whm, whe], axis=1)                       # (1024, 1024)
    bh = np.concatenate([bhm, bhe])

    # --- row-folded deconv weights -----------------------------------------
    def fold_deconv1_2d(w, b):
        # rows K = (ci, j1); cols N = (a1, co, j_mid = 2*j1 + bo)
        w, b = np32(w), np32(b)
        K, N = CI * Mq, 2 * CO * (2 * Mq)
        mat = np.zeros((K, N), np.float32)
        for ci in range(CI):
            for j1 in range(Mq):
                for co in range(CO):
                    for a1 in range(2):
                        for bo in range(2):
                            mat[ci * Mq + j1,
                                a1 * (CO * 2 * Mq) + co * (2 * Mq) + 2 * j1 + bo] = \
                                w[ci, co, a1, bo]
        bias = np.zeros((N,), np.float32)
        for a1 in range(2):
            for co in range(CO):
                base = a1 * (CO * 2 * Mq) + co * (2 * Mq)
                bias[base: base + 2 * Mq] = b[co]
        return mat, bias

    def fold_deconv1_3d(w, b):
        # rows K = (ci, h1, w1); cols N = (a1, co, h_mid, w_mid)
        w, b = np32(w), np32(b)
        Hm, Wm = 2 * Hq, 2 * Wdq
        K, N = CI * Hq * Wdq, 2 * CO * Hm * Wm
        mat = np.zeros((K, N), np.float32)
        for ci in range(CI):
            for h1 in range(Hq):
                for w1 in range(Wdq):
                    for co in range(CO):
                        for a1 in range(2):
                            for b1 in range(2):
                                for c1 in range(2):
                                    mat[ci * Hq * Wdq + h1 * Wdq + w1,
                                        a1 * (CO * Hm * Wm) + co * (Hm * Wm)
                                        + (2 * h1 + b1) * Wm + (2 * w1 + c1)] = \
                                        w[ci, co, a1, b1, c1]
        bias = np.zeros((N,), np.float32)
        for a1 in range(2):
            for co in range(CO):
                base = a1 * (CO * Hm * Wm) + co * (Hm * Wm)
                bias[base: base + Hm * Wm] = b[co]
        return mat, bias

    def fold_deconv2_2d(w, b):
        # rows K = (co, j2); cols N = (a2, j_out = 2*j2 + bo)
        w, b = np32(w), np32(b)
        J2 = 2 * Mq
        K, N = CO * J2, 2 * num_mel_bins
        mat = np.zeros((K, N), np.float32)
        for co in range(CO):
            for j2 in range(J2):
                for a2 in range(2):
                    for bo in range(2):
                        mat[co * J2 + j2, a2 * num_mel_bins + 2 * j2 + bo] = \
                            w[co, 0, a2, bo]
        bias = np.full((N,), b[0], np.float32)
        return mat, bias

    def fold_deconv2_3d(w, b):
        # rows K = (co, h2, w2); cols N = (a2, h_out * width + w_out)
        w, b = np32(w), np32(b)
        H2, W2 = 2 * Hq, 2 * Wdq
        K, N = CO * H2 * W2, 2 * height * width
        mat = np.zeros((K, N), np.float32)
        for co in range(CO):
            for h2 in range(H2):
                for w2 in range(W2):
                    for a2 in range(2):
                        for b2 in range(2):
                            for c2 in range(2):
                                mat[co * H2 * W2 + h2 * W2 + w2,
                                    a2 * (height * width)
                                    + (2 * h2 + b2) * width + (2 * w2 + c2)] = \
                                    w[co, 0, a2, b2, c2]
        bias = np.full((N,), b[0], np.float32)
        return mat, bias

    wm1, bm1 = fold_deconv1_2d(p["mel_deconv1_w"], p["mel_deconv1_b"])
    wm2, bm2 = fold_deconv2_2d(p["mel_deconv2_w"], p["mel_deconv2_b"])
    we1, be1 = fold_deconv1_3d(p["energy_deconv1_w"], p["energy_deconv1_b"])
    we2, be2 = fold_deconv2_3d(p["energy_deconv2_w"], p["energy_deconv2_b"])

    return {
        "w1": wcast(np32(p["shared_fc_w"]).T),  "b1": bias_row(np32(p["shared_fc_b"])),
        "w2": wcast(np32(p["shared_fc2_w"]).T), "b2": bias_row(np32(p["shared_fc2_b"])),
        "wh": wcast(wh),  "bh": bias_row(bh),
        "wm1": wcast(wm1), "bm1": bias_row(bm1),
        "wm2": wcast(wm2), "bm2": bias_row(bm2),
        "we1": wcast(we1), "be1": bias_row(be1),
        "we2": wcast(we2), "be2": bias_row(be2),
    }


# ----------------------------------------------------------------------------
# Deterministic parameter init (PyTorch-layout raw params).
# ----------------------------------------------------------------------------
def _uniform(key, shape, bound):
    return jax.random.uniform(key, shape, jnp.float32, -bound, bound)


def init_params(key, window_size, num_mel_bins, height, width, embedding_size):
    ks = jax.random.split(key, 16)
    p = {}

    def lin(k1, k2, out_f, in_f):
        bound = 1.0 / float(np.sqrt(in_f))
        return _uniform(k1, (out_f, in_f), bound), _uniform(k2, (out_f,), bound)

    def deconv2d(k1, k2, ci, co):
        bound = 1.0 / float(np.sqrt(ci * 4))
        return _uniform(k1, (ci, co, 2, 2), bound), _uniform(k2, (co,), bound)

    def deconv3d(k1, k2, ci, co):
        bound = 1.0 / float(np.sqrt(ci * 8))
        return _uniform(k1, (ci, co, 2, 2, 2), bound), _uniform(k2, (co,), bound)

    p["shared_fc_w"], p["shared_fc_b"] = lin(ks[0], ks[1], 512, embedding_size * 2)
    p["shared_fc2_w"], p["shared_fc2_b"] = lin(ks[2], ks[3], 1024, 512)
    p["mel_fc_w"], p["mel_fc_b"] = lin(ks[4], ks[5], 512, 1024)
    p["energy_fc_w"], p["energy_fc_b"] = lin(ks[6], ks[7], 512, 1024)
    p["mel_deconv1_w"], p["mel_deconv1_b"] = deconv2d(ks[8], ks[9], 32, 16)
    p["mel_deconv2_w"], p["mel_deconv2_b"] = deconv2d(ks[10], ks[11], 16, 1)
    p["energy_deconv1_w"], p["energy_deconv1_b"] = deconv3d(ks[12], ks[13], 32, 16)
    p["energy_deconv2_w"], p["energy_deconv2_b"] = deconv3d(ks[14], ks[15], 16, 1)
    return p


# ----------------------------------------------------------------------------
# Pure-JAX reference (mirrors the PyTorch forward; optionally models the
# kernel's bf16 matmul-input rounding with f32 accumulation).
# ----------------------------------------------------------------------------
def _dot_ref(x, w, round_dtype):
    if round_dtype is not None:
        x, w = x.astype(round_dtype), w.astype(round_dtype)
    return jnp.dot(x, w, preferred_element_type=jnp.float32)


def _convT2d_ref(x, w, b, round_dtype):
    if round_dtype is not None:
        x, w = x.astype(round_dtype), w.astype(round_dtype)
    y = jnp.einsum("bcij,cokl->boikjl", x, w, preferred_element_type=jnp.float32)
    bsz, co, hi, _, wi, _ = y.shape
    return y.reshape(bsz, co, 2 * hi, 2 * wi) + b[None, :, None, None]


def _convT3d_ref(x, w, b, round_dtype):
    if round_dtype is not None:
        x, w = x.astype(round_dtype), w.astype(round_dtype)
    y = jnp.einsum("bcdij,coklm->bodkiljm", x, w, preferred_element_type=jnp.float32)
    bsz, co, di, _, hi, _, wi, _ = y.shape
    return y.reshape(bsz, co, 2 * di, 2 * hi, 2 * wi) + b[None, :, None, None, None]


def reference_forward(z, p, *, window_size, num_mel_bins, height, width,
                      round_dtype=None):
    relu = lambda v: jnp.maximum(v, 0.0)
    f32 = lambda x: jnp.asarray(x, jnp.float32)
    B = z.shape[0]

    shared = relu(_dot_ref(z, f32(p["shared_fc_w"]).T, round_dtype) + f32(p["shared_fc_b"]))
    shared = relu(_dot_ref(shared, f32(p["shared_fc2_w"]).T, round_dtype) + f32(p["shared_fc2_b"]))

    mel = relu(_dot_ref(shared, f32(p["mel_fc_w"]).T, round_dtype) + f32(p["mel_fc_b"]))
    mel = mel.reshape(B, 32, window_size // 4, num_mel_bins // 4)
    mel = relu(_convT2d_ref(mel, f32(p["mel_deconv1_w"]), f32(p["mel_deconv1_b"]), round_dtype))
    mel_recon = _convT2d_ref(mel, f32(p["mel_deconv2_w"]), f32(p["mel_deconv2_b"]), round_dtype)
    mel_recon = jnp.squeeze(mel_recon, axis=1)

    energy = relu(_dot_ref(shared, f32(p["energy_fc_w"]).T, round_dtype) + f32(p["energy_fc_b"]))
    energy = energy.reshape(B, 32, window_size // 4, height // 4, width // 4)
    energy = relu(_convT3d_ref(energy, f32(p["energy_deconv1_w"]),
                               f32(p["energy_deconv1_b"]), round_dtype))
    energy_recon = _convT3d_ref(energy, f32(p["energy_deconv2_w"]),
                                f32(p["energy_deconv2_b"]), round_dtype)
    energy_recon = jnp.squeeze(energy_recon, axis=1)
    return mel_recon, energy_recon


if __name__ == "__main__":
    # Shapes consistent with the module's unflatten constraints:
    #   32 * (window/4) * (mel/4)       == 512 -> window=16, mel=16
    #   32 * (window/4) * (h/4) * (w/4) == 512 -> h=8, w=8
    window_size, num_mel_bins, height, width, embedding_size = 16, 16, 8, 8, 32
    batch = 2

    key = jax.random.PRNGKey(0)
    k_params, k_z = jax.random.split(key)
    params = init_params(k_params, window_size, num_mel_bins, height, width, embedding_size)
    z = jax.random.normal(k_z, (batch, embedding_size * 2), jnp.float32)

    # One-time weight preparation (head permutation, row-folded deconvs, bf16).
    fused = prepare_fused_params(params, window_size=window_size,
                                 num_mel_bins=num_mel_bins, height=height, width=width)

    mel_recon, energy_recon = hierarchical_decoder_forward(
        z, fused, window_size=window_size, num_mel_bins=num_mel_bins,
        height=height, width=width)
    jax.block_until_ready((mel_recon, energy_recon))

    assert mel_recon.shape == (batch, window_size, num_mel_bins), mel_recon.shape
    assert energy_recon.shape == (batch, window_size, height, width), energy_recon.shape

    # Validate against the pure-JAX PyTorch-equivalent reference with the same
    # mixed precision (bf16 matmul inputs, f32 accumulation / activations).
    mel_ref, energy_ref = reference_forward(
        z, params, window_size=window_size, num_mel_bins=num_mel_bins,
        height=height, width=width, round_dtype=WEIGHT_DTYPE)
    mel_err = float(jnp.max(jnp.abs(mel_recon - mel_ref)))
    energy_err = float(jnp.max(jnp.abs(energy_recon - energy_ref)))
    assert jnp.allclose(mel_recon, mel_ref, atol=2e-2, rtol=2e-2), mel_err
    assert jnp.allclose(energy_recon, energy_ref, atol=2e-2, rtol=2e-2), energy_err

    print("KERNEL_OK")
</pallas_src>

<mosaic_0001>
module attributes {stable_mosaic.version = 11 : i64} {
  func.func @kernel(%arg0: i32, %arg1: memref<2x64xf32, #tpu.memory_space<vmem>>, %arg2: memref<64x512xbf16, #tpu.memory_space<vmem>>, %arg3: memref<1x512xf32, #tpu.memory_space<vmem>>, %arg4: memref<512x1024xbf16, #tpu.memory_space<vmem>>, %arg5: memref<1x1024xf32, #tpu.memory_space<vmem>>, %arg6: memref<1024x1024xbf16, #tpu.memory_space<vmem>>, %arg7: memref<1x1024xf32, #tpu.memory_space<vmem>>, %arg8: memref<128x256xbf16, #tpu.memory_space<vmem>>, %arg9: memref<1x256xf32, #tpu.memory_space<vmem>>, %arg10: memref<128x32xbf16, #tpu.memory_space<vmem>>, %arg11: memref<1x32xf32, #tpu.memory_space<vmem>>, %arg12: memref<128x512xbf16, #tpu.memory_space<vmem>>, %arg13: memref<1x512xf32, #tpu.memory_space<vmem>>, %arg14: memref<256x128xbf16, #tpu.memory_space<vmem>>, %arg15: memref<1x128xf32, #tpu.memory_space<vmem>>, %arg16: memref<32x16xf32, #tpu.memory_space<vmem>>, %arg17: memref<32x64xf32, #tpu.memory_space<vmem>>, %arg18: memref<8x128xf32, #tpu.memory_space<vmem>>, %arg19: memref<8x128xf32, #tpu.memory_space<vmem>>, %arg20: memref<16x128xf32, #tpu.memory_space<vmem>>, %arg21: memref<16x256xf32, #tpu.memory_space<vmem>>) attributes {dimension_semantics = [#tpu.dimension_semantics<arbitrary>], iteration_bounds = array<i64: 1>, scalar_prefetch = 0 : i64, scratch_operands = 4 : i64, tpu.core_type = #tpu.core_type<tc>, window_params = [{pipeline_mode = #tpu.pipeline_mode<synchronous>, transform_indices = @transform_0, window_bounds = array<i64: 2, 64>}, {pipeline_mode = #tpu.pipeline_mode<synchronous>, transform_indices = @transform_1, window_bounds = array<i64: 64, 512>}, {pipeline_mode = #tpu.pipeline_mode<synchronous>, transform_indices = @transform_2, window_bounds = array<i64: 1, 512>}, {pipeline_mode = #tpu.pipeline_mode<synchronous>, transform_indices = @transform_3, window_bounds = array<i64: 512, 1024>}, {pipeline_mode = #tpu.pipeline_mode<synchronous>, transform_indices = @transform_4, window_bounds = array<i64: 1, 1024>}, {pipeline_mode = #tpu.pipeline_mode<synchronous>, transform_indices = @transform_5, window_bounds = array<i64: 1024, 1024>}, {pipeline_mode = #tpu.pipeline_mode<synchronous>, transform_indices = @transform_6, window_bounds = array<i64: 1, 1024>}, {pipeline_mode = #tpu.pipeline_mode<synchronous>, transform_indices = @transform_7, window_bounds = array<i64: 128, 256>}, {pipeline_mode = #tpu.pipeline_mode<synchronous>, transform_indices = @transform_8, window_bounds = array<i64: 1, 256>}, {pipeline_mode = #tpu.pipeline_mode<synchronous>, transform_indices = @transform_9, window_bounds = array<i64: 128, 32>}, {pipeline_mode = #tpu.pipeline_mode<synchronous>, transform_indices = @transform_10, window_bounds = array<i64: 1, 32>}, {pipeline_mode = #tpu.pipeline_mode<synchronous>, transform_indices = @transform_11, window_bounds = array<i64: 128, 512>}, {pipeline_mode = #tpu.pipeline_mode<synchronous>, transform_indices = @transform_12, window_bounds = array<i64: 1, 512>}, {pipeline_mode = #tpu.pipeline_mode<synchronous>, transform_indices = @transform_13, window_bounds = array<i64: 256, 128>}, {pipeline_mode = #tpu.pipeline_mode<synchronous>, transform_indices = @transform_14, window_bounds = array<i64: 1, 128>}, {pipeline_mode = #tpu.pipeline_mode<synchronous>, transform_indices = @transform_15, window_bounds = array<i64: 32, 16>}, {pipeline_mode = #tpu.pipeline_mode<synchronous>, transform_indices = @transform_16, window_bounds = array<i64: 32, 64>}]} {
    %c0 = arith.constant 0 : index
    %c0_0 = arith.constant 0 : index
    %0 = vector.load %arg1[%c0, %c0_0] : memref<2x64xf32, #tpu.memory_space<vmem>>, vector<2x64xf32>
    %1 = arith.truncf %0 : vector<2x64xf32> to vector<2x64xbf16>
    %c0_1 = arith.constant 0 : index
    %c0_2 = arith.constant 0 : index
    %2 = vector.load %arg2[%c0_1, %c0_2] : memref<64x512xbf16, #tpu.memory_space<vmem>>, vector<64x512xbf16>
    %cst = arith.constant dense<0.000000e+00> : vector<2x512xf32>
    %3 = tpu.matmul %1, %2, %cst {dimension_numbers = #tpu.dot_dimension_numbers<[1], [0], [0], [1], [0, 0, 1, 1], [], []>} : vector<2x64xbf16>, vector<64x512xbf16>, vector<2x512xf32> -> vector<2x512xf32>
    %c0_3 = arith.constant 0 : index
    %c0_4 = arith.constant 0 : index
    %4 = vector.load %arg3[%c0_3, %c0_4] : memref<1x512xf32, #tpu.memory_space<vmem>>, vector<1x512xf32>
    %5 = vector.broadcast %4 : vector<1x512xf32> to vector<2x512xf32>
    %6 = arith.addf %3, %5 : vector<2x512xf32>
    %cst_5 = arith.constant 0.000000e+00 : f32
    %7 = vector.broadcast %cst_5 : f32 to vector<2x512xf32>
    %8 = arith.maximumf %6, %7 : vector<2x512xf32>
    %9 = arith.truncf %8 : vector<2x512xf32> to vector<2x512xbf16>
    %c0_6 = arith.constant 0 : index
    %c0_7 = arith.constant 0 : index
    %10 = vector.load %arg4[%c0_6, %c0_7] : memref<512x1024xbf16, #tpu.memory_space<vmem>>, vector<512x1024xbf16>
    %cst_8 = arith.constant dense<0.000000e+00> : vector<2x1024xf32>
    %11 = tpu.matmul %9, %10, %cst_8 {dimension_numbers = #tpu.dot_dimension_numbers<[1], [0], [0], [1], [0, 0, 1, 1], [], []>} : vector<2x512xbf16>, vector<512x1024xbf16>, vector<2x1024xf32> -> vector<2x1024xf32>
    %c0_9 = arith.constant 0 : index
    %c0_10 = arith.constant 0 : index
    %12 = vector.load %arg5[%c0_9, %c0_10] : memref<1x1024xf32, #tpu.memory_space<vmem>>, vector<1x1024xf32>
    %13 = vector.broadcast %12 : vector<1x1024xf32> to vector<2x1024xf32>
    %14 = arith.addf %11, %13 : vector<2x1024xf32>
    %cst_11 = arith.constant 0.000000e+00 : f32
    %15 = vector.broadcast %cst_11 : f32 to vector<2x1024xf32>
    %16 = arith.maximumf %14, %15 : vector<2x1024xf32>
    %17 = arith.truncf %16 : vector<2x1024xf32> to vector<2x1024xbf16>
    %c0_12 = arith.constant 0 : index
    %c0_13 = arith.constant 0 : index
    %18 = vector.load %arg6[%c0_12, %c0_13] : memref<1024x1024xbf16, #tpu.memory_space<vmem>>, vector<1024x1024xbf16>
    %cst_14 = arith.constant dense<0.000000e+00> : vector<2x1024xf32>
    %19 = tpu.matmul %17, %18, %cst_14 {dimension_numbers = #tpu.dot_dimension_numbers<[1], [0], [0], [1], [0, 0, 1, 1], [], []>} : vector<2x1024xbf16>, vector<1024x1024xbf16>, vector<2x1024xf32> -> vector<2x1024xf32>
    %c0_15 = arith.constant 0 : index
    %c0_16 = arith.constant 0 : index
    %20 = vector.load %arg7[%c0_15, %c0_16] : memref<1x1024xf32, #tpu.memory_space<vmem>>, vector<1x1024xf32>
    %21 = vector.broadcast %20 : vector<1x1024xf32> to vector<2x1024xf32>
    %22 = arith.addf %19, %21 : vector<2x1024xf32>
    %cst_17 = arith.constant 0.000000e+00 : f32
    %23 = vector.broadcast %cst_17 : f32 to vector<2x1024xf32>
    %24 = arith.maximumf %22, %23 : vector<2x1024xf32>
    %25 = vector.extract_strided_slice %24 {offsets = [0, 0], sizes = [2, 128], strides = [1, 1]} : vector<2x1024xf32> to vector<2x128xf32>
    %c0_18 = arith.constant 0 : index
    %c0_19 = arith.constant 0 : index
    %26 = vector.load %arg18[%c0_18, %c0_19] : memref<8x128xf32, #tpu.memory_space<vmem>>, vector<2x128xf32>
    tpu.vector_store %arg18[%c0_18, %c0_19], %25 {strides = array<i32>} : memref<8x128xf32, #tpu.memory_space<vmem>>, vector<2x128xf32>,
    %27 = vector.extract_strided_slice %24 {offsets = [0, 512], sizes = [2, 128], strides = [1, 1]} : vector<2x1024xf32> to vector<2x128xf32>
    %c0_20 = arith.constant 0 : index
    %c0_21 = arith.constant 0 : index
    %28 = vector.load %arg19[%c0_20, %c0_21] : memref<8x128xf32, #tpu.memory_space<vmem>>, vector<2x128xf32>
    tpu.vector_store %arg19[%c0_20, %c0_21], %27 {strides = array<i32>} : memref<8x128xf32, #tpu.memory_space<vmem>>, vector<2x128xf32>,
    %29 = vector.extract_strided_slice %24 {offsets = [0, 128], sizes = [2, 128], strides = [1, 1]} : vector<2x1024xf32> to vector<2x128xf32>
    %c2 = arith.constant 2 : index
    %c0_22 = arith.constant 0 : index
    %30 = vector.load %arg18[%c2, %c0_22] : memref<8x128xf32, #tpu.memory_space<vmem>>, vector<2x128xf32>
    tpu.vector_store %arg18[%c2, %c0_22], %29 {strides = array<i32>} : memref<8x128xf32, #tpu.memory_space<vmem>>, vector<2x128xf32>,
    %31 = vector.extract_strided_slice %24 {offsets = [0, 640], sizes = [2, 128], strides = [1, 1]} : vector<2x1024xf32> to vector<2x128xf32>
    %c2_23 = arith.constant 2 : index
    %c0_24 = arith.constant 0 : index
    %32 = vector.load %arg19[%c2_23, %c0_24] : memref<8x128xf32, #tpu.memory_space<vmem>>, vector<2x128xf32>
    tpu.vector_store %arg19[%c2_23, %c0_24], %31 {strides = array<i32>} : memref<8x128xf32, #tpu.memory_space<vmem>>, vector<2x128xf32>,
    %33 = vector.extract_strided_slice %24 {offsets = [0, 256], sizes = [2, 128], strides = [1, 1]} : vector<2x1024xf32> to vector<2x128xf32>
    %c4 = arith.constant 4 : index
    %c0_25 = arith.constant 0 : index
    %34 = vector.load %arg18[%c4, %c0_25] : memref<8x128xf32, #tpu.memory_space<vmem>>, vector<2x128xf32>
    tpu.vector_store %arg18[%c4, %c0_25], %33 {strides = array<i32>} : memref<8x128xf32, #tpu.memory_space<vmem>>, vector<2x128xf32>,
    %35 = vector.extract_strided_slice %24 {offsets = [0, 768], sizes = [2, 128], strides = [1, 1]} : vector<2x1024xf32> to vector<2x128xf32>
    %c4_26 = arith.constant 4 : index
    %c0_27 = arith.constant 0 : index
    %36 = vector.load %arg19[%c4_26, %c0_27] : memref<8x128xf32, #tpu.memory_space<vmem>>, vector<2x128xf32>
    tpu.vector_store %arg19[%c4_26, %c0_27], %35 {strides = array<i32>} : memref<8x128xf32, #tpu.memory_space<vmem>>, vector<2x128xf32>,
    %37 = vector.extract_strided_slice %24 {offsets = [0, 384], sizes = [2, 128], strides = [1, 1]} : vector<2x1024xf32> to vector<2x128xf32>
    %c6 = arith.constant 6 : index
    %c0_28 = arith.constant 0 : index
    %38 = vector.load %arg18[%c6, %c0_28] : memref<8x128xf32, #tpu.memory_space<vmem>>, vector<2x128xf32>
    tpu.vector_store %arg18[%c6, %c0_28], %37 {strides = array<i32>} : memref<8x128xf32, #tpu.memory_space<vmem>>, vector<2x128xf32>,
    %39 = vector.extract_strided_slice %24 {offsets = [0, 896], sizes = [2, 128], strides = [1, 1]} : vector<2x1024xf32> to vector<2x128xf32>
    %c6_29 = arith.constant 6 : index
    %c0_30 = arith.constant 0 : index
    %40 = vector.load %arg19[%c6_29, %c0_30] : memref<8x128xf32, #tpu.memory_space<vmem>>, vector<2x128xf32>
    tpu.vector_store %arg19[%c6_29, %c0_30], %39 {strides = array<i32>} : memref<8x128xf32, #tpu.memory_space<vmem>>, vector<2x128xf32>,
    %c0_31 = arith.constant 0 : index
    %c0_32 = arith.constant 0 : index
    %41 = vector.load %arg18[%c0_31, %c0_32] : memref<8x128xf32, #tpu.memory_space<vmem>>, vector<8x128xf32>
    %42 = arith.truncf %41 : vector<8x128xf32> to vector<8x128xbf16>
    %c0_33 = arith.constant 0 : index
    %c0_34 = arith.constant 0 : index
    %43 = vector.load %arg8[%c0_33, %c0_34] : memref<128x256xbf16, #tpu.memory_space<vmem>>, vector<128x256xbf16>
    %cst_35 = arith.constant dense<0.000000e+00> : vector<8x256xf32>
    %44 = tpu.matmul %42, %43, %cst_35 {dimension_numbers = #tpu.dot_dimension_numbers<[1], [0], [0], [1], [0, 0, 1, 1], [], []>} : vector<8x128xbf16>, vector<128x256xbf16>, vector<8x256xf32> -> vector<8x256xf32>
    %c0_36 = arith.constant 0 : index
    %c0_37 = arith.constant 0 : index
    %45 = vector.load %arg9[%c0_36, %c0_37] : memref<1x256xf32, #tpu.memory_space<vmem>>, vector<1x256xf32>
    %46 = vector.broadcast %45 : vector<1x256xf32> to vector<8x256xf32>
    %47 = arith.addf %44, %46 : vector<8x256xf32>
    %cst_38 = arith.constant 0.000000e+00 : f32
    %48 = vector.broadcast %cst_38 : f32 to vector<8x256xf32>
    %49 = arith.maximumf %47, %48 : vector<8x256xf32>
    %c0_39 = arith.constant 0 : index
    %c0_40 = arith.constant 0 : index
    %50 = vector.load %arg19[%c0_39, %c0_40] : memref<8x128xf32, #tpu.memory_space<vmem>>, vector<8x128xf32>
    %51 = arith.truncf %50 : vector<8x128xf32> to vector<8x128xbf16>
    %c0_41 = arith.constant 0 : index
    %c0_42 = arith.constant 0 : index
    %52 = vector.load %arg12[%c0_41, %c0_42] : memref<128x512xbf16, #tpu.memory_space<vmem>>, vector<128x512xbf16>
    %cst_43 = arith.constant dense<0.000000e+00> : vector<8x512xf32>
    %53 = tpu.matmul %51, %52, %cst_43 {dimension_numbers = #tpu.dot_dimension_numbers<[1], [0], [0], [1], [0, 0, 1, 1], [], []>} : vector<8x128xbf16>, vector<128x512xbf16>, vector<8x512xf32> -> vector<8x512xf32>
    %c0_44 = arith.constant 0 : index
    %c0_45 = arith.constant 0 : index
    %54 = vector.load %arg13[%c0_44, %c0_45] : memref<1x512xf32, #tpu.memory_space<vmem>>, vector<1x512xf32>
    %55 = vector.broadcast %54 : vector<1x512xf32> to vector<8x512xf32>
    %56 = arith.addf %53, %55 : vector<8x512xf32>
    %cst_46 = arith.constant 0.000000e+00 : f32
    %57 = vector.broadcast %cst_46 : f32 to vector<8x512xf32>
    %58 = arith.maximumf %56, %57 : vector<8x512xf32>
    %59 = vector.extract_strided_slice %49 {offsets = [0, 0], sizes = [8, 128], strides = [1, 1]} : vector<8x256xf32> to vector<8x128xf32>
    %c0_47 = arith.constant 0 : index
    %c0_48 = arith.constant 0 : index
    %60 = vector.load %arg20[%c0_47, %c0_48] : memref<16x128xf32, #tpu.memory_space<vmem>>, vector<8x128xf32>
    tpu.vector_store %arg20[%c0_47, %c0_48], %59 {strides = array<i32>} : memref<16x128xf32, #tpu.memory_space<vmem>>, vector<8x128xf32>,
    %61 = vector.extract_strided_slice %58 {offsets = [0, 0], sizes = [8, 256], strides = [1, 1]} : vector<8x512xf32> to vector<8x256xf32>
    %c0_49 = arith.constant 0 : index
    %c0_50 = arith.constant 0 : index
    %62 = vector.load %arg21[%c0_49, %c0_50] : memref<16x256xf32, #tpu.memory_space<vmem>>, vector<8x256xf32>
    tpu.vector_store %arg21[%c0_49, %c0_50], %61 {strides = array<i32>} : memref<16x256xf32, #tpu.memory_space<vmem>>, vector<8x256xf32>,
    %63 = vector.extract_strided_slice %49 {offsets = [0, 128], sizes = [8, 128], strides = [1, 1]} : vector<8x256xf32> to vector<8x128xf32>
    %c8 = arith.constant 8 : index
    %c0_51 = arith.constant 0 : index
    %64 = vector.load %arg20[%c8, %c0_51] : memref<16x128xf32, #tpu.memory_space<vmem>>, vector<8x128xf32>
    tpu.vector_store %arg20[%c8, %c0_51], %63 {strides = array<i32>} : memref<16x128xf32, #tpu.memory_space<vmem>>, vector<8x128xf32>,
    %65 = vector.extract_strided_slice %58 {offsets = [0, 256], sizes = [8, 256], strides = [1, 1]} : vector<8x512xf32> to vector<8x256xf32>
    %c8_52 = arith.constant 8 : index
    %c0_53 = arith.constant 0 : index
    %66 = vector.load %arg21[%c8_52, %c0_53] : memref<16x256xf32, #tpu.memory_space<vmem>>, vector<8x256xf32>
    tpu.vector_store %arg21[%c8_52, %c0_53], %65 {strides = array<i32>} : memref<16x256xf32, #tpu.memory_space<vmem>>, vector<8x256xf32>,
    %c0_54 = arith.constant 0 : index
    %c0_55 = arith.constant 0 : index
    %67 = vector.load %arg20[%c0_54, %c0_55] : memref<16x128xf32, #tpu.memory_space<vmem>>, vector<16x128xf32>
    %68 = arith.truncf %67 : vector<16x128xf32> to vector<16x128xbf16>
    %c0_56 = arith.constant 0 : index
    %c0_57 = arith.constant 0 : index
    %69 = vector.load %arg10[%c0_56, %c0_57] : memref<128x32xbf16, #tpu.memory_space<vmem>>, vector<128x32xbf16>
    %cst_58 = arith.constant dense<0.000000e+00> : vector<16x32xf32>
    %70 = tpu.matmul %68, %69, %cst_58 {dimension_numbers = #tpu.dot_dimension_numbers<[1], [0], [0], [1], [0, 0, 1, 1], [], []>} : vector<16x128xbf16>, vector<128x32xbf16>, vector<16x32xf32> -> vector<16x32xf32>
    %c0_59 = arith.constant 0 : index
    %c0_60 = arith.constant 0 : index
    %71 = vector.load %arg11[%c0_59, %c0_60] : memref<1x32xf32, #tpu.memory_space<vmem>>, vector<1x32xf32>
    %72 = vector.broadcast %71 : vector<1x32xf32> to vector<16x32xf32>
    %73 = arith.addf %70, %72 : vector<16x32xf32>
    %c0_61 = arith.constant 0 : index
    %c0_62 = arith.constant 0 : index
    %74 = vector.load %arg21[%c0_61, %c0_62] : memref<16x256xf32, #tpu.memory_space<vmem>>, vector<16x256xf32>
    %75 = arith.truncf %74 : vector<16x256xf32> to vector<16x256xbf16>
    %c0_63 = arith.constant 0 : index
    %c0_64 = arith.constant 0 : index
    %76 = vector.load %arg14[%c0_63, %c0_64] : memref<256x128xbf16, #tpu.memory_space<vmem>>, vector<256x128xbf16>
    %cst_65 = arith.constant dense<0.000000e+00> : vector<16x128xf32>
    %77 = tpu.matmul %75, %76, %cst_65 {dimension_numbers = #tpu.dot_dimension_numbers<[1], [0], [0], [1], [0, 0, 1, 1], [], []>} : vector<16x256xbf16>, vector<256x128xbf16>, vector<16x128xf32> -> vector<16x128xf32>
    %c0_66 = arith.constant 0 : index
    %c0_67 = arith.constant 0 : index
    %78 = vector.load %arg15[%c0_66, %c0_67] : memref<1x128xf32, #tpu.memory_space<vmem>>, vector<1x128xf32>
    %79 = vector.broadcast %78 : vector<1x128xf32> to vector<16x128xf32>
    %80 = arith.addf %77, %79 : vector<16x128xf32>
    %81 = vector.extract_strided_slice %73 {offsets = [0, 0], sizes = [1, 16], strides = [1, 1]} : vector<16x32xf32> to vector<1x16xf32>
    %c0_68 = arith.constant 0 : index
    %c0_69 = arith.constant 0 : index
    %82 = vector.load %arg16[%c0_68, %c0_69] : memref<32x16xf32, #tpu.memory_space<vmem>>, vector<1x16xf32>
    tpu.vector_store %arg16[%c0_68, %c0_69], %81 {strides = array<i32>} : memref<32x16xf32, #tpu.memory_space<vmem>>, vector<1x16xf32>,
    %83 = vector.extract_strided_slice %80 {offsets = [0, 0], sizes = [1, 64], strides = [1, 1]} : vector<16x128xf32> to vector<1x64xf32>
    %c0_70 = arith.constant 0 : index
    %c0_71 = arith.constant 0 : index
    %84 = vector.load %arg17[%c0_70, %c0_71] : memref<32x64xf32, #tpu.memory_space<vmem>>, vector<1x64xf32>
    tpu.vector_store %arg17[%c0_70, %c0_71], %83 {strides = array<i32>} : memref<32x64xf32, #tpu.memory_space<vmem>>, vector<1x64xf32>,
    %85 = vector.extract_strided_slice %73 {offsets = [0, 16], sizes = [1, 16], strides = [1, 1]} : vector<16x32xf32> to vector<1x16xf32>
    %c1 = arith.constant 1 : index
    %c0_72 = arith.constant 0 : index
    %86 = vector.load %arg16[%c1, %c0_72] : memref<32x16xf32, #tpu.memory_space<vmem>>, vector<1x16xf32>
    tpu.vector_store %arg16[%c1, %c0_72], %85 {strides = array<i32>} : memref<32x16xf32, #tpu.memory_space<vmem>>, vector<1x16xf32>,
    %87 = vector.extract_strided_slice %80 {offsets = [0, 64], sizes = [1, 64], strides = [1, 1]} : vector<16x128xf32> to vector<1x64xf32>
    %c1_73 = arith.constant 1 : index
    %c0_74 = arith.constant 0 : index
    %88 = vector.load %arg17[%c1_73, %c0_74] : memref<32x64xf32, #tpu.memory_space<vmem>>, vector<1x64xf32>
    tpu.vector_store %arg17[%c1_73, %c0_74], %87 {strides = array<i32>} : memref<32x64xf32, #tpu.memory_space<vmem>>, vector<1x64xf32>,
    %89 = vector.extract_strided_slice %73 {offsets = [1, 0], sizes = [1, 16], strides = [1, 1]} : vector<16x32xf32> to vector<1x16xf32>
    %c16 = arith.constant 16 : index
    %c0_75 = arith.constant 0 : index
    %90 = vector.load %arg16[%c16, %c0_75] : memref<32x16xf32, #tpu.memory_space<vmem>>, vector<1x16xf32>
    tpu.vector_store %arg16[%c16, %c0_75], %89 {strides = array<i32>} : memref<32x16xf32, #tpu.memory_space<vmem>>, vector<1x16xf32>,
    %91 = vector.extract_strided_slice %80 {offsets = [1, 0], sizes = [1, 64], strides = [1, 1]} : vector<16x128xf32> to vector<1x64xf32>
    %c16_76 = arith.constant 16 : index
    %c0_77 = arith.constant 0 : index
    %92 = vector.load %arg17[%c16_76, %c0_77] : memref<32x64xf32, #tpu.memory_space<vmem>>, vector<1x64xf32>
    tpu.vector_store %arg17[%c16_76, %c0_77], %91 {strides = array<i32>} : memref<32x64xf32, #tpu.memory_space<vmem>>, vector<1x64xf32>,
    %93 = vector.extract_strided_slice %73 {offsets = [1, 16], sizes = [1, 16], strides = [1, 1]} : vector<16x32xf32> to vector<1x16xf32>
    %c17 = arith.constant 17 : index
    %c0_78 = arith.constant 0 : index
    %94 = vector.load %arg16[%c17, %c0_78] : memref<32x16xf32, #tpu.memory_space<vmem>>, vector<1x16xf32>
    tpu.vector_store %arg16[%c17, %c0_78], %93 {strides = array<i32>} : memref<32x16xf32, #tpu.memory_space<vmem>>, vector<1x16xf32>,
    %95 = vector.extract_strided_slice %80 {offsets = [1, 64], sizes = [1, 64], strides = [1, 1]} : vector<16x128xf32> to vector<1x64xf32>
    %c17_79 = arith.constant 17 : index
    %c0_80 = arith.constant 0 : index
    %96 = vector.load %arg17[%c17_79, %c0_80] : memref<32x64xf32, #tpu.memory_space<vmem>>, vector<1x64xf32>
    tpu.vector_store %arg17[%c17_79, %c0_80], %95 {strides = array<i32>} : memref<32x64xf32, #tpu.memory_space<vmem>>, vector<1x64xf32>,
    %97 = vector.extract_strided_slice %73 {offsets = [2, 0], sizes = [1, 16], strides = [1, 1]} : vector<16x32xf32> to vector<1x16xf32>
    %c4_81 = arith.constant 4 : index
    %c0_82 = arith.constant 0 : index
    %98 = vector.load %arg16[%c4_81, %c0_82] : memref<32x16xf32, #tpu.memory_space<vmem>>, vector<1x16xf32>
    tpu.vector_store %arg16[%c4_81, %c0_82], %97 {strides = array<i32>} : memref<32x16xf32, #tpu.memory_space<vmem>>, vector<1x16xf32>,
    %99 = vector.extract_strided_slice %80 {offsets = [2, 0], sizes = [1, 64], strides = [1, 1]} : vector<16x128xf32> to vector<1x64xf32>
    %c4_83 = arith.constant 4 : index
    %c0_84 = arith.constant 0 : index
    %100 = vector.load %arg17[%c4_83, %c0_84] : memref<32x64xf32, #tpu.memory_space<vmem>>, vector<1x64xf32>
    tpu.vector_store %arg17[%c4_83, %c0_84], %99 {strides = array<i32>} : memref<32x64xf32, #tpu.memory_space<vmem>>, vector<1x64xf32>,
    %101 = vector.extract_strided_slice %73 {offsets = [2, 16], sizes = [1, 16], strides = [1, 1]} : vector<16x32xf32> to vector<1x16xf32>
    %c5 = arith.constant 5 : index
    %c0_85 = arith.constant 0 : index
    %102 = vector.load %arg16[%c5, %c0_85] : memref<32x16xf32, #tpu.memory_space<vmem>>, vector<1x16xf32>
    tpu.vector_store %arg16[%c5, %c0_85], %101 {strides = array<i32>} : memref<32x16xf32, #tpu.memory_space<vmem>>, vector<1x16xf32>,
    %103 = vector.extract_strided_slice %80 {offsets = [2, 64], sizes = [1, 64], strides = [1, 1]} : vector<16x128xf32> to vector<1x64xf32>
    %c5_86 = arith.constant 5 : index
    %c0_87 = arith.constant 0 : index
    %104 = vector.load %arg17[%c5_86, %c0_87] : memref<32x64xf32, #tpu.memory_space<vmem>>, vector<1x64xf32>
    tpu.vector_store %arg17[%c5_86, %c0_87], %103 {strides = array<i32>} : memref<32x64xf32, #tpu.memory_space<vmem>>, vector<1x64xf32>,
    %105 = vector.extract_strided_slice %73 {offsets = [3, 0], sizes = [1, 16], strides = [1, 1]} : vector<16x32xf32> to vector<1x16xf32>
    %c20 = arith.constant 20 : index
    %c0_88 = arith.constant 0 : index
    %106 = vector.load %arg16[%c20, %c0_88] : memref<32x16xf32, #tpu.memory_space<vmem>>, vector<1x16xf32>
    tpu.vector_store %arg16[%c20, %c0_88], %105 {strides = array<i32>} : memref<32x16xf32, #tpu.memory_space<vmem>>, vector<1x16xf32>,
    %107 = vector.extract_strided_slice %80 {offsets = [3, 0], sizes = [1, 64], strides = [1, 1]} : vector<16x128xf32> to vector<1x64xf32>
    %c20_89 = arith.constant 20 : index
    %c0_90 = arith.constant 0 : index
    %108 = vector.load %arg17[%c20_89, %c0_90] : memref<32x64xf32, #tpu.memory_space<vmem>>, vector<1x64xf32>
    tpu.vector_store %arg17[%c20_89, %c0_90], %107 {strides = array<i32>} : memref<32x64xf32, #tpu.memory_space<vmem>>, vector<1x64xf32>,
    %109 = vector.extract_strided_slice %73 {offsets = [3, 16], sizes = [1, 16], strides = [1, 1]} : vector<16x32xf32> to vector<1x16xf32>
    %c21 = arith.constant 21 : index
    %c0_91 = arith.constant 0 : index
    %110 = vector.load %arg16[%c21, %c0_91] : memref<32x16xf32, #tpu.memory_space<vmem>>, vector<1x16xf32>
    tpu.vector_store %arg16[%c21, %c0_91], %109 {strides = array<i32>} : memref<32x16xf32, #tpu.memory_space<vmem>>, vector<1x16xf32>,
    %111 = vector.extract_strided_slice %80 {offsets = [3, 64], sizes = [1, 64], strides = [1, 1]} : vector<16x128xf32> to vector<1x64xf32>
    %c21_92 = arith.constant 21 : index
    %c0_93 = arith.constant 0 : index
    %112 = vector.load %arg17[%c21_92, %c0_93] : memref<32x64xf32, #tpu.memory_space<vmem>>, vector<1x64xf32>
    tpu.vector_store %arg17[%c21_92, %c0_93], %111 {strides = array<i32>} : memref<32x64xf32, #tpu.memory_space<vmem>>, vector<1x64xf32>,
    %113 = vector.extract_strided_slice %73 {offsets = [4, 0], sizes = [1, 16], strides = [1, 1]} : vector<16x32xf32> to vector<1x16xf32>
    %c8_94 = arith.constant 8 : index
    %c0_95 = arith.constant 0 : index
    %114 = vector.load %arg16[%c8_94, %c0_95] : memref<32x16xf32, #tpu.memory_space<vmem>>, vector<1x16xf32>
    tpu.vector_store %arg16[%c8_94, %c0_95], %113 {strides = array<i32>} : memref<32x16xf32, #tpu.memory_space<vmem>>, vector<1x16xf32>,
    %115 = vector.extract_strided_slice %80 {offsets = [4, 0], sizes = [1, 64], strides = [1, 1]} : vector<16x128xf32> to vector<1x64xf32>
    %c8_96 = arith.constant 8 : index
    %c0_97 = arith.constant 0 : index
    %116 = vector.load %arg17[%c8_96, %c0_97] : memref<32x64xf32, #tpu.memory_space<vmem>>, vector<1x64xf32>
    tpu.vector_store %arg17[%c8_96, %c0_97], %115 {strides = array<i32>} : memref<32x64xf32, #tpu.memory_space<vmem>>, vector<1x64xf32>,
    %117 = vector.extract_strided_slice %73 {offsets = [4, 16], sizes = [1, 16], strides = [1, 1]} : vector<16x32xf32> to vector<1x16xf32>
    %c9 = arith.constant 9 : index
    %c0_98 = arith.constant 0 : index
    %118 = vector.load %arg16[%c9, %c0_98] : memref<32x16xf32, #tpu.memory_space<vmem>>, vector<1x16xf32>
    tpu.vector_store %arg16[%c9, %c0_98], %117 {strides = array<i32>} : memref<32x16xf32, #tpu.memory_space<vmem>>, vector<1x16xf32>,
    %119 = vector.extract_strided_slice %80 {offsets = [4, 64], sizes = [1, 64], strides = [1, 1]} : vector<16x128xf32> to vector<1x64xf32>
    %c9_99 = arith.constant 9 : index
    %c0_100 = arith.constant 0 : index
    %120 = vector.load %arg17[%c9_99, %c0_100] : memref<32x64xf32, #tpu.memory_space<vmem>>, vector<1x64xf32>
    tpu.vector_store %arg17[%c9_99, %c0_100], %119 {strides = array<i32>} : memref<32x64xf32, #tpu.memory_space<vmem>>, vector<1x64xf32>,
    %121 = vector.extract_strided_slice %73 {offsets = [5, 0], sizes = [1, 16], strides = [1, 1]} : vector<16x32xf32> to vector<1x16xf32>
    %c24 = arith.constant 24 : index
    %c0_101 = arith.constant 0 : index
    %122 = vector.load %arg16[%c24, %c0_101] : memref<32x16xf32, #tpu.memory_space<vmem>>, vector<1x16xf32>
    tpu.vector_store %arg16[%c24, %c0_101], %121 {strides = array<i32>} : memref<32x16xf32, #tpu.memory_space<vmem>>, vector<1x16xf32>,
    %123 = vector.extract_strided_slice %80 {offsets = [5, 0], sizes = [1, 64], strides = [1, 1]} : vector<16x128xf32> to vector<1x64xf32>
    %c24_102 = arith.constant 24 : index
    %c0_103 = arith.constant 0 : index
    %124 = vector.load %arg17[%c24_102, %c0_103] : memref<32x64xf32, #tpu.memory_space<vmem>>, vector<1x64xf32>
    tpu.vector_store %arg17[%c24_102, %c0_103], %123 {strides = array<i32>} : memref<32x64xf32, #tpu.memory_space<vmem>>, vector<1x64xf32>,
    %125 = vector.extract_strided_slice %73 {offsets = [5, 16], sizes = [1, 16], strides = [1, 1]} : vector<16x32xf32> to vector<1x16xf32>
    %c25 = arith.constant 25 : index
    %c0_104 = arith.constant 0 : index
    %126 = vector.load %arg16[%c25, %c0_104] : memref<32x16xf32, #tpu.memory_space<vmem>>, vector<1x16xf32>
    tpu.vector_store %arg16[%c25, %c0_104], %125 {strides = array<i32>} : memref<32x16xf32, #tpu.memory_space<vmem>>, vector<1x16xf32>,
    %127 = vector.extract_strided_slice %80 {offsets = [5, 64], sizes = [1, 64], strides = [1, 1]} : vector<16x128xf32> to vector<1x64xf32>
    %c25_105 = arith.constant 25 : index
    %c0_106 = arith.constant 0 : index
    %128 = vector.load %arg17[%c25_105, %c0_106] : memref<32x64xf32, #tpu.memory_space<vmem>>, vector<1x64xf32>
    tpu.vector_store %arg17[%c25_105, %c0_106], %127 {strides = array<i32>} : memref<32x64xf32, #tpu.memory_space<vmem>>, vector<1x64xf32>,
    %129 = vector.extract_strided_slice %73 {offsets = [6, 0], sizes = [1, 16], strides = [1, 1]} : vector<16x32xf32> to vector<1x16xf32>
    %c12 = arith.constant 12 : index
    %c0_107 = arith.constant 0 : index
    %130 = vector.load %arg16[%c12, %c0_107] : memref<32x16xf32, #tpu.memory_space<vmem>>, vector<1x16xf32>
    tpu.vector_store %arg16[%c12, %c0_107], %129 {strides = array<i32>} : memref<32x16xf32, #tpu.memory_space<vmem>>, vector<1x16xf32>,
    %131 = vector.extract_strided_slice %80 {offsets = [6, 0], sizes = [1, 64], strides = [1, 1]} : vector<16x128xf32> to vector<1x64xf32>
    %c12_108 = arith.constant 12 : index
    %c0_109 = arith.constant 0 : index
    %132 = vector.load %arg17[%c12_108, %c0_109] : memref<32x64xf32, #tpu.memory_space<vmem>>, vector<1x64xf32>
    tpu.vector_store %arg17[%c12_108, %c0_109], %131 {strides = array<i32>} : memref<32x64xf32, #tpu.memory_space<vmem>>, vector<1x64xf32>,
    %133 = vector.extract_strided_slice %73 {offsets = [6, 16], sizes = [1, 16], strides = [1, 1]} : vector<16x32xf32> to vector<1x16xf32>
    %c13 = arith.constant 13 : index
    %c0_110 = arith.constant 0 : index
    %134 = vector.load %arg16[%c13, %c0_110] : memref<32x16xf32, #tpu.memory_space<vmem>>, vector<1x16xf32>
    tpu.vector_store %arg16[%c13, %c0_110], %133 {strides = array<i32>} : memref<32x16xf32, #tpu.memory_space<vmem>>, vector<1x16xf32>,
    %135 = vector.extract_strided_slice %80 {offsets = [6, 64], sizes = [1, 64], strides = [1, 1]} : vector<16x128xf32> to vector<1x64xf32>
    %c13_111 = arith.constant 13 : index
    %c0_112 = arith.constant 0 : index
    %136 = vector.load %arg17[%c13_111, %c0_112] : memref<32x64xf32, #tpu.memory_space<vmem>>, vector<1x64xf32>
    tpu.vector_store %arg17[%c13_111, %c0_112], %135 {strides = array<i32>} : memref<32x64xf32, #tpu.memory_space<vmem>>, vector<1x64xf32>,
    %137 = vector.extract_strided_slice %73 {offsets = [7, 0], sizes = [1, 16], strides = [1, 1]} : vector<16x32xf32> to vector<1x16xf32>
    %c28 = arith.constant 28 : index
    %c0_113 = arith.constant 0 : index
    %138 = vector.load %arg16[%c28, %c0_113] : memref<32x16xf32, #tpu.memory_space<vmem>>, vector<1x16xf32>
    tpu.vector_store %arg16[%c28, %c0_113], %137 {strides = array<i32>} : memref<32x16xf32, #tpu.memory_space<vmem>>, vector<1x16xf32>,
    %139 = vector.extract_strided_slice %80 {offsets = [7, 0], sizes = [1, 64], strides = [1, 1]} : vector<16x128xf32> to vector<1x64xf32>
    %c28_114 = arith.constant 28 : index
    %c0_115 = arith.constant 0 : index
    %140 = vector.load %arg17[%c28_114, %c0_115] : memref<32x64xf32, #tpu.memory_space<vmem>>, vector<1x64xf32>
    tpu.vector_store %arg17[%c28_114, %c0_115], %139 {strides = array<i32>} : memref<32x64xf32, #tpu.memory_space<vmem>>, vector<1x64xf32>,
    %141 = vector.extract_strided_slice %73 {offsets = [7, 16], sizes = [1, 16], strides = [1, 1]} : vector<16x32xf32> to vector<1x16xf32>
    %c29 = arith.constant 29 : index
    %c0_116 = arith.constant 0 : index
    %142 = vector.load %arg16[%c29, %c0_116] : memref<32x16xf32, #tpu.memory_space<vmem>>, vector<1x16xf32>
    tpu.vector_store %arg16[%c29, %c0_116], %141 {strides = array<i32>} : memref<32x16xf32, #tpu.memory_space<vmem>>, vector<1x16xf32>,
    %143 = vector.extract_strided_slice %80 {offsets = [7, 64], sizes = [1, 64], strides = [1, 1]} : vector<16x128xf32> to vector<1x64xf32>
    %c29_117 = arith.constant 29 : index
    %c0_118 = arith.constant 0 : index
    %144 = vector.load %arg17[%c29_117, %c0_118] : memref<32x64xf32, #tpu.memory_space<vmem>>, vector<1x64xf32>
    tpu.vector_store %arg17[%c29_117, %c0_118], %143 {strides = array<i32>} : memref<32x64xf32, #tpu.memory_space<vmem>>, vector<1x64xf32>,
    %145 = vector.extract_strided_slice %73 {offsets = [8, 0], sizes = [1, 16], strides = [1, 1]} : vector<16x32xf32> to vector<1x16xf32>
    %c2_119 = arith.constant 2 : index
    %c0_120 = arith.constant 0 : index
    %146 = vector.load %arg16[%c2_119, %c0_120] : memref<32x16xf32, #tpu.memory_space<vmem>>, vector<1x16xf32>
    tpu.vector_store %arg16[%c2_119, %c0_120], %145 {strides = array<i32>} : memref<32x16xf32, #tpu.memory_space<vmem>>, vector<1x16xf32>,
    %147 = vector.extract_strided_slice %80 {offsets = [8, 0], sizes = [1, 64], strides = [1, 1]} : vector<16x128xf32> to vector<1x64xf32>
    %c2_121 = arith.constant 2 : index
    %c0_122 = arith.constant 0 : index
    %148 = vector.load %arg17[%c2_121, %c0_122] : memref<32x64xf32, #tpu.memory_space<vmem>>, vector<1x64xf32>
    tpu.vector_store %arg17[%c2_121, %c0_122], %147 {strides = array<i32>} : memref<32x64xf32, #tpu.memory_space<vmem>>, vector<1x64xf32>,
    %149 = vector.extract_strided_slice %73 {offsets = [8, 16], sizes = [1, 16], strides = [1, 1]} : vector<16x32xf32> to vector<1x16xf32>
    %c3 = arith.constant 3 : index
    %c0_123 = arith.constant 0 : index
    %150 = vector.load %arg16[%c3, %c0_123] : memref<32x16xf32, #tpu.memory_space<vmem>>, vector<1x16xf32>
    tpu.vector_store %arg16[%c3, %c0_123], %149 {strides = array<i32>} : memref<32x16xf32, #tpu.memory_space<vmem>>, vector<1x16xf32>,
    %151 = vector.extract_strided_slice %80 {offsets = [8, 64], sizes = [1, 64], strides = [1, 1]} : vector<16x128xf32> to vector<1x64xf32>
    %c3_124 = arith.constant 3 : index
    %c0_125 = arith.constant 0 : index
    %152 = vector.load %arg17[%c3_124, %c0_125] : memref<32x64xf32, #tpu.memory_space<vmem>>, vector<1x64xf32>
    tpu.vector_store %arg17[%c3_124, %c0_125], %151 {strides = array<i32>} : memref<32x64xf32, #tpu.memory_space<vmem>>, vector<1x64xf32>,
    %153 = vector.extract_strided_slice %73 {offsets = [9, 0], sizes = [1, 16], strides = [1, 1]} : vector<16x32xf32> to vector<1x16xf32>
    %c18 = arith.constant 18 : index
    %c0_126 = arith.constant 0 : index
    %154 = vector.load %arg16[%c18, %c0_126] : memref<32x16xf32, #tpu.memory_space<vmem>>, vector<1x16xf32>
    tpu.vector_store %arg16[%c18, %c0_126], %153 {strides = array<i32>} : memref<32x16xf32, #tpu.memory_space<vmem>>, vector<1x16xf32>,
    %155 = vector.extract_strided_slice %80 {offsets = [9, 0], sizes = [1, 64], strides = [1, 1]} : vector<16x128xf32> to vector<1x64xf32>
    %c18_127 = arith.constant 18 : index
    %c0_128 = arith.constant 0 : index
    %156 = vector.load %arg17[%c18_127, %c0_128] : memref<32x64xf32, #tpu.memory_space<vmem>>, vector<1x64xf32>
    tpu.vector_store %arg17[%c18_127, %c0_128], %155 {strides = array<i32>} : memref<32x64xf32, #tpu.memory_space<vmem>>, vector<1x64xf32>,
    %157 = vector.extract_strided_slice %73 {offsets = [9, 16], sizes = [1, 16], strides = [1, 1]} : vector<16x32xf32> to vector<1x16xf32>
    %c19 = arith.constant 19 : index
    %c0_129 = arith.constant 0 : index
    %158 = vector.load %arg16[%c19, %c0_129] : memref<32x16xf32, #tpu.memory_space<vmem>>, vector<1x16xf32>
    tpu.vector_store %arg16[%c19, %c0_129], %157 {strides = array<i32>} : memref<32x16xf32, #tpu.memory_space<vmem>>, vector<1x16xf32>,
    %159 = vector.extract_strided_slice %80 {offsets = [9, 64], sizes = [1, 64], strides = [1, 1]} : vector<16x128xf32> to vector<1x64xf32>
    %c19_130 = arith.constant 19 : index
    %c0_131 = arith.constant 0 : index
    %160 = vector.load %arg17[%c19_130, %c0_131] : memref<32x64xf32, #tpu.memory_space<vmem>>, vector<1x64xf32>
    tpu.vector_store %arg17[%c19_130, %c0_131], %159 {strides = array<i32>} : memref<32x64xf32, #tpu.memory_space<vmem>>, vector<1x64xf32>,
    %161 = vector.extract_strided_slice %73 {offsets = [10, 0], sizes = [1, 16], strides = [1, 1]} : vector<16x32xf32> to vector<1x16xf32>
    %c6_132 = arith.constant 6 : index
    %c0_133 = arith.constant 0 : index
    %162 = vector.load %arg16[%c6_132, %c0_133] : memref<32x16xf32, #tpu.memory_space<vmem>>, vector<1x16xf32>
    tpu.vector_store %arg16[%c6_132, %c0_133], %161 {strides = array<i32>} : memref<32x16xf32, #tpu.memory_space<vmem>>, vector<1x16xf32>,
    %163 = vector.extract_strided_slice %80 {offsets = [10, 0], sizes = [1, 64], strides = [1, 1]} : vector<16x128xf32> to vector<1x64xf32>
    %c6_134 = arith.constant 6 : index
    %c0_135 = arith.constant 0 : index
    %164 = vector.load %arg17[%c6_134, %c0_135] : memref<32x64xf32, #tpu.memory_space<vmem>>, vector<1x64xf32>
    tpu.vector_store %arg17[%c6_134, %c0_135], %163 {strides = array<i32>} : memref<32x64xf32, #tpu.memory_space<vmem>>, vector<1x64xf32>,
    %165 = vector.extract_strided_slice %73 {offsets = [10, 16], sizes = [1, 16], strides = [1, 1]} : vector<16x32xf32> to vector<1x16xf32>
    %c7 = arith.constant 7 : index
    %c0_136 = arith.constant 0 : index
    %166 = vector.load %arg16[%c7, %c0_136] : memref<32x16xf32, #tpu.memory_space<vmem>>, vector<1x16xf32>
    tpu.vector_store %arg16[%c7, %c0_136], %165 {strides = array<i32>} : memref<32x16xf32, #tpu.memory_space<vmem>>, vector<1x16xf32>,
    %167 = vector.extract_strided_slice %80 {offsets = [10, 64], sizes = [1, 64], strides = [1, 1]} : vector<16x128xf32> to vector<1x64xf32>
    %c7_137 = arith.constant 7 : index
    %c0_138 = arith.constant 0 : index
    %168 = vector.load %arg17[%c7_137, %c0_138] : memref<32x64xf32, #tpu.memory_space<vmem>>, vector<1x64xf32>
    tpu.vector_store %arg17[%c7_137, %c0_138], %167 {strides = array<i32>} : memref<32x64xf32, #tpu.memory_space<vmem>>, vector<1x64xf32>,
    %169 = vector.extract_strided_slice %73 {offsets = [11, 0], sizes = [1, 16], strides = [1, 1]} : vector<16x32xf32> to vector<1x16xf32>
    %c22 = arith.constant 22 : index
    %c0_139 = arith.constant 0 : index
    %170 = vector.load %arg16[%c22, %c0_139] : memref<32x16xf32, #tpu.memory_space<vmem>>, vector<1x16xf32>
    tpu.vector_store %arg16[%c22, %c0_139], %169 {strides = array<i32>} : memref<32x16xf32, #tpu.memory_space<vmem>>, vector<1x16xf32>,
    %171 = vector.extract_strided_slice %80 {offsets = [11, 0], sizes = [1, 64], strides = [1, 1]} : vector<16x128xf32> to vector<1x64xf32>
    %c22_140 = arith.constant 22 : index
    %c0_141 = arith.constant 0 : index
    %172 = vector.load %arg17[%c22_140, %c0_141] : memref<32x64xf32, #tpu.memory_space<vmem>>, vector<1x64xf32>
    tpu.vector_store %arg17[%c22_140, %c0_141], %171 {strides = array<i32>} : memref<32x64xf32, #tpu.memory_space<vmem>>, vector<1x64xf32>,
    %173 = vector.extract_strided_slice %73 {offsets = [11, 16], sizes = [1, 16], strides = [1, 1]} : vector<16x32xf32> to vector<1x16xf32>
    %c23 = arith.constant 23 : index
    %c0_142 = arith.constant 0 : index
    %174 = vector.load %arg16[%c23, %c0_142] : memref<32x16xf32, #tpu.memory_space<vmem>>, vector<1x16xf32>
    tpu.vector_store %arg16[%c23, %c0_142], %173 {strides = array<i32>} : memref<32x16xf32, #tpu.memory_space<vmem>>, vector<1x16xf32>,
    %175 = vector.extract_strided_slice %80 {offsets = [11, 64], sizes = [1, 64], strides = [1, 1]} : vector<16x128xf32> to vector<1x64xf32>
    %c23_143 = arith.constant 23 : index
    %c0_144 = arith.constant 0 : index
    %176 = vector.load %arg17[%c23_143, %c0_144] : memref<32x64xf32, #tpu.memory_space<vmem>>, vector<1x64xf32>
    tpu.vector_store %arg17[%c23_143, %c0_144], %175 {strides = array<i32>} : memref<32x64xf32, #tpu.memory_space<vmem>>, vector<1x64xf32>,
    %177 = vector.extract_strided_slice %73 {offsets = [12, 0], sizes = [1, 16], strides = [1, 1]} : vector<16x32xf32> to vector<1x16xf32>
    %c10 = arith.constant 10 : index
    %c0_145 = arith.constant 0 : index
    %178 = vector.load %arg16[%c10, %c0_145] : memref<32x16xf32, #tpu.memory_space<vmem>>, vector<1x16xf32>
    tpu.vector_store %arg16[%c10, %c0_145], %177 {strides = array<i32>} : memref<32x16xf32, #tpu.memory_space<vmem>>, vector<1x16xf32>,
    %179 = vector.extract_strided_slice %80 {offsets = [12, 0], sizes = [1, 64], strides = [1, 1]} : vector<16x128xf32> to vector<1x64xf32>
    %c10_146 = arith.constant 10 : index
    %c0_147 = arith.constant 0 : index
    %180 = vector.load %arg17[%c10_146, %c0_147] : memref<32x64xf32, #tpu.memory_space<vmem>>, vector<1x64xf32>
    tpu.vector_store %arg17[%c10_146, %c0_147], %179 {strides = array<i32>} : memref<32x64xf32, #tpu.memory_space<vmem>>, vector<1x64xf32>,
    %181 = vector.extract_strided_slice %73 {offsets = [12, 16], sizes = [1, 16], strides = [1, 1]} : vector<16x32xf32> to vector<1x16xf32>
    %c11 = arith.constant 11 : index
    %c0_148 = arith.constant 0 : index
    %182 = vector.load %arg16[%c11, %c0_148] : memref<32x16xf32, #tpu.memory_space<vmem>>, vector<1x16xf32>
    tpu.vector_store %arg16[%c11, %c0_148], %181 {strides = array<i32>} : memref<32x16xf32, #tpu.memory_space<vmem>>, vector<1x16xf32>,
    %183 = vector.extract_strided_slice %80 {offsets = [12, 64], sizes = [1, 64], strides = [1, 1]} : vector<16x128xf32> to vector<1x64xf32>
    %c11_149 = arith.constant 11 : index
    %c0_150 = arith.constant 0 : index
    %184 = vector.load %arg17[%c11_149, %c0_150] : memref<32x64xf32, #tpu.memory_space<vmem>>, vector<1x64xf32>
    tpu.vector_store %arg17[%c11_149, %c0_150], %183 {strides = array<i32>} : memref<32x64xf32, #tpu.memory_space<vmem>>, vector<1x64xf32>,
    %185 = vector.extract_strided_slice %73 {offsets = [13, 0], sizes = [1, 16], strides = [1, 1]} : vector<16x32xf32> to vector<1x16xf32>
    %c26 = arith.constant 26 : index
    %c0_151 = arith.constant 0 : index
    %186 = vector.load %arg16[%c26, %c0_151] : memref<32x16xf32, #tpu.memory_space<vmem>>, vector<1x16xf32>
    tpu.vector_store %arg16[%c26, %c0_151], %185 {strides = array<i32>} : memref<32x16xf32, #tpu.memory_space<vmem>>, vector<1x16xf32>,
    %187 = vector.extract_strided_slice %80 {offsets = [13, 0], sizes = [1, 64], strides = [1, 1]} : vector<16x128xf32> to vector<1x64xf32>
    %c26_152 = arith.constant 26 : index
    %c0_153 = arith.constant 0 : index
    %188 = vector.load %arg17[%c26_152, %c0_153] : memref<32x64xf32, #tpu.memory_space<vmem>>, vector<1x64xf32>
    tpu.vector_store %arg17[%c26_152, %c0_153], %187 {strides = array<i32>} : memref<32x64xf32, #tpu.memory_space<vmem>>, vector<1x64xf32>,
    %189 = vector.extract_strided_slice %73 {offsets = [13, 16], sizes = [1, 16], strides = [1, 1]} : vector<16x32xf32> to vector<1x16xf32>
    %c27 = arith.constant 27 : index
    %c0_154 = arith.constant 0 : index
    %190 = vector.load %arg16[%c27, %c0_154] : memref<32x16xf32, #tpu.memory_space<vmem>>, vector<1x16xf32>
    tpu.vector_store %arg16[%c27, %c0_154], %189 {strides = array<i32>} : memref<32x16xf32, #tpu.memory_space<vmem>>, vector<1x16xf32>,
    %191 = vector.extract_strided_slice %80 {offsets = [13, 64], sizes = [1, 64], strides = [1, 1]} : vector<16x128xf32> to vector<1x64xf32>
    %c27_155 = arith.constant 27 : index
    %c0_156 = arith.constant 0 : index
    %192 = vector.load %arg17[%c27_155, %c0_156] : memref<32x64xf32, #tpu.memory_space<vmem>>, vector<1x64xf32>
    tpu.vector_store %arg17[%c27_155, %c0_156], %191 {strides = array<i32>} : memref<32x64xf32, #tpu.memory_space<vmem>>, vector<1x64xf32>,
    %193 = vector.extract_strided_slice %73 {offsets = [14, 0], sizes = [1, 16], strides = [1, 1]} : vector<16x32xf32> to vector<1x16xf32>
    %c14 = arith.constant 14 : index
    %c0_157 = arith.constant 0 : index
    %194 = vector.load %arg16[%c14, %c0_157] : memref<32x16xf32, #tpu.memory_space<vmem>>, vector<1x16xf32>
    tpu.vector_store %arg16[%c14, %c0_157], %193 {strides = array<i32>} : memref<32x16xf32, #tpu.memory_space<vmem>>, vector<1x16xf32>,
    %195 = vector.extract_strided_slice %80 {offsets = [14, 0], sizes = [1, 64], strides = [1, 1]} : vector<16x128xf32> to vector<1x64xf32>
    %c14_158 = arith.constant 14 : index
    %c0_159 = arith.constant 0 : index
    %196 = vector.load %arg17[%c14_158, %c0_159] : memref<32x64xf32, #tpu.memory_space<vmem>>, vector<1x64xf32>
    tpu.vector_store %arg17[%c14_158, %c0_159], %195 {strides = array<i32>} : memref<32x64xf32, #tpu.memory_space<vmem>>, vector<1x64xf32>,
    %197 = vector.extract_strided_slice %73 {offsets = [14, 16], sizes = [1, 16], strides = [1, 1]} : vector<16x32xf32> to vector<1x16xf32>
    %c15 = arith.constant 15 : index
    %c0_160 = arith.constant 0 : index
    %198 = vector.load %arg16[%c15, %c0_160] : memref<32x16xf32, #tpu.memory_space<vmem>>, vector<1x16xf32>
    tpu.vector_store %arg16[%c15, %c0_160], %197 {strides = array<i32>} : memref<32x16xf32, #tpu.memory_space<vmem>>, vector<1x16xf32>,
    %199 = vector.extract_strided_slice %80 {offsets = [14, 64], sizes = [1, 64], strides = [1, 1]} : vector<16x128xf32> to vector<1x64xf32>
    %c15_161 = arith.constant 15 : index
    %c0_162 = arith.constant 0 : index
    %200 = vector.load %arg17[%c15_161, %c0_162] : memref<32x64xf32, #tpu.memory_space<vmem>>, vector<1x64xf32>
    tpu.vector_store %arg17[%c15_161, %c0_162], %199 {strides = array<i32>} : memref<32x64xf32, #tpu.memory_space<vmem>>, vector<1x64xf32>,
    %201 = vector.extract_strided_slice %73 {offsets = [15, 0], sizes = [1, 16], strides = [1, 1]} : vector<16x32xf32> to vector<1x16xf32>
    %c30 = arith.constant 30 : index
    %c0_163 = arith.constant 0 : index
    %202 = vector.load %arg16[%c30, %c0_163] : memref<32x16xf32, #tpu.memory_space<vmem>>, vector<1x16xf32>
    tpu.vector_store %arg16[%c30, %c0_163], %201 {strides = array<i32>} : memref<32x16xf32, #tpu.memory_space<vmem>>, vector<1x16xf32>,
    %203 = vector.extract_strided_slice %80 {offsets = [15, 0], sizes = [1, 64], strides = [1, 1]} : vector<16x128xf32> to vector<1x64xf32>
    %c30_164 = arith.constant 30 : index
    %c0_165 = arith.constant 0 : index
    %204 = vector.load %arg17[%c30_164, %c0_165] : memref<32x64xf32, #tpu.memory_space<vmem>>, vector<1x64xf32>
    tpu.vector_store %arg17[%c30_164, %c0_165], %203 {strides = array<i32>} : memref<32x64xf32, #tpu.memory_space<vmem>>, vector<1x64xf32>,
    %205 = vector.extract_strided_slice %73 {offsets = [15, 16], sizes = [1, 16], strides = [1, 1]} : vector<16x32xf32> to vector<1x16xf32>
    %c31 = arith.constant 31 : index
    %c0_166 = arith.constant 0 : index
    %206 = vector.load %arg16[%c31, %c0_166] : memref<32x16xf32, #tpu.memory_space<vmem>>, vector<1x16xf32>
    tpu.vector_store %arg16[%c31, %c0_166], %205 {strides = array<i32>} : memref<32x16xf32, #tpu.memory_space<vmem>>, vector<1x16xf32>,
    %207 = vector.extract_strided_slice %80 {offsets = [15, 64], sizes = [1, 64], strides = [1, 1]} : vector<16x128xf32> to vector<1x64xf32>
    %c31_167 = arith.constant 31 : index
    %c0_168 = arith.constant 0 : index
    %208 = vector.load %arg17[%c31_167, %c0_168] : memref<32x64xf32, #tpu.memory_space<vmem>>, vector<1x64xf32>
    tpu.vector_store %arg17[%c31_167, %c0_168], %207 {strides = array<i32>} : memref<32x64xf32, #tpu.memory_space<vmem>>, vector<1x64xf32>,
    return
  }
  func.func @transform_0(%arg0: i32) -> (i32, i32) {
    %c0_i32 = arith.constant 0 : i32
    %c0_i32_0 = arith.constant 0 : i32
    %c0_i32_1 = arith.constant 0 : i32
    return %c0_i32, %c0_i32_0 : i32, i32
  }
  func.func @transform_1(%arg0: i32) -> (i32, i32) {
    %c0_i32 = arith.constant 0 : i32
    %c0_i32_0 = arith.constant 0 : i32
    %c0_i32_1 = arith.constant 0 : i32
    return %c0_i32, %c0_i32_0 : i32, i32
  }
  func.func @transform_2(%arg0: i32) -> (i32, i32) {
    %c0_i32 = arith.constant 0 : i32
    %c0_i32_0 = arith.constant 0 : i32
    %c0_i32_1 = arith.constant 0 : i32
    return %c0_i32, %c0_i32_0 : i32, i32
  }
  func.func @transform_3(%arg0: i32) -> (i32, i32) {
    %c0_i32 = arith.constant 0 : i32
    %c0_i32_0 = arith.constant 0 : i32
    %c0_i32_1 = arith.constant 0 : i32
    return %c0_i32, %c0_i32_0 : i32, i32
  }
  func.func @transform_4(%arg0: i32) -> (i32, i32) {
    %c0_i32 = arith.constant 0 : i32
    %c0_i32_0 = arith.constant 0 : i32
    %c0_i32_1 = arith.constant 0 : i32
    return %c0_i32, %c0_i32_0 : i32, i32
  }
  func.func @transform_5(%arg0: i32) -> (i32, i32) {
    %c0_i32 = arith.constant 0 : i32
    %c0_i32_0 = arith.constant 0 : i32
    %c0_i32_1 = arith.constant 0 : i32
    return %c0_i32, %c0_i32_0 : i32, i32
  }
  func.func @transform_6(%arg0: i32) -> (i32, i32) {
    %c0_i32 = arith.constant 0 : i32
    %c0_i32_0 = arith.constant 0 : i32
    %c0_i32_1 = arith.constant 0 : i32
    return %c0_i32, %c0_i32_0 : i32, i32
  }
  func.func @transform_7(%arg0: i32) -> (i32, i32) {
    %c0_i32 = arith.constant 0 : i32
    %c0_i32_0 = arith.constant 0 : i32
    %c0_i32_1 = arith.constant 0 : i32
    return %c0_i32, %c0_i32_0 : i32, i32
  }
  func.func @transform_8(%arg0: i32) -> (i32, i32) {
    %c0_i32 = arith.constant 0 : i32
    %c0_i32_0 = arith.constant 0 : i32
    %c0_i32_1 = arith.constant 0 : i32
    return %c0_i32, %c0_i32_0 : i32, i32
  }
  func.func @transform_9(%arg0: i32) -> (i32, i32) {
    %c0_i32 = arith.constant 0 : i32
    %c0_i32_0 = arith.constant 0 : i32
    %c0_i32_1 = arith.constant 0 : i32
    return %c0_i32, %c0_i32_0 : i32, i32
  }
  func.func @transform_10(%arg0: i32) -> (i32, i32) {
    %c0_i32 = arith.constant 0 : i32
    %c0_i32_0 = arith.constant 0 : i32
    %c0_i32_1 = arith.constant 0 : i32
    return %c0_i32, %c0_i32_0 : i32, i32
  }
  func.func @transform_11(%arg0: i32) -> (i32, i32) {
    %c0_i32 = arith.constant 0 : i32
    %c0_i32_0 = arith.constant 0 : i32
    %c0_i32_1 = arith.constant 0 : i32
    return %c0_i32, %c0_i32_0 : i32, i32
  }
  func.func @transform_12(%arg0: i32) -> (i32, i32) {
    %c0_i32 = arith.constant 0 : i32
    %c0_i32_0 = arith.constant 0 : i32
    %c0_i32_1 = arith.constant 0 : i32
    return %c0_i32, %c0_i32_0 : i32, i32
  }
  func.func @transform_13(%arg0: i32) -> (i32, i32) {
    %c0_i32 = arith.constant 0 : i32
    %c0_i32_0 = arith.constant 0 : i32
    %c0_i32_1 = arith.constant 0 : i32
    return %c0_i32, %c0_i32_0 : i32, i32
  }
  func.func @transform_14(%arg0: i32) -> (i32, i32) {
    %c0_i32 = arith.constant 0 : i32
    %c0_i32_0 = arith.constant 0 : i32
    %c0_i32_1 = arith.constant 0 : i32
    return %c0_i32, %c0_i32_0 : i32, i32
  }
  func.func @transform_15(%arg0: i32) -> (i32, i32) {
    %c0_i32 = arith.constant 0 : i32
    %c0_i32_0 = arith.constant 0 : i32
    %c0_i32_1 = arith.constant 0 : i32
    return %c0_i32, %c0_i32_0 : i32, i32
  }
  func.func @transform_16(%arg0: i32) -> (i32, i32) {
    %c0_i32 = arith.constant 0 : i32
    %c0_i32_0 = arith.constant 0 : i32
    %c0_i32_1 = arith.constant 0 : i32
    return %c0_i32, %c0_i32_0 : i32, i32
  }
}

</mosaic_0001>

<llo_original>
// kernel: hierarchical_decoder_forward.1
$region0: #{hierarchical_decoder_forward.1}
  #allocation0 [shape = 'u32[]', space=smem, size = 0x4, offset = 0x4, fixed_abs, tag = 'smem constant byte address 0x4 - core index']
  #allocation1 [shape = 'u32[144,128]{1,0:T(1,128)}', space=vmem, size = 0x12000, scoped, tag = 'internal scratch']
  #allocation2 [shape = 'f32[8,128]{1,0:T(8,128)}', space=vmem, size = 0x1000, scoped, tag = 'scratch operand']
  #allocation3 [shape = 'f32[8,128]{1,0:T(8,128)}', space=vmem, size = 0x1000, scoped, tag = 'scratch operand']
  #allocation4 [shape = 'f32[16,128]{1,0:T(8,128)}', space=vmem, size = 0x2000, scoped, tag = 'scratch operand']
  #allocation5 [shape = 'f32[16,256]{1,0:T(8,128)}', space=vmem, size = 0x4000, scoped, tag = 'scratch operand']
  %s0 = inlined_call_operand.hbm [shape: f32[2,64], index: 0, kind: input, shape index: {}]
  %s1 = inlined_call_operand.hbm [shape: bf16[64,512], index: 1, kind: input, shape index: {}]
  %s2 = inlined_call_operand.hbm [shape: f32[1,512], index: 2, kind: input, shape index: {}]
  %s3 = inlined_call_operand.hbm [shape: bf16[512,1024], index: 3, kind: input, shape index: {}]
  %s4 = inlined_call_operand.hbm [shape: f32[1,1024], index: 4, kind: input, shape index: {}]
  %s5 = inlined_call_operand.hbm [shape: bf16[1024,1024], index: 5, kind: input, shape index: {}]
  %s6 = inlined_call_operand.hbm [shape: f32[1,1024], index: 6, kind: input, shape index: {}]
  %s7 = inlined_call_operand.hbm [shape: bf16[128,256], index: 7, kind: input, shape index: {}]
  %s8 = inlined_call_operand.hbm [shape: f32[1,256], index: 8, kind: input, shape index: {}]
  %s9 = inlined_call_operand.vmem [shape: bf16[128,32], index: 9, kind: input, shape index: {}]
  %s10 = inlined_call_operand.hbm [shape: f32[1,32], index: 10, kind: input, shape index: {}]
  %s11 = inlined_call_operand.hbm [shape: bf16[128,512], index: 11, kind: input, shape index: {}]
  %s12 = inlined_call_operand.hbm [shape: f32[1,512], index: 12, kind: input, shape index: {}]
  %s13 = inlined_call_operand.hbm [shape: bf16[256,128], index: 13, kind: input, shape index: {}]
  %s14 = inlined_call_operand.hbm [shape: f32[1,128], index: 14, kind: input, shape index: {}]
  %s15 = inlined_call_operand.hbm [shape: f32[32,16], index: 15, kind: output, shape index: {0}]
  %s16 = inlined_call_operand.vmem [shape: f32[32,64], index: 16, kind: output, shape index: {1}]
  %17 = xla_tuple %s15, %s16
  %s18 = sld [smem:[#allocation0]]
  $region134: #{hierarchical_decoder_forward.1} parent=0
    _
  %s20 = ssub.s32 1, %s18
  %s21 = scalar_select 0, %s20, %s18
  $region1: #{hierarchical_decoder_forward.1} parent=0
    #allocation6 [shape = 'u8[1024]{0}', space=vmem, size = 0x400, scoped, tag = 'input window, operand 0, single buffered']
    #allocation7 [shape = 's32[1]{0}', space=sflag, size = 0x4, scoped, tag = 'scoped memory for hierarchical_decoder_forward.1']
    #allocation8 [shape = 's32[1]{0}', space=sflag, size = 0x4, scoped, tag = 'scoped memory for hierarchical_decoder_forward.1']
    #allocation9 [shape = 'u8[65536]{0}', space=vmem, size = 0x10000, scoped, tag = 'input window, operand 1, single buffered']
    #allocation10 [shape = 's32[1]{0}', space=sflag, size = 0x4, scoped, tag = 'scoped memory for hierarchical_decoder_forward.1']
    #allocation11 [shape = 'u8[2048]{0}', space=vmem, size = 0x800, scoped, tag = 'input window, operand 2, single buffered']
    #allocation12 [shape = 'u8[1048576]{0}', space=vmem, size = 0x100000, scoped, tag = 'input window, operand 3, single buffered']
    #allocation13 [shape = 's32[1]{0}', space=sflag, size = 0x4, scoped, tag = 'scoped memory for hierarchical_decoder_forward.1']
    #allocation14 [shape = 'u8[4096]{0}', space=vmem, size = 0x1000, scoped, tag = 'input window, operand 4, single buffered']
    #allocation15 [shape = 'u8[2097152]{0}', space=vmem, size = 0x200000, scoped, tag = 'input window, operand 5, single buffered']
    #allocation16 [shape = 's32[1]{0}', space=sflag, size = 0x4, scoped, tag = 'scoped memory for hierarchical_decoder_forward.1']
    #allocation17 [shape = 'u8[4096]{0}', space=vmem, size = 0x1000, scoped, tag = 'input window, operand 6, single buffered']
    #allocation18 [shape = 'u8[65536]{0}', space=vmem, size = 0x10000, scoped, tag = 'input window, operand 7, single buffered']
    #allocation19 [shape = 's32[1]{0}', space=sflag, size = 0x4, scoped, tag = 'scoped memory for hierarchical_decoder_forward.1']
    #allocation20 [shape = 'u8[1024]{0}', space=vmem, size = 0x400, scoped, tag = 'input window, operand 8, single buffered']
    #allocation21 [shape = 'u8[512]{0}', space=vmem, size = 0x400, scoped, tag = 'input window, operand 10, single buffered']
    #allocation22 [shape = 's32[1]{0}', space=sflag, size = 0x4, scoped, tag = 'scoped memory for hierarchical_decoder_forward.1']
    #allocation23 [shape = 'u8[131072]{0}', space=vmem, size = 0x20000, scoped, tag = 'input window, operand 11, single buffered']
    #allocation24 [shape = 'u8[2048]{0}', space=vmem, size = 0x800, scoped, tag = 'input window, operand 12, single buffered']
    #allocation25 [shape = 's32[1]{0}', space=sflag, size = 0x4, scoped, tag = 'scoped memory for hierarchical_decoder_forward.1']
    #allocation26 [shape = 'u8[65536]{0}', space=vmem, size = 0x10000, scoped, tag = 'input window, operand 13, single buffered']
    #allocation27 [shape = 'u8[512]{0}', space=vmem, size = 0x400, scoped, tag = 'input window, operand 14, single buffered']
    #allocation28 [shape = 's32[1]{0}', space=sflag, size = 0x4, scoped, tag = 'scoped memory for hierarchical_decoder_forward.1']
    #allocation29 [shape = 'u8[16384]{0}', space=vmem, size = 0x4000, scoped, tag = 'output window, operand 0, single buffered']
    %22 = vsyncpa [#allocation7], 0
    %23 = vsyncpa [#allocation10], 0
    %24 = vsyncpa [#allocation13], 0
    %25 = vsyncpa [#allocation16], 0
    %26 = vsyncpa [#allocation19], 0
    %27 = vsyncpa [#allocation22], 0
    %28 = vsyncpa [#allocation25], 0
    %29 = vsyncpa [#allocation28], 0
    %30 = vsyncpa [#allocation8], 0
    // Predicated region
    $region2: #{hierarchical_decoder_forward.1} parent=1 // pred_check
      _
    $region3: #{hierarchical_decoder_forward.1} parent=1 // pred_check_branch
      %32 = sbr.rel (0) target = $region5
    $region4: #{hierarchical_decoder_forward.1} parent=1 // pred_region
      %s34 = ssub.s32 32, 32
      %35 = vsyncadd [#allocation7], %s34
      %s37 = sshll.u32 [#allocation6], 4
      %s38 = int_to_ptr.vmem [resolvable:$true] %s37
      %40 = dma.hbm_to_vmem [thread:$0]  %s0, 32, %s38, [#allocation7]
    $region5: #{hierarchical_decoder_forward.1} parent=1 // pred_fallthru
      _
    // Predicated region
    $region6: #{hierarchical_decoder_forward.1} parent=1 // pred_check
      _
    $region7: #{hierarchical_decoder_forward.1} parent=1 // pred_check_branch
      %42 = sbr.rel (0) target = $region9
    $region8: #{hierarchical_decoder_forward.1} parent=1 // pred_region
      %s44 = ssub.s32 2048, 2048
      %45 = vsyncadd [#allocation10], %s44
      %s46 = sshll.u32 [#allocation9], 4
      %s47 = int_to_ptr.vmem [resolvable:$true] %s46
      %52 = dma.hbm_to_vmem [thread:$0]  %s1, 2048, %s47, [#allocation10], 256, 256, 16
    $region9: #{hierarchical_decoder_forward.1} parent=1 // pred_fallthru
      _
    // Predicated region
    $region10: #{hierarchical_decoder_forward.1} parent=1 // pred_check
      _
    $region11: #{hierarchical_decoder_forward.1} parent=1 // pred_check_branch
      %54 = sbr.rel (0) target = $region13
    $region12: #{hierarchical_decoder_forward.1} parent=1 // pred_region
      %s56 = ssub.s32 64, 64
      %57 = vsyncadd [#allocation10], %s56
      %s59 = sshll.u32 [#allocation11], 4
      %s60 = int_to_ptr.vmem [resolvable:$true] %s59
      %62 = dma.hbm_to_vmem [thread:$0]  %s2, 64, %s60, [#allocation10]
    $region13: #{hierarchical_decoder_forward.1} parent=1 // pred_fallthru
      _
    // Predicated region
    $region14: #{hierarchical_decoder_forward.1} parent=1 // pred_check
      _
    $region15: #{hierarchical_decoder_forward.1} parent=1 // pred_check_branch
      %64 = sbr.rel (0) target = $region17
    $region16: #{hierarchical_decoder_forward.1} parent=1 // pred_region
      %s66 = ssub.s32 32768, 32768
      %67 = vsyncadd [#allocation13], %s66
      %s68 = sshll.u32 [#allocation12], 4
      %s69 = int_to_ptr.vmem [resolvable:$true] %s68
      %74 = dma.hbm_to_vmem [thread:$0]  %s3, 32768, %s69, [#allocation13], 512, 512, 32
    $region17: #{hierarchical_decoder_forward.1} parent=1 // pred_fallthru
      _
    // Predicated region
    $region18: #{hierarchical_decoder_forward.1} parent=1 // pred_check
      _
    $region19: #{hierarchical_decoder_forward.1} parent=1 // pred_check_branch
      %76 = sbr.rel (0) target = $region21
    $region20: #{hierarchical_decoder_forward.1} parent=1 // pred_region
      %s78 = ssub.s32 128, 128
      %79 = vsyncadd [#allocation13], %s78
      %s81 = sshll.u32 [#allocation14], 4
      %s82 = int_to_ptr.vmem [resolvable:$true] %s81
      %84 = dma.hbm_to_vmem [thread:$0]  %s4, 128, %s82, [#allocation13]
    $region21: #{hierarchical_decoder_forward.1} parent=1 // pred_fallthru
      _
    // Predicated region
    $region22: #{hierarchical_decoder_forward.1} parent=1 // pred_check
      _
    $region23: #{hierarchical_decoder_forward.1} parent=1 // pred_check_branch
      %86 = sbr.rel (0) target = $region25
    $region24: #{hierarchical_decoder_forward.1} parent=1 // pred_region
      %s88 = ssub.s32 65536, 65536
      %89 = vsyncadd [#allocation16], %s88
      %s90 = sshll.u32 [#allocation15], 4
      %s91 = int_to_ptr.vmem [resolvable:$true] %s90
      %96 = dma.hbm_to_vmem [thread:$0]  %s5, 65536, %s91, [#allocation16], 512, 512, 32
    $region25: #{hierarchical_decoder_forward.1} parent=1 // pred_fallthru
      _
    // Predicated region
    $region26: #{hierarchical_decoder_forward.1} parent=1 // pred_check
      _
    $region27: #{hierarchical_decoder_forward.1} parent=1 // pred_check_branch
      %98 = sbr.rel (0) target = $region29
    $region28: #{hierarchical_decoder_forward.1} parent=1 // pred_region
      %s100 = ssub.s32 128, 128
      %101 = vsyncadd [#allocation16], %s100
      %s103 = sshll.u32 [#allocation17], 4
      %s104 = int_to_ptr.vmem [resolvable:$true] %s103
      %106 = dma.hbm_to_vmem [thread:$0]  %s6, 128, %s104, [#allocation16]
    $region29: #{hierarchical_decoder_forward.1} parent=1 // pred_fallthru
      _
    // Predicated region
    $region30: #{hierarchical_decoder_forward.1} parent=1 // pred_check
      _
    $region31: #{hierarchical_decoder_forward.1} parent=1 // pred_check_branch
      %108 = sbr.rel (0) target = $region33
    $region32: #{hierarchical_decoder_forward.1} parent=1 // pred_region
      %s110 = ssub.s32 2048, 2048
      %111 = vsyncadd [#allocation19], %s110
      %s112 = sshll.u32 [#allocation18], 4
      %s113 = int_to_ptr.vmem [resolvable:$true] %s112
      %118 = dma.hbm_to_vmem [thread:$0]  %s7, 2048, %s113, [#allocation19], 128, 128, 8
    $region33: #{hierarchical_decoder_forward.1} parent=1 // pred_fallthru
      _
    // Predicated region
    $region34: #{hierarchical_decoder_forward.1} parent=1 // pred_check
      _
    $region35: #{hierarchical_decoder_forward.1} parent=1 // pred_check_branch
      %120 = sbr.rel (0) target = $region37
    $region36: #{hierarchical_decoder_forward.1} parent=1 // pred_region
      %s122 = ssub.s32 32, 32
      %123 = vsyncadd [#allocation19], %s122
      %s125 = sshll.u32 [#allocation20], 4
      %s126 = int_to_ptr.vmem [resolvable:$true] %s125
      %128 = dma.hbm_to_vmem [thread:$0]  %s8, 32, %s126, [#allocation19]
    $region37: #{hierarchical_decoder_forward.1} parent=1 // pred_fallthru
      _
    // Predicated region
    $region38: #{hierarchical_decoder_forward.1} parent=1 // pred_check
      _
    $region39: #{hierarchical_decoder_forward.1} parent=1 // pred_check_branch
      %130 = sbr.rel (0) target = $region41
    $region40: #{hierarchical_decoder_forward.1} parent=1 // pred_region
      _
    $region41: #{hierarchical_decoder_forward.1} parent=1 // pred_fallthru
      _
    // Predicated region
    $region42: #{hierarchical_decoder_forward.1} parent=1 // pred_check
      _
    $region43: #{hierarchical_decoder_forward.1} parent=1 // pred_check_branch
      %132 = sbr.rel (0) target = $region45
    $region44: #{hierarchical_decoder_forward.1} parent=1 // pred_region
      %s134 = ssub.s32 16, 16
      %135 = vsyncadd [#allocation22], %s134
      %s137 = sshll.u32 [#allocation21], 4
      %s138 = int_to_ptr.vmem [resolvable:$true] %s137
      %140 = dma.hbm_to_vmem [thread:$0]  %s10, 16, %s138, [#allocation22]
    $region45: #{hierarchical_decoder_forward.1} parent=1 // pred_fallthru
      _
    // Predicated region
    $region46: #{hierarchical_decoder_forward.1} parent=1 // pred_check
      _
    $region47: #{hierarchical_decoder_forward.1} parent=1 // pred_check_branch
      %142 = sbr.rel (0) target = $region49
    $region48: #{hierarchical_decoder_forward.1} parent=1 // pred_region
      %s144 = ssub.s32 4096, 4096
      %145 = vsyncadd [#allocation22], %s144
      %s146 = sshll.u32 [#allocation23], 4
      %s147 = int_to_ptr.vmem [resolvable:$true] %s146
      %152 = dma.hbm_to_vmem [thread:$0]  %s11, 4096, %s147, [#allocation22], 256, 256, 16
    $region49: #{hierarchical_decoder_forward.1} parent=1 // pred_fallthru
      _
    // Predicated region
    $region50: #{hierarchical_decoder_forward.1} parent=1 // pred_check
      _
    $region51: #{hierarchical_decoder_forward.1} parent=1 // pred_check_branch
      %154 = sbr.rel (0) target = $region53
    $region52: #{hierarchical_decoder_forward.1} parent=1 // pred_region
      %s156 = ssub.s32 64, 64
      %157 = vsyncadd [#allocation25], %s156
      %s159 = sshll.u32 [#allocation24], 4
      %s160 = int_to_ptr.vmem [resolvable:$true] %s159
      %162 = dma.hbm_to_vmem [thread:$0]  %s12, 64, %s160, [#allocation25]
    $region53: #{hierarchical_decoder_forward.1} parent=1 // pred_fallthru
      _
    // Predicated region
    $region54: #{hierarchical_decoder_forward.1} parent=1 // pred_check
      _
    $region55: #{hierarchical_decoder_forward.1} parent=1 // pred_check_branch
      %164 = sbr.rel (0) target = $region57
    $region56: #{hierarchical_decoder_forward.1} parent=1 // pred_region
      %s166 = ssub.s32 2048, 2048
      %167 = vsyncadd [#allocation25], %s166
      %s168 = sshll.u32 [#allocation26], 4
      %s169 = int_to_ptr.vmem [resolvable:$true] %s168
      %174 = dma.hbm_to_vmem [thread:$0]  %s13, 2048, %s169, [#allocation25], 64, 64, 4
    $region57: #{hierarchical_decoder_forward.1} parent=1 // pred_fallthru
      _
    // Predicated region
    $region58: #{hierarchical_decoder_forward.1} parent=1 // pred_check
      _
    $region59: #{hierarchical_decoder_forward.1} parent=1 // pred_check_branch
      %176 = sbr.rel (0) target = $region61
    $region60: #{hierarchical_decoder_forward.1} parent=1 // pred_region
      %s178 = ssub.s32 16, 16
      %179 = vsyncadd [#allocation28], %s178
      %s181 = sshll.u32 [#allocation27], 4
      %s182 = int_to_ptr.vmem [resolvable:$true] %s181
      %184 = dma.hbm_to_vmem [thread:$0]  %s14, 16, %s182, [#allocation28]
    $region61: #{hierarchical_decoder_forward.1} parent=1 // pred_fallthru
      _
    // Predicated region
    $region62: #{hierarchical_decoder_forward.1} parent=1 // pred_check
      _
    $region63: #{hierarchical_decoder_forward.1} parent=1 // pred_check_branch
      %186 = sbr.rel (0) target = $region65
    $region64: #{hierarchical_decoder_forward.1} parent=1 // pred_region
      %187 = dma.done [#allocation7], 32
    $region65: #{hierarchical_decoder_forward.1} parent=1 // pred_fallthru
      _
    // Predicated region
    $region66: #{hierarchical_decoder_forward.1} parent=1 // pred_check
      _
    $region67: #{hierarchical_decoder_forward.1} parent=1 // pred_check_branch
      %189 = sbr.rel (0) target = $region69
    $region68: #{hierarchical_decoder_forward.1} parent=1 // pred_region
      %190 = dma.done [#allocation10], 2048
    $region69: #{hierarchical_decoder_forward.1} parent=1 // pred_fallthru
      _
    // Predicated region
    $region70: #{hierarchical_decoder_forward.1} parent=1 // pred_check
      _
    $region71: #{hierarchical_decoder_forward.1} parent=1 // pred_check_branch
      %192 = sbr.rel (0) target = $region73
    $region72: #{hierarchical_decoder_forward.1} parent=1 // pred_region
      %193 = dma.done [#allocation10], 64
    $region73: #{hierarchical_decoder_forward.1} parent=1 // pred_fallthru
      _
    // Predicated region
    $region74: #{hierarchical_decoder_forward.1} parent=1 // pred_check
      _
    $region75: #{hierarchical_decoder_forward.1} parent=1 // pred_check_branch
      %195 = sbr.rel (0) target = $region77
    $region76: #{hierarchical_decoder_forward.1} parent=1 // pred_region
      %196 = dma.done [#allocation13], 32768
    $region77: #{hierarchical_decoder_forward.1} parent=1 // pred_fallthru
      _
    // Predicated region
    $region78: #{hierarchical_decoder_forward.1} parent=1 // pred_check
      _
    $region79: #{hierarchical_decoder_forward.1} parent=1 // pred_check_branch
      %198 = sbr.rel (0) target = $region81
    $region80: #{hierarchical_decoder_forward.1} parent=1 // pred_region
      %199 = dma.done [#allocation13], 128
    $region81: #{hierarchical_decoder_forward.1} parent=1 // pred_fallthru
      _
    // Predicated region
    $region82: #{hierarchical_decoder_forward.1} parent=1 // pred_check
      _
    $region83: #{hierarchical_decoder_forward.1} parent=1 // pred_check_branch
      %201 = sbr.rel (0) target = $region85
    $region84: #{hierarchical_decoder_forward.1} parent=1 // pred_region
      %202 = dma.done [#allocation16], 65536
    $region85: #{hierarchical_decoder_forward.1} parent=1 // pred_fallthru
      _
    // Predicated region
    $region86: #{hierarchical_decoder_forward.1} parent=1 // pred_check
      _
    $region87: #{hierarchical_decoder_forward.1} parent=1 // pred_check_branch
      %204 = sbr.rel (0) target = $region89
    $region88: #{hierarchical_decoder_forward.1} parent=1 // pred_region
      %205 = dma.done [#allocation16], 128
    $region89: #{hierarchical_decoder_forward.1} parent=1 // pred_fallthru
      _
    // Predicated region
    $region90: #{hierarchical_decoder_forward.1} parent=1 // pred_check
      _
    $region91: #{hierarchical_decoder_forward.1} parent=1 // pred_check_branch
      %207 = sbr.rel (0) target = $region93
    $region92: #{hierarchical_decoder_forward.1} parent=1 // pred_region
      %208 = dma.done [#allocation19], 2048
    $region93: #{hierarchical_decoder_forward.1} parent=1 // pred_fallthru
      _
    // Predicated region
    $region94: #{hierarchical_decoder_forward.1} parent=1 // pred_check
      _
    $region95: #{hierarchical_decoder_forward.1} parent=1 // pred_check_branch
      %210 = sbr.rel (0) target = $region97
    $region96: #{hierarchical_decoder_forward.1} parent=1 // pred_region
      %211 = dma.done [#allocation19], 32
    $region97: #{hierarchical_decoder_forward.1} parent=1 // pred_fallthru
      _
    // Predicated region
    $region98: #{hierarchical_decoder_forward.1} parent=1 // pred_check
      _
    $region99: #{hierarchical_decoder_forward.1} parent=1 // pred_check_branch
      %213 = sbr.rel (0) target = $region101
    $region100: #{hierarchical_decoder_forward.1} parent=1 // pred_region
      %214 = dma.done [#allocation22], 16
    $region101: #{hierarchical_decoder_forward.1} parent=1 // pred_fallthru
      _
    // Predicated region
    $region102: #{hierarchical_decoder_forward.1} parent=1 // pred_check
      _
    $region103: #{hierarchical_decoder_forward.1} parent=1 // pred_check_branch
      %216 = sbr.rel (0) target = $region105
    $region104: #{hierarchical_decoder_forward.1} parent=1 // pred_region
      %217 = dma.done [#allocation22], 4096
    $region105: #{hierarchical_decoder_forward.1} parent=1 // pred_fallthru
      _
    // Predicated region
    $region106: #{hierarchical_decoder_forward.1} parent=1 // pred_check
      _
    $region107: #{hierarchical_decoder_forward.1} parent=1 // pred_check_branch
      %219 = sbr.rel (0) target = $region109
    $region108: #{hierarchical_decoder_forward.1} parent=1 // pred_region
      %220 = dma.done [#allocation25], 64
    $region109: #{hierarchical_decoder_forward.1} parent=1 // pred_fallthru
      _
    // Predicated region
    $region110: #{hierarchical_decoder_forward.1} parent=1 // pred_check
      _
    $region111: #{hierarchical_decoder_forward.1} parent=1 // pred_check_branch
      %222 = sbr.rel (0) target = $region113
    $region112: #{hierarchical_decoder_forward.1} parent=1 // pred_region
      %223 = dma.done [#allocation25], 2048
    $region113: #{hierarchical_decoder_forward.1} parent=1 // pred_fallthru
      _
    // Predicated region
    $region114: #{hierarchical_decoder_forward.1} parent=1 // pred_check
      _
    $region115: #{hierarchical_decoder_forward.1} parent=1 // pred_check_branch
      %225 = sbr.rel (0) target = $region117
    $region116: #{hierarchical_decoder_forward.1} parent=1 // pred_region
      %226 = dma.done [#allocation28], 16
    $region117: #{hierarchical_decoder_forward.1} parent=1 // pred_fallthru
      _
    %v228 = vld [vmem:[#allocation6] sm:$0x3]
    %v229 = vpack.c.bf16 %v228, %v228
    %v230 = vld [vmem:[#allocation9] sm:$0xff]
    %v231 = vld [vmem:[#allocation9 + $0x8] sm:$0xff]
    %v232 = vld [vmem:[#allocation9 + $0x10] sm:$0xff]
    %v233 = vld [vmem:[#allocation9 + $0x18] sm:$0xff]
    %v234 = vld [vmem:[#allocation9 + $0x20] sm:$0xff]
    %v235 = vld [vmem:[#allocation9 + $0x28] sm:$0xff]
    %v236 = vld [vmem:[#allocation9 + $0x30] sm:$0xff]
    %v237 = vld [vmem:[#allocation9 + $0x38] sm:$0xff]
    %v238 = vld [vmem:[#allocation9 + $0x40] sm:$0xff]
    %v239 = vld [vmem:[#allocation9 + $0x48] sm:$0xff]
    %v240 = vld [vmem:[#allocation9 + $0x50] sm:$0xff]
    %v241 = vld [vmem:[#allocation9 + $0x58] sm:$0xff]
    %v242 = vld [vmem:[#allocation9 + $0x60] sm:$0xff]
    %v243 = vld [vmem:[#allocation9 + $0x68] sm:$0xff]
    %v244 = vld [vmem:[#allocation9 + $0x70] sm:$0xff]
    %v245 = vld [vmem:[#allocation9 + $0x78] sm:$0xff]
    %v246 = vld [vmem:[#allocation11] sm:$0xf]
    %v248 = vlaneseq
    %v249 = vshrl.u32 %v248, 7
    %v250 = vsub.s32 0, %v249
    %v251 = vrot.slane %v246, %v250
    %v252 = vlaneseq
    %v253 = vshrl.u32 %v252, 7
    %v254 = vsub.s32 1, %v253
    %v255 = vrot.slane %v246, %v254
    %v256 = vlaneseq
    %v257 = vshrl.u32 %v256, 7
    %v258 = vsub.s32 2, %v257
    %v259 = vrot.slane %v246, %v258
    %v260 = vlaneseq
    %v261 = vshrl.u32 %v260, 7
    %v262 = vsub.s32 3, %v261
    %v263 = vrot.slane %v246, %v262
    %v284 = vunpack.c.l.b16 %v230
    %v285 = vunpack.c.h.b16 %v230
    %v286 = vunpack.c.l.b16 %v231
    %v287 = vunpack.c.h.b16 %v231
    %v288 = vunpack.c.l.b16 %v232
    %v289 = vunpack.c.h.b16 %v232
    %v290 = vunpack.c.l.b16 %v233
    %v291 = vunpack.c.h.b16 %v233
    %v292 = vunpack.c.l.b16 %v234
    %v293 = vunpack.c.h.b16 %v234
    %v294 = vunpack.c.l.b16 %v235
    %v295 = vunpack.c.h.b16 %v235
    %v296 = vunpack.c.l.b16 %v236
    %v297 = vunpack.c.h.b16 %v236
    %v298 = vunpack.c.l.b16 %v237
    %v299 = vunpack.c.h.b16 %v237
    %v300 = vunpack.c.l.b16 %v238
    %v301 = vunpack.c.h.b16 %v238
    %v302 = vunpack.c.l.b16 %v239
    %v303 = vunpack.c.h.b16 %v239
    %v304 = vunpack.c.l.b16 %v240
    %v305 = vunpack.c.h.b16 %v240
    %v306 = vunpack.c.l.b16 %v241
    %v307 = vunpack.c.h.b16 %v241
    %v308 = vunpack.c.l.b16 %v242
    %v309 = vunpack.c.h.b16 %v242
    %v310 = vunpack.c.l.b16 %v243
    %v311 = vunpack.c.h.b16 %v243
    %v312 = vunpack.c.l.b16 %v244
    %v313 = vunpack.c.h.b16 %v244
    %v314 = vunpack.c.l.b16 %v245
    %v315 = vunpack.c.h.b16 %v245
    %v316 = vpack.c.b16 %v288, %v284
    %v317 = vpack.c.b16 %v289, %v285
    %v318 = vpack.c.b16 %v290, %v286
    %v319 = vpack.c.b16 %v291, %v287
    %v320 = vpack.c.b16 %v296, %v292
    %v321 = vpack.c.b16 %v297, %v293
    %v322 = vpack.c.b16 %v298, %v294
    %v323 = vpack.c.b16 %v299, %v295
    %v324 = vpack.c.b16 %v304, %v300
    %v325 = vpack.c.b16 %v305, %v301
    %v326 = vpack.c.b16 %v306, %v302
    %v327 = vpack.c.b16 %v307, %v303
    %v328 = vpack.c.b16 %v312, %v308
    %v329 = vpack.c.b16 %v313, %v309
    %v330 = vpack.c.b16 %v314, %v310
    %v331 = vpack.c.b16 %v315, %v311
    %vm348 = vcmask 523264
    %v350 = vsel %vm348, %v229, 0
    %352 = vmatprep.subr.bf16.mxu0 0
    %353 = vmatpush1.bf16.msra.mxu0 0
    %354 = vmatprep.subr.bf16.mxu0 0
    %355 = vmatpush1.bf16.msra.mxu0 0
    %356 = vmatprep.subr.bf16.mxu0 0
    %357 = vmatpush1.bf16.msra.mxu0 0
    %358 = vmatprep.subr.bf16.mxu0 0
    %359 = vmatpush1.bf16.msra.mxu0 0
    %360 = vmatprep.subr.bf16.mxu0 %v329
    %361 = vmatpush1.bf16.msra.mxu0 %v328
    %362 = vmatprep.subr.bf16.mxu0 %v325
    %363 = vmatpush1.bf16.msra.mxu0 %v324
    %364 = vmatprep.subr.bf16.mxu0 %v321
    %365 = vmatpush1.bf16.msra.mxu0 %v320
    %366 = vmatprep.subr.bf16.mxu0 %v317
    %367 = vmatpush1.bf16.msra.mxu0 %v316
    %368 = vmatprep.subr.bf16.mxu0 0
    %369 = vmatpush2.bf16.msra.mxu0 0
    %370 = vmatprep.subr.bf16.mxu0 0
    %371 = vmatpush2.bf16.msra.mxu0 0
    %372 = vmatprep.subr.bf16.mxu0 0
    %373 = vmatpush2.bf16.msra.mxu0 0
    %374 = vmatprep.subr.bf16.mxu0 0
    %375 = vmatpush2.bf16.msra.mxu0 0
    %376 = vmatprep.subr.bf16.mxu0 0
    %377 = vmatpush2.bf16.msra.mxu0 0
    %378 = vmatprep.subr.bf16.mxu0 0
    %379 = vmatpush2.bf16.msra.mxu0 0
    %380 = vmatprep.subr.bf16.mxu0 0
    %381 = vmatpush2.bf16.msra.mxu0 0
    %382 = vmatprep.subr.bf16.mxu0 0
    %383 = vmatpush2.bf16.msra.mxu0 0
    %384 = vmatprep.mubr.bf16.mxu0 0
    %385 = vmatmul.mubr.bf16.gmra.mxu0 %v350
    %v386 = vpop.f32.mrf.mxu0
    %v387 = vadd.f32 %v251, %v386
    %v388 = vpop.f32.mrf.mxu0
    %v389 = vadd.f32 %v255, %v388
    %v390 = vpop.f32.mrf.mxu0
    %v391 = vpop.f32.mrf.mxu0
    %392 = vdwg.mxu0
    %393 = vmatprep.subr.bf16.mxu0 0
    %394 = vmatpush1.bf16.msra.mxu0 0
    %395 = vmatprep.subr.bf16.mxu0 0
    %396 = vmatpush1.bf16.msra.mxu0 0
    %397 = vmatprep.subr.bf16.mxu0 0
    %398 = vmatpush1.bf16.msra.mxu0 0
    %399 = vmatprep.subr.bf16.mxu0 0
    %400 = vmatpush1.bf16.msra.mxu0 0
    %401 = vmatprep.subr.bf16.mxu0 %v331
    %402 = vmatpush1.bf16.msra.mxu0 %v330
    %403 = vmatprep.subr.bf16.mxu0 %v327
    %404 = vmatpush1.bf16.msra.mxu0 %v326
    %405 = vmatprep.subr.bf16.mxu0 %v323
    %406 = vmatpush1.bf16.msra.mxu0 %v322
    %407 = vmatprep.subr.bf16.mxu0 %v319
    %408 = vmatpush1.bf16.msra.mxu0 %v318
    %409 = vmatprep.subr.bf16.mxu0 0
    %410 = vmatpush2.bf16.msra.mxu0 0
    %411 = vmatprep.subr.bf16.mxu0 0
    %412 = vmatpush2.bf16.msra.mxu0 0
    %413 = vmatprep.subr.bf16.mxu0 0
    %414 = vmatpush2.bf16.msra.mxu0 0
    %415 = vmatprep.subr.bf16.mxu0 0
    %416 = vmatpush2.bf16.msra.mxu0 0
    %417 = vmatprep.subr.bf16.mxu0 0
    %418 = vmatpush2.bf16.msra.mxu0 0
    %419 = vmatprep.subr.bf16.mxu0 0
    %420 = vmatpush2.bf16.msra.mxu0 0
    %421 = vmatprep.subr.bf16.mxu0 0
    %422 = vmatpush2.bf16.msra.mxu0 0
    %423 = vmatprep.subr.bf16.mxu0 0
    %424 = vmatpush2.bf16.msra.mxu0 0
    %425 = vmatprep.mubr.bf16.mxu0 0
    %426 = vmatmul.mubr.bf16.gmra.mxu0 %v350
    %v427 = vpop.f32.mrf.mxu0
    %v428 = vadd.f32 %v259, %v427
    %v429 = vpop.f32.mrf.mxu0
    %v430 = vadd.f32 %v263, %v429
    %v431 = vpop.f32.mrf.mxu0
    %v432 = vpop.f32.mrf.mxu0
    %433 = vdwg.mxu0
    %v434 = vmax.f32 %v387, 0.0
    %v435 = vmax.f32 %v389, 0.0
    %v436 = vmax.f32 %v428, 0.0
    %v437 = vmax.f32 %v430, 0.0
    %v438 = vpack.c.bf16 %v434, %v434
    %v439 = vpack.c.bf16 %v435, %v435
    %v440 = vpack.c.bf16 %v436, %v436
    %v441 = vpack.c.bf16 %v437, %v437
    %v442 = vld [vmem:[#allocation12] sm:$0xff]
    %v443 = vld [vmem:[#allocation12 + $0x8] sm:$0xff]
    %v444 = vld [vmem:[#allocation12 + $0x10] sm:$0xff]
    %v445 = vld [vmem:[#allocation12 + $0x18] sm:$0xff]
    %v446 = vld [vmem:[#allocation12 + $0x20] sm:$0xff]
    %v447 = vld [vmem:[#allocation12 + $0x28] sm:$0xff]
    %v448 = vld [vmem:[#allocation12 + $0x30] sm:$0xff]
    %v449 = vld [vmem:[#allocation12 + $0x38] sm:$0xff]
    %v450 = vld [vmem:[#allocation12 + $0x40] sm:$0xff]
    %v451 = vld [vmem:[#allocation12 + $0x48] sm:$0xff]
    %v452 = vld [vmem:[#allocation12 + $0x50] sm:$0xff]
    %v453 = vld [vmem:[#allocation12 + $0x58] sm:$0xff]
    %v454 = vld [vmem:[#allocation12 + $0x60] sm:$0xff]
    %v455 = vld [vmem:[#allocation12 + $0x68] sm:$0xff]
    %v456 = vld [vmem:[#allocation12 + $0x70] sm:$0xff]
    %v457 = vld [vmem:[#allocation12 + $0x78] sm:$0xff]
    %v458 = vld [vmem:[#allocation12 + $0x80] sm:$0xff]
    %v459 = vld [vmem:[#allocation12 + $0x88] sm:$0xff]
    %v460 = vld [vmem:[#allocation12 + $0x90] sm:$0xff]
    %v461 = vld [vmem:[#allocation12 + $0x98] sm:$0xff]
    %v462 = vld [vmem:[#allocation12 + $0xa0] sm:$0xff]
    %v463 = vld [vmem:[#allocation12 + $0xa8] sm:$0xff]
    %v464 = vld [vmem:[#allocation12 + $0xb0] sm:$0xff]
    %v465 = vld [vmem:[#allocation12 + $0xb8] sm:$0xff]
    %v466 = vld [vmem:[#allocation12 + $0xc0] sm:$0xff]
    %v467 = vld [vmem:[#allocation12 + $0xc8] sm:$0xff]
    %v468 = vld [vmem:[#allocation12 + $0xd0] sm:$0xff]
    %v469 = vld [vmem:[#allocation12 + $0xd8] sm:$0xff]
    %v470 = vld [vmem:[#allocation12 + $0xe0] sm:$0xff]
    %v471 = vld [vmem:[#allocation12 + $0xe8] sm:$0xff]
    %v472 = vld [vmem:[#allocation12 + $0xf0] sm:$0xff]
    %v473 = vld [vmem:[#allocation12 + $0xf8] sm:$0xff]
    %v474 = vld [vmem:[#allocation12 + $0x100] sm:$0xff]
    %v475 = vld [vmem:[#allocation12 + $0x108] sm:$0xff]
    %v476 = vld [vmem:[#allocation12 + $0x110] sm:$0xff]
    %v477 = vld [vmem:[#allocation12 + $0x118] sm:$0xff]
    %v478 = vld [vmem:[#allocation12 + $0x120] sm:$0xff]
    %v479 = vld [vmem:[#allocation12 + $0x128] sm:$0xff]
    %v480 = vld [vmem:[#allocation12 + $0x130] sm:$0xff]
    %v481 = vld [vmem:[#allocation12 + $0x138] sm:$0xff]
    %v482 = vld [vmem:[#allocation12 + $0x140] sm:$0xff]
    %v483 = vld [vmem:[#allocation12 + $0x148] sm:$0xff]
    %v484 = vld [vmem:[#allocation12 + $0x150] sm:$0xff]
    %v485 = vld [vmem:[#allocation12 + $0x158] sm:$0xff]
    %v486 = vld [vmem:[#allocation12 + $0x160] sm:$0xff]
    %v487 = vld [vmem:[#allocation12 + $0x168] sm:$0xff]
    %v488 = vld [vmem:[#allocation12 + $0x170] sm:$0xff]
    %v489 = vld [vmem:[#allocation12 + $0x178] sm:$0xff]
    %v490 = vld [vmem:[#allocation12 + $0x180] sm:$0xff]
    %v491 = vld [vmem:[#allocation12 + $0x188] sm:$0xff]
    %v492 = vld [vmem:[#allocation12 + $0x190] sm:$0xff]
    %v493 = vld [vmem:[#allocation12 + $0x198] sm:$0xff]
    %v494 = vld [vmem:[#allocation12 + $0x1a0] sm:$0xff]
    %v495 = vld [vmem:[#allocation12 + $0x1a8] sm:$0xff]
    %v496 = vld [vmem:[#allocation12 + $0x1b0] sm:$0xff]
    %v497 = vld [vmem:[#allocation12 + $0x1b8] sm:$0xff]
    %v498 = vld [vmem:[#allocation12 + $0x1c0] sm:$0xff]
    %v499 = vld [vmem:[#allocation12 + $0x1c8] sm:$0xff]
    %v500 = vld [vmem:[#allocation12 + $0x1d0] sm:$0xff]
    %v501 = vld [vmem:[#allocation12 + $0x1d8] sm:$0xff]
    %v502 = vld [vmem:[#allocation12 + $0x1e0] sm:$0xff]
    %v503 = vld [vmem:[#allocation12 + $0x1e8] sm:$0xff]
    %v504 = vld [vmem:[#allocation12 + $0x1f0] sm:$0xff]
    %v505 = vld [vmem:[#allocation12 + $0x1f8] sm:$0xff]
    %v506 = vld [vmem:[#allocation12 + $0x200] sm:$0xff]
    %v507 = vld [vmem:[#allocation12 + $0x208] sm:$0xff]
    %v508 = vld [vmem:[#allocation12 + $0x210] sm:$0xff]
    %v509 = vld [vmem:[#allocation12 + $0x218] sm:$0xff]
    %v510 = vld [vmem:[#allocation12 + $0x220] sm:$0xff]
    %v511 = vld [vmem:[#allocation12 + $0x228] sm:$0xff]
    %v512 = vld [vmem:[#allocation12 + $0x230] sm:$0xff]
    %v513 = vld [vmem:[#allocation12 + $0x238] sm:$0xff]
    %v514 = vld [vmem:[#allocation12 + $0x240] sm:$0xff]
    %v515 = vld [vmem:[#allocation12 + $0x248] sm:$0xff]
    %v516 = vld [vmem:[#allocation12 + $0x250] sm:$0xff]
    %v517 = vld [vmem:[#allocation12 + $0x258] sm:$0xff]
    %v518 = vld [vmem:[#allocation12 + $0x260] sm:$0xff]
    %v519 = vld [vmem:[#allocation12 + $0x268] sm:$0xff]
    %v520 = vld [vmem:[#allocation12 + $0x270] sm:$0xff]
    %v521 = vld [vmem:[#allocation12 + $0x278] sm:$0xff]
    %v522 = vld [vmem:[#allocation12 + $0x280] sm:$0xff]
    %v523 = vld [vmem:[#allocation12 + $0x288] sm:$0xff]
    %v524 = vld [vmem:[#allocation12 + $0x290] sm:$0xff]
    %v525 = vld [vmem:[#allocation12 + $0x298] sm:$0xff]
    %v526 = vld [vmem:[#allocation12 + $0x2a0] sm:$0xff]
    %v527 = vld [vmem:[#allocation12 + $0x2a8] sm:$0xff]
    %v528 = vld [vmem:[#allocation12 + $0x2b0] sm:$0xff]
    %v529 = vld [vmem:[#allocation12 + $0x2b8] sm:$0xff]
    %v530 = vld [vmem:[#allocation12 + $0x2c0] sm:$0xff]
    %v531 = vld [vmem:[#allocation12 + $0x2c8] sm:$0xff]
    %v532 = vld [vmem:[#allocation12 + $0x2d0] sm:$0xff]
    %v533 = vld [vmem:[#allocation12 + $0x2d8] sm:$0xff]
    %v534 = vld [vmem:[#allocation12 + $0x2e0] sm:$0xff]
    %v535 = vld [vmem:[#allocation12 + $0x2e8] sm:$0xff]
    %v536 = vld [vmem:[#allocation12 + $0x2f0] sm:$0xff]
    %v537 = vld [vmem:[#allocation12 + $0x2f8] sm:$0xff]
    %v538 = vld [vmem:[#allocation12 + $0x300] sm:$0xff]
    %v539 = vld [vmem:[#allocation12 + $0x308] sm:$0xff]
    %v540 = vld [vmem:[#allocation12 + $0x310] sm:$0xff]
    %v541 = vld [vmem:[#allocation12 + $0x318] sm:$0xff]
    %v542 = vld [vmem:[#allocation12 + $0x320] sm:$0xff]
    %v543 = vld [vmem:[#allocation12 + $0x328] sm:$0xff]
    %v544 = vld [vmem:[#allocation12 + $0x330] sm:$0xff]
    %v545 = vld [vmem:[#allocation12 + $0x338] sm:$0xff]
    %v546 = vld [vmem:[#allocation12 + $0x340] sm:$0xff]
    %v547 = vld [vmem:[#allocation12 + $0x348] sm:$0xff]
    %v548 = vld [vmem:[#allocation12 + $0x350] sm:$0xff]
    %v549 = vld [vmem:[#allocation12 + $0x358] sm:$0xff]
    %v550 = vld [vmem:[#allocation12 + $0x360] sm:$0xff]
    %v551 = vld [vmem:[#allocation12 + $0x368] sm:$0xff]
    %v552 = vld [vmem:[#allocation12 + $0x370] sm:$0xff]
    %v553 = vld [vmem:[#allocation12 + $0x378] sm:$0xff]
    %v554 = vld [vmem:[#allocation12 + $0x380] sm:$0xff]
    %v555 = vld [vmem:[#allocation12 + $0x388] sm:$0xff]
    %v556 = vld [vmem:[#allocation12 + $0x390] sm:$0xff]
    %v557 = vld [vmem:[#allocation12 + $0x398] sm:$0xff]
    %v558 = vld [vmem:[#allocation12 + $0x3a0] sm:$0xff]
    %v559 = vld [vmem:[#allocation12 + $0x3a8] sm:$0xff]
    %v560 = vld [vmem:[#allocation12 + $0x3b0] sm:$0xff]
    %v561 = vld [vmem:[#allocation12 + $0x3b8] sm:$0xff]
    %v562 = vld [vmem:[#allocation12 + $0x3c0] sm:$0xff]
    %v563 = vld [vmem:[#allocation12 + $0x3c8] sm:$0xff]
    %v564 = vld [vmem:[#allocation12 + $0x3d0] sm:$0xff]
    %v565 = vld [vmem:[#allocation12 + $0x3d8] sm:$0xff]
    %v566 = vld [vmem:[#allocation12 + $0x3e0] sm:$0xff]
    %v567 = vld [vmem:[#allocation12 + $0x3e8] sm:$0xff]
    %v568 = vld [vmem:[#allocation12 + $0x3f0] sm:$0xff]
    %v569 = vld [vmem:[#allocation12 + $0x3f8] sm:$0xff]
    %v570 = vld [vmem:[#allocation12 + $0x400] sm:$0xff]
    %v571 = vld [vmem:[#allocation12 + $0x408] sm:$0xff]
    %v572 = vld [vmem:[#allocation12 + $0x410] sm:$0xff]
    %v573 = vld [vmem:[#allocation12 + $0x418] sm:$0xff]
    %v574 = vld [vmem:[#allocation12 + $0x420] sm:$0xff]
    %v575 = vld [vmem:[#allocation12 + $0x428] sm:$0xff]
    %v576 = vld [vmem:[#allocation12 + $0x430] sm:$0xff]
    %v577 = vld [vmem:[#allocation12 + $0x438] sm:$0xff]
    %v578 = vld [vmem:[#allocation12 + $0x440] sm:$0xff]
    %v579 = vld [vmem:[#allocation12 + $0x448] sm:$0xff]
    %v580 = vld [vmem:[#allocation12 + $0x450] sm:$0xff]
    %v581 = vld [vmem:[#allocation12 + $0x458] sm:$0xff]
    %v582 = vld [vmem:[#allocation12 + $0x460] sm:$0xff]
    %v583 = vld [vmem:[#allocation12 + $0x468] sm:$0xff]
    %v584 = vld [vmem:[#allocation12 + $0x470] sm:$0xff]
    %v585 = vld [vmem:[#allocation12 + $0x478] sm:$0xff]
    %v586 = vld [vmem:[#allocation12 + $0x480] sm:$0xff]
    %v587 = vld [vmem:[#allocation12 + $0x488] sm:$0xff]
    %v588 = vld [vmem:[#allocation12 + $0x490] sm:$0xff]
    %v589 = vld [vmem:[#allocation12 + $0x498] sm:$0xff]
    %v590 = vld [vmem:[#allocation12 + $0x4a0] sm:$0xff]
    %v591 = vld [vmem:[#allocation12 + $0x4a8] sm:$0xff]
    %v592 = vld [vmem:[#allocation12 + $0x4b0] sm:$0xff]
    %v593 = vld [vmem:[#allocation12 + $0x4b8] sm:$0xff]
    %v594 = vld [vmem:[#allocation12 + $0x4c0] sm:$0xff]
    %v595 = vld [vmem:[#allocation12 + $0x4c8] sm:$0xff]
    %v596 = vld [vmem:[#allocation12 + $0x4d0] sm:$0xff]
    %v597 = vld [vmem:[#allocation12 + $0x4d8] sm:$0xff]
    %v598 = vld [vmem:[#allocation12 + $0x4e0] sm:$0xff]
    %v599 = vld [vmem:[#allocation12 + $0x4e8] sm:$0xff]
    %v600 = vld [vmem:[#allocation12 + $0x4f0] sm:$0xff]
    %v601 = vld [vmem:[#allocation12 + $0x4f8] sm:$0xff]
    %v602 = vld [vmem:[#allocation12 + $0x500] sm:$0xff]
    %v603 = vld [vmem:[#allocation12 + $0x508] sm:$0xff]
    %v604 = vld [vmem:[#allocation12 + $0x510] sm:$0xff]
    %v605 = vld [vmem:[#allocation12 + $0x518] sm:$0xff]
    %v606 = vld [vmem:[#allocation12 + $0x520] sm:$0xff]
    %v607 = vld [vmem:[#allocation12 + $0x528] sm:$0xff]
    %v608 = vld [vmem:[#allocation12 + $0x530] sm:$0xff]
    %v609 = vld [vmem:[#allocation12 + $0x538] sm:$0xff]
    %v610 = vld [vmem:[#allocation12 + $0x540] sm:$0xff]
    %v611 = vld [vmem:[#allocation12 + $0x548] sm:$0xff]
    %v612 = vld [vmem:[#allocation12 + $0x550] sm:$0xff]
    %v613 = vld [vmem:[#allocation12 + $0x558] sm:$0xff]
    %v614 = vld [vmem:[#allocation12 + $0x560] sm:$0xff]
    %v615 = vld [vmem:[#allocation12 + $0x568] sm:$0xff]
    %v616 = vld [vmem:[#allocation12 + $0x570] sm:$0xff]
    %v617 = vld [vmem:[#allocation12 + $0x578] sm:$0xff]
    %v618 = vld [vmem:[#allocation12 + $0x580] sm:$0xff]
    %v619 = vld [vmem:[#allocation12 + $0x588] sm:$0xff]
    %v620 = vld [vmem:[#allocation12 + $0x590] sm:$0xff]
    %v621 = vld [vmem:[#allocation12 + $0x598] sm:$0xff]
    %v622 = vld [vmem:[#allocation12 + $0x5a0] sm:$0xff]
    %v623 = vld [vmem:[#allocation12 + $0x5a8] sm:$0xff]
    %v624 = vld [vmem:[#allocation12 + $0x5b0] sm:$0xff]
    %v625 = vld [vmem:[#allocation12 + $0x5b8] sm:$0xff]
    %v626 = vld [vmem:[#allocation12 + $0x5c0] sm:$0xff]
    %v627 = vld [vmem:[#allocation12 + $0x5c8] sm:$0xff]
    %v628 = vld [vmem:[#allocation12 + $0x5d0] sm:$0xff]
    %v629 = vld [vmem:[#allocation12 + $0x5d8] sm:$0xff]
    %v630 = vld [vmem:[#allocation12 + $0x5e0] sm:$0xff]
    %v631 = vld [vmem:[#allocation12 + $0x5e8] sm:$0xff]
    %v632 = vld [vmem:[#allocation12 + $0x5f0] sm:$0xff]
    %v633 = vld [vmem:[#allocation12 + $0x5f8] sm:$0xff]
    %v634 = vld [vmem:[#allocation12 + $0x600] sm:$0xff]
    %v635 = vld [vmem:[#allocation12 + $0x608] sm:$0xff]
    %v636 = vld [vmem:[#allocation12 + $0x610] sm:$0xff]
    %v637 = vld [vmem:[#allocation12 + $0x618] sm:$0xff]
    %v638 = vld [vmem:[#allocation12 + $0x620] sm:$0xff]
    %v639 = vld [vmem:[#allocation12 + $0x628] sm:$0xff]
    %v640 = vld [vmem:[#allocation12 + $0x630] sm:$0xff]
    %v641 = vld [vmem:[#allocation12 + $0x638] sm:$0xff]
    %v642 = vld [vmem:[#allocation12 + $0x640] sm:$0xff]
    %v643 = vld [vmem:[#allocation12 + $0x648] sm:$0xff]
    %v644 = vld [vmem:[#allocation12 + $0x650] sm:$0xff]
    %v645 = vld [vmem:[#allocation12 + $0x658] sm:$0xff]
    %v646 = vld [vmem:[#allocation12 + $0x660] sm:$0xff]
    %v647 = vld [vmem:[#allocation12 + $0x668] sm:$0xff]
    %v648 = vld [vmem:[#allocation12 + $0x670] sm:$0xff]
    %v649 = vld [vmem:[#allocation12 + $0x678] sm:$0xff]
    %v650 = vld [vmem:[#allocation12 + $0x680] sm:$0xff]
    %v651 = vld [vmem:[#allocation12 + $0x688] sm:$0xff]
    %v652 = vld [vmem:[#allocation12 + $0x690] sm:$0xff]
    %v653 = vld [vmem:[#allocation12 + $0x698] sm:$0xff]
    %v654 = vld [vmem:[#allocation12 + $0x6a0] sm:$0xff]
    %v655 = vld [vmem:[#allocation12 + $0x6a8] sm:$0xff]
    %v656 = vld [vmem:[#allocation12 + $0x6b0] sm:$0xff]
    %v657 = vld [vmem:[#allocation12 + $0x6b8] sm:$0xff]
    %v658 = vld [vmem:[#allocation12 + $0x6c0] sm:$0xff]
    %v659 = vld [vmem:[#allocation12 + $0x6c8] sm:$0xff]
    %v660 = vld [vmem:[#allocation12 + $0x6d0] sm:$0xff]
    %v661 = vld [vmem:[#allocation12 + $0x6d8] sm:$0xff]
    %v662 = vld [vmem:[#allocation12 + $0x6e0] sm:$0xff]
    %v663 = vld [vmem:[#allocation12 + $0x6e8] sm:$0xff]
    %v664 = vld [vmem:[#allocation12 + $0x6f0] sm:$0xff]
    %v665 = vld [vmem:[#allocation12 + $0x6f8] sm:$0xff]
    %v666 = vld [vmem:[#allocation12 + $0x700] sm:$0xff]
    %v667 = vld [vmem:[#allocation12 + $0x708] sm:$0xff]
    %v668 = vld [vmem:[#allocation12 + $0x710] sm:$0xff]
    %v669 = vld [vmem:[#allocation12 + $0x718] sm:$0xff]
    %v670 = vld [vmem:[#allocation12 + $0x720] sm:$0xff]
    %v671 = vld [vmem:[#allocation12 + $0x728] sm:$0xff]
    %v672 = vld [vmem:[#allocation12 + $0x730] sm:$0xff]
    %v673 = vld [vmem:[#allocation12 + $0x738] sm:$0xff]
    %v674 = vld [vmem:[#allocation12 + $0x740] sm:$0xff]
    %v675 = vld [vmem:[#allocation12 + $0x748] sm:$0xff]
    %v676 = vld [vmem:[#allocation12 + $0x750] sm:$0xff]
    %v677 = vld [vmem:[#allocation12 + $0x758] sm:$0xff]
    %v678 = vld [vmem:[#allocation12 + $0x760] sm:$0xff]
    %v679 = vld [vmem:[#allocation12 + $0x768] sm:$0xff]
    %v680 = vld [vmem:[#allocation12 + $0x770] sm:$0xff]
    %v681 = vld [vmem:[#allocation12 + $0x778] sm:$0xff]
    %v682 = vld [vmem:[#allocation12 + $0x780] sm:$0xff]
    %v683 = vld [vmem:[#allocation12 + $0x788] sm:$0xff]
    %v684 = vld [vmem:[#allocation12 + $0x790] sm:$0xff]
    %v685 = vld [vmem:[#allocation12 + $0x798] sm:$0xff]
    %v686 = vld [vmem:[#allocation12 + $0x7a0] sm:$0xff]
    %v687 = vld [vmem:[#allocation12 + $0x7a8] sm:$0xff]
    %v688 = vld [vmem:[#allocation12 + $0x7b0] sm:$0xff]
    %v689 = vld [vmem:[#allocation12 + $0x7b8] sm:$0xff]
    %v690 = vld [vmem:[#allocation12 + $0x7c0] sm:$0xff]
    %v691 = vld [vmem:[#allocation12 + $0x7c8] sm:$0xff]
    %v692 = vld [vmem:[#allocation12 + $0x7d0] sm:$0xff]
    %v693 = vld [vmem:[#allocation12 + $0x7d8] sm:$0xff]
    %v694 = vld [vmem:[#allocation12 + $0x7e0] sm:$0xff]
    %v695 = vld [vmem:[#allocation12 + $0x7e8] sm:$0xff]
    %v696 = vld [vmem:[#allocation12 + $0x7f0] sm:$0xff]
    %v697 = vld [vmem:[#allocation12 + $0x7f8] sm:$0xff]
    %v698 = vld [vmem:[#allocation14] sm:$0xff]
    %v700 = vlaneseq
    %v701 = vshrl.u32 %v700, 7
    %v702 = vsub.s32 0, %v701
    %v703 = vrot.slane %v698, %v702
    %v704 = vlaneseq
    %v705 = vshrl.u32 %v704, 7
    %v706 = vsub.s32 1, %v705
    %v707 = vrot.slane %v698, %v706
    %v708 = vlaneseq
    %v709 = vshrl.u32 %v708, 7
    %v710 = vsub.s32 2, %v709
    %v711 = vrot.slane %v698, %v710
    %v712 = vlaneseq
    %v713 = vshrl.u32 %v712, 7
    %v714 = vsub.s32 3, %v713
    %v715 = vrot.slane %v698, %v714
    %v716 = vlaneseq
    %v717 = vshrl.u32 %v716, 7
    %v718 = vsub.s32 4, %v717
    %v719 = vrot.slane %v698, %v718
    %v720 = vlaneseq
    %v721 = vshrl.u32 %v720, 7
    %v722 = vsub.s32 5, %v721
    %v723 = vrot.slane %v698, %v722
    %v724 = vlaneseq
    %v725 = vshrl.u32 %v724, 7
    %v726 = vsub.s32 6, %v725
    %v727 = vrot.slane %v698, %v726
    %v728 = vlaneseq
    %v729 = vshrl.u32 %v728, 7
    %v730 = vsub.s32 7, %v729
    %v731 = vrot.slane %v698, %v730
    %v996 = vunpack.c.l.b16 %v442
    %v997 = vunpack.c.h.b16 %v442
    %v998 = vunpack.c.l.b16 %v443
    %v999 = vunpack.c.h.b16 %v443
    %v1000 = vunpack.c.l.b16 %v444
    %v1001 = vunpack.c.h.b16 %v444
    %v1002 = vunpack.c.l.b16 %v445
    %v1003 = vunpack.c.h.b16 %v445
    %v1004 = vunpack.c.l.b16 %v446
    %v1005 = vunpack.c.h.b16 %v446
    %v1006 = vunpack.c.l.b16 %v447
    %v1007 = vunpack.c.h.b16 %v447
    %v1008 = vunpack.c.l.b16 %v448
    %v1009 = vunpack.c.h.b16 %v448
    %v1010 = vunpack.c.l.b16 %v449
    %v1011 = vunpack.c.h.b16 %v449
    %v1012 = vunpack.c.l.b16 %v450
    %v1013 = vunpack.c.h.b16 %v450
    %v1014 = vunpack.c.l.b16 %v451
    %v1015 = vunpack.c.h.b16 %v451
    %v1016 = vunpack.c.l.b16 %v452
    %v1017 = vunpack.c.h.b16 %v452
    %v1018 = vunpack.c.l.b16 %v453
    %v1019 = vunpack.c.h.b16 %v453
    %v1020 = vunpack.c.l.b16 %v454
    %v1021 = vunpack.c.h.b16 %v454
    %v1022 = vunpack.c.l.b16 %v455
    %v1023 = vunpack.c.h.b16 %v455
    %v1024 = vunpack.c.l.b16 %v456
    %v1025 = vunpack.c.h.b16 %v456
    %v1026 = vunpack.c.l.b16 %v457
    %v1027 = vunpack.c.h.b16 %v457
    %v1028 = vunpack.c.l.b16 %v458
    %v1029 = vunpack.c.h.b16 %v458
    %v1030 = vunpack.c.l.b16 %v459
    %v1031 = vunpack.c.h.b16 %v459
    %v1032 = vunpack.c.l.b16 %v460
    %v1033 = vunpack.c.h.b16 %v460
    %v1034 = vunpack.c.l.b16 %v461
    %v1035 = vunpack.c.h.b16 %v461
    %v1036 = vunpack.c.l.b16 %v462
    %v1037 = vunpack.c.h.b16 %v462
    %v1038 = vunpack.c.l.b16 %v463
    %v1039 = vunpack.c.h.b16 %v463
    %v1040 = vunpack.c.l.b16 %v464
    %v1041 = vunpack.c.h.b16 %v464
    %v1042 = vunpack.c.l.b16 %v465
    %v1043 = vunpack.c.h.b16 %v465
    %v1044 = vunpack.c.l.b16 %v466
    %v1045 = vunpack.c.h.b16 %v466
    %v1046 = vunpack.c.l.b16 %v467
    %v1047 = vunpack.c.h.b16 %v467
    %v1048 = vunpack.c.l.b16 %v468
    %v1049 = vunpack.c.h.b16 %v468
    %v1050 = vunpack.c.l.b16 %v469
    %v1051 = vunpack.c.h.b16 %v469
    %v1052 = vunpack.c.l.b16 %v470
    %v1053 = vunpack.c.h.b16 %v470
    %v1054 = vunpack.c.l.b16 %v471
    %v1055 = vunpack.c.h.b16 %v471
    %v1056 = vunpack.c.l.b16 %v472
    %v1057 = vunpack.c.h.b16 %v472
    %v1058 = vunpack.c.l.b16 %v473
    %v1059 = vunpack.c.h.b16 %v473
    %v1060 = vunpack.c.l.b16 %v474
    %v1061 = vunpack.c.h.b16 %v474
    %v1062 = vunpack.c.l.b16 %v475
    %v1063 = vunpack.c.h.b16 %v475
    %v1064 = vunpack.c.l.b16 %v476
    %v1065 = vunpack.c.h.b16 %v476
    %v1066 = vunpack.c.l.b16 %v477
    %v1067 = vunpack.c.h.b16 %v477
    %v1068 = vunpack.c.l.b16 %v478
    %v1069 = vunpack.c.h.b16 %v478
    %v1070 = vunpack.c.l.b16 %v479
    %v1071 = vunpack.c.h.b16 %v479
    %v1072 = vunpack.c.l.b16 %v480
    %v1073 = vunpack.c.h.b16 %v480
    %v1074 = vunpack.c.l.b16 %v481
    %v1075 = vunpack.c.h.b16 %v481
    %v1076 = vunpack.c.l.b16 %v482
    %v1077 = vunpack.c.h.b16 %v482
    %v1078 = vunpack.c.l.b16 %v483
    %v1079 = vunpack.c.h.b16 %v483
    %v1080 = vunpack.c.l.b16 %v484
    %v1081 = vunpack.c.h.b16 %v484
    %v1082 = vunpack.c.l.b16 %v485
    %v1083 = vunpack.c.h.b16 %v485
    %v1084 = vunpack.c.l.b16 %v486
    %v1085 = vunpack.c.h.b16 %v486
    %v1086 = vunpack.c.l.b16 %v487
    %v1087 = vunpack.c.h.b16 %v487
    %v1088 = vunpack.c.l.b16 %v488
    %v1089 = vunpack.c.h.b16 %v488
    %v1090 = vunpack.c.l.b16 %v489
    %v1091 = vunpack.c.h.b16 %v489
    %v1092 = vunpack.c.l.b16 %v490
    %v1093 = vunpack.c.h.b16 %v490
    %v1094 = vunpack.c.l.b16 %v491
    %v1095 = vunpack.c.h.b16 %v491
    %v1096 = vunpack.c.l.b16 %v492
    %v1097 = vunpack.c.h.b16 %v492
    %v1098 = vunpack.c.l.b16 %v493
    %v1099 = vunpack.c.h.b16 %v493
    %v1100 = vunpack.c.l.b16 %v494
    %v1101 = vunpack.c.h.b16 %v494
    %v1102 = vunpack.c.l.b16 %v495
    %v1103 = vunpack.c.h.b16 %v495
    %v1104 = vunpack.c.l.b16 %v496
    %v1105 = vunpack.c.h.b16 %v496
    %v1106 = vunpack.c.l.b16 %v497
    %v1107 = vunpack.c.h.b16 %v497
    %v1108 = vunpack.c.l.b16 %v498
    %v1109 = vunpack.c.h.b16 %v498
    %v1110 = vunpack.c.l.b16 %v499
    %v1111 = vunpack.c.h.b16 %v499
    %v1112 = vunpack.c.l.b16 %v500
    %v1113 = vunpack.c.h.b16 %v500
    %v1114 = vunpack.c.l.b16 %v501
    %v1115 = vunpack.c.h.b16 %v501
    %v1116 = vunpack.c.l.b16 %v502
    %v1117 = vunpack.c.h.b16 %v502
    %v1118 = vunpack.c.l.b16 %v503
    %v1119 = vunpack.c.h.b16 %v503
    %v1120 = vunpack.c.l.b16 %v504
    %v1121 = vunpack.c.h.b16 %v504
    %v1122 = vunpack.c.l.b16 %v505
    %v1123 = vunpack.c.h.b16 %v505
    %v1124 = vunpack.c.l.b16 %v506
    %v1125 = vunpack.c.h.b16 %v506
    %v1126 = vunpack.c.l.b16 %v507
    %v1127 = vunpack.c.h.b16 %v507
    %v1128 = vunpack.c.l.b16 %v508
    %v1129 = vunpack.c.h.b16 %v508
    %v1130 = vunpack.c.l.b16 %v509
    %v1131 = vunpack.c.h.b16 %v509
    %v1132 = vunpack.c.l.b16 %v510
    %v1133 = vunpack.c.h.b16 %v510
    %v1134 = vunpack.c.l.b16 %v511
    %v1135 = vunpack.c.h.b16 %v511
    %v1136 = vunpack.c.l.b16 %v512
    %v1137 = vunpack.c.h.b16 %v512
    %v1138 = vunpack.c.l.b16 %v513
    %v1139 = vunpack.c.h.b16 %v513
    %v1140 = vunpack.c.l.b16 %v514
    %v1141 = vunpack.c.h.b16 %v514
    %v1142 = vunpack.c.l.b16 %v515
    %v1143 = vunpack.c.h.b16 %v515
    %v1144 = vunpack.c.l.b16 %v516
    %v1145 = vunpack.c.h.b16 %v516
    %v1146 = vunpack.c.l.b16 %v517
    %v1147 = vunpack.c.h.b16 %v517
    %v1148 = vunpack.c.l.b16 %v518
    %v1149 = vunpack.c.h.b16 %v518
    %v1150 = vunpack.c.l.b16 %v519
    %v1151 = vunpack.c.h.b16 %v519
    %v1152 = vunpack.c.l.b16 %v520
    %v1153 = vunpack.c.h.b16 %v520
    %v1154 = vunpack.c.l.b16 %v521
    %v1155 = vunpack.c.h.b16 %v521
    %v1156 = vunpack.c.l.b16 %v522
    %v1157 = vunpack.c.h.b16 %v522
    %v1158 = vunpack.c.l.b16 %v523
    %v1159 = vunpack.c.h.b16 %v523
    %v1160 = vunpack.c.l.b16 %v524
    %v1161 = vunpack.c.h.b16 %v524
    %v1162 = vunpack.c.l.b16 %v525
    %v1163 = vunpack.c.h.b16 %v525
    %v1164 = vunpack.c.l.b16 %v526
    %v1165 = vunpack.c.h.b16 %v526
    %v1166 = vunpack.c.l.b16 %v527
    %v1167 = vunpack.c.h.b16 %v527
    %v1168 = vunpack.c.l.b16 %v528
    %v1169 = vunpack.c.h.b16 %v528
    %v1170 = vunpack.c.l.b16 %v529
    %v1171 = vunpack.c.h.b16 %v529
    %v1172 = vunpack.c.l.b16 %v530
    %v1173 = vunpack.c.h.b16 %v530
    %v1174 = vunpack.c.l.b16 %v531
    %v1175 = vunpack.c.h.b16 %v531
    %v1176 = vunpack.c.l.b16 %v532
    %v1177 = vunpack.c.h.b16 %v532
    %v1178 = vunpack.c.l.b16 %v533
    %v1179 = vunpack.c.h.b16 %v533
    %v1180 = vunpack.c.l.b16 %v534
    %v1181 = vunpack.c.h.b16 %v534
    %v1182 = vunpack.c.l.b16 %v535
    %v1183 = vunpack.c.h.b16 %v535
    %v1184 = vunpack.c.l.b16 %v536
    %v1185 = vunpack.c.h.b16 %v536
    %v1186 = vunpack.c.l.b16 %v537
    %v1187 = vunpack.c.h.b16 %v537
    %v1188 = vunpack.c.l.b16 %v538
    %v1189 = vunpack.c.h.b16 %v538
    %v1190 = vunpack.c.l.b16 %v539
    %v1191 = vunpack.c.h.b16 %v539
    %v1192 = vunpack.c.l.b16 %v540
    %v1193 = vunpack.c.h.b16 %v540
    %v1194 = vunpack.c.l.b16 %v541
    %v1195 = vunpack.c.h.b16 %v541
    %v1196 = vunpack.c.l.b16 %v542
    %v1197 = vunpack.c.h.b16 %v542
    %v1198 = vunpack.c.l.b16 %v543
    %v1199 = vunpack.c.h.b16 %v543
    %v1200 = vunpack.c.l.b16 %v544
    %v1201 = vunpack.c.h.b16 %v544
    %v1202 = vunpack.c.l.b16 %v545
    %v1203 = vunpack.c.h.b16 %v545
    %v1204 = vunpack.c.l.b16 %v546
    %v1205 = vunpack.c.h.b16 %v546
    %v1206 = vunpack.c.l.b16 %v547
    %v1207 = vunpack.c.h.b16 %v547
    %v1208 = vunpack.c.l.b16 %v548
    %v1209 = vunpack.c.h.b16 %v548
    %v1210 = vunpack.c.l.b16 %v549
    %v1211 = vunpack.c.h.b16 %v549
    %v1212 = vunpack.c.l.b16 %v550
    %v1213 = vunpack.c.h.b16 %v550
    %v1214 = vunpack.c.l.b16 %v551
    %v1215 = vunpack.c.h.b16 %v551
    %v1216 = vunpack.c.l.b16 %v552
    %v1217 = vunpack.c.h.b16 %v552
    %v1218 = vunpack.c.l.b16 %v553
    %v1219 = vunpack.c.h.b16 %v553
    %v1220 = vunpack.c.l.b16 %v554
    %v1221 = vunpack.c.h.b16 %v554
    %v1222 = vunpack.c.l.b16 %v555
    %v1223 = vunpack.c.h.b16 %v555
    %v1224 = vunpack.c.l.b16 %v556
    %v1225 = vunpack.c.h.b16 %v556
    %v1226 = vunpack.c.l.b16 %v557
    %v1227 = vunpack.c.h.b16 %v557
    %v1228 = vunpack.c.l.b16 %v558
    %v1229 = vunpack.c.h.b16 %v558
    %v1230 = vunpack.c.l.b16 %v559
    %v1231 = vunpack.c.h.b16 %v559
    %v1232 = vunpack.c.l.b16 %v560
    %v1233 = vunpack.c.h.b16 %v560
    %v1234 = vunpack.c.l.b16 %v561
    %v1235 = vunpack.c.h.b16 %v561
    %v1236 = vunpack.c.l.b16 %v562
    %v1237 = vunpack.c.h.b16 %v562
    %v1238 = vunpack.c.l.b16 %v563
    %v1239 = vunpack.c.h.b16 %v563
    %v1240 = vunpack.c.l.b16 %v564
    %v1241 = vunpack.c.h.b16 %v564
    %v1242 = vunpack.c.l.b16 %v565
    %v1243 = vunpack.c.h.b16 %v565
    %v1244 = vunpack.c.l.b16 %v566
    %v1245 = vunpack.c.h.b16 %v566
    %v1246 = vunpack.c.l.b16 %v567
    %v1247 = vunpack.c.h.b16 %v567
    %v1248 = vunpack.c.l.b16 %v568
    %v1249 = vunpack.c.h.b16 %v568
    %v1250 = vunpack.c.l.b16 %v569
    %v1251 = vunpack.c.h.b16 %v569
    %v1252 = vunpack.c.l.b16 %v570
    %v1253 = vunpack.c.h.b16 %v570
    %v1254 = vunpack.c.l.b16 %v571
    %v1255 = vunpack.c.h.b16 %v571
    %v1256 = vunpack.c.l.b16 %v572
    %v1257 = vunpack.c.h.b16 %v572
    %v1258 = vunpack.c.l.b16 %v573
    %v1259 = vunpack.c.h.b16 %v573
    %v1260 = vunpack.c.l.b16 %v574
    %v1261 = vunpack.c.h.b16 %v574
    %v1262 = vunpack.c.l.b16 %v575
    %v1263 = vunpack.c.h.b16 %v575
    %v1264 = vunpack.c.l.b16 %v576
    %v1265 = vunpack.c.h.b16 %v576
    %v1266 = vunpack.c.l.b16 %v577
    %v1267 = vunpack.c.h.b16 %v577
    %v1268 = vunpack.c.l.b16 %v578
    %v1269 = vunpack.c.h.b16 %v578
    %v1270 = vunpack.c.l.b16 %v579
    %v1271 = vunpack.c.h.b16 %v579
    %v1272 = vunpack.c.l.b16 %v580
    %v1273 = vunpack.c.h.b16 %v580
    %v1274 = vunpack.c.l.b16 %v581
    %v1275 = vunpack.c.h.b16 %v581
    %v1276 = vunpack.c.l.b16 %v582
    %v1277 = vunpack.c.h.b16 %v582
    %v1278 = vunpack.c.l.b16 %v583
    %v1279 = vunpack.c.h.b16 %v583
    %v1280 = vunpack.c.l.b16 %v584
    %v1281 = vunpack.c.h.b16 %v584
    %v1282 = vunpack.c.l.b16 %v585
    %v1283 = vunpack.c.h.b16 %v585
    %v1284 = vunpack.c.l.b16 %v586
    %v1285 = vunpack.c.h.b16 %v586
    %v1286 = vunpack.c.l.b16 %v587
    %v1287 = vunpack.c.h.b16 %v587
    %v1288 = vunpack.c.l.b16 %v588
    %v1289 = vunpack.c.h.b16 %v588
    %v1290 = vunpack.c.l.b16 %v589
    %v1291 = vunpack.c.h.b16 %v589
    %v1292 = vunpack.c.l.b16 %v590
    %v1293 = vunpack.c.h.b16 %v590
    %v1294 = vunpack.c.l.b16 %v591
    %v1295 = vunpack.c.h.b16 %v591
    %v1296 = vunpack.c.l.b16 %v592
    %v1297 = vunpack.c.h.b16 %v592
    %v1298 = vunpack.c.l.b16 %v593
    %v1299 = vunpack.c.h.b16 %v593
    %v1300 = vunpack.c.l.b16 %v594
    %v1301 = vunpack.c.h.b16 %v594
    %v1302 = vunpack.c.l.b16 %v595
    %v1303 = vunpack.c.h.b16 %v595
    %v1304 = vunpack.c.l.b16 %v596
    %v1305 = vunpack.c.h.b16 %v596
    %v1306 = vunpack.c.l.b16 %v597
    %v1307 = vunpack.c.h.b16 %v597
    %v1308 = vunpack.c.l.b16 %v598
    %v1309 = vunpack.c.h.b16 %v598
    %v1310 = vunpack.c.l.b16 %v599
    %v1311 = vunpack.c.h.b16 %v599
    %v1312 = vunpack.c.l.b16 %v600
    %v1313 = vunpack.c.h.b16 %v600
    %v1314 = vunpack.c.l.b16 %v601
    %v1315 = vunpack.c.h.b16 %v601
    %v1316 = vunpack.c.l.b16 %v602
    %v1317 = vunpack.c.h.b16 %v602
    %v1318 = vunpack.c.l.b16 %v603
    %v1319 = vunpack.c.h.b16 %v603
    %v1320 = vunpack.c.l.b16 %v604
    %v1321 = vunpack.c.h.b16 %v604
    %v1322 = vunpack.c.l.b16 %v605
    %v1323 = vunpack.c.h.b16 %v605
    %v1324 = vunpack.c.l.b16 %v606
    %v1325 = vunpack.c.h.b16 %v606
    %v1326 = vunpack.c.l.b16 %v607
    %v1327 = vunpack.c.h.b16 %v607
    %v1328 = vunpack.c.l.b16 %v608
    %v1329 = vunpack.c.h.b16 %v608
    %v1330 = vunpack.c.l.b16 %v609
    %v1331 = vunpack.c.h.b16 %v609
    %v1332 = vunpack.c.l.b16 %v610
    %v1333 = vunpack.c.h.b16 %v610
    %v1334 = vunpack.c.l.b16 %v611
    %v1335 = vunpack.c.h.b16 %v611
    %v1336 = vunpack.c.l.b16 %v612
    %v1337 = vunpack.c.h.b16 %v612
    %v1338 = vunpack.c.l.b16 %v613
    %v1339 = vunpack.c.h.b16 %v613
    %v1340 = vunpack.c.l.b16 %v614
    %v1341 = vunpack.c.h.b16 %v614
    %v1342 = vunpack.c.l.b16 %v615
    %v1343 = vunpack.c.h.b16 %v615
    %v1344 = vunpack.c.l.b16 %v616
    %v1345 = vunpack.c.h.b16 %v616
    %v1346 = vunpack.c.l.b16 %v617
    %v1347 = vunpack.c.h.b16 %v617
    %v1348 = vunpack.c.l.b16 %v618
    %v1349 = vunpack.c.h.b16 %v618
    %v1350 = vunpack.c.l.b16 %v619
    %v1351 = vunpack.c.h.b16 %v619
    %v1352 = vunpack.c.l.b16 %v620
    %v1353 = vunpack.c.h.b16 %v620
    %v1354 = vunpack.c.l.b16 %v621
    %v1355 = vunpack.c.h.b16 %v621
    %v1356 = vunpack.c.l.b16 %v622
    %v1357 = vunpack.c.h.b16 %v622
    %v1358 = vunpack.c.l.b16 %v623
    %v1359 = vunpack.c.h.b16 %v623
    %v1360 = vunpack.c.l.b16 %v624
    %v1361 = vunpack.c.h.b16 %v624
    %v1362 = vunpack.c.l.b16 %v625
    %v1363 = vunpack.c.h.b16 %v625
    %v1364 = vunpack.c.l.b16 %v626
    %v1365 = vunpack.c.h.b16 %v626
    %v1366 = vunpack.c.l.b16 %v627
    %v1367 = vunpack.c.h.b16 %v627
    %v1368 = vunpack.c.l.b16 %v628
    %v1369 = vunpack.c.h.b16 %v628
    %v1370 = vunpack.c.l.b16 %v629
    %v1371 = vunpack.c.h.b16 %v629
    %v1372 = vunpack.c.l.b16 %v630
    %v1373 = vunpack.c.h.b16 %v630
    %v1374 = vunpack.c.l.b16 %v631
    %v1375 = vunpack.c.h.b16 %v631
    %v1376 = vunpack.c.l.b16 %v632
    %v1377 = vunpack.c.h.b16 %v632
    %v1378 = vunpack.c.l.b16 %v633
    %v1379 = vunpack.c.h.b16 %v633
    %v1380 = vunpack.c.l.b16 %v634
    %v1381 = vunpack.c.h.b16 %v634
    %v1382 = vunpack.c.l.b16 %v635
    %v1383 = vunpack.c.h.b16 %v635
    %v1384 = vunpack.c.l.b16 %v636
    %v1385 = vunpack.c.h.b16 %v636
    %v1386 = vunpack.c.l.b16 %v637
    %v1387 = vunpack.c.h.b16 %v637
    %v1388 = vunpack.c.l.b16 %v638
    %v1389 = vunpack.c.h.b16 %v638
    %v1390 = vunpack.c.l.b16 %v639
    %v1391 = vunpack.c.h.b16 %v639
    %v1392 = vunpack.c.l.b16 %v640
    %v1393 = vunpack.c.h.b16 %v640
    %v1394 = vunpack.c.l.b16 %v641
    %v1395 = vunpack.c.h.b16 %v641
    %v1396 = vunpack.c.l.b16 %v642
    %v1397 = vunpack.c.h.b16 %v642
    %v1398 = vunpack.c.l.b16 %v643
    %v1399 = vunpack.c.h.b16 %v643
    %v1400 = vunpack.c.l.b16 %v644
    %v1401 = vunpack.c.h.b16 %v644
    %v1402 = vunpack.c.l.b16 %v645
    %v1403 = vunpack.c.h.b16 %v645
    %v1404 = vunpack.c.l.b16 %v646
    %v1405 = vunpack.c.h.b16 %v646
    %v1406 = vunpack.c.l.b16 %v647
    %v1407 = vunpack.c.h.b16 %v647
    %v1408 = vunpack.c.l.b16 %v648
    %v1409 = vunpack.c.h.b16 %v648
    %v1410 = vunpack.c.l.b16 %v649
    %v1411 = vunpack.c.h.b16 %v649
    %v1412 = vunpack.c.l.b16 %v650
    %v1413 = vunpack.c.h.b16 %v650
    %v1414 = vunpack.c.l.b16 %v651
    %v1415 = vunpack.c.h.b16 %v651
    %v1416 = vunpack.c.l.b16 %v652
    %v1417 = vunpack.c.h.b16 %v652
    %v1418 = vunpack.c.l.b16 %v653
    %v1419 = vunpack.c.h.b16 %v653
    %v1420 = vunpack.c.l.b16 %v654
    %v1421 = vunpack.c.h.b16 %v654
    %v1422 = vunpack.c.l.b16 %v655
    %v1423 = vunpack.c.h.b16 %v655
    %v1424 = vunpack.c.l.b16 %v656
    %v1425 = vunpack.c.h.b16 %v656
    %v1426 = vunpack.c.l.b16 %v657
    %v1427 = vunpack.c.h.b16 %v657
    %v1428 = vunpack.c.l.b16 %v658
    %v1429 = vunpack.c.h.b16 %v658
    %v1430 = vunpack.c.l.b16 %v659
    %v1431 = vunpack.c.h.b16 %v659
    %v1432 = vunpack.c.l.b16 %v660
    %v1433 = vunpack.c.h.b16 %v660
    %v1434 = vunpack.c.l.b16 %v661
    %v1435 = vunpack.c.h.b16 %v661
    %v1436 = vunpack.c.l.b16 %v662
    %v1437 = vunpack.c.h.b16 %v662
    %v1438 = vunpack.c.l.b16 %v663
    %v1439 = vunpack.c.h.b16 %v663
    %v1440 = vunpack.c.l.b16 %v664
    %v1441 = vunpack.c.h.b16 %v664
    %v1442 = vunpack.c.l.b16 %v665
    %v1443 = vunpack.c.h.b16 %v665
    %v1444 = vunpack.c.l.b16 %v666
    %v1445 = vunpack.c.h.b16 %v666
    %v1446 = vunpack.c.l.b16 %v667
    %v1447 = vunpack.c.h.b16 %v667
    %v1448 = vunpack.c.l.b16 %v668
    %v1449 = vunpack.c.h.b16 %v668
    %v1450 = vunpack.c.l.b16 %v669
    %v1451 = vunpack.c.h.b16 %v669
    %v1452 = vunpack.c.l.b16 %v670
    %v1453 = vunpack.c.h.b16 %v670
    %v1454 = vunpack.c.l.b16 %v671
    %v1455 = vunpack.c.h.b16 %v671
    %v1456 = vunpack.c.l.b16 %v672
    %v1457 = vunpack.c.h.b16 %v672
    %v1458 = vunpack.c.l.b16 %v673
    %v1459 = vunpack.c.h.b16 %v673
    %v1460 = vunpack.c.l.b16 %v674
    %v1461 = vunpack.c.h.b16 %v674
    %v1462 = vunpack.c.l.b16 %v675
    %v1463 = vunpack.c.h.b16 %v675
    %v1464 = vunpack.c.l.b16 %v676
    %v1465 = vunpack.c.h.b16 %v676
    %v1466 = vunpack.c.l.b16 %v677
    %v1467 = vunpack.c.h.b16 %v677
    %v1468 = vunpack.c.l.b16 %v678
    %v1469 = vunpack.c.h.b16 %v678
    %v1470 = vunpack.c.l.b16 %v679
    %v1471 = vunpack.c.h.b16 %v679
    %v1472 = vunpack.c.l.b16 %v680
    %v1473 = vunpack.c.h.b16 %v680
    %v1474 = vunpack.c.l.b16 %v681
    %v1475 = vunpack.c.h.b16 %v681
    %v1476 = vunpack.c.l.b16 %v682
    %v1477 = vunpack.c.h.b16 %v682
    %v1478 = vunpack.c.l.b16 %v683
    %v1479 = vunpack.c.h.b16 %v683
    %v1480 = vunpack.c.l.b16 %v684
    %v1481 = vunpack.c.h.b16 %v684
    %v1482 = vunpack.c.l.b16 %v685
    %v1483 = vunpack.c.h.b16 %v685
    %v1484 = vunpack.c.l.b16 %v686
    %v1485 = vunpack.c.h.b16 %v686
    %v1486 = vunpack.c.l.b16 %v687
    %v1487 = vunpack.c.h.b16 %v687
    %v1488 = vunpack.c.l.b16 %v688
    %v1489 = vunpack.c.h.b16 %v688
    %v1490 = vunpack.c.l.b16 %v689
    %v1491 = vunpack.c.h.b16 %v689
    %v1492 = vunpack.c.l.b16 %v690
    %v1493 = vunpack.c.h.b16 %v690
    %v1494 = vunpack.c.l.b16 %v691
    %v1495 = vunpack.c.h.b16 %v691
    %v1496 = vunpack.c.l.b16 %v692
    %v1497 = vunpack.c.h.b16 %v692
    %v1498 = vunpack.c.l.b16 %v693
    %v1499 = vunpack.c.h.b16 %v693
    %v1500 = vunpack.c.l.b16 %v694
    %v1501 = vunpack.c.h.b16 %v694
    %v1502 = vunpack.c.l.b16 %v695
    %v1503 = vunpack.c.h.b16 %v695
    %v1504 = vunpack.c.l.b16 %v696
    %v1505 = vunpack.c.h.b16 %v696
    %v1506 = vunpack.c.l.b16 %v697
    %v1507 = vunpack.c.h.b16 %v697
    %v1508 = vpack.c.b16 %v1004, %v996
    %v1509 = vpack.c.b16 %v1005, %v997
    %v1510 = vpack.c.b16 %v1006, %v998
    %v1511 = vpack.c.b16 %v1007, %v999
    %v1512 = vpack.c.b16 %v1008, %v1000
    %v1513 = vpack.c.b16 %v1009, %v1001
    %v1514 = vpack.c.b16 %v1010, %v1002
    %v1515 = vpack.c.b16 %v1011, %v1003
    %v1516 = vpack.c.b16 %v1020, %v1012
    %v1517 = vpack.c.b16 %v1021, %v1013
    %v1518 = vpack.c.b16 %v1022, %v1014
    %v1519 = vpack.c.b16 %v1023, %v1015
    %v1520 = vpack.c.b16 %v1024, %v1016
    %v1521 = vpack.c.b16 %v1025, %v1017
    %v1522 = vpack.c.b16 %v1026, %v1018
    %v1523 = vpack.c.b16 %v1027, %v1019
    %v1524 = vpack.c.b16 %v1036, %v1028
    %v1525 = vpack.c.b16 %v1037, %v1029
    %v1526 = vpack.c.b16 %v1038, %v1030
    %v1527 = vpack.c.b16 %v1039, %v1031
    %v1528 = vpack.c.b16 %v1040, %v1032
    %v1529 = vpack.c.b16 %v1041, %v1033
    %v1530 = vpack.c.b16 %v1042, %v1034
    %v1531 = vpack.c.b16 %v1043, %v1035
    %v1532 = vpack.c.b16 %v1052, %v1044
    %v1533 = vpack.c.b16 %v1053, %v1045
    %v1534 = vpack.c.b16 %v1054, %v1046
    %v1535 = vpack.c.b16 %v1055, %v1047
    %v1536 = vpack.c.b16 %v1056, %v1048
    %v1537 = vpack.c.b16 %v1057, %v1049
    %v1538 = vpack.c.b16 %v1058, %v1050
    %v1539 = vpack.c.b16 %v1059, %v1051
    %v1540 = vpack.c.b16 %v1068, %v1060
    %v1541 = vpack.c.b16 %v1069, %v1061
    %v1542 = vpack.c.b16 %v1070, %v1062
    %v1543 = vpack.c.b16 %v1071, %v1063
    %v1544 = vpack.c.b16 %v1072, %v1064
    %v1545 = vpack.c.b16 %v1073, %v1065
    %v1546 = vpack.c.b16 %v1074, %v1066
    %v1547 = vpack.c.b16 %v1075, %v1067
    %v1548 = vpack.c.b16 %v1084, %v1076
    %v1549 = vpack.c.b16 %v1085, %v1077
    %v1550 = vpack.c.b16 %v1086, %v1078
    %v1551 = vpack.c.b16 %v1087, %v1079
    %v1552 = vpack.c.b16 %v1088, %v1080
    %v1553 = vpack.c.b16 %v1089, %v1081
    %v1554 = vpack.c.b16 %v1090, %v1082
    %v1555 = vpack.c.b16 %v1091, %v1083
    %v1556 = vpack.c.b16 %v1100, %v1092
    %v1557 = vpack.c.b16 %v1101, %v1093
    %v1558 = vpack.c.b16 %v1102, %v1094
    %v1559 = vpack.c.b16 %v1103, %v1095
    %v1560 = vpack.c.b16 %v1104, %v1096
    %v1561 = vpack.c.b16 %v1105, %v1097
    %v1562 = vpack.c.b16 %v1106, %v1098
    %v1563 = vpack.c.b16 %v1107, %v1099
    %v1564 = vpack.c.b16 %v1116, %v1108
    %v1565 = vpack.c.b16 %v1117, %v1109
    %v1566 = vpack.c.b16 %v1118, %v1110
    %v1567 = vpack.c.b16 %v1119, %v1111
    %v1568 = vpack.c.b16 %v1120, %v1112
    %v1569 = vpack.c.b16 %v1121, %v1113
    %v1570 = vpack.c.b16 %v1122, %v1114
    %v1571 = vpack.c.b16 %v1123, %v1115
    %v1572 = vpack.c.b16 %v1132, %v1124
    %v1573 = vpack.c.b16 %v1133, %v1125
    %v1574 = vpack.c.b16 %v1134, %v1126
    %v1575 = vpack.c.b16 %v1135, %v1127
    %v1576 = vpack.c.b16 %v1136, %v1128
    %v1577 = vpack.c.b16 %v1137, %v1129
    %v1578 = vpack.c.b16 %v1138, %v1130
    %v1579 = vpack.c.b16 %v1139, %v1131
    %v1580 = vpack.c.b16 %v1148, %v1140
    %v1581 = vpack.c.b16 %v1149, %v1141
    %v1582 = vpack.c.b16 %v1150, %v1142
    %v1583 = vpack.c.b16 %v1151, %v1143
    %v1584 = vpack.c.b16 %v1152, %v1144
    %v1585 = vpack.c.b16 %v1153, %v1145
    %v1586 = vpack.c.b16 %v1154, %v1146
    %v1587 = vpack.c.b16 %v1155, %v1147
    %v1588 = vpack.c.b16 %v1164, %v1156
    %v1589 = vpack.c.b16 %v1165, %v1157
    %v1590 = vpack.c.b16 %v1166, %v1158
    %v1591 = vpack.c.b16 %v1167, %v1159
    %v1592 = vpack.c.b16 %v1168, %v1160
    %v1593 = vpack.c.b16 %v1169, %v1161
    %v1594 = vpack.c.b16 %v1170, %v1162
    %v1595 = vpack.c.b16 %v1171, %v1163
    %v1596 = vpack.c.b16 %v1180, %v1172
    %v1597 = vpack.c.b16 %v1181, %v1173
    %v1598 = vpack.c.b16 %v1182, %v1174
    %v1599 = vpack.c.b16 %v1183, %v1175
    %v1600 = vpack.c.b16 %v1184, %v1176
    %v1601 = vpack.c.b16 %v1185, %v1177
    %v1602 = vpack.c.b16 %v1186, %v1178
    %v1603 = vpack.c.b16 %v1187, %v1179
    %v1604 = vpack.c.b16 %v1196, %v1188
    %v1605 = vpack.c.b16 %v1197, %v1189
    %v1606 = vpack.c.b16 %v1198, %v1190
    %v1607 = vpack.c.b16 %v1199, %v1191
    %v1608 = vpack.c.b16 %v1200, %v1192
    %v1609 = vpack.c.b16 %v1201, %v1193
    %v1610 = vpack.c.b16 %v1202, %v1194
    %v1611 = vpack.c.b16 %v1203, %v1195
    %v1612 = vpack.c.b16 %v1212, %v1204
    %v1613 = vpack.c.b16 %v1213, %v1205
    %v1614 = vpack.c.b16 %v1214, %v1206
    %v1615 = vpack.c.b16 %v1215, %v1207
    %v1616 = vpack.c.b16 %v1216, %v1208
    %v1617 = vpack.c.b16 %v1217, %v1209
    %v1618 = vpack.c.b16 %v1218, %v1210
    %v1619 = vpack.c.b16 %v1219, %v1211
    %v1620 = vpack.c.b16 %v1228, %v1220
    %v1621 = vpack.c.b16 %v1229, %v1221
    %v1622 = vpack.c.b16 %v1230, %v1222
    %v1623 = vpack.c.b16 %v1231, %v1223
    %v1624 = vpack.c.b16 %v1232, %v1224
    %v1625 = vpack.c.b16 %v1233, %v1225
    %v1626 = vpack.c.b16 %v1234, %v1226
    %v1627 = vpack.c.b16 %v1235, %v1227
    %v1628 = vpack.c.b16 %v1244, %v1236
    %v1629 = vpack.c.b16 %v1245, %v1237
    %v1630 = vpack.c.b16 %v1246, %v1238
    %v1631 = vpack.c.b16 %v1247, %v1239
    %v1632 = vpack.c.b16 %v1248, %v1240
    %v1633 = vpack.c.b16 %v1249, %v1241
    %v1634 = vpack.c.b16 %v1250, %v1242
    %v1635 = vpack.c.b16 %v1251, %v1243
    %v1636 = vpack.c.b16 %v1260, %v1252
    %v1637 = vpack.c.b16 %v1261, %v1253
    %v1638 = vpack.c.b16 %v1262, %v1254
    %v1639 = vpack.c.b16 %v1263, %v1255
    %v1640 = vpack.c.b16 %v1264, %v1256
    %v1641 = vpack.c.b16 %v1265, %v1257
    %v1642 = vpack.c.b16 %v1266, %v1258
    %v1643 = vpack.c.b16 %v1267, %v1259
    %v1644 = vpack.c.b16 %v1276, %v1268
    %v1645 = vpack.c.b16 %v1277, %v1269
    %v1646 = vpack.c.b16 %v1278, %v1270
    %v1647 = vpack.c.b16 %v1279, %v1271
    %v1648 = vpack.c.b16 %v1280, %v1272
    %v1649 = vpack.c.b16 %v1281, %v1273
    %v1650 = vpack.c.b16 %v1282, %v1274
    %v1651 = vpack.c.b16 %v1283, %v1275
    %v1652 = vpack.c.b16 %v1292, %v1284
    %v1653 = vpack.c.b16 %v1293, %v1285
    %v1654 = vpack.c.b16 %v1294, %v1286
    %v1655 = vpack.c.b16 %v1295, %v1287
    %v1656 = vpack.c.b16 %v1296, %v1288
    %v1657 = vpack.c.b16 %v1297, %v1289
    %v1658 = vpack.c.b16 %v1298, %v1290
    %v1659 = vpack.c.b16 %v1299, %v1291
    %v1660 = vpack.c.b16 %v1308, %v1300
    %v1661 = vpack.c.b16 %v1309, %v1301
    %v1662 = vpack.c.b16 %v1310, %v1302
    %v1663 = vpack.c.b16 %v1311, %v1303
    %v1664 = vpack.c.b16 %v1312, %v1304
    %v1665 = vpack.c.b16 %v1313, %v1305
    %v1666 = vpack.c.b16 %v1314, %v1306
    %v1667 = vpack.c.b16 %v1315, %v1307
    %v1668 = vpack.c.b16 %v1324, %v1316
    %v1669 = vpack.c.b16 %v1325, %v1317
    %v1670 = vpack.c.b16 %v1326, %v1318
    %v1671 = vpack.c.b16 %v1327, %v1319
    %v1672 = vpack.c.b16 %v1328, %v1320
    %v1673 = vpack.c.b16 %v1329, %v1321
    %v1674 = vpack.c.b16 %v1330, %v1322
    %v1675 = vpack.c.b16 %v1331, %v1323
    %v1676 = vpack.c.b16 %v1340, %v1332
    %v1677 = vpack.c.b16 %v1341, %v1333
    %v1678 = vpack.c.b16 %v1342, %v1334
    %v1679 = vpack.c.b16 %v1343, %v1335
    %v1680 = vpack.c.b16 %v1344, %v1336
    %v1681 = vpack.c.b16 %v1345, %v1337
    %v1682 = vpack.c.b16 %v1346, %v1338
    %v1683 = vpack.c.b16 %v1347, %v1339
    %v1684 = vpack.c.b16 %v1356, %v1348
    %v1685 = vpack.c.b16 %v1357, %v1349
    %v1686 = vpack.c.b16 %v1358, %v1350
    %v1687 = vpack.c.b16 %v1359, %v1351
    %v1688 = vpack.c.b16 %v1360, %v1352
    %v1689 = vpack.c.b16 %v1361, %v1353
    %v1690 = vpack.c.b16 %v1362, %v1354
    %v1691 = vpack.c.b16 %v1363, %v1355
    %v1692 = vpack.c.b16 %v1372, %v1364
    %v1693 = vpack.c.b16 %v1373, %v1365
    %v1694 = vpack.c.b16 %v1374, %v1366
    %v1695 = vpack.c.b16 %v1375, %v1367
    %v1696 = vpack.c.b16 %v1376, %v1368
    %v1697 = vpack.c.b16 %v1377, %v1369
    %v1698 = vpack.c.b16 %v1378, %v1370
    %v1699 = vpack.c.b16 %v1379, %v1371
    %v1700 = vpack.c.b16 %v1388, %v1380
    %v1701 = vpack.c.b16 %v1389, %v1381
    %v1702 = vpack.c.b16 %v1390, %v1382
    %v1703 = vpack.c.b16 %v1391, %v1383
    %v1704 = vpack.c.b16 %v1392, %v1384
    %v1705 = vpack.c.b16 %v1393, %v1385
    %v1706 = vpack.c.b16 %v1394, %v1386
    %v1707 = vpack.c.b16 %v1395, %v1387
    %v1708 = vpack.c.b16 %v1404, %v1396
    %v1709 = vpack.c.b16 %v1405, %v1397
    %v1710 = vpack.c.b16 %v1406, %v1398
    %v1711 = vpack.c.b16 %v1407, %v1399
    %v1712 = vpack.c.b16 %v1408, %v1400
    %v1713 = vpack.c.b16 %v1409, %v1401
    %v1714 = vpack.c.b16 %v1410, %v1402
    %v1715 = vpack.c.b16 %v1411, %v1403
    %v1716 = vpack.c.b16 %v1420, %v1412
    %v1717 = vpack.c.b16 %v1421, %v1413
    %v1718 = vpack.c.b16 %v1422, %v1414
    %v1719 = vpack.c.b16 %v1423, %v1415
    %v1720 = vpack.c.b16 %v1424, %v1416
    %v1721 = vpack.c.b16 %v1425, %v1417
    %v1722 = vpack.c.b16 %v1426, %v1418
    %v1723 = vpack.c.b16 %v1427, %v1419
    %v1724 = vpack.c.b16 %v1436, %v1428
    %v1725 = vpack.c.b16 %v1437, %v1429
    %v1726 = vpack.c.b16 %v1438, %v1430
    %v1727 = vpack.c.b16 %v1439, %v1431
    %v1728 = vpack.c.b16 %v1440, %v1432
    %v1729 = vpack.c.b16 %v1441, %v1433
    %v1730 = vpack.c.b16 %v1442, %v1434
    %v1731 = vpack.c.b16 %v1443, %v1435
    %v1732 = vpack.c.b16 %v1452, %v1444
    %v1733 = vpack.c.b16 %v1453, %v1445
    %v1734 = vpack.c.b16 %v1454, %v1446
    %v1735 = vpack.c.b16 %v1455, %v1447
    %v1736 = vpack.c.b16 %v1456, %v1448
    %v1737 = vpack.c.b16 %v1457, %v1449
    %v1738 = vpack.c.b16 %v1458, %v1450
    %v1739 = vpack.c.b16 %v1459, %v1451
    %v1740 = vpack.c.b16 %v1468, %v1460
    %v1741 = vpack.c.b16 %v1469, %v1461
    %v1742 = vpack.c.b16 %v1470, %v1462
    %v1743 = vpack.c.b16 %v1471, %v1463
    %v1744 = vpack.c.b16 %v1472, %v1464
    %v1745 = vpack.c.b16 %v1473, %v1465
    %v1746 = vpack.c.b16 %v1474, %v1466
    %v1747 = vpack.c.b16 %v1475, %v1467
    %v1748 = vpack.c.b16 %v1484, %v1476
    %v1749 = vpack.c.b16 %v1485, %v1477
    %v1750 = vpack.c.b16 %v1486, %v1478
    %v1751 = vpack.c.b16 %v1487, %v1479
    %v1752 = vpack.c.b16 %v1488, %v1480
    %v1753 = vpack.c.b16 %v1489, %v1481
    %v1754 = vpack.c.b16 %v1490, %v1482
    %v1755 = vpack.c.b16 %v1491, %v1483
    %v1756 = vpack.c.b16 %v1500, %v1492
    %v1757 = vpack.c.b16 %v1501, %v1493
    %v1758 = vpack.c.b16 %v1502, %v1494
    %v1759 = vpack.c.b16 %v1503, %v1495
    %v1760 = vpack.c.b16 %v1504, %v1496
    %v1761 = vpack.c.b16 %v1505, %v1497
    %v1762 = vpack.c.b16 %v1506, %v1498
    %v1763 = vpack.c.b16 %v1507, %v1499
    %2020 = vmatprep.subr.bf16.mxu0 %v1565
    %2021 = vmatpush1.bf16.msra.mxu0 %v1564
    %2022 = vmatprep.subr.bf16.mxu0 %v1557
    %2023 = vmatpush1.bf16.msra.mxu0 %v1556
    %2024 = vmatprep.subr.bf16.mxu0 %v1549
    %2025 = vmatpush1.bf16.msra.mxu0 %v1548
    %2026 = vmatprep.subr.bf16.mxu0 %v1541
    %2027 = vmatpush1.bf16.msra.mxu0 %v1540
    %2028 = vmatprep.subr.bf16.mxu0 %v1533
    %2029 = vmatpush1.bf16.msra.mxu0 %v1532
    %2030 = vmatprep.subr.bf16.mxu0 %v1525
    %2031 = vmatpush1.bf16.msra.mxu0 %v1524
    %2032 = vmatprep.subr.bf16.mxu0 %v1517
    %2033 = vmatpush1.bf16.msra.mxu0 %v1516
    %2034 = vmatprep.subr.bf16.mxu0 %v1509
    %2035 = vmatpush1.bf16.msra.mxu0 %v1508
    %2036 = vmatprep.subr.bf16.mxu0 %v1629
    %2037 = vmatpush2.bf16.msra.mxu0 %v1628
    %2038 = vmatprep.subr.bf16.mxu0 %v1621
    %2039 = vmatpush2.bf16.msra.mxu0 %v1620
    %2040 = vmatprep.subr.bf16.mxu0 %v1613
    %2041 = vmatpush2.bf16.msra.mxu0 %v1612
    %2042 = vmatprep.subr.bf16.mxu0 %v1605
    %2043 = vmatpush2.bf16.msra.mxu0 %v1604
    %2044 = vmatprep.subr.bf16.mxu0 %v1597
    %2045 = vmatpush2.bf16.msra.mxu0 %v1596
    %2046 = vmatprep.subr.bf16.mxu0 %v1589
    %2047 = vmatpush2.bf16.msra.mxu0 %v1588
    %2048 = vmatprep.subr.bf16.mxu0 %v1581
    %2049 = vmatpush2.bf16.msra.mxu0 %v1580
    %2050 = vmatprep.subr.bf16.mxu0 %v1573
    %2051 = vmatpush2.bf16.msra.mxu0 %v1572
    %2052 = vmatprep.mubr.bf16.mxu0 %v439
    %2053 = vmatmul.mubr.bf16.gmra.mxu0 %v438
    %v2054 = vpop.f32.mrf.mxu0
    %v2055 = vadd.f32 %v703, %v2054
    %v2056 = vpop.f32.mrf.mxu0
    %v2057 = vadd.f32 %v707, %v2056
    %v2058 = vpop.f32.mrf.mxu0
    %v2059 = vpop.f32.mrf.mxu0
    %2060 = vdwg.mxu0
    %2061 = vmatprep.subr.bf16.mxu0 %v1693
    %2062 = vmatpush1.bf16.msra.mxu0 %v1692
    %2063 = vmatprep.subr.bf16.mxu0 %v1685
    %2064 = vmatpush1.bf16.msra.mxu0 %v1684
    %2065 = vmatprep.subr.bf16.mxu0 %v1677
    %2066 = vmatpush1.bf16.msra.mxu0 %v1676
    %2067 = vmatprep.subr.bf16.mxu0 %v1669
    %2068 = vmatpush1.bf16.msra.mxu0 %v1668
    %2069 = vmatprep.subr.bf16.mxu0 %v1661
    %2070 = vmatpush1.bf16.msra.mxu0 %v1660
    %2071 = vmatprep.subr.bf16.mxu0 %v1653
    %2072 = vmatpush1.bf16.msra.mxu0 %v1652
    %2073 = vmatprep.subr.bf16.mxu0 %v1645
    %2074 = vmatpush1.bf16.msra.mxu0 %v1644
    %2075 = vmatprep.subr.bf16.mxu0 %v1637
    %2076 = vmatpush1.bf16.msra.mxu0 %v1636
    %2077 = vmatprep.subr.bf16.mxu0 %v1757
    %2078 = vmatpush2.bf16.msra.mxu0 %v1756
    %2079 = vmatprep.subr.bf16.mxu0 %v1749
    %2080 = vmatpush2.bf16.msra.mxu0 %v1748
    %2081 = vmatprep.subr.bf16.mxu0 %v1741
    %2082 = vmatpush2.bf16.msra.mxu0 %v1740
    %2083 = vmatprep.subr.bf16.mxu0 %v1733
    %2084 = vmatpush2.bf16.msra.mxu0 %v1732
    %2085 = vmatprep.subr.bf16.mxu0 %v1725
    %2086 = vmatpush2.bf16.msra.mxu0 %v1724
    %2087 = vmatprep.subr.bf16.mxu0 %v1717
    %2088 = vmatpush2.bf16.msra.mxu0 %v1716
    %2089 = vmatprep.subr.bf16.mxu0 %v1709
    %2090 = vmatpush2.bf16.msra.mxu0 %v1708
    %2091 = vmatprep.subr.bf16.mxu0 %v1701
    %2092 = vmatpush2.bf16.msra.mxu0 %v1700
    %2093 = vmatprep.mubr.bf16.mxu0 %v441
    %2094 = vmatmul.mubr.bf16.gmra.mxu0 %v440
    %v2095 = vpop.f32.mrf.mxu0
    %v2096 = vadd.f32 %v2055, %v2095
    %v2097 = vpop.f32.mrf.mxu0
    %v2098 = vadd.f32 %v2057, %v2097
    %v2099 = vpop.f32.mrf.mxu0
    %v2100 = vpop.f32.mrf.mxu0
    %2101 = vdwg.mxu0
    %2102 = vmatprep.subr.bf16.mxu0 %v1567
    %2103 = vmatpush1.bf16.msra.mxu0 %v1566
    %2104 = vmatprep.subr.bf16.mxu0 %v1559
    %2105 = vmatpush1.bf16.msra.mxu0 %v1558
    %2106 = vmatprep.subr.bf16.mxu0 %v1551
    %2107 = vmatpush1.bf16.msra.mxu0 %v1550
    %2108 = vmatprep.subr.bf16.mxu0 %v1543
    %2109 = vmatpush1.bf16.msra.mxu0 %v1542
    %2110 = vmatprep.subr.bf16.mxu0 %v1535
    %2111 = vmatpush1.bf16.msra.mxu0 %v1534
    %2112 = vmatprep.subr.bf16.mxu0 %v1527
    %2113 = vmatpush1.bf16.msra.mxu0 %v1526
    %2114 = vmatprep.subr.bf16.mxu0 %v1519
    %2115 = vmatpush1.bf16.msra.mxu0 %v1518
    %2116 = vmatprep.subr.bf16.mxu0 %v1511
    %2117 = vmatpush1.bf16.msra.mxu0 %v1510
    %2118 = vmatprep.subr.bf16.mxu0 %v1631
    %2119 = vmatpush2.bf16.msra.mxu0 %v1630
    %2120 = vmatprep.subr.bf16.mxu0 %v1623
    %2121 = vmatpush2.bf16.msra.mxu0 %v1622
    %2122 = vmatprep.subr.bf16.mxu0 %v1615
    %2123 = vmatpush2.bf16.msra.mxu0 %v1614
    %2124 = vmatprep.subr.bf16.mxu0 %v1607
    %2125 = vmatpush2.bf16.msra.mxu0 %v1606
    %2126 = vmatprep.subr.bf16.mxu0 %v1599
    %2127 = vmatpush2.bf16.msra.mxu0 %v1598
    %2128 = vmatprep.subr.bf16.mxu0 %v1591
    %2129 = vmatpush2.bf16.msra.mxu0 %v1590
    %2130 = vmatprep.subr.bf16.mxu0 %v1583
    %2131 = vmatpush2.bf16.msra.mxu0 %v1582
    %2132 = vmatprep.subr.bf16.mxu0 %v1575
    %2133 = vmatpush2.bf16.msra.mxu0 %v1574
    %2134 = vmatprep.mubr.bf16.mxu0 %v439
    %2135 = vmatmul.mubr.bf16.gmra.mxu0 %v438
    %v2136 = vpop.f32.mrf.mxu0
    %v2137 = vadd.f32 %v711, %v2136
    %v2138 = vpop.f32.mrf.mxu0
    %v2139 = vadd.f32 %v715, %v2138
    %v2140 = vpop.f32.mrf.mxu0
    %v2141 = vpop.f32.mrf.mxu0
    %2142 = vdwg.mxu0
    %2143 = vmatprep.subr.bf16.mxu0 %v1695
    %2144 = vmatpush1.bf16.msra.mxu0 %v1694
    %2145 = vmatprep.subr.bf16.mxu0 %v1687
    %2146 = vmatpush1.bf16.msra.mxu0 %v1686
    %2147 = vmatprep.subr.bf16.mxu0 %v1679
    %2148 = vmatpush1.bf16.msra.mxu0 %v1678
    %2149 = vmatprep.subr.bf16.mxu0 %v1671
    %2150 = vmatpush1.bf16.msra.mxu0 %v1670
    %2151 = vmatprep.subr.bf16.mxu0 %v1663
    %2152 = vmatpush1.bf16.msra.mxu0 %v1662
    %2153 = vmatprep.subr.bf16.mxu0 %v1655
    %2154 = vmatpush1.bf16.msra.mxu0 %v1654
    %2155 = vmatprep.subr.bf16.mxu0 %v1647
    %2156 = vmatpush1.bf16.msra.mxu0 %v1646
    %2157 = vmatprep.subr.bf16.mxu0 %v1639
    %2158 = vmatpush1.bf16.msra.mxu0 %v1638
    %2159 = vmatprep.subr.bf16.mxu0 %v1759
    %2160 = vmatpush2.bf16.msra.mxu0 %v1758
    %2161 = vmatprep.subr.bf16.mxu0 %v1751
    %2162 = vmatpush2.bf16.msra.mxu0 %v1750
    %2163 = vmatprep.subr.bf16.mxu0 %v1743
    %2164 = vmatpush2.bf16.msra.mxu0 %v1742
    %2165 = vmatprep.subr.bf16.mxu0 %v1735
    %2166 = vmatpush2.bf16.msra.mxu0 %v1734
    %2167 = vmatprep.subr.bf16.mxu0 %v1727
    %2168 = vmatpush2.bf16.msra.mxu0 %v1726
    %2169 = vmatprep.subr.bf16.mxu0 %v1719
    %2170 = vmatpush2.bf16.msra.mxu0 %v1718
    %2171 = vmatprep.subr.bf16.mxu0 %v1711
    %2172 = vmatpush2.bf16.msra.mxu0 %v1710
    %2173 = vmatprep.subr.bf16.mxu0 %v1703
    %2174 = vmatpush2.bf16.msra.mxu0 %v1702
    %2175 = vmatprep.mubr.bf16.mxu0 %v441
    %2176 = vmatmul.mubr.bf16.gmra.mxu0 %v440
    %v2177 = vpop.f32.mrf.mxu0
    %v2178 = vadd.f32 %v2137, %v2177
    %v2179 = vpop.f32.mrf.mxu0
    %v2180 = vadd.f32 %v2139, %v2179
    %v2181 = vpop.f32.mrf.mxu0
    %v2182 = vpop.f32.mrf.mxu0
    %2183 = vdwg.mxu0
    %2184 = vmatprep.subr.bf16.mxu0 %v1569
    %2185 = vmatpush1.bf16.msra.mxu0 %v1568
    %2186 = vmatprep.subr.bf16.mxu0 %v1561
    %2187 = vmatpush1.bf16.msra.mxu0 %v1560
    %2188 = vmatprep.subr.bf16.mxu0 %v1553
    %2189 = vmatpush1.bf16.msra.mxu0 %v1552
    %2190 = vmatprep.subr.bf16.mxu0 %v1545
    %2191 = vmatpush1.bf16.msra.mxu0 %v1544
    %2192 = vmatprep.subr.bf16.mxu0 %v1537
    %2193 = vmatpush1.bf16.msra.mxu0 %v1536
    %2194 = vmatprep.subr.bf16.mxu0 %v1529
    %2195 = vmatpush1.bf16.msra.mxu0 %v1528
    %2196 = vmatprep.subr.bf16.mxu0 %v1521
    %2197 = vmatpush1.bf16.msra.mxu0 %v1520
    %2198 = vmatprep.subr.bf16.mxu0 %v1513
    %2199 = vmatpush1.bf16.msra.mxu0 %v1512
    %2200 = vmatprep.subr.bf16.mxu0 %v1633
    %2201 = vmatpush2.bf16.msra.mxu0 %v1632
    %2202 = vmatprep.subr.bf16.mxu0 %v1625
    %2203 = vmatpush2.bf16.msra.mxu0 %v1624
    %2204 = vmatprep.subr.bf16.mxu0 %v1617
    %2205 = vmatpush2.bf16.msra.mxu0 %v1616
    %2206 = vmatprep.subr.bf16.mxu0 %v1609
    %2207 = vmatpush2.bf16.msra.mxu0 %v1608
    %2208 = vmatprep.subr.bf16.mxu0 %v1601
    %2209 = vmatpush2.bf16.msra.mxu0 %v1600
    %2210 = vmatprep.subr.bf16.mxu0 %v1593
    %2211 = vmatpush2.bf16.msra.mxu0 %v1592
    %2212 = vmatprep.subr.bf16.mxu0 %v1585
    %2213 = vmatpush2.bf16.msra.mxu0 %v1584
    %2214 = vmatprep.subr.bf16.mxu0 %v1577
    %2215 = vmatpush2.bf16.msra.mxu0 %v1576
    %2216 = vmatprep.mubr.bf16.mxu0 %v439
    %2217 = vmatmul.mubr.bf16.gmra.mxu0 %v438
    %v2218 = vpop.f32.mrf.mxu0
    %v2219 = vadd.f32 %v719, %v2218
    %v2220 = vpop.f32.mrf.mxu0
    %v2221 = vadd.f32 %v723, %v2220
    %v2222 = vpop.f32.mrf.mxu0
    %v2223 = vpop.f32.mrf.mxu0
    %2224 = vdwg.mxu0
    %2225 = vmatprep.subr.bf16.mxu0 %v1697
    %2226 = vmatpush1.bf16.msra.mxu0 %v1696
    %2227 = vmatprep.subr.bf16.mxu0 %v1689
    %2228 = vmatpush1.bf16.msra.mxu0 %v1688
    %2229 = vmatprep.subr.bf16.mxu0 %v1681
    %2230 = vmatpush1.bf16.msra.mxu0 %v1680
    %2231 = vmatprep.subr.bf16.mxu0 %v1673
    %2232 = vmatpush1.bf16.msra.mxu0 %v1672
    %2233 = vmatprep.subr.bf16.mxu0 %v1665
    %2234 = vmatpush1.bf16.msra.mxu0 %v1664
    %2235 = vmatprep.subr.bf16.mxu0 %v1657
    %2236 = vmatpush1.bf16.msra.mxu0 %v1656
    %2237 = vmatprep.subr.bf16.mxu0 %v1649
    %2238 = vmatpush1.bf16.msra.mxu0 %v1648
    %2239 = vmatprep.subr.bf16.mxu0 %v1641
    %2240 = vmatpush1.bf16.msra.mxu0 %v1640
    %2241 = vmatprep.subr.bf16.mxu0 %v1761
    %2242 = vmatpush2.bf16.msra.mxu0 %v1760
    %2243 = vmatprep.subr.bf16.mxu0 %v1753
    %2244 = vmatpush2.bf16.msra.mxu0 %v1752
    %2245 = vmatprep.subr.bf16.mxu0 %v1745
    %2246 = vmatpush2.bf16.msra.mxu0 %v1744
    %2247 = vmatprep.subr.bf16.mxu0 %v1737
    %2248 = vmatpush2.bf16.msra.mxu0 %v1736
    %2249 = vmatprep.subr.bf16.mxu0 %v1729
    %2250 = vmatpush2.bf16.msra.mxu0 %v1728
    %2251 = vmatprep.subr.bf16.mxu0 %v1721
    %2252 = vmatpush2.bf16.msra.mxu0 %v1720
    %2253 = vmatprep.subr.bf16.mxu0 %v1713
    %2254 = vmatpush2.bf16.msra.mxu0 %v1712
    %2255 = vmatprep.subr.bf16.mxu0 %v1705
    %2256 = vmatpush2.bf16.msra.mxu0 %v1704
    %2257 = vmatprep.mubr.bf16.mxu0 %v441
    %2258 = vmatmul.mubr.bf16.gmra.mxu0 %v440
    %v2259 = vpop.f32.mrf.mxu0
    %v2260 = vadd.f32 %v2219, %v2259
    %v2261 = vpop.f32.mrf.mxu0
    %v2262 = vadd.f32 %v2221, %v2261
    %v2263 = vpop.f32.mrf.mxu0
    %v2264 = vpop.f32.mrf.mxu0
    %2265 = vdwg.mxu0
    %2266 = vmatprep.subr.bf16.mxu0 %v1571
    %2267 = vmatpush1.bf16.msra.mxu0 %v1570
    %2268 = vmatprep.subr.bf16.mxu0 %v1563
    %2269 = vmatpush1.bf16.msra.mxu0 %v1562
    %2270 = vmatprep.subr.bf16.mxu0 %v1555
    %2271 = vmatpush1.bf16.msra.mxu0 %v1554
    %2272 = vmatprep.subr.bf16.mxu0 %v1547
    %2273 = vmatpush1.bf16.msra.mxu0 %v1546
    %2274 = vmatprep.subr.bf16.mxu0 %v1539
    %2275 = vmatpush1.bf16.msra.mxu0 %v1538
    %2276 = vmatprep.subr.bf16.mxu0 %v1531
    %2277 = vmatpush1.bf16.msra.mxu0 %v1530
    %2278 = vmatprep.subr.bf16.mxu0 %v1523
    %2279 = vmatpush1.bf16.msra.mxu0 %v1522
    %2280 = vmatprep.subr.bf16.mxu0 %v1515
    %2281 = vmatpush1.bf16.msra.mxu0 %v1514
    %2282 = vmatprep.subr.bf16.mxu0 %v1635
    %2283 = vmatpush2.bf16.msra.mxu0 %v1634
    %2284 = vmatprep.subr.bf16.mxu0 %v1627
    %2285 = vmatpush2.bf16.msra.mxu0 %v1626
    %2286 = vmatprep.subr.bf16.mxu0 %v1619
    %2287 = vmatpush2.bf16.msra.mxu0 %v1618
    %2288 = vmatprep.subr.bf16.mxu0 %v1611
    %2289 = vmatpush2.bf16.msra.mxu0 %v1610
    %2290 = vmatprep.subr.bf16.mxu0 %v1603
    %2291 = vmatpush2.bf16.msra.mxu0 %v1602
    %2292 = vmatprep.subr.bf16.mxu0 %v1595
    %2293 = vmatpush2.bf16.msra.mxu0 %v1594
    %2294 = vmatprep.subr.bf16.mxu0 %v1587
    %2295 = vmatpush2.bf16.msra.mxu0 %v1586
    %2296 = vmatprep.subr.bf16.mxu0 %v1579
    %2297 = vmatpush2.bf16.msra.mxu0 %v1578
    %2298 = vmatprep.mubr.bf16.mxu0 %v439
    %2299 = vmatmul.mubr.bf16.gmra.mxu0 %v438
    %v2300 = vpop.f32.mrf.mxu0
    %v2301 = vadd.f32 %v727, %v2300
    %v2302 = vpop.f32.mrf.mxu0
    %v2303 = vadd.f32 %v731, %v2302
    %v2304 = vpop.f32.mrf.mxu0
    %v2305 = vpop.f32.mrf.mxu0
    %2306 = vdwg.mxu0
    %2307 = vmatprep.subr.bf16.mxu0 %v1699
    %2308 = vmatpush1.bf16.msra.mxu0 %v1698
    %2309 = vmatprep.subr.bf16.mxu0 %v1691
    %2310 = vmatpush1.bf16.msra.mxu0 %v1690
    %2311 = vmatprep.subr.bf16.mxu0 %v1683
    %2312 = vmatpush1.bf16.msra.mxu0 %v1682
    %2313 = vmatprep.subr.bf16.mxu0 %v1675
    %2314 = vmatpush1.bf16.msra.mxu0 %v1674
    %2315 = vmatprep.subr.bf16.mxu0 %v1667
    %2316 = vmatpush1.bf16.msra.mxu0 %v1666
    %2317 = vmatprep.subr.bf16.mxu0 %v1659
    %2318 = vmatpush1.bf16.msra.mxu0 %v1658
    %2319 = vmatprep.subr.bf16.mxu0 %v1651
    %2320 = vmatpush1.bf16.msra.mxu0 %v1650
    %2321 = vmatprep.subr.bf16.mxu0 %v1643
    %2322 = vmatpush1.bf16.msra.mxu0 %v1642
    %2323 = vmatprep.subr.bf16.mxu0 %v1763
    %2324 = vmatpush2.bf16.msra.mxu0 %v1762
    %2325 = vmatprep.subr.bf16.mxu0 %v1755
    %2326 = vmatpush2.bf16.msra.mxu0 %v1754
    %2327 = vmatprep.subr.bf16.mxu0 %v1747
    %2328 = vmatpush2.bf16.msra.mxu0 %v1746
    %2329 = vmatprep.subr.bf16.mxu0 %v1739
    %2330 = vmatpush2.bf16.msra.mxu0 %v1738
    %2331 = vmatprep.subr.bf16.mxu0 %v1731
    %2332 = vmatpush2.bf16.msra.mxu0 %v1730
    %2333 = vmatprep.subr.bf16.mxu0 %v1723
    %2334 = vmatpush2.bf16.msra.mxu0 %v1722
    %2335 = vmatprep.subr.bf16.mxu0 %v1715
    %2336 = vmatpush2.bf16.msra.mxu0 %v1714
    %2337 = vmatprep.subr.bf16.mxu0 %v1707
    %2338 = vmatpush2.bf16.msra.mxu0 %v1706
    %2339 = vmatprep.mubr.bf16.mxu0 %v441
    %2340 = vmatmul.mubr.bf16.gmra.mxu0 %v440
    %v2341 = vpop.f32.mrf.mxu0
    %v2342 = vadd.f32 %v2301, %v2341
    %v2343 = vpop.f32.mrf.mxu0
    %v2344 = vadd.f32 %v2303, %v2343
    %v2345 = vpop.f32.mrf.mxu0
    %v2346 = vpop.f32.mrf.mxu0
    %2347 = vdwg.mxu0
    %v2348 = vmax.f32 %v2096, 0.0
    %v2349 = vmax.f32 %v2098, 0.0
    %v2350 = vmax.f32 %v2178, 0.0
    %v2351 = vmax.f32 %v2180, 0.0
    %v2352 = vmax.f32 %v2260, 0.0
    %v2353 = vmax.f32 %v2262, 0.0
    %v2354 = vmax.f32 %v2342, 0.0
    %v2355 = vmax.f32 %v2344, 0.0
    %v2356 = vpack.c.bf16 %v2348, %v2348
    %v2357 = vpack.c.bf16 %v2349, %v2349
    %v2358 = vpack.c.bf16 %v2350, %v2350
    %v2359 = vpack.c.bf16 %v2351, %v2351
    %v2360 = vpack.c.bf16 %v2352, %v2352
    %v2361 = vpack.c.bf16 %v2353, %v2353
    %v2362 = vpack.c.bf16 %v2354, %v2354
    %v2363 = vpack.c.bf16 %v2355, %v2355
    %v2364 = vld [vmem:[#allocation15] sm:$0xff]
    %v2365 = vld [vmem:[#allocation15 + $0x8] sm:$0xff]
    %v2366 = vld [vmem:[#allocation15 + $0x10] sm:$0xff]
    %v2367 = vld [vmem:[#allocation15 + $0x18] sm:$0xff]
    %v2368 = vld [vmem:[#allocation15 + $0x20] sm:$0xff]
    %v2369 = vld [vmem:[#allocation15 + $0x28] sm:$0xff]
    %v2370 = vld [vmem:[#allocation15 + $0x30] sm:$0xff]
    %v2371 = vld [vmem:[#allocation15 + $0x38] sm:$0xff]
    %v2372 = vld [vmem:[#allocation15 + $0x40] sm:$0xff]
    %v2373 = vld [vmem:[#allocation15 + $0x48] sm:$0xff]
    %v2374 = vld [vmem:[#allocation15 + $0x50] sm:$0xff]
    %v2375 = vld [vmem:[#allocation15 + $0x58] sm:$0xff]
    %v2376 = vld [vmem:[#allocation15 + $0x60] sm:$0xff]
    %v2377 = vld [vmem:[#allocation15 + $0x68] sm:$0xff]
    %v2378 = vld [vmem:[#allocation15 + $0x70] sm:$0xff]
    %v2379 = vld [vmem:[#allocation15 + $0x78] sm:$0xff]
    %v2380 = vld [vmem:[#allocation15 + $0x80] sm:$0xff]
    %v2381 = vld [vmem:[#allocation15 + $0x88] sm:$0xff]
    %v2382 = vld [vmem:[#allocation15 + $0x90] sm:$0xff]
    %v2383 = vld [vmem:[#allocation15 + $0x98] sm:$0xff]
    %v2384 = vld [vmem:[#allocation15 + $0xa0] sm:$0xff]
    %v2385 = vld [vmem:[#allocation15 + $0xa8] sm:$0xff]
    %v2386 = vld [vmem:[#allocation15 + $0xb0] sm:$0xff]
    %v2387 = vld [vmem:[#allocation15 + $0xb8] sm:$0xff]
    %v2388 = vld [vmem:[#allocation15 + $0xc0] sm:$0xff]
    %v2389 = vld [vmem:[#allocation15 + $0xc8] sm:$0xff]
    %v2390 = vld [vmem:[#allocation15 + $0xd0] sm:$0xff]
    %v2391 = vld [vmem:[#allocation15 + $0xd8] sm:$0xff]
    %v2392 = vld [vmem:[#allocation15 + $0xe0] sm:$0xff]
    %v2393 = vld [vmem:[#allocation15 + $0xe8] sm:$0xff]
    %v2394 = vld [vmem:[#allocation15 + $0xf0] sm:$0xff]
    %v2395 = vld [vmem:[#allocation15 + $0xf8] sm:$0xff]
    %v2396 = vld [vmem:[#allocation15 + $0x100] sm:$0xff]
    %v2397 = vld [vmem:[#allocation15 + $0x108] sm:$0xff]
    %v2398 = vld [vmem:[#allocation15 + $0x110] sm:$0xff]
    %v2399 = vld [vmem:[#allocation15 + $0x118] sm:$0xff]
    %v2400 = vld [vmem:[#allocation15 + $0x120] sm:$0xff]
    %v2401 = vld [vmem:[#allocation15 + $0x128] sm:$0xff]
    %v2402 = vld [vmem:[#allocation15 + $0x130] sm:$0xff]
    %v2403 = vld [vmem:[#allocation15 + $0x138] sm:$0xff]
    %v2404 = vld [vmem:[#allocation15 + $0x140] sm:$0xff]
    %v2405 = vld [vmem:[#allocation15 + $0x148] sm:$0xff]
    %v2406 = vld [vmem:[#allocation15 + $0x150] sm:$0xff]
    %v2407 = vld [vmem:[#allocation15 + $0x158] sm:$0xff]
    %v2408 = vld [vmem:[#allocation15 + $0x160] sm:$0xff]
    %v2409 = vld [vmem:[#allocation15 + $0x168] sm:$0xff]
    %v2410 = vld [vmem:[#allocation15 + $0x170] sm:$0xff]
    %v2411 = vld [vmem:[#allocation15 + $0x178] sm:$0xff]
    %v2412 = vld [vmem:[#allocation15 + $0x180] sm:$0xff]
    %v2413 = vld [vmem:[#allocation15 + $0x188] sm:$0xff]
    %v2414 = vld [vmem:[#allocation15 + $0x190] sm:$0xff]
    %v2415 = vld [vmem:[#allocation15 + $0x198] sm:$0xff]
    %v2416 = vld [vmem:[#allocation15 + $0x1a0] sm:$0xff]
    %v2417 = vld [vmem:[#allocation15 + $0x1a8] sm:$0xff]
    %v2418 = vld [vmem:[#allocation15 + $0x1b0] sm:$0xff]
    %v2419 = vld [vmem:[#allocation15 + $0x1b8] sm:$0xff]
    %v2420 = vld [vmem:[#allocation15 + $0x1c0] sm:$0xff]
    %v2421 = vld [vmem:[#allocation15 + $0x1c8] sm:$0xff]
    %v2422 = vld [vmem:[#allocation15 + $0x1d0] sm:$0xff]
    %v2423 = vld [vmem:[#allocation15 + $0x1d8] sm:$0xff]
    %v2424 = vld [vmem:[#allocation15 + $0x1e0] sm:$0xff]
    %v2425 = vld [vmem:[#allocation15 + $0x1e8] sm:$0xff]
    %v2426 = vld [vmem:[#allocation15 + $0x1f0] sm:$0xff]
    %v2427 = vld [vmem:[#allocation15 + $0x1f8] sm:$0xff]
    %v2428 = vld [vmem:[#allocation15 + $0x200] sm:$0xff]
    %v2429 = vld [vmem:[#allocation15 + $0x208] sm:$0xff]
    %v2430 = vld [vmem:[#allocation15 + $0x210] sm:$0xff]
    %v2431 = vld [vmem:[#allocation15 + $0x218] sm:$0xff]
    %v2432 = vld [vmem:[#allocation15 + $0x220] sm:$0xff]
    %v2433 = vld [vmem:[#allocation15 + $0x228] sm:$0xff]
    %v2434 = vld [vmem:[#allocation15 + $0x230] sm:$0xff]
    %v2435 = vld [vmem:[#allocation15 + $0x238] sm:$0xff]
    %v2436 = vld [vmem:[#allocation15 + $0x240] sm:$0xff]
    %v2437 = vld [vmem:[#allocation15 + $0x248] sm:$0xff]
    %v2438 = vld [vmem:[#allocation15 + $0x250] sm:$0xff]
    %v2439 = vld [vmem:[#allocation15 + $0x258] sm:$0xff]
    %v2440 = vld [vmem:[#allocation15 + $0x260] sm:$0xff]
    %v2441 = vld [vmem:[#allocation15 + $0x268] sm:$0xff]
    %v2442 = vld [vmem:[#allocation15 + $0x270] sm:$0xff]
    %v2443 = vld [vmem:[#allocation15 + $0x278] sm:$0xff]
    %v2444 = vld [vmem:[#allocation15 + $0x280] sm:$0xff]
    %v2445 = vld [vmem:[#allocation15 + $0x288] sm:$0xff]
    %v2446 = vld [vmem:[#allocation15 + $0x290] sm:$0xff]
    %v2447 = vld [vmem:[#allocation15 + $0x298] sm:$0xff]
    %v2448 = vld [vmem:[#allocation15 + $0x2a0] sm:$0xff]
    %v2449 = vld [vmem:[#allocation15 + $0x2a8] sm:$0xff]
    %v2450 = vld [vmem:[#allocation15 + $0x2b0] sm:$0xff]
    %v2451 = vld [vmem:[#allocation15 + $0x2b8] sm:$0xff]
    %v2452 = vld [vmem:[#allocation15 + $0x2c0] sm:$0xff]
    %v2453 = vld [vmem:[#allocation15 + $0x2c8] sm:$0xff]
    %v2454 = vld [vmem:[#allocation15 + $0x2d0] sm:$0xff]
    %v2455 = vld [vmem:[#allocation15 + $0x2d8] sm:$0xff]
    %v2456 = vld [vmem:[#allocation15 + $0x2e0] sm:$0xff]
    %v2457 = vld [vmem:[#allocation15 + $0x2e8] sm:$0xff]
    %v2458 = vld [vmem:[#allocation15 + $0x2f0] sm:$0xff]
    %v2459 = vld [vmem:[#allocation15 + $0x2f8] sm:$0xff]
    %v2460 = vld [vmem:[#allocation15 + $0x300] sm:$0xff]
    %v2461 = vld [vmem:[#allocation15 + $0x308] sm:$0xff]
    %v2462 = vld [vmem:[#allocation15 + $0x310] sm:$0xff]
    %v2463 = vld [vmem:[#allocation15 + $0x318] sm:$0xff]
    %v2464 = vld [vmem:[#allocation15 + $0x320] sm:$0xff]
    %v2465 = vld [vmem:[#allocation15 + $0x328] sm:$0xff]
    %v2466 = vld [vmem:[#allocation15 + $0x330] sm:$0xff]
    %v2467 = vld [vmem:[#allocation15 + $0x338] sm:$0xff]
    %v2468 = vld [vmem:[#allocation15 + $0x340] sm:$0xff]
    %v2469 = vld [vmem:[#allocation15 + $0x348] sm:$0xff]
    %v2470 = vld [vmem:[#allocation15 + $0x350] sm:$0xff]
    %v2471 = vld [vmem:[#allocation15 + $0x358] sm:$0xff]
    %v2472 = vld [vmem:[#allocation15 + $0x360] sm:$0xff]
    %v2473 = vld [vmem:[#allocation15 + $0x368] sm:$0xff]
    %v2474 = vld [vmem:[#allocation15 + $0x370] sm:$0xff]
    %v2475 = vld [vmem:[#allocation15 + $0x378] sm:$0xff]
    %v2476 = vld [vmem:[#allocation15 + $0x380] sm:$0xff]
    %v2477 = vld [vmem:[#allocation15 + $0x388] sm:$0xff]
    %v2478 = vld [vmem:[#allocation15 + $0x390] sm:$0xff]
    %v2479 = vld [vmem:[#allocation15 + $0x398] sm:$0xff]
    %v2480 = vld [vmem:[#allocation15 + $0x3a0] sm:$0xff]
    %v2481 = vld [vmem:[#allocation15 + $0x3a8] sm:$0xff]
    %v2482 = vld [vmem:[#allocation15 + $0x3b0] sm:$0xff]
    %v2483 = vld [vmem:[#allocation15 + $0x3b8] sm:$0xff]
    %v2484 = vld [vmem:[#allocation15 + $0x3c0] sm:$0xff]
    %v2485 = vld [vmem:[#allocation15 + $0x3c8] sm:$0xff]
    %v2486 = vld [vmem:[#allocation15 + $0x3d0] sm:$0xff]
    %v2487 = vld [vmem:[#allocation15 + $0x3d8] sm:$0xff]
    %v2488 = vld [vmem:[#allocation15 + $0x3e0] sm:$0xff]
    %v2489 = vld [vmem:[#allocation15 + $0x3e8] sm:$0xff]
    %v2490 = vld [vmem:[#allocation15 + $0x3f0] sm:$0xff]
    %v2491 = vld [vmem:[#allocation15 + $0x3f8] sm:$0xff]
    %v2492 = vld [vmem:[#allocation15 + $0x400] sm:$0xff]
    %v2493 = vld [vmem:[#allocation15 + $0x408] sm:$0xff]
    %v2494 = vld [vmem:[#allocation15 + $0x410] sm:$0xff]
    %v2495 = vld [vmem:[#allocation15 + $0x418] sm:$0xff]
    %v2496 = vld [vmem:[#allocation15 + $0x420] sm:$0xff]
    %v2497 = vld [vmem:[#allocation15 + $0x428] sm:$0xff]
    %v2498 = vld [vmem:[#allocation15 + $0x430] sm:$0xff]
    %v2499 = vld [vmem:[#allocation15 + $0x438] sm:$0xff]
    %v2500 = vld [vmem:[#allocation15 + $0x440] sm:$0xff]
    %v2501 = vld [vmem:[#allocation15 + $0x448] sm:$0xff]
    %v2502 = vld [vmem:[#allocation15 + $0x450] sm:$0xff]
    %v2503 = vld [vmem:[#allocation15 + $0x458] sm:$0xff]
    %v2504 = vld [vmem:[#allocation15 + $0x460] sm:$0xff]
    %v2505 = vld [vmem:[#allocation15 + $0x468] sm:$0xff]
    %v2506 = vld [vmem:[#allocation15 + $0x470] sm:$0xff]
    %v2507 = vld [vmem:[#allocation15 + $0x478] sm:$0xff]
    %v2508 = vld [vmem:[#allocation15 + $0x480] sm:$0xff]
    %v2509 = vld [vmem:[#allocation15 + $0x488] sm:$0xff]
    %v2510 = vld [vmem:[#allocation15 + $0x490] sm:$0xff]
    %v2511 = vld [vmem:[#allocation15 + $0x498] sm:$0xff]
    %v2512 = vld [vmem:[#allocation15 + $0x4a0] sm:$0xff]
    %v2513 = vld [vmem:[#allocation15 + $0x4a8] sm:$0xff]
    %v2514 = vld [vmem:[#allocation15 + $0x4b0] sm:$0xff]
    %v2515 = vld [vmem:[#allocation15 + $0x4b8] sm:$0xff]
    %v2516 = vld [vmem:[#allocation15 + $0x4c0] sm:$0xff]
    %v2517 = vld [vmem:[#allocation15 + $0x4c8] sm:$0xff]
    %v2518 = vld [vmem:[#allocation15 + $0x4d0] sm:$0xff]
    %v2519 = vld [vmem:[#allocation15 + $0x4d8] sm:$0xff]
    %v2520 = vld [vmem:[#allocation15 + $0x4e0] sm:$0xff]
    %v2521 = vld [vmem:[#allocation15 + $0x4e8] sm:$0xff]
    %v2522 = vld [vmem:[#allocation15 + $0x4f0] sm:$0xff]
    %v2523 = vld [vmem:[#allocation15 + $0x4f8] sm:$0xff]
    %v2524 = vld [vmem:[#allocation15 + $0x500] sm:$0xff]
    %v2525 = vld [vmem:[#allocation15 + $0x508] sm:$0xff]
    %v2526 = vld [vmem:[#allocation15 + $0x510] sm:$0xff]
    %v2527 = vld [vmem:[#allocation15 + $0x518] sm:$0xff]
    %v2528 = vld [vmem:[#allocation15 + $0x520] sm:$0xff]
    %v2529 = vld [vmem:[#allocation15 + $0x528] sm:$0xff]
    %v2530 = vld [vmem:[#allocation15 + $0x530] sm:$0xff]
    %v2531 = vld [vmem:[#allocation15 + $0x538] sm:$0xff]
    %v2532 = vld [vmem:[#allocation15 + $0x540] sm:$0xff]
    %v2533 = vld [vmem:[#allocation15 + $0x548] sm:$0xff]
    %v2534 = vld [vmem:[#allocation15 + $0x550] sm:$0xff]
    %v2535 = vld [vmem:[#allocation15 + $0x558] sm:$0xff]
    %v2536 = vld [vmem:[#allocation15 + $0x560] sm:$0xff]
    %v2537 = vld [vmem:[#allocation15 + $0x568] sm:$0xff]
    %v2538 = vld [vmem:[#allocation15 + $0x570] sm:$0xff]
    %v2539 = vld [vmem:[#allocation15 + $0x578] sm:$0xff]
    %v2540 = vld [vmem:[#allocation15 + $0x580] sm:$0xff]
    %v2541 = vld [vmem:[#allocation15 + $0x588] sm:$0xff]
    %v2542 = vld [vmem:[#allocation15 + $0x590] sm:$0xff]
    %v2543 = vld [vmem:[#allocation15 + $0x598] sm:$0xff]
    %v2544 = vld [vmem:[#allocation15 + $0x5a0] sm:$0xff]
    %v2545 = vld [vmem:[#allocation15 + $0x5a8] sm:$0xff]
    %v2546 = vld [vmem:[#allocation15 + $0x5b0] sm:$0xff]
    %v2547 = vld [vmem:[#allocation15 + $0x5b8] sm:$0xff]
    %v2548 = vld [vmem:[#allocation15 + $0x5c0] sm:$0xff]
    %v2549 = vld [vmem:[#allocation15 + $0x5c8] sm:$0xff]
    %v2550 = vld [vmem:[#allocation15 + $0x5d0] sm:$0xff]
    %v2551 = vld [vmem:[#allocation15 + $0x5d8] sm:$0xff]
    %v2552 = vld [vmem:[#allocation15 + $0x5e0] sm:$0xff]
    %v2553 = vld [vmem:[#allocation15 + $0x5e8] sm:$0xff]
    %v2554 = vld [vmem:[#allocation15 + $0x5f0] sm:$0xff]
    %v2555 = vld [vmem:[#allocation15 + $0x5f8] sm:$0xff]
    %v2556 = vld [vmem:[#allocation15 + $0x600] sm:$0xff]
    %v2557 = vld [vmem:[#allocation15 + $0x608] sm:$0xff]
    %v2558 = vld [vmem:[#allocation15 + $0x610] sm:$0xff]
    %v2559 = vld [vmem:[#allocation15 + $0x618] sm:$0xff]
    %v2560 = vld [vmem:[#allocation15 + $0x620] sm:$0xff]
    %v2561 = vld [vmem:[#allocation15 + $0x628] sm:$0xff]
    %v2562 = vld [vmem:[#allocation15 + $0x630] sm:$0xff]
    %v2563 = vld [vmem:[#allocation15 + $0x638] sm:$0xff]
    %v2564 = vld [vmem:[#allocation15 + $0x640] sm:$0xff]
    %v2565 = vld [vmem:[#allocation15 + $0x648] sm:$0xff]
    %v2566 = vld [vmem:[#allocation15 + $0x650] sm:$0xff]
    %v2567 = vld [vmem:[#allocation15 + $0x658] sm:$0xff]
    %v2568 = vld [vmem:[#allocation15 + $0x660] sm:$0xff]
    %v2569 = vld [vmem:[#allocation15 + $0x668] sm:$0xff]
    %v2570 = vld [vmem:[#allocation15 + $0x670] sm:$0xff]
    %v2571 = vld [vmem:[#allocation15 + $0x678] sm:$0xff]
    %v2572 = vld [vmem:[#allocation15 + $0x680] sm:$0xff]
    %v2573 = vld [vmem:[#allocation15 + $0x688] sm:$0xff]
    %v2574 = vld [vmem:[#allocation15 + $0x690] sm:$0xff]
    %v2575 = vld [vmem:[#allocation15 + $0x698] sm:$0xff]
    %v2576 = vld [vmem:[#allocation15 + $0x6a0] sm:$0xff]
    %v2577 = vld [vmem:[#allocation15 + $0x6a8] sm:$0xff]
    %v2578 = vld [vmem:[#allocation15 + $0x6b0] sm:$0xff]
    %v2579 = vld [vmem:[#allocation15 + $0x6b8] sm:$0xff]
    %v2580 = vld [vmem:[#allocation15 + $0x6c0] sm:$0xff]
    %v2581 = vld [vmem:[#allocation15 + $0x6c8] sm:$0xff]
    %v2582 = vld [vmem:[#allocation15 + $0x6d0] sm:$0xff]
    %v2583 = vld [vmem:[#allocation15 + $0x6d8] sm:$0xff]
    %v2584 = vld [vmem:[#allocation15 + $0x6e0] sm:$0xff]
    %v2585 = vld [vmem:[#allocation15 + $0x6e8] sm:$0xff]
    %v2586 = vld [vmem:[#allocation15 + $0x6f0] sm:$0xff]
    %v2587 = vld [vmem:[#allocation15 + $0x6f8] sm:$0xff]
    %v2588 = vld [vmem:[#allocation15 + $0x700] sm:$0xff]
    %v2589 = vld [vmem:[#allocation15 + $0x708] sm:$0xff]
    %v2590 = vld [vmem:[#allocation15 + $0x710] sm:$0xff]
    %v2591 = vld [vmem:[#allocation15 + $0x718] sm:$0xff]
    %v2592 = vld [vmem:[#allocation15 + $0x720] sm:$0xff]
    %v2593 = vld [vmem:[#allocation15 + $0x728] sm:$0xff]
    %v2594 = vld [vmem:[#allocation15 + $0x730] sm:$0xff]
    %v2595 = vld [vmem:[#allocation15 + $0x738] sm:$0xff]
    %v2596 = vld [vmem:[#allocation15 + $0x740] sm:$0xff]
    %v2597 = vld [vmem:[#allocation15 + $0x748] sm:$0xff]
    %v2598 = vld [vmem:[#allocation15 + $0x750] sm:$0xff]
    %v2599 = vld [vmem:[#allocation15 + $0x758] sm:$0xff]
    %v2600 = vld [vmem:[#allocation15 + $0x760] sm:$0xff]
    %v2601 = vld [vmem:[#allocation15 + $0x768] sm:$0xff]
    %v2602 = vld [vmem:[#allocation15 + $0x770] sm:$0xff]
    %v2603 = vld [vmem:[#allocation15 + $0x778] sm:$0xff]
    %v2604 = vld [vmem:[#allocation15 + $0x780] sm:$0xff]
    %v2605 = vld [vmem:[#allocation15 + $0x788] sm:$0xff]
    %v2606 = vld [vmem:[#allocation15 + $0x790] sm:$0xff]
    %v2607 = vld [vmem:[#allocation15 + $0x798] sm:$0xff]
    %v2608 = vld [vmem:[#allocation15 + $0x7a0] sm:$0xff]
    %v2609 = vld [vmem:[#allocation15 + $0x7a8] sm:$0xff]
    %v2610 = vld [vmem:[#allocation15 + $0x7b0] sm:$0xff]
    %v2611 = vld [vmem:[#allocation15 + $0x7b8] sm:$0xff]
    %v2612 = vld [vmem:[#allocation15 + $0x7c0] sm:$0xff]
    %v2613 = vld [vmem:[#allocation15 + $0x7c8] sm:$0xff]
    %v2614 = vld [vmem:[#allocation15 + $0x7d0] sm:$0xff]
    %v2615 = vld [vmem:[#allocation15 + $0x7d8] sm:$0xff]
    %v2616 = vld [vmem:[#allocation15 + $0x7e0] sm:$0xff]
    %v2617 = vld [vmem:[#allocation15 + $0x7e8] sm:$0xff]
    %v2618 = vld [vmem:[#allocation15 + $0x7f0] sm:$0xff]
    %v2619 = vld [vmem:[#allocation15 + $0x7f8] sm:$0xff]
    %v2620 = vld [vmem:[#allocation15 + $0x800] sm:$0xff]
    %v2621 = vld [vmem:[#allocation15 + $0x808] sm:$0xff]
    %v2622 = vld [vmem:[#allocation15 + $0x810] sm:$0xff]
    %v2623 = vld [vmem:[#allocation15 + $0x818] sm:$0xff]
    %v2624 = vld [vmem:[#allocation15 + $0x820] sm:$0xff]
    %v2625 = vld [vmem:[#allocation15 + $0x828] sm:$0xff]
    %v2626 = vld [vmem:[#allocation15 + $0x830] sm:$0xff]
    %v2627 = vld [vmem:[#allocation15 + $0x838] sm:$0xff]
    %v2628 = vld [vmem:[#allocation15 + $0x840] sm:$0xff]
    %v2629 = vld [vmem:[#allocation15 + $0x848] sm:$0xff]
    %v2630 = vld [vmem:[#allocation15 + $0x850] sm:$0xff]
    %v2631 = vld [vmem:[#allocation15 + $0x858] sm:$0xff]
    %v2632 = vld [vmem:[#allocation15 + $0x860] sm:$0xff]
    %v2633 = vld [vmem:[#allocation15 + $0x868] sm:$0xff]
    %v2634 = vld [vmem:[#allocation15 + $0x870] sm:$0xff]
    %v2635 = vld [vmem:[#allocation15 + $0x878] sm:$0xff]
    %v2636 = vld [vmem:[#allocation15 + $0x880] sm:$0xff]
    %v2637 = vld [vmem:[#allocation15 + $0x888] sm:$0xff]
    %v2638 = vld [vmem:[#allocation15 + $0x890] sm:$0xff]
    %v2639 = vld [vmem:[#allocation15 + $0x898] sm:$0xff]
    %v2640 = vld [vmem:[#allocation15 + $0x8a0] sm:$0xff]
    %v2641 = vld [vmem:[#allocation15 + $0x8a8] sm:$0xff]
    %v2642 = vld [vmem:[#allocation15 + $0x8b0] sm:$0xff]
    %v2643 = vld [vmem:[#allocation15 + $0x8b8] sm:$0xff]
    %v2644 = vld [vmem:[#allocation15 + $0x8c0] sm:$0xff]
    %v2645 = vld [vmem:[#allocation15 + $0x8c8] sm:$0xff]
    %v2646 = vld [vmem:[#allocation15 + $0x8d0] sm:$0xff]
    %v2647 = vld [vmem:[#allocation15 + $0x8d8] sm:$0xff]
    %v2648 = vld [vmem:[#allocation15 + $0x8e0] sm:$0xff]
    %v2649 = vld [vmem:[#allocation15 + $0x8e8] sm:$0xff]
    %v2650 = vld [vmem:[#allocation15 + $0x8f0] sm:$0xff]
    %v2651 = vld [vmem:[#allocation15 + $0x8f8] sm:$0xff]
    %v2652 = vld [vmem:[#allocation15 + $0x900] sm:$0xff]
    %v2653 = vld [vmem:[#allocation15 + $0x908] sm:$0xff]
    %v2654 = vld [vmem:[#allocation15 + $0x910] sm:$0xff]
    %v2655 = vld [vmem:[#allocation15 + $0x918] sm:$0xff]
    %v2656 = vld [vmem:[#allocation15 + $0x920] sm:$0xff]
    %v2657 = vld [vmem:[#allocation15 + $0x928] sm:$0xff]
    %v2658 = vld [vmem:[#allocation15 + $0x930] sm:$0xff]
    %v2659 = vld [vmem:[#allocation15 + $0x938] sm:$0xff]
    %v2660 = vld [vmem:[#allocation15 + $0x940] sm:$0xff]
    %v2661 = vld [vmem:[#allocation15 + $0x948] sm:$0xff]
    %v2662 = vld [vmem:[#allocation15 + $0x950] sm:$0xff]
    %v2663 = vld [vmem:[#allocation15 + $0x958] sm:$0xff]
    %v2664 = vld [vmem:[#allocation15 + $0x960] sm:$0xff]
    %v2665 = vld [vmem:[#allocation15 + $0x968] sm:$0xff]
    %v2666 = vld [vmem:[#allocation15 + $0x970] sm:$0xff]
    %v2667 = vld [vmem:[#allocation15 + $0x978] sm:$0xff]
    %v2668 = vld [vmem:[#allocation15 + $0x980] sm:$0xff]
    %v2669 = vld [vmem:[#allocation15 + $0x988] sm:$0xff]
    %v2670 = vld [vmem:[#allocation15 + $0x990] sm:$0xff]
    %v2671 = vld [vmem:[#allocation15 + $0x998] sm:$0xff]
    %v2672 = vld [vmem:[#allocation15 + $0x9a0] sm:$0xff]
    %v2673 = vld [vmem:[#allocation15 + $0x9a8] sm:$0xff]
    %v2674 = vld [vmem:[#allocation15 + $0x9b0] sm:$0xff]
    %v2675 = vld [vmem:[#allocation15 + $0x9b8] sm:$0xff]
    %v2676 = vld [vmem:[#allocation15 + $0x9c0] sm:$0xff]
    %v2677 = vld [vmem:[#allocation15 + $0x9c8] sm:$0xff]
    %v2678 = vld [vmem:[#allocation15 + $0x9d0] sm:$0xff]
    %v2679 = vld [vmem:[#allocation15 + $0x9d8] sm:$0xff]
    %v2680 = vld [vmem:[#allocation15 + $0x9e0] sm:$0xff]
    %v2681 = vld [vmem:[#allocation15 + $0x9e8] sm:$0xff]
    %v2682 = vld [vmem:[#allocation15 + $0x9f0] sm:$0xff]
    %v2683 = vld [vmem:[#allocation15 + $0x9f8] sm:$0xff]
    %v2684 = vld [vmem:[#allocation15 + $0xa00] sm:$0xff]
    %v2685 = vld [vmem:[#allocation15 + $0xa08] sm:$0xff]
    %v2686 = vld [vmem:[#allocation15 + $0xa10] sm:$0xff]
    %v2687 = vld [vmem:[#allocation15 + $0xa18] sm:$0xff]
    %v2688 = vld [vmem:[#allocation15 + $0xa20] sm:$0xff]
    %v2689 = vld [vmem:[#allocation15 + $0xa28] sm:$0xff]
    %v2690 = vld [vmem:[#allocation15 + $0xa30] sm:$0xff]
    %v2691 = vld [vmem:[#allocation15 + $0xa38] sm:$0xff]
    %v2692 = vld [vmem:[#allocation15 + $0xa40] sm:$0xff]
    %v2693 = vld [vmem:[#allocation15 + $0xa48] sm:$0xff]
    %v2694 = vld [vmem:[#allocation15 + $0xa50] sm:$0xff]
    %v2695 = vld [vmem:[#allocation15 + $0xa58] sm:$0xff]
    %v2696 = vld [vmem:[#allocation15 + $0xa60] sm:$0xff]
    %v2697 = vld [vmem:[#allocation15 + $0xa68] sm:$0xff]
    %v2698 = vld [vmem:[#allocation15 + $0xa70] sm:$0xff]
    %v2699 = vld [vmem:[#allocation15 + $0xa78] sm:$0xff]
    %v2700 = vld [vmem:[#allocation15 + $0xa80] sm:$0xff]
    %v2701 = vld [vmem:[#allocation15 + $0xa88] sm:$0xff]
    %v2702 = vld [vmem:[#allocation15 + $0xa90] sm:$0xff]
    %v2703 = vld [vmem:[#allocation15 + $0xa98] sm:$0xff]
    %v2704 = vld [vmem:[#allocation15 + $0xaa0] sm:$0xff]
    %v2705 = vld [vmem:[#allocation15 + $0xaa8] sm:$0xff]
    %v2706 = vld [vmem:[#allocation15 + $0xab0] sm:$0xff]
    %v2707 = vld [vmem:[#allocation15 + $0xab8] sm:$0xff]
    %v2708 = vld [vmem:[#allocation15 + $0xac0] sm:$0xff]
    %v2709 = vld [vmem:[#allocation15 + $0xac8] sm:$0xff]
    %v2710 = vld [vmem:[#allocation15 + $0xad0] sm:$0xff]
    %v2711 = vld [vmem:[#allocation15 + $0xad8] sm:$0xff]
    %v2712 = vld [vmem:[#allocation15 + $0xae0] sm:$0xff]
    %v2713 = vld [vmem:[#allocation15 + $0xae8] sm:$0xff]
    %v2714 = vld [vmem:[#allocation15 + $0xaf0] sm:$0xff]
    %v2715 = vld [vmem:[#allocation15 + $0xaf8] sm:$0xff]
    %v2716 = vld [vmem:[#allocation15 + $0xb00] sm:$0xff]
    %v2717 = vld [vmem:[#allocation15 + $0xb08] sm:$0xff]
    %v2718 = vld [vmem:[#allocation15 + $0xb10] sm:$0xff]
    %v2719 = vld [vmem:[#allocation15 + $0xb18] sm:$0xff]
    %v2720 = vld [vmem:[#allocation15 + $0xb20] sm:$0xff]
    %v2721 = vld [vmem:[#allocation15 + $0xb28] sm:$0xff]
    %v2722 = vld [vmem:[#allocation15 + $0xb30] sm:$0xff]
    %v2723 = vld [vmem:[#allocation15 + $0xb38] sm:$0xff]
    %v2724 = vld [vmem:[#allocation15 + $0xb40] sm:$0xff]
    %v2725 = vld [vmem:[#allocation15 + $0xb48] sm:$0xff]
    %v2726 = vld [vmem:[#allocation15 + $0xb50] sm:$0xff]
    %v2727 = vld [vmem:[#allocation15 + $0xb58] sm:$0xff]
    %v2728 = vld [vmem:[#allocation15 + $0xb60] sm:$0xff]
    %v2729 = vld [vmem:[#allocation15 + $0xb68] sm:$0xff]
    %v2730 = vld [vmem:[#allocation15 + $0xb70] sm:$0xff]
    %v2731 = vld [vmem:[#allocation15 + $0xb78] sm:$0xff]
    %v2732 = vld [vmem:[#allocation15 + $0xb80] sm:$0xff]
    %v2733 = vld [vmem:[#allocation15 + $0xb88] sm:$0xff]
    %v2734 = vld [vmem:[#allocation15 + $0xb90] sm:$0xff]
    %v2735 = vld [vmem:[#allocation15 + $0xb98] sm:$0xff]
    %v2736 = vld [vmem:[#allocation15 + $0xba0] sm:$0xff]
    %v2737 = vld [vmem:[#allocation15 + $0xba8] sm:$0xff]
    %v2738 = vld [vmem:[#allocation15 + $0xbb0] sm:$0xff]
    %v2739 = vld [vmem:[#allocation15 + $0xbb8] sm:$0xff]
    %v2740 = vld [vmem:[#allocation15 + $0xbc0] sm:$0xff]
    %v2741 = vld [vmem:[#allocation15 + $0xbc8] sm:$0xff]
    %v2742 = vld [vmem:[#allocation15 + $0xbd0] sm:$0xff]
    %v2743 = vld [vmem:[#allocation15 + $0xbd8] sm:$0xff]
    %v2744 = vld [vmem:[#allocation15 + $0xbe0] sm:$0xff]
    %v2745 = vld [vmem:[#allocation15 + $0xbe8] sm:$0xff]
    %v2746 = vld [vmem:[#allocation15 + $0xbf0] sm:$0xff]
    %v2747 = vld [vmem:[#allocation15 + $0xbf8] sm:$0xff]
    %v2748 = vld [vmem:[#allocation15 + $0xc00] sm:$0xff]
    %v2749 = vld [vmem:[#allocation15 + $0xc08] sm:$0xff]
    %v2750 = vld [vmem:[#allocation15 + $0xc10] sm:$0xff]
    %v2751 = vld [vmem:[#allocation15 + $0xc18] sm:$0xff]
    %v2752 = vld [vmem:[#allocation15 + $0xc20] sm:$0xff]
    %v2753 = vld [vmem:[#allocation15 + $0xc28] sm:$0xff]
    %v2754 = vld [vmem:[#allocation15 + $0xc30] sm:$0xff]
    %v2755 = vld [vmem:[#allocation15 + $0xc38] sm:$0xff]
    %v2756 = vld [vmem:[#allocation15 + $0xc40] sm:$0xff]
    %v2757 = vld [vmem:[#allocation15 + $0xc48] sm:$0xff]
    %v2758 = vld [vmem:[#allocation15 + $0xc50] sm:$0xff]
    %v2759 = vld [vmem:[#allocation15 + $0xc58] sm:$0xff]
    %v2760 = vld [vmem:[#allocation15 + $0xc60] sm:$0xff]
    %v2761 = vld [vmem:[#allocation15 + $0xc68] sm:$0xff]
    %v2762 = vld [vmem:[#allocation15 + $0xc70] sm:$0xff]
    %v2763 = vld [vmem:[#allocation15 + $0xc78] sm:$0xff]
    %v2764 = vld [vmem:[#allocation15 + $0xc80] sm:$0xff]
    %v2765 = vld [vmem:[#allocation15 + $0xc88] sm:$0xff]
    %v2766 = vld [vmem:[#allocation15 + $0xc90] sm:$0xff]
    %v2767 = vld [vmem:[#allocation15 + $0xc98] sm:$0xff]
    %v2768 = vld [vmem:[#allocation15 + $0xca0] sm:$0xff]
    %v2769 = vld [vmem:[#allocation15 + $0xca8] sm:$0xff]
    %v2770 = vld [vmem:[#allocation15 + $0xcb0] sm:$0xff]
    %v2771 = vld [vmem:[#allocation15 + $0xcb8] sm:$0xff]
    %v2772 = vld [vmem:[#allocation15 + $0xcc0] sm:$0xff]
    %v2773 = vld [vmem:[#allocation15 + $0xcc8] sm:$0xff]
    %v2774 = vld [vmem:[#allocation15 + $0xcd0] sm:$0xff]
    %v2775 = vld [vmem:[#allocation15 + $0xcd8] sm:$0xff]
    %v2776 = vld [vmem:[#allocation15 + $0xce0] sm:$0xff]
    %v2777 = vld [vmem:[#allocation15 + $0xce8] sm:$0xff]
    %v2778 = vld [vmem:[#allocation15 + $0xcf0] sm:$0xff]
    %v2779 = vld [vmem:[#allocation15 + $0xcf8] sm:$0xff]
    %v2780 = vld [vmem:[#allocation15 + $0xd00] sm:$0xff]
    %v2781 = vld [vmem:[#allocation15 + $0xd08] sm:$0xff]
    %v2782 = vld [vmem:[#allocation15 + $0xd10] sm:$0xff]
    %v2783 = vld [vmem:[#allocation15 + $0xd18] sm:$0xff]
    %v2784 = vld [vmem:[#allocation15 + $0xd20] sm:$0xff]
    %v2785 = vld [vmem:[#allocation15 + $0xd28] sm:$0xff]
    %v2786 = vld [vmem:[#allocation15 + $0xd30] sm:$0xff]
    %v2787 = vld [vmem:[#allocation15 + $0xd38] sm:$0xff]
    %v2788 = vld [vmem:[#allocation15 + $0xd40] sm:$0xff]
    %v2789 = vld [vmem:[#allocation15 + $0xd48] sm:$0xff]
    %v2790 = vld [vmem:[#allocation15 + $0xd50] sm:$0xff]
    %v2791 = vld [vmem:[#allocation15 + $0xd58] sm:$0xff]
    %v2792 = vld [vmem:[#allocation15 + $0xd60] sm:$0xff]
    %v2793 = vld [vmem:[#allocation15 + $0xd68] sm:$0xff]
    %v2794 = vld [vmem:[#allocation15 + $0xd70] sm:$0xff]
    %v2795 = vld [vmem:[#allocation15 + $0xd78] sm:$0xff]
    %v2796 = vld [vmem:[#allocation15 + $0xd80] sm:$0xff]
    %v2797 = vld [vmem:[#allocation15 + $0xd88] sm:$0xff]
    %v2798 = vld [vmem:[#allocation15 + $0xd90] sm:$0xff]
    %v2799 = vld [vmem:[#allocation15 + $0xd98] sm:$0xff]
    %v2800 = vld [vmem:[#allocation15 + $0xda0] sm:$0xff]
    %v2801 = vld [vmem:[#allocation15 + $0xda8] sm:$0xff]
    %v2802 = vld [vmem:[#allocation15 + $0xdb0] sm:$0xff]
    %v2803 = vld [vmem:[#allocation15 + $0xdb8] sm:$0xff]
    %v2804 = vld [vmem:[#allocation15 + $0xdc0] sm:$0xff]
    %v2805 = vld [vmem:[#allocation15 + $0xdc8] sm:$0xff]
    %v2806 = vld [vmem:[#allocation15 + $0xdd0] sm:$0xff]
    %v2807 = vld [vmem:[#allocation15 + $0xdd8] sm:$0xff]
    %v2808 = vld [vmem:[#allocation15 + $0xde0] sm:$0xff]
    %v2809 = vld [vmem:[#allocation15 + $0xde8] sm:$0xff]
    %v2810 = vld [vmem:[#allocation15 + $0xdf0] sm:$0xff]
    %v2811 = vld [vmem:[#allocation15 + $0xdf8] sm:$0xff]
    %v2812 = vld [vmem:[#allocation15 + $0xe00] sm:$0xff]
    %v2813 = vld [vmem:[#allocation15 + $0xe08] sm:$0xff]
    %v2814 = vld [vmem:[#allocation15 + $0xe10] sm:$0xff]
    %v2815 = vld [vmem:[#allocation15 + $0xe18] sm:$0xff]
    %v2816 = vld [vmem:[#allocation15 + $0xe20] sm:$0xff]
    %v2817 = vld [vmem:[#allocation15 + $0xe28] sm:$0xff]
    %v2818 = vld [vmem:[#allocation15 + $0xe30] sm:$0xff]
    %v2819 = vld [vmem:[#allocation15 + $0xe38] sm:$0xff]
    %v2820 = vld [vmem:[#allocation15 + $0xe40] sm:$0xff]
    %v2821 = vld [vmem:[#allocation15 + $0xe48] sm:$0xff]
    %v2822 = vld [vmem:[#allocation15 + $0xe50] sm:$0xff]
    %v2823 = vld [vmem:[#allocation15 + $0xe58] sm:$0xff]
    %v2824 = vld [vmem:[#allocation15 + $0xe60] sm:$0xff]
    %v2825 = vld [vmem:[#allocation15 + $0xe68] sm:$0xff]
    %v2826 = vld [vmem:[#allocation15 + $0xe70] sm:$0xff]
    %v2827 = vld [vmem:[#allocation15 + $0xe78] sm:$0xff]
    %v2828 = vld [vmem:[#allocation15 + $0xe80] sm:$0xff]
    %v2829 = vld [vmem:[#allocation15 + $0xe88] sm:$0xff]
    %v2830 = vld [vmem:[#allocation15 + $0xe90] sm:$0xff]
    %v2831 = vld [vmem:[#allocation15 + $0xe98] sm:$0xff]
    %v2832 = vld [vmem:[#allocation15 + $0xea0] sm:$0xff]
    %v2833 = vld [vmem:[#allocation15 + $0xea8] sm:$0xff]
    %v2834 = vld [vmem:[#allocation15 + $0xeb0] sm:$0xff]
    %v2835 = vld [vmem:[#allocation15 + $0xeb8] sm:$0xff]
    %v2836 = vld [vmem:[#allocation15 + $0xec0] sm:$0xff]
    %v2837 = vld [vmem:[#allocation15 + $0xec8] sm:$0xff]
    %v2838 = vld [vmem:[#allocation15 + $0xed0] sm:$0xff]
    %v2839 = vld [vmem:[#allocation15 + $0xed8] sm:$0xff]
    %v2840 = vld [vmem:[#allocation15 + $0xee0] sm:$0xff]
    %v2841 = vld [vmem:[#allocation15 + $0xee8] sm:$0xff]
    %v2842 = vld [vmem:[#allocation15 + $0xef0] sm:$0xff]
    %v2843 = vld [vmem:[#allocation15 + $0xef8] sm:$0xff]
    %v2844 = vld [vmem:[#allocation15 + $0xf00] sm:$0xff]
    %v2845 = vld [vmem:[#allocation15 + $0xf08] sm:$0xff]
    %v2846 = vld [vmem:[#allocation15 + $0xf10] sm:$0xff]
    %v2847 = vld [vmem:[#allocation15 + $0xf18] sm:$0xff]
    %v2848 = vld [vmem:[#allocation15 + $0xf20] sm:$0xff]
    %v2849 = vld [vmem:[#allocation15 + $0xf28] sm:$0xff]
    %v2850 = vld [vmem:[#allocation15 + $0xf30] sm:$0xff]
    %v2851 = vld [vmem:[#allocation15 + $0xf38] sm:$0xff]
    %v2852 = vld [vmem:[#allocation15 + $0xf40] sm:$0xff]
    %v2853 = vld [vmem:[#allocation15 + $0xf48] sm:$0xff]
    %v2854 = vld [vmem:[#allocation15 + $0xf50] sm:$0xff]
    %v2855 = vld [vmem:[#allocation15 + $0xf58] sm:$0xff]
    %v2856 = vld [vmem:[#allocation15 + $0xf60] sm:$0xff]
    %v2857 = vld [vmem:[#allocation15 + $0xf68] sm:$0xff]
    %v2858 = vld [vmem:[#allocation15 + $0xf70] sm:$0xff]
    %v2859 = vld [vmem:[#allocation15 + $0xf78] sm:$0xff]
    %v2860 = vld [vmem:[#allocation15 + $0xf80] sm:$0xff]
    %v2861 = vld [vmem:[#allocation15 + $0xf88] sm:$0xff]
    %v2862 = vld [vmem:[#allocation15 + $0xf90] sm:$0xff]
    %v2863 = vld [vmem:[#allocation15 + $0xf98] sm:$0xff]
    %v2864 = vld [vmem:[#allocation15 + $0xfa0] sm:$0xff]
    %v2865 = vld [vmem:[#allocation15 + $0xfa8] sm:$0xff]
    %v2866 = vld [vmem:[#allocation15 + $0xfb0] sm:$0xff]
    %v2867 = vld [vmem:[#allocation15 + $0xfb8] sm:$0xff]
    %v2868 = vld [vmem:[#allocation15 + $0xfc0] sm:$0xff]
    %v2869 = vld [vmem:[#allocation15 + $0xfc8] sm:$0xff]
    %v2870 = vld [vmem:[#allocation15 + $0xfd0] sm:$0xff]
    %v2871 = vld [vmem:[#allocation15 + $0xfd8] sm:$0xff]
    %v2872 = vld [vmem:[#allocation15 + $0xfe0] sm:$0xff]
    %v2873 = vld [vmem:[#allocation15 + $0xfe8] sm:$0xff]
    %v2874 = vld [vmem:[#allocation15 + $0xff0] sm:$0xff]
    %v2875 = vld [vmem:[#allocation15 + $0xff8] sm:$0xff]
    %v2876 = vld [vmem:[#allocation17] sm:$0xff]
    %v2878 = vlaneseq
    %v2879 = vshrl.u32 %v2878, 7
    %v2880 = vsub.s32 0, %v2879
    %v2881 = vrot.slane %v2876, %v2880
    %v2882 = vlaneseq
    %v2883 = vshrl.u32 %v2882, 7
    %v2884 = vsub.s32 1, %v2883
    %v2885 = vrot.slane %v2876, %v2884
    %v2886 = vlaneseq
    %v2887 = vshrl.u32 %v2886, 7
    %v2888 = vsub.s32 2, %v2887
    %v2889 = vrot.slane %v2876, %v2888
    %v2890 = vlaneseq
    %v2891 = vshrl.u32 %v2890, 7
    %v2892 = vsub.s32 3, %v2891
    %v2893 = vrot.slane %v2876, %v2892
    %v2894 = vlaneseq
    %v2895 = vshrl.u32 %v2894, 7
    %v2896 = vsub.s32 4, %v2895
    %v2897 = vrot.slane %v2876, %v2896
    %v2898 = vlaneseq
    %v2899 = vshrl.u32 %v2898, 7
    %v2900 = vsub.s32 5, %v2899
    %v2901 = vrot.slane %v2876, %v2900
    %v2902 = vlaneseq
    %v2903 = vshrl.u32 %v2902, 7
    %v2904 = vsub.s32 6, %v2903
    %v2905 = vrot.slane %v2876, %v2904
    %v2906 = vlaneseq
    %v2907 = vshrl.u32 %v2906, 7
    %v2908 = vsub.s32 7, %v2907
    %v2909 = vrot.slane %v2876, %v2908
    %v3430 = vunpack.c.l.b16 %v2364
    %v3431 = vunpack.c.h.b16 %v2364
    %v3432 = vunpack.c.l.b16 %v2365
    %v3433 = vunpack.c.h.b16 %v2365
    %v3434 = vunpack.c.l.b16 %v2366
    %v3435 = vunpack.c.h.b16 %v2366
    %v3436 = vunpack.c.l.b16 %v2367
    %v3437 = vunpack.c.h.b16 %v2367
    %v3438 = vunpack.c.l.b16 %v2368
    %v3439 = vunpack.c.h.b16 %v2368
    %v3440 = vunpack.c.l.b16 %v2369
    %v3441 = vunpack.c.h.b16 %v2369
    %v3442 = vunpack.c.l.b16 %v2370
    %v3443 = vunpack.c.h.b16 %v2370
    %v3444 = vunpack.c.l.b16 %v2371
    %v3445 = vunpack.c.h.b16 %v2371
    %v3446 = vunpack.c.l.b16 %v2372
    %v3447 = vunpack.c.h.b16 %v2372
    %v3448 = vunpack.c.l.b16 %v2373
    %v3449 = vunpack.c.h.b16 %v2373
    %v3450 = vunpack.c.l.b16 %v2374
    %v3451 = vunpack.c.h.b16 %v2374
    %v3452 = vunpack.c.l.b16 %v2375
    %v3453 = vunpack.c.h.b16 %v2375
    %v3454 = vunpack.c.l.b16 %v2376
    %v3455 = vunpack.c.h.b16 %v2376
    %v3456 = vunpack.c.l.b16 %v2377
    %v3457 = vunpack.c.h.b16 %v2377
    %v3458 = vunpack.c.l.b16 %v2378
    %v3459 = vunpack.c.h.b16 %v2378
    %v3460 = vunpack.c.l.b16 %v2379
    %v3461 = vunpack.c.h.b16 %v2379
    %v3462 = vunpack.c.l.b16 %v2380
    %v3463 = vunpack.c.h.b16 %v2380
    %v3464 = vunpack.c.l.b16 %v2381
    %v3465 = vunpack.c.h.b16 %v2381
    %v3466 = vunpack.c.l.b16 %v2382
    %v3467 = vunpack.c.h.b16 %v2382
    %v3468 = vunpack.c.l.b16 %v2383
    %v3469 = vunpack.c.h.b16 %v2383
    %v3470 = vunpack.c.l.b16 %v2384
    %v3471 = vunpack.c.h.b16 %v2384
    %v3472 = vunpack.c.l.b16 %v2385
    %v3473 = vunpack.c.h.b16 %v2385
    %v3474 = vunpack.c.l.b16 %v2386
    %v3475 = vunpack.c.h.b16 %v2386
    %v3476 = vunpack.c.l.b16 %v2387
    %v3477 = vunpack.c.h.b16 %v2387
    %v3478 = vunpack.c.l.b16 %v2388
    %v3479 = vunpack.c.h.b16 %v2388
    %v3480 = vunpack.c.l.b16 %v2389
    %v3481 = vunpack.c.h.b16 %v2389
    %v3482 = vunpack.c.l.b16 %v2390
    %v3483 = vunpack.c.h.b16 %v2390
    %v3484 = vunpack.c.l.b16 %v2391
    %v3485 = vunpack.c.h.b16 %v2391
    %v3486 = vunpack.c.l.b16 %v2392
    %v3487 = vunpack.c.h.b16 %v2392
    %v3488 = vunpack.c.l.b16 %v2393
    %v3489 = vunpack.c.h.b16 %v2393
    %v3490 = vunpack.c.l.b16 %v2394
    %v3491 = vunpack.c.h.b16 %v2394
    %v3492 = vunpack.c.l.b16 %v2395
    %v3493 = vunpack.c.h.b16 %v2395
    %v3494 = vunpack.c.l.b16 %v2396
    %v3495 = vunpack.c.h.b16 %v2396
    %v3496 = vunpack.c.l.b16 %v2397
    %v3497 = vunpack.c.h.b16 %v2397
    %v3498 = vunpack.c.l.b16 %v2398
    %v3499 = vunpack.c.h.b16 %v2398
    %v3500 = vunpack.c.l.b16 %v2399
    %v3501 = vunpack.c.h.b16 %v2399
    %v3502 = vunpack.c.l.b16 %v2400
    %v3503 = vunpack.c.h.b16 %v2400
    %v3504 = vunpack.c.l.b16 %v2401
    %v3505 = vunpack.c.h.b16 %v2401
    %v3506 = vunpack.c.l.b16 %v2402
    %v3507 = vunpack.c.h.b16 %v2402
    %v3508 = vunpack.c.l.b16 %v2403
    %v3509 = vunpack.c.h.b16 %v2403
    %v3510 = vunpack.c.l.b16 %v2404
    %v3511 = vunpack.c.h.b16 %v2404
    %v3512 = vunpack.c.l.b16 %v2405
    %v3513 = vunpack.c.h.b16 %v2405
    %v3514 = vunpack.c.l.b16 %v2406
    %v3515 = vunpack.c.h.b16 %v2406
    %v3516 = vunpack.c.l.b16 %v2407
    %v3517 = vunpack.c.h.b16 %v2407
    %v3518 = vunpack.c.l.b16 %v2408
    %v3519 = vunpack.c.h.b16 %v2408
    %v3520 = vunpack.c.l.b16 %v2409
    %v3521 = vunpack.c.h.b16 %v2409
    %v3522 = vunpack.c.l.b16 %v2410
    %v3523 = vunpack.c.h.b16 %v2410
    %v3524 = vunpack.c.l.b16 %v2411
    %v3525 = vunpack.c.h.b16 %v2411
    %v3526 = vunpack.c.l.b16 %v2412
    %v3527 = vunpack.c.h.b16 %v2412
    %v3528 = vunpack.c.l.b16 %v2413
    %v3529 = vunpack.c.h.b16 %v2413
    %v3530 = vunpack.c.l.b16 %v2414
    %v3531 = vunpack.c.h.b16 %v2414
    %v3532 = vunpack.c.l.b16 %v2415
    %v3533 = vunpack.c.h.b16 %v2415
    %v3534 = vunpack.c.l.b16 %v2416
    %v3535 = vunpack.c.h.b16 %v2416
    %v3536 = vunpack.c.l.b16 %v2417
    %v3537 = vunpack.c.h.b16 %v2417
    %v3538 = vunpack.c.l.b16 %v2418
    %v3539 = vunpack.c.h.b16 %v2418
    %v3540 = vunpack.c.l.b16 %v2419
    %v3541 = vunpack.c.h.b16 %v2419
    %v3542 = vunpack.c.l.b16 %v2420
    %v3543 = vunpack.c.h.b16 %v2420
    %v3544 = vunpack.c.l.b16 %v2421
    %v3545 = vunpack.c.h.b16 %v2421
    %v3546 = vunpack.c.l.b16 %v2422
    %v3547 = vunpack.c.h.b16 %v2422
    %v3548 = vunpack.c.l.b16 %v2423
    %v3549 = vunpack.c.h.b16 %v2423
    %v3550 = vunpack.c.l.b16 %v2424
    %v3551 = vunpack.c.h.b16 %v2424
    %v3552 = vunpack.c.l.b16 %v2425
    %v3553 = vunpack.c.h.b16 %v2425
    %v3554 = vunpack.c.l.b16 %v2426
    %v3555 = vunpack.c.h.b16 %v2426
    %v3556 = vunpack.c.l.b16 %v2427
    %v3557 = vunpack.c.h.b16 %v2427
    %v3558 = vunpack.c.l.b16 %v2428
    %v3559 = vunpack.c.h.b16 %v2428
    %v3560 = vunpack.c.l.b16 %v2429
    %v3561 = vunpack.c.h.b16 %v2429
    %v3562 = vunpack.c.l.b16 %v2430
    %v3563 = vunpack.c.h.b16 %v2430
    %v3564 = vunpack.c.l.b16 %v2431
    %v3565 = vunpack.c.h.b16 %v2431
    %v3566 = vunpack.c.l.b16 %v2432
    %v3567 = vunpack.c.h.b16 %v2432
    %v3568 = vunpack.c.l.b16 %v2433
    %v3569 = vunpack.c.h.b16 %v2433
    %v3570 = vunpack.c.l.b16 %v2434
    %v3571 = vunpack.c.h.b16 %v2434
    %v3572 = vunpack.c.l.b16 %v2435
    %v3573 = vunpack.c.h.b16 %v2435
    %v3574 = vunpack.c.l.b16 %v2436
    %v3575 = vunpack.c.h.b16 %v2436
    %v3576 = vunpack.c.l.b16 %v2437
    %v3577 = vunpack.c.h.b16 %v2437
    %v3578 = vunpack.c.l.b16 %v2438
    %v3579 = vunpack.c.h.b16 %v2438
    %v3580 = vunpack.c.l.b16 %v2439
    %v3581 = vunpack.c.h.b16 %v2439
    %v3582 = vunpack.c.l.b16 %v2440
    %v3583 = vunpack.c.h.b16 %v2440
    %v3584 = vunpack.c.l.b16 %v2441
    %v3585 = vunpack.c.h.b16 %v2441
    %v3586 = vunpack.c.l.b16 %v2442
    %v3587 = vunpack.c.h.b16 %v2442
    %v3588 = vunpack.c.l.b16 %v2443
    %v3589 = vunpack.c.h.b16 %v2443
    %v3590 = vunpack.c.l.b16 %v2444
    %v3591 = vunpack.c.h.b16 %v2444
    %v3592 = vunpack.c.l.b16 %v2445
    %v3593 = vunpack.c.h.b16 %v2445
    %v3594 = vunpack.c.l.b16 %v2446
    %v3595 = vunpack.c.h.b16 %v2446
    %v3596 = vunpack.c.l.b16 %v2447
    %v3597 = vunpack.c.h.b16 %v2447
    %v3598 = vunpack.c.l.b16 %v2448
    %v3599 = vunpack.c.h.b16 %v2448
    %v3600 = vunpack.c.l.b16 %v2449
    %v3601 = vunpack.c.h.b16 %v2449
    %v3602 = vunpack.c.l.b16 %v2450
    %v3603 = vunpack.c.h.b16 %v2450
    %v3604 = vunpack.c.l.b16 %v2451
    %v3605 = vunpack.c.h.b16 %v2451
    %v3606 = vunpack.c.l.b16 %v2452
    %v3607 = vunpack.c.h.b16 %v2452
    %v3608 = vunpack.c.l.b16 %v2453
    %v3609 = vunpack.c.h.b16 %v2453
    %v3610 = vunpack.c.l.b16 %v2454
    %v3611 = vunpack.c.h.b16 %v2454
    %v3612 = vunpack.c.l.b16 %v2455
    %v3613 = vunpack.c.h.b16 %v2455
    %v3614 = vunpack.c.l.b16 %v2456
    %v3615 = vunpack.c.h.b16 %v2456
    %v3616 = vunpack.c.l.b16 %v2457
    %v3617 = vunpack.c.h.b16 %v2457
    %v3618 = vunpack.c.l.b16 %v2458
    %v3619 = vunpack.c.h.b16 %v2458
    %v3620 = vunpack.c.l.b16 %v2459
    %v3621 = vunpack.c.h.b16 %v2459
    %v3622 = vunpack.c.l.b16 %v2460
    %v3623 = vunpack.c.h.b16 %v2460
    %v3624 = vunpack.c.l.b16 %v2461
    %v3625 = vunpack.c.h.b16 %v2461
    %v3626 = vunpack.c.l.b16 %v2462
    %v3627 = vunpack.c.h.b16 %v2462
    %v3628 = vunpack.c.l.b16 %v2463
    %v3629 = vunpack.c.h.b16 %v2463
    %v3630 = vunpack.c.l.b16 %v2464
    %v3631 = vunpack.c.h.b16 %v2464
    %v3632 = vunpack.c.l.b16 %v2465
    %v3633 = vunpack.c.h.b16 %v2465
    %v3634 = vunpack.c.l.b16 %v2466
    %v3635 = vunpack.c.h.b16 %v2466
    %v3636 = vunpack.c.l.b16 %v2467
    %v3637 = vunpack.c.h.b16 %v2467
    %v3638 = vunpack.c.l.b16 %v2468
    %v3639 = vunpack.c.h.b16 %v2468
    %v3640 = vunpack.c.l.b16 %v2469
    %v3641 = vunpack.c.h.b16 %v2469
    %v3642 = vunpack.c.l.b16 %v2470
    %v3643 = vunpack.c.h.b16 %v2470
    %v3644 = vunpack.c.l.b16 %v2471
    %v3645 = vunpack.c.h.b16 %v2471
    %v3646 = vunpack.c.l.b16 %v2472
    %v3647 = vunpack.c.h.b16 %v2472
    %v3648 = vunpack.c.l.b16 %v2473
    %v3649 = vunpack.c.h.b16 %v2473
    %v3650 = vunpack.c.l.b16 %v2474
    %v3651 = vunpack.c.h.b16 %v2474
    %v3652 = vunpack.c.l.b16 %v2475
    %v3653 = vunpack.c.h.b16 %v2475
    %v3654 = vunpack.c.l.b16 %v2476
    %v3655 = vunpack.c.h.b16 %v2476
    %v3656 = vunpack.c.l.b16 %v2477
    %v3657 = vunpack.c.h.b16 %v2477
    %v3658 = vunpack.c.l.b16 %v2478
    %v3659 = vunpack.c.h.b16 %v2478
    %v3660 = vunpack.c.l.b16 %v2479
    %v3661 = vunpack.c.h.b16 %v2479
    %v3662 = vunpack.c.l.b16 %v2480
    %v3663 = vunpack.c.h.b16 %v2480
    %v3664 = vunpack.c.l.b16 %v2481
    %v3665 = vunpack.c.h.b16 %v2481
    %v3666 = vunpack.c.l.b16 %v2482
    %v3667 = vunpack.c.h.b16 %v2482
    %v3668 = vunpack.c.l.b16 %v2483
    %v3669 = vunpack.c.h.b16 %v2483
    %v3670 = vunpack.c.l.b16 %v2484
    %v3671 = vunpack.c.h.b16 %v2484
    %v3672 = vunpack.c.l.b16 %v2485
    %v3673 = vunpack.c.h.b16 %v2485
    %v3674 = vunpack.c.l.b16 %v2486
    %v3675 = vunpack.c.h.b16 %v2486
    %v3676 = vunpack.c.l.b16 %v2487
    %v3677 = vunpack.c.h.b16 %v2487
    %v3678 = vunpack.c.l.b16 %v2488
    %v3679 = vunpack.c.h.b16 %v2488
    %v3680 = vunpack.c.l.b16 %v2489
    %v3681 = vunpack.c.h.b16 %v2489
    %v3682 = vunpack.c.l.b16 %v2490
    %v3683 = vunpack.c.h.b16 %v2490
    %v3684 = vunpack.c.l.b16 %v2491
    %v3685 = vunpack.c.h.b16 %v2491
    %v3686 = vunpack.c.l.b16 %v2492
    %v3687 = vunpack.c.h.b16 %v2492
    %v3688 = vunpack.c.l.b16 %v2493
    %v3689 = vunpack.c.h.b16 %v2493
    %v3690 = vunpack.c.l.b16 %v2494
    %v3691 = vunpack.c.h.b16 %v2494
    %v3692 = vunpack.c.l.b16 %v2495
    %v3693 = vunpack.c.h.b16 %v2495
    %v3694 = vunpack.c.l.b16 %v2496
    %v3695 = vunpack.c.h.b16 %v2496
    %v3696 = vunpack.c.l.b16 %v2497
    %v3697 = vunpack.c.h.b16 %v2497
    %v3698 = vunpack.c.l.b16 %v2498
    %v3699 = vunpack.c.h.b16 %v2498
    %v3700 = vunpack.c.l.b16 %v2499
    %v3701 = vunpack.c.h.b16 %v2499
    %v3702 = vunpack.c.l.b16 %v2500
    %v3703 = vunpack.c.h.b16 %v2500
    %v3704 = vunpack.c.l.b16 %v2501
    %v3705 = vunpack.c.h.b16 %v2501
    %v3706 = vunpack.c.l.b16 %v2502
    %v3707 = vunpack.c.h.b16 %v2502
    %v3708 = vunpack.c.l.b16 %v2503
    %v3709 = vunpack.c.h.b16 %v2503
    %v3710 = vunpack.c.l.b16 %v2504
    %v3711 = vunpack.c.h.b16 %v2504
    %v3712 = vunpack.c.l.b16 %v2505
    %v3713 = vunpack.c.h.b16 %v2505
    %v3714 = vunpack.c.l.b16 %v2506
    %v3715 = vunpack.c.h.b16 %v2506
    %v3716 = vunpack.c.l.b16 %v2507
    %v3717 = vunpack.c.h.b16 %v2507
    %v3718 = vunpack.c.l.b16 %v2508
    %v3719 = vunpack.c.h.b16 %v2508
    %v3720 = vunpack.c.l.b16 %v2509
    %v3721 = vunpack.c.h.b16 %v2509
    %v3722 = vunpack.c.l.b16 %v2510
    %v3723 = vunpack.c.h.b16 %v2510
    %v3724 = vunpack.c.l.b16 %v2511
    %v3725 = vunpack.c.h.b16 %v2511
    %v3726 = vunpack.c.l.b16 %v2512
    %v3727 = vunpack.c.h.b16 %v2512
    %v3728 = vunpack.c.l.b16 %v2513
    %v3729 = vunpack.c.h.b16 %v2513
    %v3730 = vunpack.c.l.b16 %v2514
    %v3731 = vunpack.c.h.b16 %v2514
    %v3732 = vunpack.c.l.b16 %v2515
    %v3733 = vunpack.c.h.b16 %v2515
    %v3734 = vunpack.c.l.b16 %v2516
    %v3735 = vunpack.c.h.b16 %v2516
    %v3736 = vunpack.c.l.b16 %v2517
    %v3737 = vunpack.c.h.b16 %v2517
    %v3738 = vunpack.c.l.b16 %v2518
    %v3739 = vunpack.c.h.b16 %v2518
    %v3740 = vunpack.c.l.b16 %v2519
    %v3741 = vunpack.c.h.b16 %v2519
    %v3742 = vunpack.c.l.b16 %v2520
    %v3743 = vunpack.c.h.b16 %v2520
    %v3744 = vunpack.c.l.b16 %v2521
    %v3745 = vunpack.c.h.b16 %v2521
    %v3746 = vunpack.c.l.b16 %v2522
    %v3747 = vunpack.c.h.b16 %v2522
    %v3748 = vunpack.c.l.b16 %v2523
    %v3749 = vunpack.c.h.b16 %v2523
    %v3750 = vunpack.c.l.b16 %v2524
    %v3751 = vunpack.c.h.b16 %v2524
    %v3752 = vunpack.c.l.b16 %v2525
    %v3753 = vunpack.c.h.b16 %v2525
    %v3754 = vunpack.c.l.b16 %v2526
    %v3755 = vunpack.c.h.b16 %v2526
    %v3756 = vunpack.c.l.b16 %v2527
    %v3757 = vunpack.c.h.b16 %v2527
    %v3758 = vunpack.c.l.b16 %v2528
    %v3759 = vunpack.c.h.b16 %v2528
    %v3760 = vunpack.c.l.b16 %v2529
    %v3761 = vunpack.c.h.b16 %v2529
    %v3762 = vunpack.c.l.b16 %v2530
    %v3763 = vunpack.c.h.b16 %v2530
    %v3764 = vunpack.c.l.b16 %v2531
    %v3765 = vunpack.c.h.b16 %v2531
    %v3766 = vunpack.c.l.b16 %v2532
    %v3767 = vunpack.c.h.b16 %v2532
    %v3768 = vunpack.c.l.b16 %v2533
    %v3769 = vunpack.c.h.b16 %v2533
    %v3770 = vunpack.c.l.b16 %v2534
    %v3771 = vunpack.c.h.b16 %v2534
    %v3772 = vunpack.c.l.b16 %v2535
    %v3773 = vunpack.c.h.b16 %v2535
    %v3774 = vunpack.c.l.b16 %v2536
    %v3775 = vunpack.c.h.b16 %v2536
    %v3776 = vunpack.c.l.b16 %v2537
    %v3777 = vunpack.c.h.b16 %v2537
    %v3778 = vunpack.c.l.b16 %v2538
    %v3779 = vunpack.c.h.b16 %v2538
    %v3780 = vunpack.c.l.b16 %v2539
    %v3781 = vunpack.c.h.b16 %v2539
    %v3782 = vunpack.c.l.b16 %v2540
    %v3783 = vunpack.c.h.b16 %v2540
    %v3784 = vunpack.c.l.b16 %v2541
    %v3785 = vunpack.c.h.b16 %v2541
    %v3786 = vunpack.c.l.b16 %v2542
    %v3787 = vunpack.c.h.b16 %v2542
    %v3788 = vunpack.c.l.b16 %v2543
    %v3789 = vunpack.c.h.b16 %v2543
    %v3790 = vunpack.c.l.b16 %v2544
    %v3791 = vunpack.c.h.b16 %v2544
    %v3792 = vunpack.c.l.b16 %v2545
    %v3793 = vunpack.c.h.b16 %v2545
    %v3794 = vunpack.c.l.b16 %v2546
    %v3795 = vunpack.c.h.b16 %v2546
    %v3796 = vunpack.c.l.b16 %v2547
    %v3797 = vunpack.c.h.b16 %v2547
    %v3798 = vunpack.c.l.b16 %v2548
    %v3799 = vunpack.c.h.b16 %v2548
    %v3800 = vunpack.c.l.b16 %v2549
    %v3801 = vunpack.c.h.b16 %v2549
    %v3802 = vunpack.c.l.b16 %v2550
    %v3803 = vunpack.c.h.b16 %v2550
    %v3804 = vunpack.c.l.b16 %v2551
    %v3805 = vunpack.c.h.b16 %v2551
    %v3806 = vunpack.c.l.b16 %v2552
    %v3807 = vunpack.c.h.b16 %v2552
    %v3808 = vunpack.c.l.b16 %v2553
    %v3809 = vunpack.c.h.b16 %v2553
    %v3810 = vunpack.c.l.b16 %v2554
    %v3811 = vunpack.c.h.b16 %v2554
    %v3812 = vunpack.c.l.b16 %v2555
    %v3813 = vunpack.c.h.b16 %v2555
    %v3814 = vunpack.c.l.b16 %v2556
    %v3815 = vunpack.c.h.b16 %v2556
    %v3816 = vunpack.c.l.b16 %v2557
    %v3817 = vunpack.c.h.b16 %v2557
    %v3818 = vunpack.c.l.b16 %v2558
    %v3819 = vunpack.c.h.b16 %v2558
    %v3820 = vunpack.c.l.b16 %v2559
    %v3821 = vunpack.c.h.b16 %v2559
    %v3822 = vunpack.c.l.b16 %v2560
    %v3823 = vunpack.c.h.b16 %v2560
    %v3824 = vunpack.c.l.b16 %v2561
    %v3825 = vunpack.c.h.b16 %v2561
    %v3826 = vunpack.c.l.b16 %v2562
    %v3827 = vunpack.c.h.b16 %v2562
    %v3828 = vunpack.c.l.b16 %v2563
    %v3829 = vunpack.c.h.b16 %v2563
    %v3830 = vunpack.c.l.b16 %v2564
    %v3831 = vunpack.c.h.b16 %v2564
    %v3832 = vunpack.c.l.b16 %v2565
    %v3833 = vunpack.c.h.b16 %v2565
    %v3834 = vunpack.c.l.b16 %v2566
    %v3835 = vunpack.c.h.b16 %v2566
    %v3836 = vunpack.c.l.b16 %v2567
    %v3837 = vunpack.c.h.b16 %v2567
    %v3838 = vunpack.c.l.b16 %v2568
    %v3839 = vunpack.c.h.b16 %v2568
    %v3840 = vunpack.c.l.b16 %v2569
    %v3841 = vunpack.c.h.b16 %v2569
    %v3842 = vunpack.c.l.b16 %v2570
    %v3843 = vunpack.c.h.b16 %v2570
    %v3844 = vunpack.c.l.b16 %v2571
    %v3845 = vunpack.c.h.b16 %v2571
    %v3846 = vunpack.c.l.b16 %v2572
    %v3847 = vunpack.c.h.b16 %v2572
    %v3848 = vunpack.c.l.b16 %v2573
    %v3849 = vunpack.c.h.b16 %v2573
    %v3850 = vunpack.c.l.b16 %v2574
    %v3851 = vunpack.c.h.b16 %v2574
    %v3852 = vunpack.c.l.b16 %v2575
    %v3853 = vunpack.c.h.b16 %v2575
    %v3854 = vunpack.c.l.b16 %v2576
    %v3855 = vunpack.c.h.b16 %v2576
    %v3856 = vunpack.c.l.b16 %v2577
    %v3857 = vunpack.c.h.b16 %v2577
    %v3858 = vunpack.c.l.b16 %v2578
    %v3859 = vunpack.c.h.b16 %v2578
    %v3860 = vunpack.c.l.b16 %v2579
    %v3861 = vunpack.c.h.b16 %v2579
    %v3862 = vunpack.c.l.b16 %v2580
    %v3863 = vunpack.c.h.b16 %v2580
    %v3864 = vunpack.c.l.b16 %v2581
    %v3865 = vunpack.c.h.b16 %v2581
    %v3866 = vunpack.c.l.b16 %v2582
    %v3867 = vunpack.c.h.b16 %v2582
    %v3868 = vunpack.c.l.b16 %v2583
    %v3869 = vunpack.c.h.b16 %v2583
    %v3870 = vunpack.c.l.b16 %v2584
    %v3871 = vunpack.c.h.b16 %v2584
    %v3872 = vunpack.c.l.b16 %v2585
    %v3873 = vunpack.c.h.b16 %v2585
    %v3874 = vunpack.c.l.b16 %v2586
    %v3875 = vunpack.c.h.b16 %v2586
    %v3876 = vunpack.c.l.b16 %v2587
    %v3877 = vunpack.c.h.b16 %v2587
    %v3878 = vunpack.c.l.b16 %v2588
    %v3879 = vunpack.c.h.b16 %v2588
    %v3880 = vunpack.c.l.b16 %v2589
    %v3881 = vunpack.c.h.b16 %v2589
    %v3882 = vunpack.c.l.b16 %v2590
    %v3883 = vunpack.c.h.b16 %v2590
    %v3884 = vunpack.c.l.b16 %v2591
    %v3885 = vunpack.c.h.b16 %v2591
    %v3886 = vunpack.c.l.b16 %v2592
    %v3887 = vunpack.c.h.b16 %v2592
    %v3888 = vunpack.c.l.b16 %v2593
    %v3889 = vunpack.c.h.b16 %v2593
    %v3890 = vunpack.c.l.b16 %v2594
    %v3891 = vunpack.c.h.b16 %v2594
    %v3892 = vunpack.c.l.b16 %v2595
    %v3893 = vunpack.c.h.b16 %v2595
    %v3894 = vunpack.c.l.b16 %v2596
    %v3895 = vunpack.c.h.b16 %v2596
    %v3896 = vunpack.c.l.b16 %v2597
    %v3897 = vunpack.c.h.b16 %v2597
    %v3898 = vunpack.c.l.b16 %v2598
    %v3899 = vunpack.c.h.b16 %v2598
    %v3900 = vunpack.c.l.b16 %v2599
    %v3901 = vunpack.c.h.b16 %v2599
    %v3902 = vunpack.c.l.b16 %v2600
    %v3903 = vunpack.c.h.b16 %v2600
    %v3904 = vunpack.c.l.b16 %v2601
    %v3905 = vunpack.c.h.b16 %v2601
    %v3906 = vunpack.c.l.b16 %v2602
    %v3907 = vunpack.c.h.b16 %v2602
    %v3908 = vunpack.c.l.b16 %v2603
    %v3909 = vunpack.c.h.b16 %v2603
    %v3910 = vunpack.c.l.b16 %v2604
    %v3911 = vunpack.c.h.b16 %v2604
    %v3912 = vunpack.c.l.b16 %v2605
    %v3913 = vunpack.c.h.b16 %v2605
    %v3914 = vunpack.c.l.b16 %v2606
    %v3915 = vunpack.c.h.b16 %v2606
    %v3916 = vunpack.c.l.b16 %v2607
    %v3917 = vunpack.c.h.b16 %v2607
    %v3918 = vunpack.c.l.b16 %v2608
    %v3919 = vunpack.c.h.b16 %v2608
    %v3920 = vunpack.c.l.b16 %v2609
    %v3921 = vunpack.c.h.b16 %v2609
    %v3922 = vunpack.c.l.b16 %v2610
    %v3923 = vunpack.c.h.b16 %v2610
    %v3924 = vunpack.c.l.b16 %v2611
    %v3925 = vunpack.c.h.b16 %v2611
    %v3926 = vunpack.c.l.b16 %v2612
    %v3927 = vunpack.c.h.b16 %v2612
    %v3928 = vunpack.c.l.b16 %v2613
    %v3929 = vunpack.c.h.b16 %v2613
    %v3930 = vunpack.c.l.b16 %v2614
    %v3931 = vunpack.c.h.b16 %v2614
    %v3932 = vunpack.c.l.b16 %v2615
    %v3933 = vunpack.c.h.b16 %v2615
    %v3934 = vunpack.c.l.b16 %v2616
    %v3935 = vunpack.c.h.b16 %v2616
    %v3936 = vunpack.c.l.b16 %v2617
    %v3937 = vunpack.c.h.b16 %v2617
    %v3938 = vunpack.c.l.b16 %v2618
    %v3939 = vunpack.c.h.b16 %v2618
    %v3940 = vunpack.c.l.b16 %v2619
    %v3941 = vunpack.c.h.b16 %v2619
    %v3942 = vunpack.c.l.b16 %v2620
    %v3943 = vunpack.c.h.b16 %v2620
    %v3944 = vunpack.c.l.b16 %v2621
    %v3945 = vunpack.c.h.b16 %v2621
    %v3946 = vunpack.c.l.b16 %v2622
    %v3947 = vunpack.c.h.b16 %v2622
    %v3948 = vunpack.c.l.b16 %v2623
    %v3949 = vunpack.c.h.b16 %v2623
    %v3950 = vunpack.c.l.b16 %v2624
    %v3951 = vunpack.c.h.b16 %v2624
    %v3952 = vunpack.c.l.b16 %v2625
    %v3953 = vunpack.c.h.b16 %v2625
    %v3954 = vunpack.c.l.b16 %v2626
    %v3955 = vunpack.c.h.b16 %v2626
    %v3956 = vunpack.c.l.b16 %v2627
    %v3957 = vunpack.c.h.b16 %v2627
    %v3958 = vunpack.c.l.b16 %v2628
    %v3959 = vunpack.c.h.b16 %v2628
    %v3960 = vunpack.c.l.b16 %v2629
    %v3961 = vunpack.c.h.b16 %v2629
    %v3962 = vunpack.c.l.b16 %v2630
    %v3963 = vunpack.c.h.b16 %v2630
    %v3964 = vunpack.c.l.b16 %v2631
    %v3965 = vunpack.c.h.b16 %v2631
    %v3966 = vunpack.c.l.b16 %v2632
    %v3967 = vunpack.c.h.b16 %v2632
    %v3968 = vunpack.c.l.b16 %v2633
    %v3969 = vunpack.c.h.b16 %v2633
    %v3970 = vunpack.c.l.b16 %v2634
    %v3971 = vunpack.c.h.b16 %v2634
    %v3972 = vunpack.c.l.b16 %v2635
    %v3973 = vunpack.c.h.b16 %v2635
    %v3974 = vunpack.c.l.b16 %v2636
    %v3975 = vunpack.c.h.b16 %v2636
    %v3976 = vunpack.c.l.b16 %v2637
    %v3977 = vunpack.c.h.b16 %v2637
    %v3978 = vunpack.c.l.b16 %v2638
    %v3979 = vunpack.c.h.b16 %v2638
    %v3980 = vunpack.c.l.b16 %v2639
    %v3981 = vunpack.c.h.b16 %v2639
    %v3982 = vunpack.c.l.b16 %v2640
    %v3983 = vunpack.c.h.b16 %v2640
    %v3984 = vunpack.c.l.b16 %v2641
    %v3985 = vunpack.c.h.b16 %v2641
    %v3986 = vunpack.c.l.b16 %v2642
    %v3987 = vunpack.c.h.b16 %v2642
    %v3988 = vunpack.c.l.b16 %v2643
    %v3989 = vunpack.c.h.b16 %v2643
    %v3990 = vunpack.c.l.b16 %v2644
    %v3991 = vunpack.c.h.b16 %v2644
    %v3992 = vunpack.c.l.b16 %v2645
    %v3993 = vunpack.c.h.b16 %v2645
    %v3994 = vunpack.c.l.b16 %v2646
    %v3995 = vunpack.c.h.b16 %v2646
    %v3996 = vunpack.c.l.b16 %v2647
    %v3997 = vunpack.c.h.b16 %v2647
    %v3998 = vunpack.c.l.b16 %v2648
    %v3999 = vunpack.c.h.b16 %v2648
    %v4000 = vunpack.c.l.b16 %v2649
    %v4001 = vunpack.c.h.b16 %v2649
    %v4002 = vunpack.c.l.b16 %v2650
    %v4003 = vunpack.c.h.b16 %v2650
    %v4004 = vunpack.c.l.b16 %v2651
    %v4005 = vunpack.c.h.b16 %v2651
    %v4006 = vunpack.c.l.b16 %v2652
    %v4007 = vunpack.c.h.b16 %v2652
    %v4008 = vunpack.c.l.b16 %v2653
    %v4009 = vunpack.c.h.b16 %v2653
    %v4010 = vunpack.c.l.b16 %v2654
    %v4011 = vunpack.c.h.b16 %v2654
    %v4012 = vunpack.c.l.b16 %v2655
    %v4013 = vunpack.c.h.b16 %v2655
    %v4014 = vunpack.c.l.b16 %v2656
    %v4015 = vunpack.c.h.b16 %v2656
    %v4016 = vunpack.c.l.b16 %v2657
    %v4017 = vunpack.c.h.b16 %v2657
    %v4018 = vunpack.c.l.b16 %v2658
    %v4019 = vunpack.c.h.b16 %v2658
    %v4020 = vunpack.c.l.b16 %v2659
    %v4021 = vunpack.c.h.b16 %v2659
    %v4022 = vunpack.c.l.b16 %v2660
    %v4023 = vunpack.c.h.b16 %v2660
    %v4024 = vunpack.c.l.b16 %v2661
    %v4025 = vunpack.c.h.b16 %v2661
    %v4026 = vunpack.c.l.b16 %v2662
    %v4027 = vunpack.c.h.b16 %v2662
    %v4028 = vunpack.c.l.b16 %v2663
    %v4029 = vunpack.c.h.b16 %v2663
    %v4030 = vunpack.c.l.b16 %v2664
    %v4031 = vunpack.c.h.b16 %v2664
    %v4032 = vunpack.c.l.b16 %v2665
    %v4033 = vunpack.c.h.b16 %v2665
    %v4034 = vunpack.c.l.b16 %v2666
    %v4035 = vunpack.c.h.b16 %v2666
    %v4036 = vunpack.c.l.b16 %v2667
    %v4037 = vunpack.c.h.b16 %v2667
    %v4038 = vunpack.c.l.b16 %v2668
    %v4039 = vunpack.c.h.b16 %v2668
    %v4040 = vunpack.c.l.b16 %v2669
    %v4041 = vunpack.c.h.b16 %v2669
    %v4042 = vunpack.c.l.b16 %v2670
    %v4043 = vunpack.c.h.b16 %v2670
    %v4044 = vunpack.c.l.b16 %v2671
    %v4045 = vunpack.c.h.b16 %v2671
    %v4046 = vunpack.c.l.b16 %v2672
    %v4047 = vunpack.c.h.b16 %v2672
    %v4048 = vunpack.c.l.b16 %v2673
    %v4049 = vunpack.c.h.b16 %v2673
    %v4050 = vunpack.c.l.b16 %v2674
    %v4051 = vunpack.c.h.b16 %v2674
    %v4052 = vunpack.c.l.b16 %v2675
    %v4053 = vunpack.c.h.b16 %v2675
    %v4054 = vunpack.c.l.b16 %v2676
    %v4055 = vunpack.c.h.b16 %v2676
    %v4056 = vunpack.c.l.b16 %v2677
    %v4057 = vunpack.c.h.b16 %v2677
    %v4058 = vunpack.c.l.b16 %v2678
    %v4059 = vunpack.c.h.b16 %v2678
    %v4060 = vunpack.c.l.b16 %v2679
    %v4061 = vunpack.c.h.b16 %v2679
    %v4062 = vunpack.c.l.b16 %v2680
    %v4063 = vunpack.c.h.b16 %v2680
    %v4064 = vunpack.c.l.b16 %v2681
    %v4065 = vunpack.c.h.b16 %v2681
    %v4066 = vunpack.c.l.b16 %v2682
    %v4067 = vunpack.c.h.b16 %v2682
    %v4068 = vunpack.c.l.b16 %v2683
    %v4069 = vunpack.c.h.b16 %v2683
    %v4070 = vunpack.c.l.b16 %v2684
    %v4071 = vunpack.c.h.b16 %v2684
    %v4072 = vunpack.c.l.b16 %v2685
    %v4073 = vunpack.c.h.b16 %v2685
    %v4074 = vunpack.c.l.b16 %v2686
    %v4075 = vunpack.c.h.b16 %v2686
    %v4076 = vunpack.c.l.b16 %v2687
    %v4077 = vunpack.c.h.b16 %v2687
    %v4078 = vunpack.c.l.b16 %v2688
    %v4079 = vunpack.c.h.b16 %v2688
    %v4080 = vunpack.c.l.b16 %v2689
    %v4081 = vunpack.c.h.b16 %v2689
    %v4082 = vunpack.c.l.b16 %v2690
    %v4083 = vunpack.c.h.b16 %v2690
    %v4084 = vunpack.c.l.b16 %v2691
    %v4085 = vunpack.c.h.b16 %v2691
    %v4086 = vunpack.c.l.b16 %v2692
    %v4087 = vunpack.c.h.b16 %v2692
    %v4088 = vunpack.c.l.b16 %v2693
    %v4089 = vunpack.c.h.b16 %v2693
    %v4090 = vunpack.c.l.b16 %v2694
    %v4091 = vunpack.c.h.b16 %v2694
    %v4092 = vunpack.c.l.b16 %v2695
    %v4093 = vunpack.c.h.b16 %v2695
    %v4094 = vunpack.c.l.b16 %v2696
    %v4095 = vunpack.c.h.b16 %v2696
    %v4096 = vunpack.c.l.b16 %v2697
    %v4097 = vunpack.c.h.b16 %v2697
    %v4098 = vunpack.c.l.b16 %v2698
    %v4099 = vunpack.c.h.b16 %v2698
    %v4100 = vunpack.c.l.b16 %v2699
    %v4101 = vunpack.c.h.b16 %v2699
    %v4102 = vunpack.c.l.b16 %v2700
    %v4103 = vunpack.c.h.b16 %v2700
    %v4104 = vunpack.c.l.b16 %v2701
    %v4105 = vunpack.c.h.b16 %v2701
    %v4106 = vunpack.c.l.b16 %v2702
    %v4107 = vunpack.c.h.b16 %v2702
    %v4108 = vunpack.c.l.b16 %v2703
    %v4109 = vunpack.c.h.b16 %v2703
    %v4110 = vunpack.c.l.b16 %v2704
    %v4111 = vunpack.c.h.b16 %v2704
    %v4112 = vunpack.c.l.b16 %v2705
    %v4113 = vunpack.c.h.b16 %v2705
    %v4114 = vunpack.c.l.b16 %v2706
    %v4115 = vunpack.c.h.b16 %v2706
    %v4116 = vunpack.c.l.b16 %v2707
    %v4117 = vunpack.c.h.b16 %v2707
    %v4118 = vunpack.c.l.b16 %v2708
    %v4119 = vunpack.c.h.b16 %v2708
    %v4120 = vunpack.c.l.b16 %v2709
    %v4121 = vunpack.c.h.b16 %v2709
    %v4122 = vunpack.c.l.b16 %v2710
    %v4123 = vunpack.c.h.b16 %v2710
    %v4124 = vunpack.c.l.b16 %v2711
    %v4125 = vunpack.c.h.b16 %v2711
    %v4126 = vunpack.c.l.b16 %v2712
    %v4127 = vunpack.c.h.b16 %v2712
    %v4128 = vunpack.c.l.b16 %v2713
    %v4129 = vunpack.c.h.b16 %v2713
    %v4130 = vunpack.c.l.b16 %v2714
    %v4131 = vunpack.c.h.b16 %v2714
    %v4132 = vunpack.c.l.b16 %v2715
    %v4133 = vunpack.c.h.b16 %v2715
    %v4134 = vunpack.c.l.b16 %v2716
    %v4135 = vunpack.c.h.b16 %v2716
    %v4136 = vunpack.c.l.b16 %v2717
    %v4137 = vunpack.c.h.b16 %v2717
    %v4138 = vunpack.c.l.b16 %v2718
    %v4139 = vunpack.c.h.b16 %v2718
    %v4140 = vunpack.c.l.b16 %v2719
    %v4141 = vunpack.c.h.b16 %v2719
    %v4142 = vunpack.c.l.b16 %v2720
    %v4143 = vunpack.c.h.b16 %v2720
    %v4144 = vunpack.c.l.b16 %v2721
    %v4145 = vunpack.c.h.b16 %v2721
    %v4146 = vunpack.c.l.b16 %v2722
    %v4147 = vunpack.c.h.b16 %v2722
    %v4148 = vunpack.c.l.b16 %v2723
    %v4149 = vunpack.c.h.b16 %v2723
    %v4150 = vunpack.c.l.b16 %v2724
    %v4151 = vunpack.c.h.b16 %v2724
    %v4152 = vunpack.c.l.b16 %v2725
    %v4153 = vunpack.c.h.b16 %v2725
    %v4154 = vunpack.c.l.b16 %v2726
    %v4155 = vunpack.c.h.b16 %v2726
    %v4156 = vunpack.c.l.b16 %v2727
    %v4157 = vunpack.c.h.b16 %v2727
    %v4158 = vunpack.c.l.b16 %v2728
    %v4159 = vunpack.c.h.b16 %v2728
    %v4160 = vunpack.c.l.b16 %v2729
    %v4161 = vunpack.c.h.b16 %v2729
    %v4162 = vunpack.c.l.b16 %v2730
    %v4163 = vunpack.c.h.b16 %v2730
    %v4164 = vunpack.c.l.b16 %v2731
    %v4165 = vunpack.c.h.b16 %v2731
    %v4166 = vunpack.c.l.b16 %v2732
    %v4167 = vunpack.c.h.b16 %v2732
    %v4168 = vunpack.c.l.b16 %v2733
    %v4169 = vunpack.c.h.b16 %v2733
    %v4170 = vunpack.c.l.b16 %v2734
    %v4171 = vunpack.c.h.b16 %v2734
    %v4172 = vunpack.c.l.b16 %v2735
    %v4173 = vunpack.c.h.b16 %v2735
    %v4174 = vunpack.c.l.b16 %v2736
    %v4175 = vunpack.c.h.b16 %v2736
    %v4176 = vunpack.c.l.b16 %v2737
    %v4177 = vunpack.c.h.b16 %v2737
    %v4178 = vunpack.c.l.b16 %v2738
    %v4179 = vunpack.c.h.b16 %v2738
    %v4180 = vunpack.c.l.b16 %v2739
    %v4181 = vunpack.c.h.b16 %v2739
    %v4182 = vunpack.c.l.b16 %v2740
    %v4183 = vunpack.c.h.b16 %v2740
    %v4184 = vunpack.c.l.b16 %v2741
    %v4185 = vunpack.c.h.b16 %v2741
    %v4186 = vunpack.c.l.b16 %v2742
    %v4187 = vunpack.c.h.b16 %v2742
    %v4188 = vunpack.c.l.b16 %v2743
    %v4189 = vunpack.c.h.b16 %v2743
    %v4190 = vunpack.c.l.b16 %v2744
    %v4191 = vunpack.c.h.b16 %v2744
    %v4192 = vunpack.c.l.b16 %v2745
    %v4193 = vunpack.c.h.b16 %v2745
    %v4194 = vunpack.c.l.b16 %v2746
    %v4195 = vunpack.c.h.b16 %v2746
    %v4196 = vunpack.c.l.b16 %v2747
    %v4197 = vunpack.c.h.b16 %v2747
    %v4198 = vunpack.c.l.b16 %v2748
    %v4199 = vunpack.c.h.b16 %v2748
    %v4200 = vunpack.c.l.b16 %v2749
    %v4201 = vunpack.c.h.b16 %v2749
    %v4202 = vunpack.c.l.b16 %v2750
    %v4203 = vunpack.c.h.b16 %v2750
    %v4204 = vunpack.c.l.b16 %v2751
    %v4205 = vunpack.c.h.b16 %v2751
    %v4206 = vunpack.c.l.b16 %v2752
    %v4207 = vunpack.c.h.b16 %v2752
    %v4208 = vunpack.c.l.b16 %v2753
    %v4209 = vunpack.c.h.b16 %v2753
    %v4210 = vunpack.c.l.b16 %v2754
    %v4211 = vunpack.c.h.b16 %v2754
    %v4212 = vunpack.c.l.b16 %v2755
    %v4213 = vunpack.c.h.b16 %v2755
    %v4214 = vunpack.c.l.b16 %v2756
    %v4215 = vunpack.c.h.b16 %v2756
    %v4216 = vunpack.c.l.b16 %v2757
    %v4217 = vunpack.c.h.b16 %v2757
    %v4218 = vunpack.c.l.b16 %v2758
    %v4219 = vunpack.c.h.b16 %v2758
    %v4220 = vunpack.c.l.b16 %v2759
    %v4221 = vunpack.c.h.b16 %v2759
    %v4222 = vunpack.c.l.b16 %v2760
    %v4223 = vunpack.c.h.b16 %v2760
    %v4224 = vunpack.c.l.b16 %v2761
    %v4225 = vunpack.c.h.b16 %v2761
    %v4226 = vunpack.c.l.b16 %v2762
    %v4227 = vunpack.c.h.b16 %v2762
    %v4228 = vunpack.c.l.b16 %v2763
    %v4229 = vunpack.c.h.b16 %v2763
    %v4230 = vunpack.c.l.b16 %v2764
    %v4231 = vunpack.c.h.b16 %v2764
    %v4232 = vunpack.c.l.b16 %v2765
    %v4233 = vunpack.c.h.b16 %v2765
    %v4234 = vunpack.c.l.b16 %v2766
    %v4235 = vunpack.c.h.b16 %v2766
    %v4236 = vunpack.c.l.b16 %v2767
    %v4237 = vunpack.c.h.b16 %v2767
    %v4238 = vunpack.c.l.b16 %v2768
    %v4239 = vunpack.c.h.b16 %v2768
    %v4240 = vunpack.c.l.b16 %v2769
    %v4241 = vunpack.c.h.b16 %v2769
    %v4242 = vunpack.c.l.b16 %v2770
    %v4243 = vunpack.c.h.b16 %v2770
    %v4244 = vunpack.c.l.b16 %v2771
    %v4245 = vunpack.c.h.b16 %v2771
    %v4246 = vunpack.c.l.b16 %v2772
    %v4247 = vunpack.c.h.b16 %v2772
    %v4248 = vunpack.c.l.b16 %v2773
    %v4249 = vunpack.c.h.b16 %v2773
    %v4250 = vunpack.c.l.b16 %v2774
    %v4251 = vunpack.c.h.b16 %v2774
    %v4252 = vunpack.c.l.b16 %v2775
    %v4253 = vunpack.c.h.b16 %v2775
    %v4254 = vunpack.c.l.b16 %v2776
    %v4255 = vunpack.c.h.b16 %v2776
    %v4256 = vunpack.c.l.b16 %v2777
    %v4257 = vunpack.c.h.b16 %v2777
    %v4258 = vunpack.c.l.b16 %v2778
    %v4259 = vunpack.c.h.b16 %v2778
    %v4260 = vunpack.c.l.b16 %v2779
    %v4261 = vunpack.c.h.b16 %v2779
    %v4262 = vunpack.c.l.b16 %v2780
    %v4263 = vunpack.c.h.b16 %v2780
    %v4264 = vunpack.c.l.b16 %v2781
    %v4265 = vunpack.c.h.b16 %v2781
    %v4266 = vunpack.c.l.b16 %v2782
    %v4267 = vunpack.c.h.b16 %v2782
    %v4268 = vunpack.c.l.b16 %v2783
    %v4269 = vunpack.c.h.b16 %v2783
    %v4270 = vunpack.c.l.b16 %v2784
    %v4271 = vunpack.c.h.b16 %v2784
    %v4272 = vunpack.c.l.b16 %v2785
    %v4273 = vunpack.c.h.b16 %v2785
    %v4274 = vunpack.c.l.b16 %v2786
    %v4275 = vunpack.c.h.b16 %v2786
    %v4276 = vunpack.c.l.b16 %v2787
    %v4277 = vunpack.c.h.b16 %v2787
    %v4278 = vunpack.c.l.b16 %v2788
    %v4279 = vunpack.c.h.b16 %v2788
    %v4280 = vunpack.c.l.b16 %v2789
    %v4281 = vunpack.c.h.b16 %v2789
    %v4282 = vunpack.c.l.b16 %v2790
    %v4283 = vunpack.c.h.b16 %v2790
    %v4284 = vunpack.c.l.b16 %v2791
    %v4285 = vunpack.c.h.b16 %v2791
    %v4286 = vunpack.c.l.b16 %v2792
    %v4287 = vunpack.c.h.b16 %v2792
    %v4288 = vunpack.c.l.b16 %v2793
    %v4289 = vunpack.c.h.b16 %v2793
    %v4290 = vunpack.c.l.b16 %v2794
    %v4291 = vunpack.c.h.b16 %v2794
    %v4292 = vunpack.c.l.b16 %v2795
    %v4293 = vunpack.c.h.b16 %v2795
    %v4294 = vunpack.c.l.b16 %v2796
    %v4295 = vunpack.c.h.b16 %v2796
    %v4296 = vunpack.c.l.b16 %v2797
    %v4297 = vunpack.c.h.b16 %v2797
    %v4298 = vunpack.c.l.b16 %v2798
    %v4299 = vunpack.c.h.b16 %v2798
    %v4300 = vunpack.c.l.b16 %v2799
    %v4301 = vunpack.c.h.b16 %v2799
    %v4302 = vunpack.c.l.b16 %v2800
    %v4303 = vunpack.c.h.b16 %v2800
    %v4304 = vunpack.c.l.b16 %v2801
    %v4305 = vunpack.c.h.b16 %v2801
    %v4306 = vunpack.c.l.b16 %v2802
    %v4307 = vunpack.c.h.b16 %v2802
    %v4308 = vunpack.c.l.b16 %v2803
    %v4309 = vunpack.c.h.b16 %v2803
    %v4310 = vunpack.c.l.b16 %v2804
    %v4311 = vunpack.c.h.b16 %v2804
    %v4312 = vunpack.c.l.b16 %v2805
    %v4313 = vunpack.c.h.b16 %v2805
    %v4314 = vunpack.c.l.b16 %v2806
    %v4315 = vunpack.c.h.b16 %v2806
    %v4316 = vunpack.c.l.b16 %v2807
    %v4317 = vunpack.c.h.b16 %v2807
    %v4318 = vunpack.c.l.b16 %v2808
    %v4319 = vunpack.c.h.b16 %v2808
    %v4320 = vunpack.c.l.b16 %v2809
    %v4321 = vunpack.c.h.b16 %v2809
    %v4322 = vunpack.c.l.b16 %v2810
    %v4323 = vunpack.c.h.b16 %v2810
    %v4324 = vunpack.c.l.b16 %v2811
    %v4325 = vunpack.c.h.b16 %v2811
    %v4326 = vunpack.c.l.b16 %v2812
    %v4327 = vunpack.c.h.b16 %v2812
    %v4328 = vunpack.c.l.b16 %v2813
    %v4329 = vunpack.c.h.b16 %v2813
    %v4330 = vunpack.c.l.b16 %v2814
    %v4331 = vunpack.c.h.b16 %v2814
    %v4332 = vunpack.c.l.b16 %v2815
    %v4333 = vunpack.c.h.b16 %v2815
    %v4334 = vunpack.c.l.b16 %v2816
    %v4335 = vunpack.c.h.b16 %v2816
    %v4336 = vunpack.c.l.b16 %v2817
    %v4337 = vunpack.c.h.b16 %v2817
    %v4338 = vunpack.c.l.b16 %v2818
    %v4339 = vunpack.c.h.b16 %v2818
    %v4340 = vunpack.c.l.b16 %v2819
    %v4341 = vunpack.c.h.b16 %v2819
    %v4342 = vunpack.c.l.b16 %v2820
    %v4343 = vunpack.c.h.b16 %v2820
    %v4344 = vunpack.c.l.b16 %v2821
    %v4345 = vunpack.c.h.b16 %v2821
    %v4346 = vunpack.c.l.b16 %v2822
    %v4347 = vunpack.c.h.b16 %v2822
    %v4348 = vunpack.c.l.b16 %v2823
    %v4349 = vunpack.c.h.b16 %v2823
    %v4350 = vunpack.c.l.b16 %v2824
    %v4351 = vunpack.c.h.b16 %v2824
    %v4352 = vunpack.c.l.b16 %v2825
    %v4353 = vunpack.c.h.b16 %v2825
    %v4354 = vunpack.c.l.b16 %v2826
    %v4355 = vunpack.c.h.b16 %v2826
    %v4356 = vunpack.c.l.b16 %v2827
    %v4357 = vunpack.c.h.b16 %v2827
    %v4358 = vunpack.c.l.b16 %v2828
    %v4359 = vunpack.c.h.b16 %v2828
    %v4360 = vunpack.c.l.b16 %v2829
    %v4361 = vunpack.c.h.b16 %v2829
    %v4362 = vunpack.c.l.b16 %v2830
    %v4363 = vunpack.c.h.b16 %v2830
    %v4364 = vunpack.c.l.b16 %v2831
    %v4365 = vunpack.c.h.b16 %v2831
    %v4366 = vunpack.c.l.b16 %v2832
    %v4367 = vunpack.c.h.b16 %v2832
    %v4368 = vunpack.c.l.b16 %v2833
    %v4369 = vunpack.c.h.b16 %v2833
    %v4370 = vunpack.c.l.b16 %v2834
    %v4371 = vunpack.c.h.b16 %v2834
    %v4372 = vunpack.c.l.b16 %v2835
    %v4373 = vunpack.c.h.b16 %v2835
    %v4374 = vunpack.c.l.b16 %v2836
    %v4375 = vunpack.c.h.b16 %v2836
    %v4376 = vunpack.c.l.b16 %v2837
    %v4377 = vunpack.c.h.b16 %v2837
    %v4378 = vunpack.c.l.b16 %v2838
    %v4379 = vunpack.c.h.b16 %v2838
    %v4380 = vunpack.c.l.b16 %v2839
    %v4381 = vunpack.c.h.b16 %v2839
    %v4382 = vunpack.c.l.b16 %v2840
    %v4383 = vunpack.c.h.b16 %v2840
    %v4384 = vunpack.c.l.b16 %v2841
    %v4385 = vunpack.c.h.b16 %v2841
    %v4386 = vunpack.c.l.b16 %v2842
    %v4387 = vunpack.c.h.b16 %v2842
    %v4388 = vunpack.c.l.b16 %v2843
    %v4389 = vunpack.c.h.b16 %v2843
    %v4390 = vunpack.c.l.b16 %v2844
    %v4391 = vunpack.c.h.b16 %v2844
    %v4392 = vunpack.c.l.b16 %v2845
    %v4393 = vunpack.c.h.b16 %v2845
    %v4394 = vunpack.c.l.b16 %v2846
    %v4395 = vunpack.c.h.b16 %v2846
    %v4396 = vunpack.c.l.b16 %v2847
    %v4397 = vunpack.c.h.b16 %v2847
    %v4398 = vunpack.c.l.b16 %v2848
    %v4399 = vunpack.c.h.b16 %v2848
    %v4400 = vunpack.c.l.b16 %v2849
    %v4401 = vunpack.c.h.b16 %v2849
    %v4402 = vunpack.c.l.b16 %v2850
    %v4403 = vunpack.c.h.b16 %v2850
    %v4404 = vunpack.c.l.b16 %v2851
    %v4405 = vunpack.c.h.b16 %v2851
    %v4406 = vunpack.c.l.b16 %v2852
    %v4407 = vunpack.c.h.b16 %v2852
    %v4408 = vunpack.c.l.b16 %v2853
    %v4409 = vunpack.c.h.b16 %v2853
    %v4410 = vunpack.c.l.b16 %v2854
    %v4411 = vunpack.c.h.b16 %v2854
    %v4412 = vunpack.c.l.b16 %v2855
    %v4413 = vunpack.c.h.b16 %v2855
    %v4414 = vunpack.c.l.b16 %v2856
    %v4415 = vunpack.c.h.b16 %v2856
    %v4416 = vunpack.c.l.b16 %v2857
    %v4417 = vunpack.c.h.b16 %v2857
    %v4418 = vunpack.c.l.b16 %v2858
    %v4419 = vunpack.c.h.b16 %v2858
    %v4420 = vunpack.c.l.b16 %v2859
    %v4421 = vunpack.c.h.b16 %v2859
    %v4422 = vunpack.c.l.b16 %v2860
    %v4423 = vunpack.c.h.b16 %v2860
    %v4424 = vunpack.c.l.b16 %v2861
    %v4425 = vunpack.c.h.b16 %v2861
    %v4426 = vunpack.c.l.b16 %v2862
    %v4427 = vunpack.c.h.b16 %v2862
    %v4428 = vunpack.c.l.b16 %v2863
    %v4429 = vunpack.c.h.b16 %v2863
    %v4430 = vunpack.c.l.b16 %v2864
    %v4431 = vunpack.c.h.b16 %v2864
    %v4432 = vunpack.c.l.b16 %v2865
    %v4433 = vunpack.c.h.b16 %v2865
    %v4434 = vunpack.c.l.b16 %v2866
    %v4435 = vunpack.c.h.b16 %v2866
    %v4436 = vunpack.c.l.b16 %v2867
    %v4437 = vunpack.c.h.b16 %v2867
    %v4438 = vunpack.c.l.b16 %v2868
    %v4439 = vunpack.c.h.b16 %v2868
    %v4440 = vunpack.c.l.b16 %v2869
    %v4441 = vunpack.c.h.b16 %v2869
    %v4442 = vunpack.c.l.b16 %v2870
    %v4443 = vunpack.c.h.b16 %v2870
    %v4444 = vunpack.c.l.b16 %v2871
    %v4445 = vunpack.c.h.b16 %v2871
    %v4446 = vunpack.c.l.b16 %v2872
    %v4447 = vunpack.c.h.b16 %v2872
    %v4448 = vunpack.c.l.b16 %v2873
    %v4449 = vunpack.c.h.b16 %v2873
    %v4450 = vunpack.c.l.b16 %v2874
    %v4451 = vunpack.c.h.b16 %v2874
    %v4452 = vunpack.c.l.b16 %v2875
    %v4453 = vunpack.c.h.b16 %v2875
    %v4454 = vpack.c.b16 %v3438, %v3430
    %v4455 = vpack.c.b16 %v3439, %v3431
    %v4456 = vpack.c.b16 %v3440, %v3432
    %v4457 = vpack.c.b16 %v3441, %v3433
    %v4458 = vpack.c.b16 %v3442, %v3434
    %v4459 = vpack.c.b16 %v3443, %v3435
    %v4460 = vpack.c.b16 %v3444, %v3436
    %v4461 = vpack.c.b16 %v3445, %v3437
    %v4462 = vpack.c.b16 %v3454, %v3446
    %v4463 = vpack.c.b16 %v3455, %v3447
    %v4464 = vpack.c.b16 %v3456, %v3448
    %v4465 = vpack.c.b16 %v3457, %v3449
    %v4466 = vpack.c.b16 %v3458, %v3450
    %v4467 = vpack.c.b16 %v3459, %v3451
    %v4468 = vpack.c.b16 %v3460, %v3452
    %v4469 = vpack.c.b16 %v3461, %v3453
    %v4470 = vpack.c.b16 %v3470, %v3462
    %v4471 = vpack.c.b16 %v3471, %v3463
    %v4472 = vpack.c.b16 %v3472, %v3464
    %v4473 = vpack.c.b16 %v3473, %v3465
    %v4474 = vpack.c.b16 %v3474, %v3466
    %v4475 = vpack.c.b16 %v3475, %v3467
    %v4476 = vpack.c.b16 %v3476, %v3468
    %v4477 = vpack.c.b16 %v3477, %v3469
    %v4478 = vpack.c.b16 %v3486, %v3478
    %v4479 = vpack.c.b16 %v3487, %v3479
    %v4480 = vpack.c.b16 %v3488, %v3480
    %v4481 = vpack.c.b16 %v3489, %v3481
    %v4482 = vpack.c.b16 %v3490, %v3482
    %v4483 = vpack.c.b16 %v3491, %v3483
    %v4484 = vpack.c.b16 %v3492, %v3484
    %v4485 = vpack.c.b16 %v3493, %v3485
    %v4486 = vpack.c.b16 %v3502, %v3494
    %v4487 = vpack.c.b16 %v3503, %v3495
    %v4488 = vpack.c.b16 %v3504, %v3496
    %v4489 = vpack.c.b16 %v3505, %v3497
    %v4490 = vpack.c.b16 %v3506, %v3498
    %v4491 = vpack.c.b16 %v3507, %v3499
    %v4492 = vpack.c.b16 %v3508, %v3500
    %v4493 = vpack.c.b16 %v3509, %v3501
    %v4494 = vpack.c.b16 %v3518, %v3510
    %v4495 = vpack.c.b16 %v3519, %v3511
    %v4496 = vpack.c.b16 %v3520, %v3512
    %v4497 = vpack.c.b16 %v3521, %v3513
    %v4498 = vpack.c.b16 %v3522, %v3514
    %v4499 = vpack.c.b16 %v3523, %v3515
    %v4500 = vpack.c.b16 %v3524, %v3516
    %v4501 = vpack.c.b16 %v3525, %v3517
    %v4502 = vpack.c.b16 %v3534, %v3526
    %v4503 = vpack.c.b16 %v3535, %v3527
    %v4504 = vpack.c.b16 %v3536, %v3528
    %v4505 = vpack.c.b16 %v3537, %v3529
    %v4506 = vpack.c.b16 %v3538, %v3530
    %v4507 = vpack.c.b16 %v3539, %v3531
    %v4508 = vpack.c.b16 %v3540, %v3532
    %v4509 = vpack.c.b16 %v3541, %v3533
    %v4510 = vpack.c.b16 %v3550, %v3542
    %v4511 = vpack.c.b16 %v3551, %v3543
    %v4512 = vpack.c.b16 %v3552, %v3544
    %v4513 = vpack.c.b16 %v3553, %v3545
    %v4514 = vpack.c.b16 %v3554, %v3546
    %v4515 = vpack.c.b16 %v3555, %v3547
    %v4516 = vpack.c.b16 %v3556, %v3548
    %v4517 = vpack.c.b16 %v3557, %v3549
    %v4518 = vpack.c.b16 %v3566, %v3558
    %v4519 = vpack.c.b16 %v3567, %v3559
    %v4520 = vpack.c.b16 %v3568, %v3560
    %v4521 = vpack.c.b16 %v3569, %v3561
    %v4522 = vpack.c.b16 %v3570, %v3562
    %v4523 = vpack.c.b16 %v3571, %v3563
    %v4524 = vpack.c.b16 %v3572, %v3564
    %v4525 = vpack.c.b16 %v3573, %v3565
    %v4526 = vpack.c.b16 %v3582, %v3574
    %v4527 = vpack.c.b16 %v3583, %v3575
    %v4528 = vpack.c.b16 %v3584, %v3576
    %v4529 = vpack.c.b16 %v3585, %v3577
    %v4530 = vpack.c.b16 %v3586, %v3578
    %v4531 = vpack.c.b16 %v3587, %v3579
    %v4532 = vpack.c.b16 %v3588, %v3580
    %v4533 = vpack.c.b16 %v3589, %v3581
    %v4534 = vpack.c.b16 %v3598, %v3590
    %v4535 = vpack.c.b16 %v3599, %v3591
    %v4536 = vpack.c.b16 %v3600, %v3592
    %v4537 = vpack.c.b16 %v3601, %v3593
    %v4538 = vpack.c.b16 %v3602, %v3594
    %v4539 = vpack.c.b16 %v3603, %v3595
    %v4540 = vpack.c.b16 %v3604, %v3596
    %v4541 = vpack.c.b16 %v3605, %v3597
    %v4542 = vpack.c.b16 %v3614, %v3606
    %v4543 = vpack.c.b16 %v3615, %v3607
    %v4544 = vpack.c.b16 %v3616, %v3608
    %v4545 = vpack.c.b16 %v3617, %v3609
    %v4546 = vpack.c.b16 %v3618, %v3610
    %v4547 = vpack.c.b16 %v3619, %v3611
    %v4548 = vpack.c.b16 %v3620, %v3612
    %v4549 = vpack.c.b16 %v3621, %v3613
    %v4550 = vpack.c.b16 %v3630, %v3622
    %v4551 = vpack.c.b16 %v3631, %v3623
    %v4552 = vpack.c.b16 %v3632, %v3624
    %v4553 = vpack.c.b16 %v3633, %v3625
    %v4554 = vpack.c.b16 %v3634, %v3626
    %v4555 = vpack.c.b16 %v3635, %v3627
    %v4556 = vpack.c.b16 %v3636, %v3628
    %v4557 = vpack.c.b16 %v3637, %v3629
    %v4558 = vpack.c.b16 %v3646, %v3638
    %v4559 = vpack.c.b16 %v3647, %v3639
    %v4560 = vpack.c.b16 %v3648, %v3640
    %v4561 = vpack.c.b16 %v3649, %v3641
    %v4562 = vpack.c.b16 %v3650, %v3642
    %v4563 = vpack.c.b16 %v3651, %v3643
    %v4564 = vpack.c.b16 %v3652, %v3644
    %v4565 = vpack.c.b16 %v3653, %v3645
    %v4566 = vpack.c.b16 %v3662, %v3654
    %v4567 = vpack.c.b16 %v3663, %v3655
    %v4568 = vpack.c.b16 %v3664, %v3656
    %v4569 = vpack.c.b16 %v3665, %v3657
    %v4570 = vpack.c.b16 %v3666, %v3658
    %v4571 = vpack.c.b16 %v3667, %v3659
    %v4572 = vpack.c.b16 %v3668, %v3660
    %v4573 = vpack.c.b16 %v3669, %v3661
    %v4574 = vpack.c.b16 %v3678, %v3670
    %v4575 = vpack.c.b16 %v3679, %v3671
    %v4576 = vpack.c.b16 %v3680, %v3672
    %v4577 = vpack.c.b16 %v3681, %v3673
    %v4578 = vpack.c.b16 %v3682, %v3674
    %v4579 = vpack.c.b16 %v3683, %v3675
    %v4580 = vpack.c.b16 %v3684, %v3676
    %v4581 = vpack.c.b16 %v3685, %v3677
    %v4582 = vpack.c.b16 %v3694, %v3686
    %v4583 = vpack.c.b16 %v3695, %v3687
    %v4584 = vpack.c.b16 %v3696, %v3688
    %v4585 = vpack.c.b16 %v3697, %v3689
    %v4586 = vpack.c.b16 %v3698, %v3690
    %v4587 = vpack.c.b16 %v3699, %v3691
    %v4588 = vpack.c.b16 %v3700, %v3692
    %v4589 = vpack.c.b16 %v3701, %v3693
    %v4590 = vpack.c.b16 %v3710, %v3702
    %v4591 = vpack.c.b16 %v3711, %v3703
    %v4592 = vpack.c.b16 %v3712, %v3704
    %v4593 = vpack.c.b16 %v3713, %v3705
    %v4594 = vpack.c.b16 %v3714, %v3706
    %v4595 = vpack.c.b16 %v3715, %v3707
    %v4596 = vpack.c.b16 %v3716, %v3708
    %v4597 = vpack.c.b16 %v3717, %v3709
    %v4598 = vpack.c.b16 %v3726, %v3718
    %v4599 = vpack.c.b16 %v3727, %v3719
    %v4600 = vpack.c.b16 %v3728, %v3720
    %v4601 = vpack.c.b16 %v3729, %v3721
    %v4602 = vpack.c.b16 %v3730, %v3722
    %v4603 = vpack.c.b16 %v3731, %v3723
    %v4604 = vpack.c.b16 %v3732, %v3724
    %v4605 = vpack.c.b16 %v3733, %v3725
    %v4606 = vpack.c.b16 %v3742, %v3734
    %v4607 = vpack.c.b16 %v3743, %v3735
    %v4608 = vpack.c.b16 %v3744, %v3736
    %v4609 = vpack.c.b16 %v3745, %v3737
    %v4610 = vpack.c.b16 %v3746, %v3738
    %v4611 = vpack.c.b16 %v3747, %v3739
    %v4612 = vpack.c.b16 %v3748, %v3740
    %v4613 = vpack.c.b16 %v3749, %v3741
    %v4614 = vpack.c.b16 %v3758, %v3750
    %v4615 = vpack.c.b16 %v3759, %v3751
    %v4616 = vpack.c.b16 %v3760, %v3752
    %v4617 = vpack.c.b16 %v3761, %v3753
    %v4618 = vpack.c.b16 %v3762, %v3754
    %v4619 = vpack.c.b16 %v3763, %v3755
    %v4620 = vpack.c.b16 %v3764, %v3756
    %v4621 = vpack.c.b16 %v3765, %v3757
    %v4622 = vpack.c.b16 %v3774, %v3766
    %v4623 = vpack.c.b16 %v3775, %v3767
    %v4624 = vpack.c.b16 %v3776, %v3768
    %v4625 = vpack.c.b16 %v3777, %v3769
    %v4626 = vpack.c.b16 %v3778, %v3770
    %v4627 = vpack.c.b16 %v3779, %v3771
    %v4628 = vpack.c.b16 %v3780, %v3772
    %v4629 = vpack.c.b16 %v3781, %v3773
    %v4630 = vpack.c.b16 %v3790, %v3782
    %v4631 = vpack.c.b16 %v3791, %v3783
    %v4632 = vpack.c.b16 %v3792, %v3784
    %v4633 = vpack.c.b16 %v3793, %v3785
    %v4634 = vpack.c.b16 %v3794, %v3786
    %v4635 = vpack.c.b16 %v3795, %v3787
    %v4636 = vpack.c.b16 %v3796, %v3788
    %v4637 = vpack.c.b16 %v3797, %v3789
    %v4638 = vpack.c.b16 %v3806, %v3798
    %v4639 = vpack.c.b16 %v3807, %v3799
    %v4640 = vpack.c.b16 %v3808, %v3800
    %v4641 = vpack.c.b16 %v3809, %v3801
    %v4642 = vpack.c.b16 %v3810, %v3802
    %v4643 = vpack.c.b16 %v3811, %v3803
    %v4644 = vpack.c.b16 %v3812, %v3804
    %v4645 = vpack.c.b16 %v3813, %v3805
    %v4646 = vpack.c.b16 %v3822, %v3814
    %v4647 = vpack.c.b16 %v3823, %v3815
    %v4648 = vpack.c.b16 %v3824, %v3816
    %v4649 = vpack.c.b16 %v3825, %v3817
    %v4650 = vpack.c.b16 %v3826, %v3818
    %v4651 = vpack.c.b16 %v3827, %v3819
    %v4652 = vpack.c.b16 %v3828, %v3820
    %v4653 = vpack.c.b16 %v3829, %v3821
    %v4654 = vpack.c.b16 %v3838, %v3830
    %v4655 = vpack.c.b16 %v3839, %v3831
    %v4656 = vpack.c.b16 %v3840, %v3832
    %v4657 = vpack.c.b16 %v3841, %v3833
    %v4658 = vpack.c.b16 %v3842, %v3834
    %v4659 = vpack.c.b16 %v3843, %v3835
    %v4660 = vpack.c.b16 %v3844, %v3836
    %v4661 = vpack.c.b16 %v3845, %v3837
    %v4662 = vpack.c.b16 %v3854, %v3846
    %v4663 = vpack.c.b16 %v3855, %v3847
    %v4664 = vpack.c.b16 %v3856, %v3848
    %v4665 = vpack.c.b16 %v3857, %v3849
    %v4666 = vpack.c.b16 %v3858, %v3850
    %v4667 = vpack.c.b16 %v3859, %v3851
    %v4668 = vpack.c.b16 %v3860, %v3852
    %v4669 = vpack.c.b16 %v3861, %v3853
    %v4670 = vpack.c.b16 %v3870, %v3862
    %v4671 = vpack.c.b16 %v3871, %v3863
    %v4672 = vpack.c.b16 %v3872, %v3864
    %v4673 = vpack.c.b16 %v3873, %v3865
    %v4674 = vpack.c.b16 %v3874, %v3866
    %v4675 = vpack.c.b16 %v3875, %v3867
    %v4676 = vpack.c.b16 %v3876, %v3868
    %v4677 = vpack.c.b16 %v3877, %v3869
    %v4678 = vpack.c.b16 %v3886, %v3878
    %v4679 = vpack.c.b16 %v3887, %v3879
    %v4680 = vpack.c.b16 %v3888, %v3880
    %v4681 = vpack.c.b16 %v3889, %v3881
    %v4682 = vpack.c.b16 %v3890, %v3882
    %v4683 = vpack.c.b16 %v3891, %v3883
    %v4684 = vpack.c.b16 %v3892, %v3884
    %v4685 = vpack.c.b16 %v3893, %v3885
    %v4686 = vpack.c.b16 %v3902, %v3894
    %v4687 = vpack.c.b16 %v3903, %v3895
    %v4688 = vpack.c.b16 %v3904, %v3896
    %v4689 = vpack.c.b16 %v3905, %v3897
    %v4690 = vpack.c.b16 %v3906, %v3898
    %v4691 = vpack.c.b16 %v3907, %v3899
    %v4692 = vpack.c.b16 %v3908, %v3900
    %v4693 = vpack.c.b16 %v3909, %v3901
    %v4694 = vpack.c.b16 %v3918, %v3910
    %v4695 = vpack.c.b16 %v3919, %v3911
    %v4696 = vpack.c.b16 %v3920, %v3912
    %v4697 = vpack.c.b16 %v3921, %v3913
    %v4698 = vpack.c.b16 %v3922, %v3914
    %v4699 = vpack.c.b16 %v3923, %v3915
    %v4700 = vpack.c.b16 %v3924, %v3916
    %v4701 = vpack.c.b16 %v3925, %v3917
    %v4702 = vpack.c.b16 %v3934, %v3926
    %v4703 = vpack.c.b16 %v3935, %v3927
    %v4704 = vpack.c.b16 %v3936, %v3928
    %v4705 = vpack.c.b16 %v3937, %v3929
    %v4706 = vpack.c.b16 %v3938, %v3930
    %v4707 = vpack.c.b16 %v3939, %v3931
    %v4708 = vpack.c.b16 %v3940, %v3932
    %v4709 = vpack.c.b16 %v3941, %v3933
    %v4710 = vpack.c.b16 %v3950, %v3942
    %v4711 = vpack.c.b16 %v3951, %v3943
    %v4712 = vpack.c.b16 %v3952, %v3944
    %v4713 = vpack.c.b16 %v3953, %v3945
    %v4714 = vpack.c.b16 %v3954, %v3946
    %v4715 = vpack.c.b16 %v3955, %v3947
    %v4716 = vpack.c.b16 %v3956, %v3948
    %v4717 = vpack.c.b16 %v3957, %v3949
    %v4718 = vpack.c.b16 %v3966, %v3958
    %v4719 = vpack.c.b16 %v3967, %v3959
    %v4720 = vpack.c.b16 %v3968, %v3960
    %v4721 = vpack.c.b16 %v3969, %v3961
    %v4722 = vpack.c.b16 %v3970, %v3962
    %v4723 = vpack.c.b16 %v3971, %v3963
    %v4724 = vpack.c.b16 %v3972, %v3964
    %v4725 = vpack.c.b16 %v3973, %v3965
    %v4726 = vpack.c.b16 %v3982, %v3974
    %v4727 = vpack.c.b16 %v3983, %v3975
    %v4728 = vpack.c.b16 %v3984, %v3976
    %v4729 = vpack.c.b16 %v3985, %v3977
    %v4730 = vpack.c.b16 %v3986, %v3978
    %v4731 = vpack.c.b16 %v3987, %v3979
    %v4732 = vpack.c.b16 %v3988, %v3980
    %v4733 = vpack.c.b16 %v3989, %v3981
    %v4734 = vpack.c.b16 %v3998, %v3990
    %v4735 = vpack.c.b16 %v3999, %v3991
    %v4736 = vpack.c.b16 %v4000, %v3992
    %v4737 = vpack.c.b16 %v4001, %v3993
    %v4738 = vpack.c.b16 %v4002, %v3994
    %v4739 = vpack.c.b16 %v4003, %v3995
    %v4740 = vpack.c.b16 %v4004, %v3996
    %v4741 = vpack.c.b16 %v4005, %v3997
    %v4742 = vpack.c.b16 %v4014, %v4006
    %v4743 = vpack.c.b16 %v4015, %v4007
    %v4744 = vpack.c.b16 %v4016, %v4008
    %v4745 = vpack.c.b16 %v4017, %v4009
    %v4746 = vpack.c.b16 %v4018, %v4010
    %v4747 = vpack.c.b16 %v4019, %v4011
    %v4748 = vpack.c.b16 %v4020, %v4012
    %v4749 = vpack.c.b16 %v4021, %v4013
    %v4750 = vpack.c.b16 %v4030, %v4022
    %v4751 = vpack.c.b16 %v4031, %v4023
    %v4752 = vpack.c.b16 %v4032, %v4024
    %v4753 = vpack.c.b16 %v4033, %v4025
    %v4754 = vpack.c.b16 %v4034, %v4026
    %v4755 = vpack.c.b16 %v4035, %v4027
    %v4756 = vpack.c.b16 %v4036, %v4028
    %v4757 = vpack.c.b16 %v4037, %v4029
    %v4758 = vpack.c.b16 %v4046, %v4038
    %v4759 = vpack.c.b16 %v4047, %v4039
    %v4760 = vpack.c.b16 %v4048, %v4040
    %v4761 = vpack.c.b16 %v4049, %v4041
    %v4762 = vpack.c.b16 %v4050, %v4042
    %v4763 = vpack.c.b16 %v4051, %v4043
    %v4764 = vpack.c.b16 %v4052, %v4044
    %v4765 = vpack.c.b16 %v4053, %v4045
    %v4766 = vpack.c.b16 %v4062, %v4054
    %v4767 = vpack.c.b16 %v4063, %v4055
    %v4768 = vpack.c.b16 %v4064, %v4056
    %v4769 = vpack.c.b16 %v4065, %v4057
    %v4770 = vpack.c.b16 %v4066, %v4058
    %v4771 = vpack.c.b16 %v4067, %v4059
    %v4772 = vpack.c.b16 %v4068, %v4060
    %v4773 = vpack.c.b16 %v4069, %v4061
    %v4774 = vpack.c.b16 %v4078, %v4070
    %v4775 = vpack.c.b16 %v4079, %v4071
    %v4776 = vpack.c.b16 %v4080, %v4072
    %v4777 = vpack.c.b16 %v4081, %v4073
    %v4778 = vpack.c.b16 %v4082, %v4074
    %v4779 = vpack.c.b16 %v4083, %v4075
    %v4780 = vpack.c.b16 %v4084, %v4076
    %v4781 = vpack.c.b16 %v4085, %v4077
    %v4782 = vpack.c.b16 %v4094, %v4086
    %v4783 = vpack.c.b16 %v4095, %v4087
    %v4784 = vpack.c.b16 %v4096, %v4088
    %v4785 = vpack.c.b16 %v4097, %v4089
    %v4786 = vpack.c.b16 %v4098, %v4090
    %v4787 = vpack.c.b16 %v4099, %v4091
    %v4788 = vpack.c.b16 %v4100, %v4092
    %v4789 = vpack.c.b16 %v4101, %v4093
    %v4790 = vpack.c.b16 %v4110, %v4102
    %v4791 = vpack.c.b16 %v4111, %v4103
    %v4792 = vpack.c.b16 %v4112, %v4104
    %v4793 = vpack.c.b16 %v4113, %v4105
    %v4794 = vpack.c.b16 %v4114, %v4106
    %v4795 = vpack.c.b16 %v4115, %v4107
    %v4796 = vpack.c.b16 %v4116, %v4108
    %v4797 = vpack.c.b16 %v4117, %v4109
    %v4798 = vpack.c.b16 %v4126, %v4118
    %v4799 = vpack.c.b16 %v4127, %v4119
    %v4800 = vpack.c.b16 %v4128, %v4120
    %v4801 = vpack.c.b16 %v4129, %v4121
    %v4802 = vpack.c.b16 %v4130, %v4122
    %v4803 = vpack.c.b16 %v4131, %v4123
    %v4804 = vpack.c.b16 %v4132, %v4124
    %v4805 = vpack.c.b16 %v4133, %v4125
    %v4806 = vpack.c.b16 %v4142, %v4134
    %v4807 = vpack.c.b16 %v4143, %v4135
    %v4808 = vpack.c.b16 %v4144, %v4136
    %v4809 = vpack.c.b16 %v4145, %v4137
    %v4810 = vpack.c.b16 %v4146, %v4138
    %v4811 = vpack.c.b16 %v4147, %v4139
    %v4812 = vpack.c.b16 %v4148, %v4140
    %v4813 = vpack.c.b16 %v4149, %v4141
    %v4814 = vpack.c.b16 %v4158, %v4150
    %v4815 = vpack.c.b16 %v4159, %v4151
    %v4816 = vpack.c.b16 %v4160, %v4152
    %v4817 = vpack.c.b16 %v4161, %v4153
    %v4818 = vpack.c.b16 %v4162, %v4154
    %v4819 = vpack.c.b16 %v4163, %v4155
    %v4820 = vpack.c.b16 %v4164, %v4156
    %v4821 = vpack.c.b16 %v4165, %v4157
    %v4822 = vpack.c.b16 %v4174, %v4166
    %v4823 = vpack.c.b16 %v4175, %v4167
    %v4824 = vpack.c.b16 %v4176, %v4168
    %v4825 = vpack.c.b16 %v4177, %v4169
    %v4826 = vpack.c.b16 %v4178, %v4170
    %v4827 = vpack.c.b16 %v4179, %v4171
    %v4828 = vpack.c.b16 %v4180, %v4172
    %v4829 = vpack.c.b16 %v4181, %v4173
    %v4830 = vpack.c.b16 %v4190, %v4182
    %v4831 = vpack.c.b16 %v4191, %v4183
    %v4832 = vpack.c.b16 %v4192, %v4184
    %v4833 = vpack.c.b16 %v4193, %v4185
    %v4834 = vpack.c.b16 %v4194, %v4186
    %v4835 = vpack.c.b16 %v4195, %v4187
    %v4836 = vpack.c.b16 %v4196, %v4188
    %v4837 = vpack.c.b16 %v4197, %v4189
    %v4838 = vpack.c.b16 %v4206, %v4198
    %v4839 = vpack.c.b16 %v4207, %v4199
    %v4840 = vpack.c.b16 %v4208, %v4200
    %v4841 = vpack.c.b16 %v4209, %v4201
    %v4842 = vpack.c.b16 %v4210, %v4202
    %v4843 = vpack.c.b16 %v4211, %v4203
    %v4844 = vpack.c.b16 %v4212, %v4204
    %v4845 = vpack.c.b16 %v4213, %v4205
    %v4846 = vpack.c.b16 %v4222, %v4214
    %v4847 = vpack.c.b16 %v4223, %v4215
    %v4848 = vpack.c.b16 %v4224, %v4216
    %v4849 = vpack.c.b16 %v4225, %v4217
    %v4850 = vpack.c.b16 %v4226, %v4218
    %v4851 = vpack.c.b16 %v4227, %v4219
    %v4852 = vpack.c.b16 %v4228, %v4220
    %v4853 = vpack.c.b16 %v4229, %v4221
    %v4854 = vpack.c.b16 %v4238, %v4230
    %v4855 = vpack.c.b16 %v4239, %v4231
    %v4856 = vpack.c.b16 %v4240, %v4232
    %v4857 = vpack.c.b16 %v4241, %v4233
    %v4858 = vpack.c.b16 %v4242, %v4234
    %v4859 = vpack.c.b16 %v4243, %v4235
    %v4860 = vpack.c.b16 %v4244, %v4236
    %v4861 = vpack.c.b16 %v4245, %v4237
    %v4862 = vpack.c.b16 %v4254, %v4246
    %v4863 = vpack.c.b16 %v4255, %v4247
    %v4864 = vpack.c.b16 %v4256, %v4248
    %v4865 = vpack.c.b16 %v4257, %v4249
    %v4866 = vpack.c.b16 %v4258, %v4250
    %v4867 = vpack.c.b16 %v4259, %v4251
    %v4868 = vpack.c.b16 %v4260, %v4252
    %v4869 = vpack.c.b16 %v4261, %v4253
    %v4870 = vpack.c.b16 %v4270, %v4262
    %v4871 = vpack.c.b16 %v4271, %v4263
    %v4872 = vpack.c.b16 %v4272, %v4264
    %v4873 = vpack.c.b16 %v4273, %v4265
    %v4874 = vpack.c.b16 %v4274, %v4266
    %v4875 = vpack.c.b16 %v4275, %v4267
    %v4876 = vpack.c.b16 %v4276, %v4268
    %v4877 = vpack.c.b16 %v4277, %v4269
    %v4878 = vpack.c.b16 %v4286, %v4278
    %v4879 = vpack.c.b16 %v4287, %v4279
    %v4880 = vpack.c.b16 %v4288, %v4280
    %v4881 = vpack.c.b16 %v4289, %v4281
    %v4882 = vpack.c.b16 %v4290, %v4282
    %v4883 = vpack.c.b16 %v4291, %v4283
    %v4884 = vpack.c.b16 %v4292, %v4284
    %v4885 = vpack.c.b16 %v4293, %v4285
    %v4886 = vpack.c.b16 %v4302, %v4294
    %v4887 = vpack.c.b16 %v4303, %v4295
    %v4888 = vpack.c.b16 %v4304, %v4296
    %v4889 = vpack.c.b16 %v4305, %v4297
    %v4890 = vpack.c.b16 %v4306, %v4298
    %v4891 = vpack.c.b16 %v4307, %v4299
    %v4892 = vpack.c.b16 %v4308, %v4300
    %v4893 = vpack.c.b16 %v4309, %v4301
    %v4894 = vpack.c.b16 %v4318, %v4310
    %v4895 = vpack.c.b16 %v4319, %v4311
    %v4896 = vpack.c.b16 %v4320, %v4312
    %v4897 = vpack.c.b16 %v4321, %v4313
    %v4898 = vpack.c.b16 %v4322, %v4314
    %v4899 = vpack.c.b16 %v4323, %v4315
    %v4900 = vpack.c.b16 %v4324, %v4316
    %v4901 = vpack.c.b16 %v4325, %v4317
    %v4902 = vpack.c.b16 %v4334, %v4326
    %v4903 = vpack.c.b16 %v4335, %v4327
    %v4904 = vpack.c.b16 %v4336, %v4328
    %v4905 = vpack.c.b16 %v4337, %v4329
    %v4906 = vpack.c.b16 %v4338, %v4330
    %v4907 = vpack.c.b16 %v4339, %v4331
    %v4908 = vpack.c.b16 %v4340, %v4332
    %v4909 = vpack.c.b16 %v4341, %v4333
    %v4910 = vpack.c.b16 %v4350, %v4342
    %v4911 = vpack.c.b16 %v4351, %v4343
    %v4912 = vpack.c.b16 %v4352, %v4344
    %v4913 = vpack.c.b16 %v4353, %v4345
    %v4914 = vpack.c.b16 %v4354, %v4346
    %v4915 = vpack.c.b16 %v4355, %v4347
    %v4916 = vpack.c.b16 %v4356, %v4348
    %v4917 = vpack.c.b16 %v4357, %v4349
    %v4918 = vpack.c.b16 %v4366, %v4358
    %v4919 = vpack.c.b16 %v4367, %v4359
    %v4920 = vpack.c.b16 %v4368, %v4360
    %v4921 = vpack.c.b16 %v4369, %v4361
    %v4922 = vpack.c.b16 %v4370, %v4362
    %v4923 = vpack.c.b16 %v4371, %v4363
    %v4924 = vpack.c.b16 %v4372, %v4364
    %v4925 = vpack.c.b16 %v4373, %v4365
    %v4926 = vpack.c.b16 %v4382, %v4374
    %v4927 = vpack.c.b16 %v4383, %v4375
    %v4928 = vpack.c.b16 %v4384, %v4376
    %v4929 = vpack.c.b16 %v4385, %v4377
    %v4930 = vpack.c.b16 %v4386, %v4378
    %v4931 = vpack.c.b16 %v4387, %v4379
    %v4932 = vpack.c.b16 %v4388, %v4380
    %v4933 = vpack.c.b16 %v4389, %v4381
    %v4934 = vpack.c.b16 %v4398, %v4390
    %v4935 = vpack.c.b16 %v4399, %v4391
    %v4936 = vpack.c.b16 %v4400, %v4392
    %v4937 = vpack.c.b16 %v4401, %v4393
    %v4938 = vpack.c.b16 %v4402, %v4394
    %v4939 = vpack.c.b16 %v4403, %v4395
    %v4940 = vpack.c.b16 %v4404, %v4396
    %v4941 = vpack.c.b16 %v4405, %v4397
    %v4942 = vpack.c.b16 %v4414, %v4406
    %v4943 = vpack.c.b16 %v4415, %v4407
    %v4944 = vpack.c.b16 %v4416, %v4408
    %v4945 = vpack.c.b16 %v4417, %v4409
    %v4946 = vpack.c.b16 %v4418, %v4410
    %v4947 = vpack.c.b16 %v4419, %v4411
    %v4948 = vpack.c.b16 %v4420, %v4412
    %v4949 = vpack.c.b16 %v4421, %v4413
    %v4950 = vpack.c.b16 %v4430, %v4422
    %v4951 = vpack.c.b16 %v4431, %v4423
    %v4952 = vpack.c.b16 %v4432, %v4424
    %v4953 = vpack.c.b16 %v4433, %v4425
    %v4954 = vpack.c.b16 %v4434, %v4426
    %v4955 = vpack.c.b16 %v4435, %v4427
    %v4956 = vpack.c.b16 %v4436, %v4428
    %v4957 = vpack.c.b16 %v4437, %v4429
    %v4958 = vpack.c.b16 %v4446, %v4438
    %v4959 = vpack.c.b16 %v4447, %v4439
    %v4960 = vpack.c.b16 %v4448, %v4440
    %v4961 = vpack.c.b16 %v4449, %v4441
    %v4962 = vpack.c.b16 %v4450, %v4442
    %v4963 = vpack.c.b16 %v4451, %v4443
    %v4964 = vpack.c.b16 %v4452, %v4444
    %v4965 = vpack.c.b16 %v4453, %v4445
    %5478 = vmatprep.subr.bf16.mxu0 %v4511
    %5479 = vmatpush1.bf16.msra.mxu0 %v4510
    %5480 = vmatprep.subr.bf16.mxu0 %v4503
    %5481 = vmatpush1.bf16.msra.mxu0 %v4502
    %5482 = vmatprep.subr.bf16.mxu0 %v4495
    %5483 = vmatpush1.bf16.msra.mxu0 %v4494
    %5484 = vmatprep.subr.bf16.mxu0 %v4487
    %5485 = vmatpush1.bf16.msra.mxu0 %v4486
    %5486 = vmatprep.subr.bf16.mxu0 %v4479
    %5487 = vmatpush1.bf16.msra.mxu0 %v4478
    %5488 = vmatprep.subr.bf16.mxu0 %v4471
    %5489 = vmatpush1.bf16.msra.mxu0 %v4470
    %5490 = vmatprep.subr.bf16.mxu0 %v4463
    %5491 = vmatpush1.bf16.msra.mxu0 %v4462
    %5492 = vmatprep.subr.bf16.mxu0 %v4455
    %5493 = vmatpush1.bf16.msra.mxu0 %v4454
    %5494 = vmatprep.subr.bf16.mxu0 %v4575
    %5495 = vmatpush2.bf16.msra.mxu0 %v4574
    %5496 = vmatprep.subr.bf16.mxu0 %v4567
    %5497 = vmatpush2.bf16.msra.mxu0 %v4566
    %5498 = vmatprep.subr.bf16.mxu0 %v4559
    %5499 = vmatpush2.bf16.msra.mxu0 %v4558
    %5500 = vmatprep.subr.bf16.mxu0 %v4551
    %5501 = vmatpush2.bf16.msra.mxu0 %v4550
    %5502 = vmatprep.subr.bf16.mxu0 %v4543
    %5503 = vmatpush2.bf16.msra.mxu0 %v4542
    %5504 = vmatprep.subr.bf16.mxu0 %v4535
    %5505 = vmatpush2.bf16.msra.mxu0 %v4534
    %5506 = vmatprep.subr.bf16.mxu0 %v4527
    %5507 = vmatpush2.bf16.msra.mxu0 %v4526
    %5508 = vmatprep.subr.bf16.mxu0 %v4519
    %5509 = vmatpush2.bf16.msra.mxu0 %v4518
    %5510 = vmatprep.mubr.bf16.mxu0 %v2357
    %5511 = vmatmul.mubr.bf16.gmra.mxu0 %v2356
    %v5512 = vpop.f32.mrf.mxu0
    %v5513 = vadd.f32 %v2881, %v5512
    %v5514 = vpop.f32.mrf.mxu0
    %v5515 = vadd.f32 %v2885, %v5514
    %v5516 = vpop.f32.mrf.mxu0
    %v5517 = vpop.f32.mrf.mxu0
    %5518 = vdwg.mxu0
    %5519 = vmatprep.subr.bf16.mxu0 %v4639
    %5520 = vmatpush1.bf16.msra.mxu0 %v4638
    %5521 = vmatprep.subr.bf16.mxu0 %v4631
    %5522 = vmatpush1.bf16.msra.mxu0 %v4630
    %5523 = vmatprep.subr.bf16.mxu0 %v4623
    %5524 = vmatpush1.bf16.msra.mxu0 %v4622
    %5525 = vmatprep.subr.bf16.mxu0 %v4615
    %5526 = vmatpush1.bf16.msra.mxu0 %v4614
    %5527 = vmatprep.subr.bf16.mxu0 %v4607
    %5528 = vmatpush1.bf16.msra.mxu0 %v4606
    %5529 = vmatprep.subr.bf16.mxu0 %v4599
    %5530 = vmatpush1.bf16.msra.mxu0 %v4598
    %5531 = vmatprep.subr.bf16.mxu0 %v4591
    %5532 = vmatpush1.bf16.msra.mxu0 %v4590
    %5533 = vmatprep.subr.bf16.mxu0 %v4583
    %5534 = vmatpush1.bf16.msra.mxu0 %v4582
    %5535 = vmatprep.subr.bf16.mxu0 %v4703
    %5536 = vmatpush2.bf16.msra.mxu0 %v4702
    %5537 = vmatprep.subr.bf16.mxu0 %v4695
    %5538 = vmatpush2.bf16.msra.mxu0 %v4694
    %5539 = vmatprep.subr.bf16.mxu0 %v4687
    %5540 = vmatpush2.bf16.msra.mxu0 %v4686
    %5541 = vmatprep.subr.bf16.mxu0 %v4679
    %5542 = vmatpush2.bf16.msra.mxu0 %v4678
    %5543 = vmatprep.subr.bf16.mxu0 %v4671
    %5544 = vmatpush2.bf16.msra.mxu0 %v4670
    %5545 = vmatprep.subr.bf16.mxu0 %v4663
    %5546 = vmatpush2.bf16.msra.mxu0 %v4662
    %5547 = vmatprep.subr.bf16.mxu0 %v4655
    %5548 = vmatpush2.bf16.msra.mxu0 %v4654
    %5549 = vmatprep.subr.bf16.mxu0 %v4647
    %5550 = vmatpush2.bf16.msra.mxu0 %v4646
    %5551 = vmatprep.mubr.bf16.mxu0 %v2359
    %5552 = vmatmul.mubr.bf16.gmra.mxu0 %v2358
    %v5553 = vpop.f32.mrf.mxu0
    %v5554 = vadd.f32 %v5513, %v5553
    %v5555 = vpop.f32.mrf.mxu0
    %v5556 = vadd.f32 %v5515, %v5555
    %v5557 = vpop.f32.mrf.mxu0
    %v5558 = vpop.f32.mrf.mxu0
    %5559 = vdwg.mxu0
    %5560 = vmatprep.subr.bf16.mxu0 %v4767
    %5561 = vmatpush1.bf16.msra.mxu0 %v4766
    %5562 = vmatprep.subr.bf16.mxu0 %v4759
    %5563 = vmatpush1.bf16.msra.mxu0 %v4758
    %5564 = vmatprep.subr.bf16.mxu0 %v4751
    %5565 = vmatpush1.bf16.msra.mxu0 %v4750
    %5566 = vmatprep.subr.bf16.mxu0 %v4743
    %5567 = vmatpush1.bf16.msra.mxu0 %v4742
    %5568 = vmatprep.subr.bf16.mxu0 %v4735
    %5569 = vmatpush1.bf16.msra.mxu0 %v4734
    %5570 = vmatprep.subr.bf16.mxu0 %v4727
    %5571 = vmatpush1.bf16.msra.mxu0 %v4726
    %5572 = vmatprep.subr.bf16.mxu0 %v4719
    %5573 = vmatpush1.bf16.msra.mxu0 %v4718
    %5574 = vmatprep.subr.bf16.mxu0 %v4711
    %5575 = vmatpush1.bf16.msra.mxu0 %v4710
    %5576 = vmatprep.subr.bf16.mxu0 %v4831
    %5577 = vmatpush2.bf16.msra.mxu0 %v4830
    %5578 = vmatprep.subr.bf16.mxu0 %v4823
    %5579 = vmatpush2.bf16.msra.mxu0 %v4822
    %5580 = vmatprep.subr.bf16.mxu0 %v4815
    %5581 = vmatpush2.bf16.msra.mxu0 %v4814
    %5582 = vmatprep.subr.bf16.mxu0 %v4807
    %5583 = vmatpush2.bf16.msra.mxu0 %v4806
    %5584 = vmatprep.subr.bf16.mxu0 %v4799
    %5585 = vmatpush2.bf16.msra.mxu0 %v4798
    %5586 = vmatprep.subr.bf16.mxu0 %v4791
    %5587 = vmatpush2.bf16.msra.mxu0 %v4790
    %5588 = vmatprep.subr.bf16.mxu0 %v4783
    %5589 = vmatpush2.bf16.msra.mxu0 %v4782
    %5590 = vmatprep.subr.bf16.mxu0 %v4775
    %5591 = vmatpush2.bf16.msra.mxu0 %v4774
    %5592 = vmatprep.mubr.bf16.mxu0 %v2361
    %5593 = vmatmul.mubr.bf16.gmra.mxu0 %v2360
    %v5594 = vpop.f32.mrf.mxu0
    %v5595 = vadd.f32 %v5554, %v5594
    %v5596 = vpop.f32.mrf.mxu0
    %v5597 = vadd.f32 %v5556, %v5596
    %v5598 = vpop.f32.mrf.mxu0
    %v5599 = vpop.f32.mrf.mxu0
    %5600 = vdwg.mxu0
    %5601 = vmatprep.subr.bf16.mxu0 %v4895
    %5602 = vmatpush1.bf16.msra.mxu0 %v4894
    %5603 = vmatprep.subr.bf16.mxu0 %v4887
    %5604 = vmatpush1.bf16.msra.mxu0 %v4886
    %5605 = vmatprep.subr.bf16.mxu0 %v4879
    %5606 = vmatpush1.bf16.msra.mxu0 %v4878
    %5607 = vmatprep.subr.bf16.mxu0 %v4871
    %5608 = vmatpush1.bf16.msra.mxu0 %v4870
    %5609 = vmatprep.subr.bf16.mxu0 %v4863
    %5610 = vmatpush1.bf16.msra.mxu0 %v4862
    %5611 = vmatprep.subr.bf16.mxu0 %v4855
    %5612 = vmatpush1.bf16.msra.mxu0 %v4854
    %5613 = vmatprep.subr.bf16.mxu0 %v4847
    %5614 = vmatpush1.bf16.msra.mxu0 %v4846
    %5615 = vmatprep.subr.bf16.mxu0 %v4839
    %5616 = vmatpush1.bf16.msra.mxu0 %v4838
    %5617 = vmatprep.subr.bf16.mxu0 %v4959
    %5618 = vmatpush2.bf16.msra.mxu0 %v4958
    %5619 = vmatprep.subr.bf16.mxu0 %v4951
    %5620 = vmatpush2.bf16.msra.mxu0 %v4950
    %5621 = vmatprep.subr.bf16.mxu0 %v4943
    %5622 = vmatpush2.bf16.msra.mxu0 %v4942
    %5623 = vmatprep.subr.bf16.mxu0 %v4935
    %5624 = vmatpush2.bf16.msra.mxu0 %v4934
    %5625 = vmatprep.subr.bf16.mxu0 %v4927
    %5626 = vmatpush2.bf16.msra.mxu0 %v4926
    %5627 = vmatprep.subr.bf16.mxu0 %v4919
    %5628 = vmatpush2.bf16.msra.mxu0 %v4918
    %5629 = vmatprep.subr.bf16.mxu0 %v4911
    %5630 = vmatpush2.bf16.msra.mxu0 %v4910
    %5631 = vmatprep.subr.bf16.mxu0 %v4903
    %5632 = vmatpush2.bf16.msra.mxu0 %v4902
    %5633 = vmatprep.mubr.bf16.mxu0 %v2363
    %5634 = vmatmul.mubr.bf16.gmra.mxu0 %v2362
    %v5635 = vpop.f32.mrf.mxu0
    %v5636 = vadd.f32 %v5595, %v5635
    %v5637 = vpop.f32.mrf.mxu0
    %v5638 = vadd.f32 %v5597, %v5637
    %v5639 = vpop.f32.mrf.mxu0
    %v5640 = vpop.f32.mrf.mxu0
    %5641 = vdwg.mxu0
    %5642 = vmatprep.subr.bf16.mxu0 %v4513
    %5643 = vmatpush1.bf16.msra.mxu0 %v4512
    %5644 = vmatprep.subr.bf16.mxu0 %v4505
    %5645 = vmatpush1.bf16.msra.mxu0 %v4504
    %5646 = vmatprep.subr.bf16.mxu0 %v4497
    %5647 = vmatpush1.bf16.msra.mxu0 %v4496
    %5648 = vmatprep.subr.bf16.mxu0 %v4489
    %5649 = vmatpush1.bf16.msra.mxu0 %v4488
    %5650 = vmatprep.subr.bf16.mxu0 %v4481
    %5651 = vmatpush1.bf16.msra.mxu0 %v4480
    %5652 = vmatprep.subr.bf16.mxu0 %v4473
    %5653 = vmatpush1.bf16.msra.mxu0 %v4472
    %5654 = vmatprep.subr.bf16.mxu0 %v4465
    %5655 = vmatpush1.bf16.msra.mxu0 %v4464
    %5656 = vmatprep.subr.bf16.mxu0 %v4457
    %5657 = vmatpush1.bf16.msra.mxu0 %v4456
    %5658 = vmatprep.subr.bf16.mxu0 %v4577
    %5659 = vmatpush2.bf16.msra.mxu0 %v4576
    %5660 = vmatprep.subr.bf16.mxu0 %v4569
    %5661 = vmatpush2.bf16.msra.mxu0 %v4568
    %5662 = vmatprep.subr.bf16.mxu0 %v4561
    %5663 = vmatpush2.bf16.msra.mxu0 %v4560
    %5664 = vmatprep.subr.bf16.mxu0 %v4553
    %5665 = vmatpush2.bf16.msra.mxu0 %v4552
    %5666 = vmatprep.subr.bf16.mxu0 %v4545
    %5667 = vmatpush2.bf16.msra.mxu0 %v4544
    %5668 = vmatprep.subr.bf16.mxu0 %v4537
    %5669 = vmatpush2.bf16.msra.mxu0 %v4536
    %5670 = vmatprep.subr.bf16.mxu0 %v4529
    %5671 = vmatpush2.bf16.msra.mxu0 %v4528
    %5672 = vmatprep.subr.bf16.mxu0 %v4521
    %5673 = vmatpush2.bf16.msra.mxu0 %v4520
    %5674 = vmatprep.mubr.bf16.mxu0 %v2357
    %5675 = vmatmul.mubr.bf16.gmra.mxu0 %v2356
    %v5676 = vpop.f32.mrf.mxu0
    %v5677 = vadd.f32 %v2889, %v5676
    %v5678 = vpop.f32.mrf.mxu0
    %v5679 = vadd.f32 %v2893, %v5678
    %v5680 = vpop.f32.mrf.mxu0
    %v5681 = vpop.f32.mrf.mxu0
    %5682 = vdwg.mxu0
    %5683 = vmatprep.subr.bf16.mxu0 %v4641
    %5684 = vmatpush1.bf16.msra.mxu0 %v4640
    %5685 = vmatprep.subr.bf16.mxu0 %v4633
    %5686 = vmatpush1.bf16.msra.mxu0 %v4632
    %5687 = vmatprep.subr.bf16.mxu0 %v4625
    %5688 = vmatpush1.bf16.msra.mxu0 %v4624
    %5689 = vmatprep.subr.bf16.mxu0 %v4617
    %5690 = vmatpush1.bf16.msra.mxu0 %v4616
    %5691 = vmatprep.subr.bf16.mxu0 %v4609
    %5692 = vmatpush1.bf16.msra.mxu0 %v4608
    %5693 = vmatprep.subr.bf16.mxu0 %v4601
    %5694 = vmatpush1.bf16.msra.mxu0 %v4600
    %5695 = vmatprep.subr.bf16.mxu0 %v4593
    %5696 = vmatpush1.bf16.msra.mxu0 %v4592
    %5697 = vmatprep.subr.bf16.mxu0 %v4585
    %5698 = vmatpush1.bf16.msra.mxu0 %v4584
    %5699 = vmatprep.subr.bf16.mxu0 %v4705
    %5700 = vmatpush2.bf16.msra.mxu0 %v4704
    %5701 = vmatprep.subr.bf16.mxu0 %v4697
    %5702 = vmatpush2.bf16.msra.mxu0 %v4696
    %5703 = vmatprep.subr.bf16.mxu0 %v4689
    %5704 = vmatpush2.bf16.msra.mxu0 %v4688
    %5705 = vmatprep.subr.bf16.mxu0 %v4681
    %5706 = vmatpush2.bf16.msra.mxu0 %v4680
    %5707 = vmatprep.subr.bf16.mxu0 %v4673
    %5708 = vmatpush2.bf16.msra.mxu0 %v4672
    %5709 = vmatprep.subr.bf16.mxu0 %v4665
    %5710 = vmatpush2.bf16.msra.mxu0 %v4664
    %5711 = vmatprep.subr.bf16.mxu0 %v4657
    %5712 = vmatpush2.bf16.msra.mxu0 %v4656
    %5713 = vmatprep.subr.bf16.mxu0 %v4649
    %5714 = vmatpush2.bf16.msra.mxu0 %v4648
    %5715 = vmatprep.mubr.bf16.mxu0 %v2359
    %5716 = vmatmul.mubr.bf16.gmra.mxu0 %v2358
    %v5717 = vpop.f32.mrf.mxu0
    %v5718 = vadd.f32 %v5677, %v5717
    %v5719 = vpop.f32.mrf.mxu0
    %v5720 = vadd.f32 %v5679, %v5719
    %v5721 = vpop.f32.mrf.mxu0
    %v5722 = vpop.f32.mrf.mxu0
    %5723 = vdwg.mxu0
    %5724 = vmatprep.subr.bf16.mxu0 %v4769
    %5725 = vmatpush1.bf16.msra.mxu0 %v4768
    %5726 = vmatprep.subr.bf16.mxu0 %v4761
    %5727 = vmatpush1.bf16.msra.mxu0 %v4760
    %5728 = vmatprep.subr.bf16.mxu0 %v4753
    %5729 = vmatpush1.bf16.msra.mxu0 %v4752
    %5730 = vmatprep.subr.bf16.mxu0 %v4745
    %5731 = vmatpush1.bf16.msra.mxu0 %v4744
    %5732 = vmatprep.subr.bf16.mxu0 %v4737
    %5733 = vmatpush1.bf16.msra.mxu0 %v4736
    %5734 = vmatprep.subr.bf16.mxu0 %v4729
    %5735 = vmatpush1.bf16.msra.mxu0 %v4728
    %5736 = vmatprep.subr.bf16.mxu0 %v4721
    %5737 = vmatpush1.bf16.msra.mxu0 %v4720
    %5738 = vmatprep.subr.bf16.mxu0 %v4713
    %5739 = vmatpush1.bf16.msra.mxu0 %v4712
    %5740 = vmatprep.subr.bf16.mxu0 %v4833
    %5741 = vmatpush2.bf16.msra.mxu0 %v4832
    %5742 = vmatprep.subr.bf16.mxu0 %v4825
    %5743 = vmatpush2.bf16.msra.mxu0 %v4824
    %5744 = vmatprep.subr.bf16.mxu0 %v4817
    %5745 = vmatpush2.bf16.msra.mxu0 %v4816
    %5746 = vmatprep.subr.bf16.mxu0 %v4809
    %5747 = vmatpush2.bf16.msra.mxu0 %v4808
    %5748 = vmatprep.subr.bf16.mxu0 %v4801
    %5749 = vmatpush2.bf16.msra.mxu0 %v4800
    %5750 = vmatprep.subr.bf16.mxu0 %v4793
    %5751 = vmatpush2.bf16.msra.mxu0 %v4792
    %5752 = vmatprep.subr.bf16.mxu0 %v4785
    %5753 = vmatpush2.bf16.msra.mxu0 %v4784
    %5754 = vmatprep.subr.bf16.mxu0 %v4777
    %5755 = vmatpush2.bf16.msra.mxu0 %v4776
    %5756 = vmatprep.mubr.bf16.mxu0 %v2361
    %5757 = vmatmul.mubr.bf16.gmra.mxu0 %v2360
    %v5758 = vpop.f32.mrf.mxu0
    %v5759 = vadd.f32 %v5718, %v5758
    %v5760 = vpop.f32.mrf.mxu0
    %v5761 = vadd.f32 %v5720, %v5760
    %v5762 = vpop.f32.mrf.mxu0
    %v5763 = vpop.f32.mrf.mxu0
    %5764 = vdwg.mxu0
    %5765 = vmatprep.subr.bf16.mxu0 %v4897
    %5766 = vmatpush1.bf16.msra.mxu0 %v4896
    %5767 = vmatprep.subr.bf16.mxu0 %v4889
    %5768 = vmatpush1.bf16.msra.mxu0 %v4888
    %5769 = vmatprep.subr.bf16.mxu0 %v4881
    %5770 = vmatpush1.bf16.msra.mxu0 %v4880
    %5771 = vmatprep.subr.bf16.mxu0 %v4873
    %5772 = vmatpush1.bf16.msra.mxu0 %v4872
    %5773 = vmatprep.subr.bf16.mxu0 %v4865
    %5774 = vmatpush1.bf16.msra.mxu0 %v4864
    %5775 = vmatprep.subr.bf16.mxu0 %v4857
    %5776 = vmatpush1.bf16.msra.mxu0 %v4856
    %5777 = vmatprep.subr.bf16.mxu0 %v4849
    %5778 = vmatpush1.bf16.msra.mxu0 %v4848
    %5779 = vmatprep.subr.bf16.mxu0 %v4841
    %5780 = vmatpush1.bf16.msra.mxu0 %v4840
    %5781 = vmatprep.subr.bf16.mxu0 %v4961
    %5782 = vmatpush2.bf16.msra.mxu0 %v4960
    %5783 = vmatprep.subr.bf16.mxu0 %v4953
    %5784 = vmatpush2.bf16.msra.mxu0 %v4952
    %5785 = vmatprep.subr.bf16.mxu0 %v4945
    %5786 = vmatpush2.bf16.msra.mxu0 %v4944
    %5787 = vmatprep.subr.bf16.mxu0 %v4937
    %5788 = vmatpush2.bf16.msra.mxu0 %v4936
    %5789 = vmatprep.subr.bf16.mxu0 %v4929
    %5790 = vmatpush2.bf16.msra.mxu0 %v4928
    %5791 = vmatprep.subr.bf16.mxu0 %v4921
    %5792 = vmatpush2.bf16.msra.mxu0 %v4920
    %5793 = vmatprep.subr.bf16.mxu0 %v4913
    %5794 = vmatpush2.bf16.msra.mxu0 %v4912
    %5795 = vmatprep.subr.bf16.mxu0 %v4905
    %5796 = vmatpush2.bf16.msra.mxu0 %v4904
    %5797 = vmatprep.mubr.bf16.mxu0 %v2363
    %5798 = vmatmul.mubr.bf16.gmra.mxu0 %v2362
    %v5799 = vpop.f32.mrf.mxu0
    %v5800 = vadd.f32 %v5759, %v5799
    %v5801 = vpop.f32.mrf.mxu0
    %v5802 = vadd.f32 %v5761, %v5801
    %v5803 = vpop.f32.mrf.mxu0
    %v5804 = vpop.f32.mrf.mxu0
    %5805 = vdwg.mxu0
    %5806 = vmatprep.subr.bf16.mxu0 %v4515
    %5807 = vmatpush1.bf16.msra.mxu0 %v4514
    %5808 = vmatprep.subr.bf16.mxu0 %v4507
    %5809 = vmatpush1.bf16.msra.mxu0 %v4506
    %5810 = vmatprep.subr.bf16.mxu0 %v4499
    %5811 = vmatpush1.bf16.msra.mxu0 %v4498
    %5812 = vmatprep.subr.bf16.mxu0 %v4491
    %5813 = vmatpush1.bf16.msra.mxu0 %v4490
    %5814 = vmatprep.subr.bf16.mxu0 %v4483
    %5815 = vmatpush1.bf16.msra.mxu0 %v4482
    %5816 = vmatprep.subr.bf16.mxu0 %v4475
    %5817 = vmatpush1.bf16.msra.mxu0 %v4474
    %5818 = vmatprep.subr.bf16.mxu0 %v4467
    %5819 = vmatpush1.bf16.msra.mxu0 %v4466
    %5820 = vmatprep.subr.bf16.mxu0 %v4459
    %5821 = vmatpush1.bf16.msra.mxu0 %v4458
    %5822 = vmatprep.subr.bf16.mxu0 %v4579
    %5823 = vmatpush2.bf16.msra.mxu0 %v4578
    %5824 = vmatprep.subr.bf16.mxu0 %v4571
    %5825 = vmatpush2.bf16.msra.mxu0 %v4570
    %5826 = vmatprep.subr.bf16.mxu0 %v4563
    %5827 = vmatpush2.bf16.msra.mxu0 %v4562
    %5828 = vmatprep.subr.bf16.mxu0 %v4555
    %5829 = vmatpush2.bf16.msra.mxu0 %v4554
    %5830 = vmatprep.subr.bf16.mxu0 %v4547
    %5831 = vmatpush2.bf16.msra.mxu0 %v4546
    %5832 = vmatprep.subr.bf16.mxu0 %v4539
    %5833 = vmatpush2.bf16.msra.mxu0 %v4538
    %5834 = vmatprep.subr.bf16.mxu0 %v4531
    %5835 = vmatpush2.bf16.msra.mxu0 %v4530
    %5836 = vmatprep.subr.bf16.mxu0 %v4523
    %5837 = vmatpush2.bf16.msra.mxu0 %v4522
    %5838 = vmatprep.mubr.bf16.mxu0 %v2357
    %5839 = vmatmul.mubr.bf16.gmra.mxu0 %v2356
    %v5840 = vpop.f32.mrf.mxu0
    %v5841 = vadd.f32 %v2897, %v5840
    %v5842 = vpop.f32.mrf.mxu0
    %v5843 = vadd.f32 %v2901, %v5842
    %v5844 = vpop.f32.mrf.mxu0
    %v5845 = vpop.f32.mrf.mxu0
    %5846 = vdwg.mxu0
    %5847 = vmatprep.subr.bf16.mxu0 %v4643
    %5848 = vmatpush1.bf16.msra.mxu0 %v4642
    %5849 = vmatprep.subr.bf16.mxu0 %v4635
    %5850 = vmatpush1.bf16.msra.mxu0 %v4634
    %5851 = vmatprep.subr.bf16.mxu0 %v4627
    %5852 = vmatpush1.bf16.msra.mxu0 %v4626
    %5853 = vmatprep.subr.bf16.mxu0 %v4619
    %5854 = vmatpush1.bf16.msra.mxu0 %v4618
    %5855 = vmatprep.subr.bf16.mxu0 %v4611
    %5856 = vmatpush1.bf16.msra.mxu0 %v4610
    %5857 = vmatprep.subr.bf16.mxu0 %v4603
    %5858 = vmatpush1.bf16.msra.mxu0 %v4602
    %5859 = vmatprep.subr.bf16.mxu0 %v4595
    %5860 = vmatpush1.bf16.msra.mxu0 %v4594
    %5861 = vmatprep.subr.bf16.mxu0 %v4587
    %5862 = vmatpush1.bf16.msra.mxu0 %v4586
    %5863 = vmatprep.subr.bf16.mxu0 %v4707
    %5864 = vmatpush2.bf16.msra.mxu0 %v4706
    %5865 = vmatprep.subr.bf16.mxu0 %v4699
    %5866 = vmatpush2.bf16.msra.mxu0 %v4698
    %5867 = vmatprep.subr.bf16.mxu0 %v4691
    %5868 = vmatpush2.bf16.msra.mxu0 %v4690
    %5869 = vmatprep.subr.bf16.mxu0 %v4683
    %5870 = vmatpush2.bf16.msra.mxu0 %v4682
    %5871 = vmatprep.subr.bf16.mxu0 %v4675
    %5872 = vmatpush2.bf16.msra.mxu0 %v4674
    %5873 = vmatprep.subr.bf16.mxu0 %v4667
    %5874 = vmatpush2.bf16.msra.mxu0 %v4666
    %5875 = vmatprep.subr.bf16.mxu0 %v4659
    %5876 = vmatpush2.bf16.msra.mxu0 %v4658
    %5877 = vmatprep.subr.bf16.mxu0 %v4651
    %5878 = vmatpush2.bf16.msra.mxu0 %v4650
    %5879 = vmatprep.mubr.bf16.mxu0 %v2359
    %5880 = vmatmul.mubr.bf16.gmra.mxu0 %v2358
    %v5881 = vpop.f32.mrf.mxu0
    %v5882 = vadd.f32 %v5841, %v5881
    %v5883 = vpop.f32.mrf.mxu0
    %v5884 = vadd.f32 %v5843, %v5883
    %v5885 = vpop.f32.mrf.mxu0
    %v5886 = vpop.f32.mrf.mxu0
    %5887 = vdwg.mxu0
    %5888 = vmatprep.subr.bf16.mxu0 %v4771
    %5889 = vmatpush1.bf16.msra.mxu0 %v4770
    %5890 = vmatprep.subr.bf16.mxu0 %v4763
    %5891 = vmatpush1.bf16.msra.mxu0 %v4762
    %5892 = vmatprep.subr.bf16.mxu0 %v4755
    %5893 = vmatpush1.bf16.msra.mxu0 %v4754
    %5894 = vmatprep.subr.bf16.mxu0 %v4747
    %5895 = vmatpush1.bf16.msra.mxu0 %v4746
    %5896 = vmatprep.subr.bf16.mxu0 %v4739
    %5897 = vmatpush1.bf16.msra.mxu0 %v4738
    %5898 = vmatprep.subr.bf16.mxu0 %v4731
    %5899 = vmatpush1.bf16.msra.mxu0 %v4730
    %5900 = vmatprep.subr.bf16.mxu0 %v4723
    %5901 = vmatpush1.bf16.msra.mxu0 %v4722
    %5902 = vmatprep.subr.bf16.mxu0 %v4715
    %5903 = vmatpush1.bf16.msra.mxu0 %v4714
    %5904 = vmatprep.subr.bf16.mxu0 %v4835
    %5905 = vmatpush2.bf16.msra.mxu0 %v4834
    %5906 = vmatprep.subr.bf16.mxu0 %v4827
    %5907 = vmatpush2.bf16.msra.mxu0 %v4826
    %5908 = vmatprep.subr.bf16.mxu0 %v4819
    %5909 = vmatpush2.bf16.msra.mxu0 %v4818
    %5910 = vmatprep.subr.bf16.mxu0 %v4811
    %5911 = vmatpush2.bf16.msra.mxu0 %v4810
    %5912 = vmatprep.subr.bf16.mxu0 %v4803
    %5913 = vmatpush2.bf16.msra.mxu0 %v4802
    %5914 = vmatprep.subr.bf16.mxu0 %v4795
    %5915 = vmatpush2.bf16.msra.mxu0 %v4794
    %5916 = vmatprep.subr.bf16.mxu0 %v4787
    %5917 = vmatpush2.bf16.msra.mxu0 %v4786
    %5918 = vmatprep.subr.bf16.mxu0 %v4779
    %5919 = vmatpush2.bf16.msra.mxu0 %v4778
    %5920 = vmatprep.mubr.bf16.mxu0 %v2361
    %5921 = vmatmul.mubr.bf16.gmra.mxu0 %v2360
    %v5922 = vpop.f32.mrf.mxu0
    %v5923 = vadd.f32 %v5882, %v5922
    %v5924 = vpop.f32.mrf.mxu0
    %v5925 = vadd.f32 %v5884, %v5924
    %v5926 = vpop.f32.mrf.mxu0
    %v5927 = vpop.f32.mrf.mxu0
    %5928 = vdwg.mxu0
    %5929 = vmatprep.subr.bf16.mxu0 %v4899
    %5930 = vmatpush1.bf16.msra.mxu0 %v4898
    %5931 = vmatprep.subr.bf16.mxu0 %v4891
    %5932 = vmatpush1.bf16.msra.mxu0 %v4890
    %5933 = vmatprep.subr.bf16.mxu0 %v4883
    %5934 = vmatpush1.bf16.msra.mxu0 %v4882
    %5935 = vmatprep.subr.bf16.mxu0 %v4875
    %5936 = vmatpush1.bf16.msra.mxu0 %v4874
    %5937 = vmatprep.subr.bf16.mxu0 %v4867
    %5938 = vmatpush1.bf16.msra.mxu0 %v4866
    %5939 = vmatprep.subr.bf16.mxu0 %v4859
    %5940 = vmatpush1.bf16.msra.mxu0 %v4858
    %5941 = vmatprep.subr.bf16.mxu0 %v4851
    %5942 = vmatpush1.bf16.msra.mxu0 %v4850
    %5943 = vmatprep.subr.bf16.mxu0 %v4843
    %5944 = vmatpush1.bf16.msra.mxu0 %v4842
    %5945 = vmatprep.subr.bf16.mxu0 %v4963
    %5946 = vmatpush2.bf16.msra.mxu0 %v4962
    %5947 = vmatprep.subr.bf16.mxu0 %v4955
    %5948 = vmatpush2.bf16.msra.mxu0 %v4954
    %5949 = vmatprep.subr.bf16.mxu0 %v4947
    %5950 = vmatpush2.bf16.msra.mxu0 %v4946
    %5951 = vmatprep.subr.bf16.mxu0 %v4939
    %5952 = vmatpush2.bf16.msra.mxu0 %v4938
    %5953 = vmatprep.subr.bf16.mxu0 %v4931
    %5954 = vmatpush2.bf16.msra.mxu0 %v4930
    %5955 = vmatprep.subr.bf16.mxu0 %v4923
    %5956 = vmatpush2.bf16.msra.mxu0 %v4922
    %5957 = vmatprep.subr.bf16.mxu0 %v4915
    %5958 = vmatpush2.bf16.msra.mxu0 %v4914
    %5959 = vmatprep.subr.bf16.mxu0 %v4907
    %5960 = vmatpush2.bf16.msra.mxu0 %v4906
    %5961 = vmatprep.mubr.bf16.mxu0 %v2363
    %5962 = vmatmul.mubr.bf16.gmra.mxu0 %v2362
    %v5963 = vpop.f32.mrf.mxu0
    %v5964 = vadd.f32 %v5923, %v5963
    %v5965 = vpop.f32.mrf.mxu0
    %v5966 = vadd.f32 %v5925, %v5965
    %v5967 = vpop.f32.mrf.mxu0
    %v5968 = vpop.f32.mrf.mxu0
    %5969 = vdwg.mxu0
    %5970 = vmatprep.subr.bf16.mxu0 %v4517
    %5971 = vmatpush1.bf16.msra.mxu0 %v4516
    %5972 = vmatprep.subr.bf16.mxu0 %v4509
    %5973 = vmatpush1.bf16.msra.mxu0 %v4508
    %5974 = vmatprep.subr.bf16.mxu0 %v4501
    %5975 = vmatpush1.bf16.msra.mxu0 %v4500
    %5976 = vmatprep.subr.bf16.mxu0 %v4493
    %5977 = vmatpush1.bf16.msra.mxu0 %v4492
    %5978 = vmatprep.subr.bf16.mxu0 %v4485
    %5979 = vmatpush1.bf16.msra.mxu0 %v4484
    %5980 = vmatprep.subr.bf16.mxu0 %v4477
    %5981 = vmatpush1.bf16.msra.mxu0 %v4476
    %5982 = vmatprep.subr.bf16.mxu0 %v4469
    %5983 = vmatpush1.bf16.msra.mxu0 %v4468
    %5984 = vmatprep.subr.bf16.mxu0 %v4461
    %5985 = vmatpush1.bf16.msra.mxu0 %v4460
    %5986 = vmatprep.subr.bf16.mxu0 %v4581
    %5987 = vmatpush2.bf16.msra.mxu0 %v4580
    %5988 = vmatprep.subr.bf16.mxu0 %v4573
    %5989 = vmatpush2.bf16.msra.mxu0 %v4572
    %5990 = vmatprep.subr.bf16.mxu0 %v4565
    %5991 = vmatpush2.bf16.msra.mxu0 %v4564
    %5992 = vmatprep.subr.bf16.mxu0 %v4557
    %5993 = vmatpush2.bf16.msra.mxu0 %v4556
    %5994 = vmatprep.subr.bf16.mxu0 %v4549
    %5995 = vmatpush2.bf16.msra.mxu0 %v4548
    %5996 = vmatprep.subr.bf16.mxu0 %v4541
    %5997 = vmatpush2.bf16.msra.mxu0 %v4540
    %5998 = vmatprep.subr.bf16.mxu0 %v4533
    %5999 = vmatpush2.bf16.msra.mxu0 %v4532
    %6000 = vmatprep.subr.bf16.mxu0 %v4525
    %6001 = vmatpush2.bf16.msra.mxu0 %v4524
    %6002 = vmatprep.mubr.bf16.mxu0 %v2357
    %6003 = vmatmul.mubr.bf16.gmra.mxu0 %v2356
    %v6004 = vpop.f32.mrf.mxu0
    %v6005 = vadd.f32 %v2905, %v6004
    %v6006 = vpop.f32.mrf.mxu0
    %v6007 = vadd.f32 %v2909, %v6006
    %v6008 = vpop.f32.mrf.mxu0
    %v6009 = vpop.f32.mrf.mxu0
    %6010 = vdwg.mxu0
    %6011 = vmatprep.subr.bf16.mxu0 %v4645
    %6012 = vmatpush1.bf16.msra.mxu0 %v4644
    %6013 = vmatprep.subr.bf16.mxu0 %v4637
    %6014 = vmatpush1.bf16.msra.mxu0 %v4636
    %6015 = vmatprep.subr.bf16.mxu0 %v4629
    %6016 = vmatpush1.bf16.msra.mxu0 %v4628
    %6017 = vmatprep.subr.bf16.mxu0 %v4621
    %6018 = vmatpush1.bf16.msra.mxu0 %v4620
    %6019 = vmatprep.subr.bf16.mxu0 %v4613
    %6020 = vmatpush1.bf16.msra.mxu0 %v4612
    %6021 = vmatprep.subr.bf16.mxu0 %v4605
    %6022 = vmatpush1.bf16.msra.mxu0 %v4604
    %6023 = vmatprep.subr.bf16.mxu0 %v4597
    %6024 = vmatpush1.bf16.msra.mxu0 %v4596
    %6025 = vmatprep.subr.bf16.mxu0 %v4589
    %6026 = vmatpush1.bf16.msra.mxu0 %v4588
    %6027 = vmatprep.subr.bf16.mxu0 %v4709
    %6028 = vmatpush2.bf16.msra.mxu0 %v4708
    %6029 = vmatprep.subr.bf16.mxu0 %v4701
    %6030 = vmatpush2.bf16.msra.mxu0 %v4700
    %6031 = vmatprep.subr.bf16.mxu0 %v4693
    %6032 = vmatpush2.bf16.msra.mxu0 %v4692
    %6033 = vmatprep.subr.bf16.mxu0 %v4685
    %6034 = vmatpush2.bf16.msra.mxu0 %v4684
    %6035 = vmatprep.subr.bf16.mxu0 %v4677
    %6036 = vmatpush2.bf16.msra.mxu0 %v4676
    %6037 = vmatprep.subr.bf16.mxu0 %v4669
    %6038 = vmatpush2.bf16.msra.mxu0 %v4668
    %6039 = vmatprep.subr.bf16.mxu0 %v4661
    %6040 = vmatpush2.bf16.msra.mxu0 %v4660
    %6041 = vmatprep.subr.bf16.mxu0 %v4653
    %6042 = vmatpush2.bf16.msra.mxu0 %v4652
    %6043 = vmatprep.mubr.bf16.mxu0 %v2359
    %6044 = vmatmul.mubr.bf16.gmra.mxu0 %v2358
    %v6045 = vpop.f32.mrf.mxu0
    %v6046 = vadd.f32 %v6005, %v6045
    %v6047 = vpop.f32.mrf.mxu0
    %v6048 = vadd.f32 %v6007, %v6047
    %v6049 = vpop.f32.mrf.mxu0
    %v6050 = vpop.f32.mrf.mxu0
    %6051 = vdwg.mxu0
    %6052 = vmatprep.subr.bf16.mxu0 %v4773
    %6053 = vmatpush1.bf16.msra.mxu0 %v4772
    %6054 = vmatprep.subr.bf16.mxu0 %v4765
    %6055 = vmatpush1.bf16.msra.mxu0 %v4764
    %6056 = vmatprep.subr.bf16.mxu0 %v4757
    %6057 = vmatpush1.bf16.msra.mxu0 %v4756
    %6058 = vmatprep.subr.bf16.mxu0 %v4749
    %6059 = vmatpush1.bf16.msra.mxu0 %v4748
    %6060 = vmatprep.subr.bf16.mxu0 %v4741
    %6061 = vmatpush1.bf16.msra.mxu0 %v4740
    %6062 = vmatprep.subr.bf16.mxu0 %v4733
    %6063 = vmatpush1.bf16.msra.mxu0 %v4732
    %6064 = vmatprep.subr.bf16.mxu0 %v4725
    %6065 = vmatpush1.bf16.msra.mxu0 %v4724
    %6066 = vmatprep.subr.bf16.mxu0 %v4717
    %6067 = vmatpush1.bf16.msra.mxu0 %v4716
    %6068 = vmatprep.subr.bf16.mxu0 %v4837
    %6069 = vmatpush2.bf16.msra.mxu0 %v4836
    %6070 = vmatprep.subr.bf16.mxu0 %v4829
    %6071 = vmatpush2.bf16.msra.mxu0 %v4828
    %6072 = vmatprep.subr.bf16.mxu0 %v4821
    %6073 = vmatpush2.bf16.msra.mxu0 %v4820
    %6074 = vmatprep.subr.bf16.mxu0 %v4813
    %6075 = vmatpush2.bf16.msra.mxu0 %v4812
    %6076 = vmatprep.subr.bf16.mxu0 %v4805
    %6077 = vmatpush2.bf16.msra.mxu0 %v4804
    %6078 = vmatprep.subr.bf16.mxu0 %v4797
    %6079 = vmatpush2.bf16.msra.mxu0 %v4796
    %6080 = vmatprep.subr.bf16.mxu0 %v4789
    %6081 = vmatpush2.bf16.msra.mxu0 %v4788
    %6082 = vmatprep.subr.bf16.mxu0 %v4781
    %6083 = vmatpush2.bf16.msra.mxu0 %v4780
    %6084 = vmatprep.mubr.bf16.mxu0 %v2361
    %6085 = vmatmul.mubr.bf16.gmra.mxu0 %v2360
    %v6086 = vpop.f32.mrf.mxu0
    %v6087 = vadd.f32 %v6046, %v6086
    %v6088 = vpop.f32.mrf.mxu0
    %v6089 = vadd.f32 %v6048, %v6088
    %v6090 = vpop.f32.mrf.mxu0
    %v6091 = vpop.f32.mrf.mxu0
    %6092 = vdwg.mxu0
    %6093 = vmatprep.subr.bf16.mxu0 %v4901
    %6094 = vmatpush1.bf16.msra.mxu0 %v4900
    %6095 = vmatprep.subr.bf16.mxu0 %v4893
    %6096 = vmatpush1.bf16.msra.mxu0 %v4892
    %6097 = vmatprep.subr.bf16.mxu0 %v4885
    %6098 = vmatpush1.bf16.msra.mxu0 %v4884
    %6099 = vmatprep.subr.bf16.mxu0 %v4877
    %6100 = vmatpush1.bf16.msra.mxu0 %v4876
    %6101 = vmatprep.subr.bf16.mxu0 %v4869
    %6102 = vmatpush1.bf16.msra.mxu0 %v4868
    %6103 = vmatprep.subr.bf16.mxu0 %v4861
    %6104 = vmatpush1.bf16.msra.mxu0 %v4860
    %6105 = vmatprep.subr.bf16.mxu0 %v4853
    %6106 = vmatpush1.bf16.msra.mxu0 %v4852
    %6107 = vmatprep.subr.bf16.mxu0 %v4845
    %6108 = vmatpush1.bf16.msra.mxu0 %v4844
    %6109 = vmatprep.subr.bf16.mxu0 %v4965
    %6110 = vmatpush2.bf16.msra.mxu0 %v4964
    %6111 = vmatprep.subr.bf16.mxu0 %v4957
    %6112 = vmatpush2.bf16.msra.mxu0 %v4956
    %6113 = vmatprep.subr.bf16.mxu0 %v4949
    %6114 = vmatpush2.bf16.msra.mxu0 %v4948
    %6115 = vmatprep.subr.bf16.mxu0 %v4941
    %6116 = vmatpush2.bf16.msra.mxu0 %v4940
    %6117 = vmatprep.subr.bf16.mxu0 %v4933
    %6118 = vmatpush2.bf16.msra.mxu0 %v4932
    %6119 = vmatprep.subr.bf16.mxu0 %v4925
    %6120 = vmatpush2.bf16.msra.mxu0 %v4924
    %6121 = vmatprep.subr.bf16.mxu0 %v4917
    %6122 = vmatpush2.bf16.msra.mxu0 %v4916
    %6123 = vmatprep.subr.bf16.mxu0 %v4909
    %6124 = vmatpush2.bf16.msra.mxu0 %v4908
    %6125 = vmatprep.mubr.bf16.mxu0 %v2363
    %6126 = vmatmul.mubr.bf16.gmra.mxu0 %v2362
    %v6127 = vpop.f32.mrf.mxu0
    %v6128 = vadd.f32 %v6087, %v6127
    %v6129 = vpop.f32.mrf.mxu0
    %v6130 = vadd.f32 %v6089, %v6129
    %v6131 = vpop.f32.mrf.mxu0
    %v6132 = vpop.f32.mrf.mxu0
    %6133 = vdwg.mxu0
    %v6134 = vmax.f32 %v5636, 0.0
    %v6135 = vmax.f32 %v5638, 0.0
    %v6136 = vmax.f32 %v5800, 0.0
    %v6137 = vmax.f32 %v5802, 0.0
    %v6138 = vmax.f32 %v5964, 0.0
    %v6139 = vmax.f32 %v5966, 0.0
    %v6140 = vmax.f32 %v6128, 0.0
    %v6141 = vmax.f32 %v6130, 0.0
    %6142 = vst [vmem:[#allocation2] sm:$0x3] %v6134
    %6143 = vst [vmem:[#allocation3] sm:$0x3] %v6138
    %6144 = vst [vmem:[#allocation2 + $0x2] sm:$0x3] %v6135
    %6145 = vst [vmem:[#allocation3 + $0x2] sm:$0x3] %v6139
    %6146 = vst [vmem:[#allocation2 + $0x4] sm:$0x3] %v6136
    %6147 = vst [vmem:[#allocation3 + $0x4] sm:$0x3] %v6140
    %6148 = vst [vmem:[#allocation2 + $0x6] sm:$0x3] %v6137
    %6149 = vst [vmem:[#allocation3 + $0x6] sm:$0x3] %v6141
    %v6150 = vld [vmem:[#allocation2] sm:$0xff]
    %v6151 = vpack.c.bf16 %v6150, %v6150
    %v6152 = vld [vmem:[#allocation18] sm:$0xff]
    %v6153 = vld [vmem:[#allocation18 + $0x8] sm:$0xff]
    %v6154 = vld [vmem:[#allocation18 + $0x10] sm:$0xff]
    %v6155 = vld [vmem:[#allocation18 + $0x18] sm:$0xff]
    %v6156 = vld [vmem:[#allocation18 + $0x20] sm:$0xff]
    %v6157 = vld [vmem:[#allocation18 + $0x28] sm:$0xff]
    %v6158 = vld [vmem:[#allocation18 + $0x30] sm:$0xff]
    %v6159 = vld [vmem:[#allocation18 + $0x38] sm:$0xff]
    %v6160 = vld [vmem:[#allocation18 + $0x40] sm:$0xff]
    %v6161 = vld [vmem:[#allocation18 + $0x48] sm:$0xff]
    %v6162 = vld [vmem:[#allocation18 + $0x50] sm:$0xff]
    %v6163 = vld [vmem:[#allocation18 + $0x58] sm:$0xff]
    %v6164 = vld [vmem:[#allocation18 + $0x60] sm:$0xff]
    %v6165 = vld [vmem:[#allocation18 + $0x68] sm:$0xff]
    %v6166 = vld [vmem:[#allocation18 + $0x70] sm:$0xff]
    %v6167 = vld [vmem:[#allocation18 + $0x78] sm:$0xff]
    %v6168 = vld [vmem:[#allocation20] sm:$0x3]
    %v6170 = vlaneseq
    %v6171 = vshrl.u32 %v6170, 7
    %v6172 = vsub.s32 0, %v6171
    %v6173 = vrot.slane %v6168, %v6172
    %v6174 = vlaneseq
    %v6175 = vshrl.u32 %v6174, 7
    %v6176 = vsub.s32 1, %v6175
    %v6177 = vrot.slane %v6168, %v6176
    %v6196 = vunpack.c.l.b16 %v6152
    %v6197 = vunpack.c.h.b16 %v6152
    %v6198 = vunpack.c.l.b16 %v6153
    %v6199 = vunpack.c.h.b16 %v6153
    %v6200 = vunpack.c.l.b16 %v6154
    %v6201 = vunpack.c.h.b16 %v6154
    %v6202 = vunpack.c.l.b16 %v6155
    %v6203 = vunpack.c.h.b16 %v6155
    %v6204 = vunpack.c.l.b16 %v6156
    %v6205 = vunpack.c.h.b16 %v6156
    %v6206 = vunpack.c.l.b16 %v6157
    %v6207 = vunpack.c.h.b16 %v6157
    %v6208 = vunpack.c.l.b16 %v6158
    %v6209 = vunpack.c.h.b16 %v6158
    %v6210 = vunpack.c.l.b16 %v6159
    %v6211 = vunpack.c.h.b16 %v6159
    %v6212 = vunpack.c.l.b16 %v6160
    %v6213 = vunpack.c.h.b16 %v6160
    %v6214 = vunpack.c.l.b16 %v6161
    %v6215 = vunpack.c.h.b16 %v6161
    %v6216 = vunpack.c.l.b16 %v6162
    %v6217 = vunpack.c.h.b16 %v6162
    %v6218 = vunpack.c.l.b16 %v6163
    %v6219 = vunpack.c.h.b16 %v6163
    %v6220 = vunpack.c.l.b16 %v6164
    %v6221 = vunpack.c.h.b16 %v6164
    %v6222 = vunpack.c.l.b16 %v6165
    %v6223 = vunpack.c.h.b16 %v6165
    %v6224 = vunpack.c.l.b16 %v6166
    %v6225 = vunpack.c.h.b16 %v6166
    %v6226 = vunpack.c.l.b16 %v6167
    %v6227 = vunpack.c.h.b16 %v6167
    %v6228 = vpack.c.b16 %v6198, %v6196
    %v6229 = vpack.c.b16 %v6199, %v6197
    %v6230 = vpack.c.b16 %v6202, %v6200
    %v6231 = vpack.c.b16 %v6203, %v6201
    %v6232 = vpack.c.b16 %v6206, %v6204
    %v6233 = vpack.c.b16 %v6207, %v6205
    %v6234 = vpack.c.b16 %v6210, %v6208
    %v6235 = vpack.c.b16 %v6211, %v6209
    %v6236 = vpack.c.b16 %v6214, %v6212
    %v6237 = vpack.c.b16 %v6215, %v6213
    %v6238 = vpack.c.b16 %v6218, %v6216
    %v6239 = vpack.c.b16 %v6219, %v6217
    %v6240 = vpack.c.b16 %v6222, %v6220
    %v6241 = vpack.c.b16 %v6223, %v6221
    %v6242 = vpack.c.b16 %v6226, %v6224
    %v6243 = vpack.c.b16 %v6227, %v6225
    %6260 = vmatprep.subr.bf16.mxu0 %v6243
    %6261 = vmatpush1.bf16.msra.mxu0 %v6242
    %6262 = vmatprep.subr.bf16.mxu0 %v6241
    %6263 = vmatpush1.bf16.msra.mxu0 %v6240
    %6264 = vmatprep.subr.bf16.mxu0 %v6239
    %6265 = vmatpush1.bf16.msra.mxu0 %v6238
    %6266 = vmatprep.subr.bf16.mxu0 %v6237
    %6267 = vmatpush1.bf16.msra.mxu0 %v6236
    %6268 = vmatprep.subr.bf16.mxu0 %v6235
    %6269 = vmatpush1.bf16.msra.mxu0 %v6234
    %6270 = vmatprep.subr.bf16.mxu0 %v6233
    %6271 = vmatpush1.bf16.msra.mxu0 %v6232
    %6272 = vmatprep.subr.bf16.mxu0 %v6231
    %6273 = vmatpush1.bf16.msra.mxu0 %v6230
    %6274 = vmatprep.subr.bf16.mxu0 %v6229
    %6275 = vmatpush1.bf16.msra.mxu0 %v6228
    %6276 = vmatprep.subr.bf16.mxu0 0
    %6277 = vmatpush2.bf16.msra.mxu0 0
    %6278 = vmatprep.subr.bf16.mxu0 0
    %6279 = vmatpush2.bf16.msra.mxu0 0
    %6280 = vmatprep.subr.bf16.mxu0 0
    %6281 = vmatpush2.bf16.msra.mxu0 0
    %6282 = vmatprep.subr.bf16.mxu0 0
    %6283 = vmatpush2.bf16.msra.mxu0 0
    %6284 = vmatprep.subr.bf16.mxu0 0
    %6285 = vmatpush2.bf16.msra.mxu0 0
    %6286 = vmatprep.subr.bf16.mxu0 0
    %6287 = vmatpush2.bf16.msra.mxu0 0
    %6288 = vmatprep.subr.bf16.mxu0 0
    %6289 = vmatpush2.bf16.msra.mxu0 0
    %6290 = vmatprep.subr.bf16.mxu0 0
    %6291 = vmatpush2.bf16.msra.mxu0 0
    %6292 = vmatprep.mubr.bf16.mxu0 0
    %6293 = vmatmul.mubr.bf16.gmra.mxu0 %v6151
    %v6294 = vpop.f32.mrf.mxu0
    %v6295 = vadd.f32 %v6173, %v6294
    %v6296 = vpop.f32.mrf.mxu0
    %v6297 = vadd.f32 %v6177, %v6296
    %v6298 = vpop.f32.mrf.mxu0
    %v6299 = vpop.f32.mrf.mxu0
    %6300 = vdwg.mxu0
    %v6301 = vmax.f32 %v6295, 0.0
    %v6302 = vmax.f32 %v6297, 0.0
    %v6303 = vld [vmem:[#allocation3] sm:$0xff]
    %v6304 = vpack.c.bf16 %v6303, %v6303
    %v6305 = vld [vmem:[#allocation23] sm:$0xff]
    %v6306 = vld [vmem:[#allocation23 + $0x8] sm:$0xff]
    %v6307 = vld [vmem:[#allocation23 + $0x10] sm:$0xff]
    %v6308 = vld [vmem:[#allocation23 + $0x18] sm:$0xff]
    %v6309 = vld [vmem:[#allocation23 + $0x20] sm:$0xff]
    %v6310 = vld [vmem:[#allocation23 + $0x28] sm:$0xff]
    %v6311 = vld [vmem:[#allocation23 + $0x30] sm:$0xff]
    %v6312 = vld [vmem:[#allocation23 + $0x38] sm:$0xff]
    %v6313 = vld [vmem:[#allocation23 + $0x40] sm:$0xff]
    %v6314 = vld [vmem:[#allocation23 + $0x48] sm:$0xff]
    %v6315 = vld [vmem:[#allocation23 + $0x50] sm:$0xff]
    %v6316 = vld [vmem:[#allocation23 + $0x58] sm:$0xff]
    %v6317 = vld [vmem:[#allocation23 + $0x60] sm:$0xff]
    %v6318 = vld [vmem:[#allocation23 + $0x68] sm:$0xff]
    %v6319 = vld [vmem:[#allocation23 + $0x70] sm:$0xff]
    %v6320 = vld [vmem:[#allocation23 + $0x78] sm:$0xff]
    %v6321 = vld [vmem:[#allocation23 + $0x80] sm:$0xff]
    %v6322 = vld [vmem:[#allocation23 + $0x88] sm:$0xff]
    %v6323 = vld [vmem:[#allocation23 + $0x90] sm:$0xff]
    %v6324 = vld [vmem:[#allocation23 + $0x98] sm:$0xff]
    %v6325 = vld [vmem:[#allocation23 + $0xa0] sm:$0xff]
    %v6326 = vld [vmem:[#allocation23 + $0xa8] sm:$0xff]
    %v6327 = vld [vmem:[#allocation23 + $0xb0] sm:$0xff]
    %v6328 = vld [vmem:[#allocation23 + $0xb8] sm:$0xff]
    %v6329 = vld [vmem:[#allocation23 + $0xc0] sm:$0xff]
    %v6330 = vld [vmem:[#allocation23 + $0xc8] sm:$0xff]
    %v6331 = vld [vmem:[#allocation23 + $0xd0] sm:$0xff]
    %v6332 = vld [vmem:[#allocation23 + $0xd8] sm:$0xff]
    %v6333 = vld [vmem:[#allocation23 + $0xe0] sm:$0xff]
    %v6334 = vld [vmem:[#allocation23 + $0xe8] sm:$0xff]
    %v6335 = vld [vmem:[#allocation23 + $0xf0] sm:$0xff]
    %v6336 = vld [vmem:[#allocation23 + $0xf8] sm:$0xff]
    %v6337 = vld [vmem:[#allocation24] sm:$0xf]
    %v6339 = vlaneseq
    %v6340 = vshrl.u32 %v6339, 7
    %v6341 = vsub.s32 0, %v6340
    %v6342 = vrot.slane %v6337, %v6341
    %v6343 = vlaneseq
    %v6344 = vshrl.u32 %v6343, 7
    %v6345 = vsub.s32 1, %v6344
    %v6346 = vrot.slane %v6337, %v6345
    %v6347 = vlaneseq
    %v6348 = vshrl.u32 %v6347, 7
    %v6349 = vsub.s32 2, %v6348
    %v6350 = vrot.slane %v6337, %v6349
    %v6351 = vlaneseq
    %v6352 = vshrl.u32 %v6351, 7
    %v6353 = vsub.s32 3, %v6352
    %v6354 = vrot.slane %v6337, %v6353
    %v6391 = vunpack.c.l.b16 %v6305
    %v6392 = vunpack.c.h.b16 %v6305
    %v6393 = vunpack.c.l.b16 %v6306
    %v6394 = vunpack.c.h.b16 %v6306
    %v6395 = vunpack.c.l.b16 %v6307
    %v6396 = vunpack.c.h.b16 %v6307
    %v6397 = vunpack.c.l.b16 %v6308
    %v6398 = vunpack.c.h.b16 %v6308
    %v6399 = vunpack.c.l.b16 %v6309
    %v6400 = vunpack.c.h.b16 %v6309
    %v6401 = vunpack.c.l.b16 %v6310
    %v6402 = vunpack.c.h.b16 %v6310
    %v6403 = vunpack.c.l.b16 %v6311
    %v6404 = vunpack.c.h.b16 %v6311
    %v6405 = vunpack.c.l.b16 %v6312
    %v6406 = vunpack.c.h.b16 %v6312
    %v6407 = vunpack.c.l.b16 %v6313
    %v6408 = vunpack.c.h.b16 %v6313
    %v6409 = vunpack.c.l.b16 %v6314
    %v6410 = vunpack.c.h.b16 %v6314
    %v6411 = vunpack.c.l.b16 %v6315
    %v6412 = vunpack.c.h.b16 %v6315
    %v6413 = vunpack.c.l.b16 %v6316
    %v6414 = vunpack.c.h.b16 %v6316
    %v6415 = vunpack.c.l.b16 %v6317
    %v6416 = vunpack.c.h.b16 %v6317
    %v6417 = vunpack.c.l.b16 %v6318
    %v6418 = vunpack.c.h.b16 %v6318
    %v6419 = vunpack.c.l.b16 %v6319
    %v6420 = vunpack.c.h.b16 %v6319
    %v6421 = vunpack.c.l.b16 %v6320
    %v6422 = vunpack.c.h.b16 %v6320
    %v6423 = vunpack.c.l.b16 %v6321
    %v6424 = vunpack.c.h.b16 %v6321
    %v6425 = vunpack.c.l.b16 %v6322
    %v6426 = vunpack.c.h.b16 %v6322
    %v6427 = vunpack.c.l.b16 %v6323
    %v6428 = vunpack.c.h.b16 %v6323
    %v6429 = vunpack.c.l.b16 %v6324
    %v6430 = vunpack.c.h.b16 %v6324
    %v6431 = vunpack.c.l.b16 %v6325
    %v6432 = vunpack.c.h.b16 %v6325
    %v6433 = vunpack.c.l.b16 %v6326
    %v6434 = vunpack.c.h.b16 %v6326
    %v6435 = vunpack.c.l.b16 %v6327
    %v6436 = vunpack.c.h.b16 %v6327
    %v6437 = vunpack.c.l.b16 %v6328
    %v6438 = vunpack.c.h.b16 %v6328
    %v6439 = vunpack.c.l.b16 %v6329
    %v6440 = vunpack.c.h.b16 %v6329
    %v6441 = vunpack.c.l.b16 %v6330
    %v6442 = vunpack.c.h.b16 %v6330
    %v6443 = vunpack.c.l.b16 %v6331
    %v6444 = vunpack.c.h.b16 %v6331
    %v6445 = vunpack.c.l.b16 %v6332
    %v6446 = vunpack.c.h.b16 %v6332
    %v6447 = vunpack.c.l.b16 %v6333
    %v6448 = vunpack.c.h.b16 %v6333
    %v6449 = vunpack.c.l.b16 %v6334
    %v6450 = vunpack.c.h.b16 %v6334
    %v6451 = vunpack.c.l.b16 %v6335
    %v6452 = vunpack.c.h.b16 %v6335
    %v6453 = vunpack.c.l.b16 %v6336
    %v6454 = vunpack.c.h.b16 %v6336
    %v6455 = vpack.c.b16 %v6395, %v6391
    %v6456 = vpack.c.b16 %v6396, %v6392
    %v6457 = vpack.c.b16 %v6397, %v6393
    %v6458 = vpack.c.b16 %v6398, %v6394
    %v6459 = vpack.c.b16 %v6403, %v6399
    %v6460 = vpack.c.b16 %v6404, %v6400
    %v6461 = vpack.c.b16 %v6405, %v6401
    %v6462 = vpack.c.b16 %v6406, %v6402
    %v6463 = vpack.c.b16 %v6411, %v6407
    %v6464 = vpack.c.b16 %v6412, %v6408
    %v6465 = vpack.c.b16 %v6413, %v6409
    %v6466 = vpack.c.b16 %v6414, %v6410
    %v6467 = vpack.c.b16 %v6419, %v6415
    %v6468 = vpack.c.b16 %v6420, %v6416
    %v6469 = vpack.c.b16 %v6421, %v6417
    %v6470 = vpack.c.b16 %v6422, %v6418
    %v6471 = vpack.c.b16 %v6427, %v6423
    %v6472 = vpack.c.b16 %v6428, %v6424
    %v6473 = vpack.c.b16 %v6429, %v6425
    %v6474 = vpack.c.b16 %v6430, %v6426
    %v6475 = vpack.c.b16 %v6435, %v6431
    %v6476 = vpack.c.b16 %v6436, %v6432
    %v6477 = vpack.c.b16 %v6437, %v6433
    %v6478 = vpack.c.b16 %v6438, %v6434
    %v6479 = vpack.c.b16 %v6443, %v6439
    %v6480 = vpack.c.b16 %v6444, %v6440
    %v6481 = vpack.c.b16 %v6445, %v6441
    %v6482 = vpack.c.b16 %v6446, %v6442
    %v6483 = vpack.c.b16 %v6451, %v6447
    %v6484 = vpack.c.b16 %v6452, %v6448
    %v6485 = vpack.c.b16 %v6453, %v6449
    %v6486 = vpack.c.b16 %v6454, %v6450
    %6519 = vmatprep.subr.bf16.mxu0 %v6484
    %6520 = vmatpush1.bf16.msra.mxu0 %v6483
    %6521 = vmatprep.subr.bf16.mxu0 %v6480
    %6522 = vmatpush1.bf16.msra.mxu0 %v6479
    %6523 = vmatprep.subr.bf16.mxu0 %v6476
    %6524 = vmatpush1.bf16.msra.mxu0 %v6475
    %6525 = vmatprep.subr.bf16.mxu0 %v6472
    %6526 = vmatpush1.bf16.msra.mxu0 %v6471
    %6527 = vmatprep.subr.bf16.mxu0 %v6468
    %6528 = vmatpush1.bf16.msra.mxu0 %v6467
    %6529 = vmatprep.subr.bf16.mxu0 %v6464
    %6530 = vmatpush1.bf16.msra.mxu0 %v6463
    %6531 = vmatprep.subr.bf16.mxu0 %v6460
    %6532 = vmatpush1.bf16.msra.mxu0 %v6459
    %6533 = vmatprep.subr.bf16.mxu0 %v6456
    %6534 = vmatpush1.bf16.msra.mxu0 %v6455
    %6535 = vmatprep.subr.bf16.mxu0 0
    %6536 = vmatpush2.bf16.msra.mxu0 0
    %6537 = vmatprep.subr.bf16.mxu0 0
    %6538 = vmatpush2.bf16.msra.mxu0 0
    %6539 = vmatprep.subr.bf16.mxu0 0
    %6540 = vmatpush2.bf16.msra.mxu0 0
    %6541 = vmatprep.subr.bf16.mxu0 0
    %6542 = vmatpush2.bf16.msra.mxu0 0
    %6543 = vmatprep.subr.bf16.mxu0 0
    %6544 = vmatpush2.bf16.msra.mxu0 0
    %6545 = vmatprep.subr.bf16.mxu0 0
    %6546 = vmatpush2.bf16.msra.mxu0 0
    %6547 = vmatprep.subr.bf16.mxu0 0
    %6548 = vmatpush2.bf16.msra.mxu0 0
    %6549 = vmatprep.subr.bf16.mxu0 0
    %6550 = vmatpush2.bf16.msra.mxu0 0
    %6551 = vmatprep.mubr.bf16.mxu0 0
    %6552 = vmatmul.mubr.bf16.gmra.mxu0 %v6304
    %v6553 = vpop.f32.mrf.mxu0
    %v6554 = vadd.f32 %v6342, %v6553
    %v6555 = vpop.f32.mrf.mxu0
    %v6556 = vadd.f32 %v6346, %v6555
    %v6557 = vpop.f32.mrf.mxu0
    %v6558 = vpop.f32.mrf.mxu0
    %6559 = vdwg.mxu0
    %6560 = vmatprep.subr.bf16.mxu0 %v6486
    %6561 = vmatpush1.bf16.msra.mxu0 %v6485
    %6562 = vmatprep.subr.bf16.mxu0 %v6482
    %6563 = vmatpush1.bf16.msra.mxu0 %v6481
    %6564 = vmatprep.subr.bf16.mxu0 %v6478
    %6565 = vmatpush1.bf16.msra.mxu0 %v6477
    %6566 = vmatprep.subr.bf16.mxu0 %v6474
    %6567 = vmatpush1.bf16.msra.mxu0 %v6473
    %6568 = vmatprep.subr.bf16.mxu0 %v6470
    %6569 = vmatpush1.bf16.msra.mxu0 %v6469
    %6570 = vmatprep.subr.bf16.mxu0 %v6466
    %6571 = vmatpush1.bf16.msra.mxu0 %v6465
    %6572 = vmatprep.subr.bf16.mxu0 %v6462
    %6573 = vmatpush1.bf16.msra.mxu0 %v6461
    %6574 = vmatprep.subr.bf16.mxu0 %v6458
    %6575 = vmatpush1.bf16.msra.mxu0 %v6457
    %6576 = vmatprep.subr.bf16.mxu0 0
    %6577 = vmatpush2.bf16.msra.mxu0 0
    %6578 = vmatprep.subr.bf16.mxu0 0
    %6579 = vmatpush2.bf16.msra.mxu0 0
    %6580 = vmatprep.subr.bf16.mxu0 0
    %6581 = vmatpush2.bf16.msra.mxu0 0
    %6582 = vmatprep.subr.bf16.mxu0 0
    %6583 = vmatpush2.bf16.msra.mxu0 0
    %6584 = vmatprep.subr.bf16.mxu0 0
    %6585 = vmatpush2.bf16.msra.mxu0 0
    %6586 = vmatprep.subr.bf16.mxu0 0
    %6587 = vmatpush2.bf16.msra.mxu0 0
    %6588 = vmatprep.subr.bf16.mxu0 0
    %6589 = vmatpush2.bf16.msra.mxu0 0
    %6590 = vmatprep.subr.bf16.mxu0 0
    %6591 = vmatpush2.bf16.msra.mxu0 0
    %6592 = vmatprep.mubr.bf16.mxu0 0
    %6593 = vmatmul.mubr.bf16.gmra.mxu0 %v6304
    %v6594 = vpop.f32.mrf.mxu0
    %v6595 = vadd.f32 %v6350, %v6594
    %v6596 = vpop.f32.mrf.mxu0
    %v6597 = vadd.f32 %v6354, %v6596
    %v6598 = vpop.f32.mrf.mxu0
    %v6599 = vpop.f32.mrf.mxu0
    %6600 = vdwg.mxu0
    %v6601 = vmax.f32 %v6554, 0.0
    %v6602 = vmax.f32 %v6556, 0.0
    %v6603 = vmax.f32 %v6595, 0.0
    %v6604 = vmax.f32 %v6597, 0.0
    %6605 = vst [vmem:[#allocation4] sm:$0xff] %v6301
    %6606 = vst [vmem:[#allocation5] sm:$0xff] %v6601
    %6607 = vst [vmem:[#allocation5 + $0x8] sm:$0xff] %v6602
    %6608 = vst [vmem:[#allocation4 + $0x8] sm:$0xff] %v6302
    %6609 = vst [vmem:[#allocation5 + $0x10] sm:$0xff] %v6603
    %6610 = vst [vmem:[#allocation5 + $0x18] sm:$0xff] %v6604
    %v6611 = vld [vmem:[#allocation4] sm:$0xff]
    %v6612 = vld [vmem:[#allocation4 + $0x8] sm:$0xff]
    %v6613 = vpack.c.bf16 %v6612, %v6611
    %v6614 = vld [vmem:[%s9] sm:$0xf]
    %v6615 = vld [vmem:[%s9 + $0x4] sm:$0xf]
    %v6616 = vld [vmem:[%s9 + $0x8] sm:$0xf]
    %v6617 = vld [vmem:[%s9 + $0xc] sm:$0xf]
    %v6618 = vld [vmem:[%s9 + $0x10] sm:$0xf]
    %v6619 = vld [vmem:[%s9 + $0x14] sm:$0xf]
    %v6620 = vld [vmem:[%s9 + $0x18] sm:$0xf]
    %v6621 = vld [vmem:[%s9 + $0x1c] sm:$0xf]
    %v6622 = vld [vmem:[%s9 + $0x20] sm:$0xf]
    %v6623 = vld [vmem:[%s9 + $0x24] sm:$0xf]
    %v6624 = vld [vmem:[%s9 + $0x28] sm:$0xf]
    %v6625 = vld [vmem:[%s9 + $0x2c] sm:$0xf]
    %v6626 = vld [vmem:[%s9 + $0x30] sm:$0xf]
    %v6627 = vld [vmem:[%s9 + $0x34] sm:$0xf]
    %v6628 = vld [vmem:[%s9 + $0x38] sm:$0xf]
    %v6629 = vld [vmem:[%s9 + $0x3c] sm:$0xf]
    %v6630 = vld [vmem:[#allocation21] sm:$0x1]
    %v6632 = vlaneseq
    %v6633 = vshrl.u32 %v6632, 7
    %v6634 = vsub.s32 0, %v6633
    %v6635 = vrot.slane %v6630, %v6634
    %v6653 = vunpack.c.l.b16 %v6614
    %v6654 = vunpack.c.l.b16 %v6615
    %v6655 = vunpack.c.l.b16 %v6616
    %v6656 = vunpack.c.l.b16 %v6617
    %v6657 = vunpack.c.l.b16 %v6618
    %v6658 = vunpack.c.l.b16 %v6619
    %v6659 = vunpack.c.l.b16 %v6620
    %v6660 = vunpack.c.l.b16 %v6621
    %v6661 = vunpack.c.l.b16 %v6622
    %v6662 = vunpack.c.l.b16 %v6623
    %v6663 = vunpack.c.l.b16 %v6624
    %v6664 = vunpack.c.l.b16 %v6625
    %v6665 = vunpack.c.l.b16 %v6626
    %v6666 = vunpack.c.l.b16 %v6627
    %v6667 = vunpack.c.l.b16 %v6628
    %v6668 = vunpack.c.l.b16 %v6629
    %v6669 = vpack.c.b16 %v6654, %v6653
    %v6670 = vpack.c.b16 %v6656, %v6655
    %v6671 = vpack.c.b16 %v6658, %v6657
    %v6672 = vpack.c.b16 %v6660, %v6659
    %v6673 = vpack.c.b16 %v6662, %v6661
    %v6674 = vpack.c.b16 %v6664, %v6663
    %v6675 = vpack.c.b16 %v6666, %v6665
    %v6676 = vpack.c.b16 %v6668, %v6667
    %6685 = vmatprep.subr.bf16.mxu0 0
    %6686 = vmatpush1.bf16.msra.mxu0 %v6676
    %6687 = vmatprep.subr.bf16.mxu0 0
    %6688 = vmatpush1.bf16.msra.mxu0 %v6675
    %6689 = vmatprep.subr.bf16.mxu0 0
    %6690 = vmatpush1.bf16.msra.mxu0 %v6674
    %6691 = vmatprep.subr.bf16.mxu0 0
    %6692 = vmatpush1.bf16.msra.mxu0 %v6673
    %6693 = vmatprep.subr.bf16.mxu0 0
    %6694 = vmatpush1.bf16.msra.mxu0 %v6672
    %6695 = vmatprep.subr.bf16.mxu0 0
    %6696 = vmatpush1.bf16.msra.mxu0 %v6671
    %6697 = vmatprep.subr.bf16.mxu0 0
    %6698 = vmatpush1.bf16.msra.mxu0 %v6670
    %6699 = vmatprep.subr.bf16.mxu0 0
    %6700 = vmatpush1.bf16.msra.mxu0 %v6669
    %6701 = vmatprep.subr.bf16.mxu0 0
    %6702 = vmatpush2.bf16.msra.mxu0 0
    %6703 = vmatprep.subr.bf16.mxu0 0
    %6704 = vmatpush2.bf16.msra.mxu0 0
    %6705 = vmatprep.subr.bf16.mxu0 0
    %6706 = vmatpush2.bf16.msra.mxu0 0
    %6707 = vmatprep.subr.bf16.mxu0 0
    %6708 = vmatpush2.bf16.msra.mxu0 0
    %6709 = vmatprep.subr.bf16.mxu0 0
    %6710 = vmatpush2.bf16.msra.mxu0 0
    %6711 = vmatprep.subr.bf16.mxu0 0
    %6712 = vmatpush2.bf16.msra.mxu0 0
    %6713 = vmatprep.subr.bf16.mxu0 0
    %6714 = vmatpush2.bf16.msra.mxu0 0
    %6715 = vmatprep.subr.bf16.mxu0 0
    %6716 = vmatpush2.bf16.msra.mxu0 0
    %6717 = vmatprep.mubr.bf16.mxu0 0
    %6718 = vmatmul.mubr.bf16.gmra.mxu0 %v6613
    %v6719 = vpop.f32.mrf.mxu0
    %v6720 = vadd.f32 %v6635, %v6719
    %v6721 = vpop.f32.mrf.mxu0
    %v6722 = vpop.f32.mrf.mxu0
    %v6723 = vadd.f32 %v6635, %v6722
    %v6724 = vpop.f32.mrf.mxu0
    %6725 = vdwg.mxu0
    %v6726 = vld [vmem:[#allocation5] sm:$0xff]
    %v6727 = vld [vmem:[#allocation5 + $0x8] sm:$0xff]
    %v6728 = vld [vmem:[#allocation5 + $0x10] sm:$0xff]
    %v6729 = vld [vmem:[#allocation5 + $0x18] sm:$0xff]
    %v6730 = vpack.c.bf16 %v6728, %v6726
    %v6731 = vpack.c.bf16 %v6729, %v6727
    %v6732 = vld [vmem:[#allocation26] sm:$0xf]
    %v6733 = vld [vmem:[#allocation26 + $0x4] sm:$0xf]
    %v6734 = vld [vmem:[#allocation26 + $0x8] sm:$0xf]
    %v6735 = vld [vmem:[#allocation26 + $0xc] sm:$0xf]
    %v6736 = vld [vmem:[#allocation26 + $0x10] sm:$0xf]
    %v6737 = vld [vmem:[#allocation26 + $0x14] sm:$0xf]
    %v6738 = vld [vmem:[#allocation26 + $0x18] sm:$0xf]
    %v6739 = vld [vmem:[#allocation26 + $0x1c] sm:$0xf]
    %v6740 = vld [vmem:[#allocation26 + $0x20] sm:$0xf]
    %v6741 = vld [vmem:[#allocation26 + $0x24] sm:$0xf]
    %v6742 = vld [vmem:[#allocation26 + $0x28] sm:$0xf]
    %v6743 = vld [vmem:[#allocation26 + $0x2c] sm:$0xf]
    %v6744 = vld [vmem:[#allocation26 + $0x30] sm:$0xf]
    %v6745 = vld [vmem:[#allocation26 + $0x34] sm:$0xf]
    %v6746 = vld [vmem:[#allocation26 + $0x38] sm:$0xf]
    %v6747 = vld [vmem:[#allocation26 + $0x3c] sm:$0xf]
    %v6748 = vld [vmem:[#allocation26 + $0x40] sm:$0xf]
    %v6749 = vld [vmem:[#allocation26 + $0x44] sm:$0xf]
    %v6750 = vld [vmem:[#allocation26 + $0x48] sm:$0xf]
    %v6751 = vld [vmem:[#allocation26 + $0x4c] sm:$0xf]
    %v6752 = vld [vmem:[#allocation26 + $0x50] sm:$0xf]
    %v6753 = vld [vmem:[#allocation26 + $0x54] sm:$0xf]
    %v6754 = vld [vmem:[#allocation26 + $0x58] sm:$0xf]
    %v6755 = vld [vmem:[#allocation26 + $0x5c] sm:$0xf]
    %v6756 = vld [vmem:[#allocation26 + $0x60] sm:$0xf]
    %v6757 = vld [vmem:[#allocation26 + $0x64] sm:$0xf]
    %v6758 = vld [vmem:[#allocation26 + $0x68] sm:$0xf]
    %v6759 = vld [vmem:[#allocation26 + $0x6c] sm:$0xf]
    %v6760 = vld [vmem:[#allocation26 + $0x70] sm:$0xf]
    %v6761 = vld [vmem:[#allocation26 + $0x74] sm:$0xf]
    %v6762 = vld [vmem:[#allocation26 + $0x78] sm:$0xf]
    %v6763 = vld [vmem:[#allocation26 + $0x7c] sm:$0xf]
    %v6764 = vld [vmem:[#allocation27] sm:$0x1]
    %v6766 = vlaneseq
    %v6767 = vshrl.u32 %v6766, 7
    %v6768 = vsub.s32 0, %v6767
    %v6769 = vrot.slane %v6764, %v6768
    %v6803 = vunpack.c.l.b16 %v6732
    %v6804 = vunpack.c.l.b16 %v6733
    %v6805 = vunpack.c.l.b16 %v6734
    %v6806 = vunpack.c.l.b16 %v6735
    %v6807 = vunpack.c.l.b16 %v6736
    %v6808 = vunpack.c.l.b16 %v6737
    %v6809 = vunpack.c.l.b16 %v6738
    %v6810 = vunpack.c.l.b16 %v6739
    %v6811 = vunpack.c.l.b16 %v6740
    %v6812 = vunpack.c.l.b16 %v6741
    %v6813 = vunpack.c.l.b16 %v6742
    %v6814 = vunpack.c.l.b16 %v6743
    %v6815 = vunpack.c.l.b16 %v6744
    %v6816 = vunpack.c.l.b16 %v6745
    %v6817 = vunpack.c.l.b16 %v6746
    %v6818 = vunpack.c.l.b16 %v6747
    %v6819 = vunpack.c.l.b16 %v6748
    %v6820 = vunpack.c.l.b16 %v6749
    %v6821 = vunpack.c.l.b16 %v6750
    %v6822 = vunpack.c.l.b16 %v6751
    %v6823 = vunpack.c.l.b16 %v6752
    %v6824 = vunpack.c.l.b16 %v6753
    %v6825 = vunpack.c.l.b16 %v6754
    %v6826 = vunpack.c.l.b16 %v6755
    %v6827 = vunpack.c.l.b16 %v6756
    %v6828 = vunpack.c.l.b16 %v6757
    %v6829 = vunpack.c.l.b16 %v6758
    %v6830 = vunpack.c.l.b16 %v6759
    %v6831 = vunpack.c.l.b16 %v6760
    %v6832 = vunpack.c.l.b16 %v6761
    %v6833 = vunpack.c.l.b16 %v6762
    %v6834 = vunpack.c.l.b16 %v6763
    %v6835 = vpack.c.b16 %v6804, %v6803
    %v6836 = vpack.c.b16 %v6806, %v6805
    %v6837 = vpack.c.b16 %v6808, %v6807
    %v6838 = vpack.c.b16 %v6810, %v6809
    %v6839 = vpack.c.b16 %v6812, %v6811
    %v6840 = vpack.c.b16 %v6814, %v6813
    %v6841 = vpack.c.b16 %v6816, %v6815
    %v6842 = vpack.c.b16 %v6818, %v6817
    %v6843 = vpack.c.b16 %v6820, %v6819
    %v6844 = vpack.c.b16 %v6822, %v6821
    %v6845 = vpack.c.b16 %v6824, %v6823
    %v6846 = vpack.c.b16 %v6826, %v6825
    %v6847 = vpack.c.b16 %v6828, %v6827
    %v6848 = vpack.c.b16 %v6830, %v6829
    %v6849 = vpack.c.b16 %v6832, %v6831
    %v6850 = vpack.c.b16 %v6834, %v6833
    %6867 = vmatprep.subr.bf16.mxu0 0
    %6868 = vmatpush1.bf16.msra.mxu0 %v6842
    %6869 = vmatprep.subr.bf16.mxu0 0
    %6870 = vmatpush1.bf16.msra.mxu0 %v6841
    %6871 = vmatprep.subr.bf16.mxu0 0
    %6872 = vmatpush1.bf16.msra.mxu0 %v6840
    %6873 = vmatprep.subr.bf16.mxu0 0
    %6874 = vmatpush1.bf16.msra.mxu0 %v6839
    %6875 = vmatprep.subr.bf16.mxu0 0
    %6876 = vmatpush1.bf16.msra.mxu0 %v6838
    %6877 = vmatprep.subr.bf16.mxu0 0
    %6878 = vmatpush1.bf16.msra.mxu0 %v6837
    %6879 = vmatprep.subr.bf16.mxu0 0
    %6880 = vmatpush1.bf16.msra.mxu0 %v6836
    %6881 = vmatprep.subr.bf16.mxu0 0
    %6882 = vmatpush1.bf16.msra.mxu0 %v6835
    %6883 = vmatprep.subr.bf16.mxu0 0
    %6884 = vmatpush2.bf16.msra.mxu0 %v6850
    %6885 = vmatprep.subr.bf16.mxu0 0
    %6886 = vmatpush2.bf16.msra.mxu0 %v6849
    %6887 = vmatprep.subr.bf16.mxu0 0
    %6888 = vmatpush2.bf16.msra.mxu0 %v6848
    %6889 = vmatprep.subr.bf16.mxu0 0
    %6890 = vmatpush2.bf16.msra.mxu0 %v6847
    %6891 = vmatprep.subr.bf16.mxu0 0
    %6892 = vmatpush2.bf16.msra.mxu0 %v6846
    %6893 = vmatprep.subr.bf16.mxu0 0
    %6894 = vmatpush2.bf16.msra.mxu0 %v6845
    %6895 = vmatprep.subr.bf16.mxu0 0
    %6896 = vmatpush2.bf16.msra.mxu0 %v6844
    %6897 = vmatprep.subr.bf16.mxu0 0
    %6898 = vmatpush2.bf16.msra.mxu0 %v6843
    %6899 = vmatprep.mubr.bf16.mxu0 %v6731
    %6900 = vmatmul.mubr.bf16.gmra.mxu0 %v6730
    %v6901 = vpop.f32.mrf.mxu0
    %v6902 = vadd.f32 %v6769, %v6901
    %v6903 = vpop.f32.mrf.mxu0
    %v6904 = vpop.f32.mrf.mxu0
    %v6905 = vadd.f32 %v6769, %v6904
    %v6906 = vpop.f32.mrf.mxu0
    %6907 = vdwg.mxu0
    %vm6908 = vcmask 122880
    %6909 = vst.msk [vmem:[#allocation29] sm:$0x1] %vm6908, %v6720
    %vm6910 = vcmask 516096
    %6911 = vst.msk [vmem:[%s16] sm:$0x1] %vm6910, %v6902
    %6913 = vrot.lane.b32.xlu0 %v6720, 112
    %v6914 = vpop.permute.xlu0 %6913
    %6916 = vst.msk [vmem:[#allocation29 + $0x1] sm:$0x1] %vm6908, %v6914
    %6918 = vrot.lane.b32.xlu0 %v6902, 64
    %v6919 = vpop.permute.xlu0 %6918
    %6921 = vst.msk [vmem:[%s16 + $0x1] sm:$0x1] %vm6910, %v6919
    %vm6922 = vcmask 123905
    %6923 = vst.msk [vmem:[#allocation29 + $0xf] sm:$0x2] %vm6922, %v6720
    %vm6924 = vcmask 517121
    %6925 = vst.msk [vmem:[%s16 + $0xf] sm:$0x2] %vm6924, %v6902
    %6926 = vst.msk [vmem:[#allocation29 + $0x10] sm:$0x2] %vm6922, %v6914
    %6927 = vst.msk [vmem:[%s16 + $0x10] sm:$0x2] %vm6924, %v6919
    %vm6928 = vcmask 124930
    %6929 = vst.msk [vmem:[#allocation29 + $0x2] sm:$0x4] %vm6928, %v6720
    %vm6930 = vcmask 518146
    %6931 = vst.msk [vmem:[%s16 + $0x2] sm:$0x4] %vm6930, %v6902
    %6932 = vst.msk [vmem:[#allocation29 + $0x3] sm:$0x4] %vm6928, %v6914
    %6933 = vst.msk [vmem:[%s16 + $0x3] sm:$0x4] %vm6930, %v6919
    %vm6934 = vcmask 125955
    %6935 = vst.msk [vmem:[#allocation29 + $0x11] sm:$0x8] %vm6934, %v6720
    %vm6936 = vcmask 519171
    %6937 = vst.msk [vmem:[%s16 + $0x11] sm:$0x8] %vm6936, %v6902
    %6938 = vst.msk [vmem:[#allocation29 + $0x12] sm:$0x8] %vm6934, %v6914
    %6939 = vst.msk [vmem:[%s16 + $0x12] sm:$0x8] %vm6936, %v6919
    %vm6940 = vcmask 126980
    %6941 = vst.msk [vmem:[#allocation29 + $0x4] sm:$0x10] %vm6940, %v6720
    %vm6942 = vcmask 520196
    %6943 = vst.msk [vmem:[%s16 + $0x4] sm:$0x10] %vm6942, %v6902
    %6944 = vst.msk [vmem:[#allocation29 + $0x5] sm:$0x10] %vm6940, %v6914
    %6945 = vst.msk [vmem:[%s16 + $0x5] sm:$0x10] %vm6942, %v6919
    %vm6946 = vcmask 128005
    %6947 = vst.msk [vmem:[#allocation29 + $0x13] sm:$0x20] %vm6946, %v6720
    %vm6948 = vcmask 521221
    %6949 = vst.msk [vmem:[%s16 + $0x13] sm:$0x20] %vm6948, %v6902
    %6950 = vst.msk [vmem:[#allocation29 + $0x14] sm:$0x20] %vm6946, %v6914
    %6951 = vst.msk [vmem:[%s16 + $0x14] sm:$0x20] %vm6948, %v6919
    %vm6952 = vcmask 129030
    %6953 = vst.msk [vmem:[#allocation29 + $0x6] sm:$0x40] %vm6952, %v6720
    %vm6954 = vcmask 522246
    %6955 = vst.msk [vmem:[%s16 + $0x6] sm:$0x40] %vm6954, %v6902
    %6956 = vst.msk [vmem:[#allocation29 + $0x7] sm:$0x40] %vm6952, %v6914
    %6957 = vst.msk [vmem:[%s16 + $0x7] sm:$0x40] %vm6954, %v6919
    %vm6958 = vcmask 130055
    %6959 = vst.msk [vmem:[#allocation29 + $0x15] sm:$0x80] %vm6958, %v6720
    %vm6960 = vcmask 523271
    %6961 = vst.msk [vmem:[%s16 + $0x15] sm:$0x80] %vm6960, %v6902
    %6962 = vst.msk [vmem:[#allocation29 + $0x16] sm:$0x80] %vm6958, %v6914
    %6963 = vst.msk [vmem:[%s16 + $0x16] sm:$0x80] %vm6960, %v6919
    %6964 = vst.msk [vmem:[#allocation29 + $0x2] sm:$0x1] %vm6908, %v6723
    %6965 = vst.msk [vmem:[%s16 + $0x2] sm:$0x1] %vm6910, %v6905
    %6967 = vrot.lane.b32.xlu0 %v6723, 112
    %v6968 = vpop.permute.xlu0 %6967
    %6970 = vst.msk [vmem:[#allocation29 + $0x3] sm:$0x1] %vm6908, %v6968
    %6972 = vrot.lane.b32.xlu0 %v6905, 64
    %v6973 = vpop.permute.xlu0 %6972
    %6975 = vst.msk [vmem:[%s16 + $0x3] sm:$0x1] %vm6910, %v6973
    %6976 = vst.msk [vmem:[#allocation29 + $0x11] sm:$0x2] %vm6922, %v6723
    %6977 = vst.msk [vmem:[%s16 + $0x11] sm:$0x2] %vm6924, %v6905
    %6978 = vst.msk [vmem:[#allocation29 + $0x12] sm:$0x2] %vm6922, %v6968
    %6979 = vst.msk [vmem:[%s16 + $0x12] sm:$0x2] %vm6924, %v6973
    %6980 = vst.msk [vmem:[#allocation29 + $0x4] sm:$0x4] %vm6928, %v6723
    %6981 = vst.msk [vmem:[%s16 + $0x4] sm:$0x4] %vm6930, %v6905
    %6982 = vst.msk [vmem:[#allocation29 + $0x5] sm:$0x4] %vm6928, %v6968
    %6983 = vst.msk [vmem:[%s16 + $0x5] sm:$0x4] %vm6930, %v6973
    %6984 = vst.msk [vmem:[#allocation29 + $0x13] sm:$0x8] %vm6934, %v6723
    %6985 = vst.msk [vmem:[%s16 + $0x13] sm:$0x8] %vm6936, %v6905
    %6986 = vst.msk [vmem:[#allocation29 + $0x14] sm:$0x8] %vm6934, %v6968
    %6987 = vst.msk [vmem:[%s16 + $0x14] sm:$0x8] %vm6936, %v6973
    %6988 = vst.msk [vmem:[#allocation29 + $0x6] sm:$0x10] %vm6940, %v6723
    %6989 = vst.msk [vmem:[%s16 + $0x6] sm:$0x10] %vm6942, %v6905
    %6990 = vst.msk [vmem:[#allocation29 + $0x7] sm:$0x10] %vm6940, %v6968
    %6991 = vst.msk [vmem:[%s16 + $0x7] sm:$0x10] %vm6942, %v6973
    %6992 = vst.msk [vmem:[#allocation29 + $0x15] sm:$0x20] %vm6946, %v6723
    %6993 = vst.msk [vmem:[%s16 + $0x15] sm:$0x20] %vm6948, %v6905
    %6994 = vst.msk [vmem:[#allocation29 + $0x16] sm:$0x20] %vm6946, %v6968
    %6995 = vst.msk [vmem:[%s16 + $0x16] sm:$0x20] %vm6948, %v6973
    %6996 = vst.msk [vmem:[#allocation29 + $0x8] sm:$0x40] %vm6952, %v6723
    %6997 = vst.msk [vmem:[%s16 + $0x8] sm:$0x40] %vm6954, %v6905
    %6998 = vst.msk [vmem:[#allocation29 + $0x9] sm:$0x40] %vm6952, %v6968
    %6999 = vst.msk [vmem:[%s16 + $0x9] sm:$0x40] %vm6954, %v6973
    %7000 = vst.msk [vmem:[#allocation29 + $0x17] sm:$0x80] %vm6958, %v6723
    %7001 = vst.msk [vmem:[%s16 + $0x17] sm:$0x80] %vm6960, %v6905
    %7002 = vst.msk [vmem:[#allocation29 + $0x18] sm:$0x80] %vm6958, %v6968
    %7003 = vst.msk [vmem:[%s16 + $0x18] sm:$0x80] %vm6960, %v6973
    // Predicated region
    $region118: #{hierarchical_decoder_forward.1} parent=1 // pred_check
      _
    $region119: #{hierarchical_decoder_forward.1} parent=1 // pred_check_branch
      %7005 = sbr.rel (0) target = $region121
    $region120: #{hierarchical_decoder_forward.1} parent=1 // pred_region
      %s7007 = ssub.s32 512, 512
      %7008 = vsyncadd [#allocation8], %s7007
      %s7009 = sshll.u32 [#allocation29], 4
      %s7010 = int_to_ptr.vmem [resolvable:$true] %s7009
      %7015 = dma.vmem_to_hbm [thread:$0]  %s7010, 512, %s15, [#allocation8], 128, 128, 8
    $region121: #{hierarchical_decoder_forward.1} parent=1 // pred_fallthru
      _
    // Predicated region
    $region122: #{hierarchical_decoder_forward.1} parent=1 // pred_check
      _
    $region123: #{hierarchical_decoder_forward.1} parent=1 // pred_check_branch
      %7017 = sbr.rel (0) target = $region125
    $region124: #{hierarchical_decoder_forward.1} parent=1 // pred_region
      _
    $region125: #{hierarchical_decoder_forward.1} parent=1 // pred_fallthru
      _
    // Predicated region
    $region126: #{hierarchical_decoder_forward.1} parent=1 // pred_check
      _
    $region127: #{hierarchical_decoder_forward.1} parent=1 // pred_check_branch
      %7019 = sbr.rel (0) target = $region129
    $region128: #{hierarchical_decoder_forward.1} parent=1 // pred_region
      %7020 = dma.done [#allocation8], 512
    $region129: #{hierarchical_decoder_forward.1} parent=1 // pred_fallthru
      _
    // Predicated region
    $region130: #{hierarchical_decoder_forward.1} parent=1 // pred_check
      _
    $region131: #{hierarchical_decoder_forward.1} parent=1 // pred_check_branch
      %7022 = sbr.rel (0) target = $region133
    $region132: #{hierarchical_decoder_forward.1} parent=1 // pred_region
      _
    $region133: #{hierarchical_decoder_forward.1} parent=1 // pred_fallthru
      _
    %7023 = vsyncpa [#allocation7], 1
    %7024 = vsyncpa [#allocation10], 1
    %7025 = vsyncpa [#allocation13], 1
    %7026 = vsyncpa [#allocation16], 1
    %7027 = vsyncpa [#allocation19], 1
    %7028 = vsyncpa [#allocation22], 1
    %7029 = vsyncpa [#allocation25], 1
    %7030 = vsyncpa [#allocation28], 1
    %7031 = vsyncpa [#allocation8], 1

</llo_original>
